<compile_context>
chip_gen: v6e
topology: v6e:2x2x1
jax: 0.10.0
libtpu: 0.0.40
codegen_flags: <defaults>
</compile_context>

<pallas_src>
import jax
import jax.numpy as jnp
from jax.experimental import pallas as pl
from jax.experimental.pallas import tpu as pltpu

# ----- small, TPU-friendly dims consistent with the module (scaled down) -------
D_IN    = 256    # Channel input_dim
H1      = 256    # Channel hidden_dim1 (fc_input out, ALL_MLP input_dim, LSTM input)
H2      = 128    # Channel hidden_dim2 (ALL_MLP hidden_dim1, LSTM hidden size)
MH2     = 128    # ALL_MLP hidden_dim2
N_MLP   = 3
LN_EPS  = 1e-5
W_DTYPE = jnp.bfloat16            # MXU-native weight/activation dtype (f32 accumulation)

MLP_DIMS = [(H1, H2), (H2, MH2), (MH2, H2), (H2, H1)]   # the 4 Linear layers of ALL_MLP

WA_COLS  = 128        # weight slab A: all MLP Linears with dout == 128
WB_COLS  = 256        # weight slab B: MLP layer-4 Linears + folded fc1@fc2 head
WC_COLS  = 6 * H2     # weight slab C: fused BiLSTM gate weights (768 wide)
VEC_COLS = 6 * H2     # bias/gamma/beta slab, every vector zero-padded to 768


# --------------------------------- fused kernel --------------------------------
def _channel_kernel(x_ref, wA_ref, wB_ref, wC_ref, vec_ref, out_ref):
    """One batch tile of the whole Channel forward pass. All params resident in VMEM."""
    x = x_ref[...]                                    # (TB, D_IN) f32

    def dot(a, w):                                    # bf16 MXU matmul, f32 accumulation
        return jnp.dot(a.astype(W_DTYPE), w, preferred_element_type=jnp.float32)

    rowA = rowB = rowC = vrow = 0

    # --- N_MLP x ALL_MLP = 12 fused Linear + LayerNorm(eps=1e-5) + ReLU blocks.
    #     fc_input is pre-folded into the very first Linear (mlp0 / layer0).
    for m in range(N_MLP):
        for li, (din, dout) in enumerate(MLP_DIMS):
            if m == 0 and li == 0:
                din = D_IN                            # folded fc_input weight: (D_IN, H2)
            if dout == WA_COLS:                       # static slab slices (zero-cost views)
                w = wA_ref[rowA:rowA + din, :]
                rowA += din
            else:
                w = wB_ref[rowB:rowB + din, :]
                rowB += din
            b     = vec_ref[vrow:vrow + 1, :dout]
            gamma = vec_ref[vrow + 1:vrow + 2, :dout]
            beta  = vec_ref[vrow + 2:vrow + 3, :dout]
            vrow += 3

            y = dot(x, w) + b
            mean = jnp.mean(y, axis=-1, keepdims=True)
            d = y - mean
            var = jnp.mean(d * d, axis=-1, keepdims=True)     # centered variance (matches torch)
            y = d * jax.lax.rsqrt(var + LN_EPS) * gamma + beta
            x = jnp.maximum(y, 0.0)

    # --- 3 bidirectional LSTM layers on a length-1 sequence, h0 = c0 = 0.
    #     Forget gate dropped, fwd/rev fused; columns = [i_f|i_r | g_f|g_r | o_f|o_r].
    for _ in range(3):
        din = x.shape[-1]                             # H1 for layer 0, 2*H2 afterwards
        w = wC_ref[rowC:rowC + din, :]
        rowC += din
        b = vec_ref[vrow:vrow + 1, :]                 # (1, 6*H2)
        vrow += 1
        gates = dot(x, w) + b
        i = jax.nn.sigmoid(gates[:, :2 * H2])
        g = jnp.tanh(gates[:, 2 * H2:4 * H2])
        o = jax.nn.sigmoid(gates[:, 4 * H2:])
        x = o * jnp.tanh(i * g)                       # == concat(h_fwd, h_rev), (TB, 2*H2)

    # --- BiLSTM head: fc1 -> dropout(identity, eval) -> fc2, pre-folded into one Linear.
    w = wB_ref[rowB:rowB + 2 * H2, :]
    b = vec_ref[vrow:vrow + 1, :H1]
    out_ref[...] = (dot(x, w) + b).astype(out_ref.dtype)


# --------------------------------- wrapper --------------------------------------
def channel_forward(slabs, x, *, tb=128):
    wA, wB, wC, vec = slabs
    B = x.shape[0]
    tb = min(tb, B)
    assert tb % 8 == 0 and B % tb == 0, (B, tb)
    grid = (B // tb,)

    # Advisory cost estimate for XLA's scheduler around this custom call.
    kn_sum = wA.size + wB.size + wC.size                      # sum(K*N) over all matmuls
    flops = 2 * B * kn_sum
    transcendentals = B * (4 * N_MLP + 3 * 8 * H2)            # LN rsqrt + LSTM sigmoid/tanh
    bytes_accessed = (x.size * 4 + B * H1 * 4 +
                      (wA.size + wB.size + wC.size) * 2 + vec.size * 4)

    return pl.pallas_call(
        _channel_kernel,
        out_shape=jax.ShapeDtypeStruct((B, H1), jnp.float32),
        grid_spec=pltpu.PrefetchScalarGridSpec(
            num_scalar_prefetch=0,
            grid=grid,
            in_specs=[
                pl.BlockSpec((tb, D_IN), lambda i: (i, 0)),       # batch-tiled activations
                pl.BlockSpec(wA.shape, lambda i: (0, 0)),          # parameter slabs: constant
                pl.BlockSpec(wB.shape, lambda i: (0, 0)),          # index -> DMA'd once and
                pl.BlockSpec(wC.shape, lambda i: (0, 0)),          # kept resident in VMEM
                pl.BlockSpec(vec.shape, lambda i: (0, 0)),
            ],
            out_specs=pl.BlockSpec((tb, H1), lambda i: (i, 0)),
        ),
        compiler_params=pltpu.CompilerParams(
            dimension_semantics=("parallel",),                     # v7x: shard batch across 2 TCs
        ),
        cost_estimate=pl.CostEstimate(
            flops=flops, transcendentals=transcendentals, bytes_accessed=bytes_accessed),
    )(x, wA, wB, wC, vec)


# --------------------------- deterministic parameters ---------------------------
def _dense(key, din, dout, scale=0.05):
    kw, kb = jax.random.split(key)
    w = scale * jax.random.normal(kw, (din, dout), jnp.float32)   # stored as W^T: (in, out)
    b = scale * jax.random.normal(kb, (dout,), jnp.float32)
    return w, b


def make_torch_params(key):
    """f32 parameters in the original (unfolded) module structure."""
    keys = iter(jax.random.split(key, 64))
    p = {"fc_input": _dense(next(keys), D_IN, H1), "mlps": [], "lstm": []}
    for _ in range(N_MLP):
        layers = []
        for din, dout in MLP_DIMS:
            w, b = _dense(next(keys), din, dout)
            layers.append((w, b, jnp.ones((dout,), jnp.float32), jnp.zeros((dout,), jnp.float32)))
        p["mlps"].append(layers)
    for layer in range(3):
        din = H1 if layer == 0 else 2 * H2
        dirs = []
        for _ in range(2):                       # forward, reverse direction
            w_ih, b_ih = _dense(next(keys), din, 4 * H2)   # gate column blocks [i|f|g|o]
            _,    b_hh = _dense(next(keys), din, 4 * H2)   # W_hh unused: h0 = 0
            dirs.append((w_ih, b_ih, b_hh))
        p["lstm"].append(dirs)
    p["fc1"] = _dense(next(keys), 2 * H2, H2)
    p["fc2"] = _dense(next(keys), H2, H1)
    return p


def fold_params(p):
    """Eval-mode algebraic folds, done in f32:
       * fc_input folded into the first ALL_MLP Linear (no nonlinearity between them),
       * fwd/rev LSTM directions fused, dead forget gate dropped (cols [i_f|i_r|g_f|g_r|o_f|o_r]),
       * fc1 -> dropout(identity) -> fc2 folded into one Linear."""
    f = {"mlps": [], "lstm": []}
    w_in, b_in = p["fc_input"]
    for m, layers in enumerate(p["mlps"]):
        folded = []
        for li, (w, b, gamma, beta) in enumerate(layers):
            if m == 0 and li == 0:
                w, b = w_in @ w, b_in @ w + b            # (D_IN, H2), (H2,)
            folded.append((w, b, gamma, beta))
        f["mlps"].append(folded)
    for dirs in p["lstm"]:
        wi, wg, wo, bi, bg, bo = [], [], [], [], [], []
        for w_ih, b_ih, b_hh in dirs:
            b = b_ih + b_hh
            wi.append(w_ih[:, 0 * H2:1 * H2]); bi.append(b[0 * H2:1 * H2])
            wg.append(w_ih[:, 2 * H2:3 * H2]); bg.append(b[2 * H2:3 * H2])
            wo.append(w_ih[:, 3 * H2:4 * H2]); bo.append(b[3 * H2:4 * H2])
        f["lstm"].append((jnp.concatenate(wi + wg + wo, axis=1),
                          jnp.concatenate(bi + bg + bo, axis=0)))
    w1, b1 = p["fc1"]; w2, b2 = p["fc2"]
    f["head"] = (w1 @ w2, b1 @ w2 + b2)
    return f


def pack_params(f):
    """Pack folded params into 3 bf16 weight slabs (by output width) + 1 f32 vector slab."""
    A, Bs, C, vec = [], [], [], []

    def add_vec(v):
        vec.append(jnp.pad(v, (0, VEC_COLS - v.shape[0]))[None, :])

    for layers in f["mlps"]:
        for w, b, gamma, beta in layers:
            (A if w.shape[1] == WA_COLS else Bs).append(w.astype(W_DTYPE))
            add_vec(b); add_vec(gamma); add_vec(beta)
    for w, b in f["lstm"]:
        C.append(w.astype(W_DTYPE))
        add_vec(b)
    w, b = f["head"]
    Bs.append(w.astype(W_DTYPE))
    add_vec(b)

    wA = jnp.concatenate(A, axis=0)                        # (1536, 128) bf16
    wB = jnp.concatenate(Bs, axis=0)                       # ( 640, 256) bf16
    wC = jnp.concatenate(C, axis=0)                        # ( 768, 768) bf16
    vecs = jnp.concatenate(vec, axis=0).astype(jnp.float32)  # (40, 768) f32
    for s in (wA, wB, wC, vecs):
        assert s.shape[0] % 8 == 0 and s.shape[1] % 128 == 0, s.shape
    return wA, wB, wC, vecs


# --------------------------- pure-JAX references --------------------------------
def ref_forward_folded(f, x):
    """Same math as the kernel (folded params, bf16 MXU dots, f32 accumulation)."""
    def dot(a, w):
        return jnp.dot(a.astype(W_DTYPE), w.astype(W_DTYPE), preferred_element_type=jnp.float32)
    for layers in f["mlps"]:
        for w, b, gamma, beta in layers:
            y = dot(x, w) + b
            mean = jnp.mean(y, axis=-1, keepdims=True)
            d = y - mean
            var = jnp.mean(d * d, axis=-1, keepdims=True)
            x = jnp.maximum(d * jax.lax.rsqrt(var + LN_EPS) * gamma + beta, 0.0)
    for w, b in f["lstm"]:
        gates = dot(x, w) + b
        i = jax.nn.sigmoid(gates[:, :2 * H2])
        g = jnp.tanh(gates[:, 2 * H2:4 * H2])
        o = jax.nn.sigmoid(gates[:, 4 * H2:])
        x = o * jnp.tanh(i * g)
    w, b = f["head"]
    return dot(x, w) + b


def ref_forward_f32(p, x):
    """Faithful f32 reference in the ORIGINAL module structure (unfolded, eval mode)."""
    w, b = p["fc_input"]
    x = x @ w + b
    for layers in p["mlps"]:
        for w, b, gamma, beta in layers:
            y = x @ w + b
            mean = jnp.mean(y, axis=-1, keepdims=True)
            d = y - mean
            var = jnp.mean(d * d, axis=-1, keepdims=True)
            x = jnp.maximum(d * jax.lax.rsqrt(var + LN_EPS) * gamma + beta, 0.0)
    for dirs in p["lstm"]:
        hs = []
        for w_ih, b_ih, b_hh in dirs:        # single timestep, h0=c0=0 -> forget gate/W_hh dead
            gates = x @ w_ih + b_ih + b_hh
            i = jax.nn.sigmoid(gates[:, 0 * H2:1 * H2])
            g = jnp.tanh(gates[:, 2 * H2:3 * H2])
            o = jax.nn.sigmoid(gates[:, 3 * H2:4 * H2])
            hs.append(o * jnp.tanh(i * g))
        x = jnp.concatenate(hs, axis=-1)
    w, b = p["fc1"]
    x = x @ w + b                             # dropout = identity in eval
    w, b = p["fc2"]
    return x @ w + b


if __name__ == "__main__":
    key = jax.random.PRNGKey(0)
    k_x, k_p = jax.random.split(key)

    B = 256                                           # batched to exercise the row grid (2 tiles)
    x = jax.random.normal(k_x, (B, D_IN), jnp.float32)

    torch_params = make_torch_params(k_p)
    folded = fold_params(torch_params)
    slabs = pack_params(folded)

    out = jax.block_until_ready(channel_forward(slabs, x, tb=128))
    assert out.shape == (B, H1), out.shape
    assert bool(jnp.all(jnp.isfinite(out)))

    # kernel vs identical-math JAX reference (folded params, bf16 dots)
    err_fold = float(jnp.max(jnp.abs(out - ref_forward_folded(folded, x))))
    assert err_fold < 2e-2, f"folded-math mismatch: {err_fold}"

    # kernel vs faithful f32 reference in the original (unfolded) module structure
    err_f32 = float(jnp.max(jnp.abs(out - ref_forward_f32(torch_params, x))))
    assert err_f32 < 1e-1, f"fidelity vs unfolded f32 reference: {err_f32}"

    print("KERNEL_OK")
</pallas_src>

<mosaic_0001>
module attributes {stable_mosaic.version = 11 : i64} {
  func.func @_channel_kernel(%arg0: i32, %arg1: memref<128x256xf32, #tpu.memory_space<vmem>>, %arg2: memref<1536x128xbf16, #tpu.memory_space<vmem>>, %arg3: memref<640x256xbf16, #tpu.memory_space<vmem>>, %arg4: memref<768x768xbf16, #tpu.memory_space<vmem>>, %arg5: memref<40x768xf32, #tpu.memory_space<vmem>>, %arg6: memref<128x256xf32, #tpu.memory_space<vmem>>) attributes {dimension_semantics = [#tpu.dimension_semantics<parallel>], iteration_bounds = array<i64: 2>, scalar_prefetch = 0 : i64, scratch_operands = 0 : i64, tpu.core_type = #tpu.core_type<tc>, window_params = [{transform_indices = @transform_0, window_bounds = array<i64: 128, 256>}, {pipeline_mode = #tpu.pipeline_mode<synchronous>, transform_indices = @transform_1, window_bounds = array<i64: 1536, 128>}, {pipeline_mode = #tpu.pipeline_mode<synchronous>, transform_indices = @transform_2, window_bounds = array<i64: 640, 256>}, {pipeline_mode = #tpu.pipeline_mode<synchronous>, transform_indices = @transform_3, window_bounds = array<i64: 768, 768>}, {pipeline_mode = #tpu.pipeline_mode<synchronous>, transform_indices = @transform_4, window_bounds = array<i64: 40, 768>}, {transform_indices = @transform_5, window_bounds = array<i64: 128, 256>}]} {
    %c0 = arith.constant 0 : index
    %c0_0 = arith.constant 0 : index
    %0 = vector.load %arg1[%c0, %c0_0] : memref<128x256xf32, #tpu.memory_space<vmem>>, vector<128x256xf32>
    %c0_1 = arith.constant 0 : index
    %c0_2 = arith.constant 0 : index
    %1 = vector.load %arg2[%c0_1, %c0_2] : memref<1536x128xbf16, #tpu.memory_space<vmem>>, vector<256x128xbf16>
    %c0_3 = arith.constant 0 : index
    %c0_4 = arith.constant 0 : index
    %2 = vector.load %arg5[%c0_3, %c0_4] : memref<40x768xf32, #tpu.memory_space<vmem>>, vector<1x128xf32>
    %c1 = arith.constant 1 : index
    %c0_5 = arith.constant 0 : index
    %3 = vector.load %arg5[%c1, %c0_5] : memref<40x768xf32, #tpu.memory_space<vmem>>, vector<1x128xf32>
    %c2 = arith.constant 2 : index
    %c0_6 = arith.constant 0 : index
    %4 = vector.load %arg5[%c2, %c0_6] : memref<40x768xf32, #tpu.memory_space<vmem>>, vector<1x128xf32>
    %5 = arith.truncf %0 : vector<128x256xf32> to vector<128x256xbf16>
    %cst = arith.constant dense<0.000000e+00> : vector<128x128xf32>
    %6 = tpu.matmul %5, %1, %cst {dimension_numbers = #tpu.dot_dimension_numbers<[1], [0], [0], [1], [0, 0, 1, 1], [], []>} : vector<128x256xbf16>, vector<256x128xbf16>, vector<128x128xf32> -> vector<128x128xf32>
    %7 = vector.broadcast %2 : vector<1x128xf32> to vector<128x128xf32>
    %8 = arith.addf %6, %7 : vector<128x128xf32>
    %cst_7 = arith.constant dense<0.000000e+00> : vector<128xf32>
    %9 = vector.multi_reduction <add>, %8, %cst_7 [1] : vector<128x128xf32> to vector<128xf32>
    %10 = vector.shape_cast %9 : vector<128xf32> to vector<128x1xf32>
    %cst_8 = arith.constant 1.280000e+02 : f32
    %11 = vector.broadcast %cst_8 : f32 to vector<128x1xf32>
    %12 = arith.divf %10, %11 : vector<128x1xf32>
    %13 = vector.broadcast %12 : vector<128x1xf32> to vector<128x128xf32>
    %14 = arith.subf %8, %13 : vector<128x128xf32>
    %15 = arith.mulf %14, %14 : vector<128x128xf32>
    %cst_9 = arith.constant dense<0.000000e+00> : vector<128xf32>
    %16 = vector.multi_reduction <add>, %15, %cst_9 [1] : vector<128x128xf32> to vector<128xf32>
    %17 = vector.shape_cast %16 : vector<128xf32> to vector<128x1xf32>
    %cst_10 = arith.constant 1.280000e+02 : f32
    %18 = vector.broadcast %cst_10 : f32 to vector<128x1xf32>
    %19 = arith.divf %17, %18 : vector<128x1xf32>
    %cst_11 = arith.constant 9.99999974E-6 : f32
    %20 = vector.broadcast %cst_11 : f32 to vector<128x1xf32>
    %21 = arith.addf %19, %20 : vector<128x1xf32>
    %22 = math.rsqrt %21 : vector<128x1xf32>
    %23 = vector.broadcast %22 : vector<128x1xf32> to vector<128x128xf32>
    %24 = arith.mulf %14, %23 : vector<128x128xf32>
    %25 = vector.broadcast %3 : vector<1x128xf32> to vector<128x128xf32>
    %26 = arith.mulf %24, %25 : vector<128x128xf32>
    %27 = vector.broadcast %4 : vector<1x128xf32> to vector<128x128xf32>
    %28 = arith.addf %26, %27 : vector<128x128xf32>
    %cst_12 = arith.constant 0.000000e+00 : f32
    %29 = vector.broadcast %cst_12 : f32 to vector<128x128xf32>
    %30 = arith.maximumf %28, %29 : vector<128x128xf32>
    %c256 = arith.constant 256 : index
    %c0_13 = arith.constant 0 : index
    %31 = vector.load %arg2[%c256, %c0_13] : memref<1536x128xbf16, #tpu.memory_space<vmem>>, vector<128x128xbf16>
    %c3 = arith.constant 3 : index
    %c0_14 = arith.constant 0 : index
    %32 = vector.load %arg5[%c3, %c0_14] : memref<40x768xf32, #tpu.memory_space<vmem>>, vector<1x128xf32>
    %c4 = arith.constant 4 : index
    %c0_15 = arith.constant 0 : index
    %33 = vector.load %arg5[%c4, %c0_15] : memref<40x768xf32, #tpu.memory_space<vmem>>, vector<1x128xf32>
    %c5 = arith.constant 5 : index
    %c0_16 = arith.constant 0 : index
    %34 = vector.load %arg5[%c5, %c0_16] : memref<40x768xf32, #tpu.memory_space<vmem>>, vector<1x128xf32>
    %35 = arith.truncf %30 : vector<128x128xf32> to vector<128x128xbf16>
    %cst_17 = arith.constant dense<0.000000e+00> : vector<128x128xf32>
    %36 = tpu.matmul %35, %31, %cst_17 {dimension_numbers = #tpu.dot_dimension_numbers<[1], [0], [0], [1], [0, 0, 1, 1], [], []>} : vector<128x128xbf16>, vector<128x128xbf16>, vector<128x128xf32> -> vector<128x128xf32>
    %37 = vector.broadcast %32 : vector<1x128xf32> to vector<128x128xf32>
    %38 = arith.addf %36, %37 : vector<128x128xf32>
    %cst_18 = arith.constant dense<0.000000e+00> : vector<128xf32>
    %39 = vector.multi_reduction <add>, %38, %cst_18 [1] : vector<128x128xf32> to vector<128xf32>
    %40 = vector.shape_cast %39 : vector<128xf32> to vector<128x1xf32>
    %cst_19 = arith.constant 1.280000e+02 : f32
    %41 = vector.broadcast %cst_19 : f32 to vector<128x1xf32>
    %42 = arith.divf %40, %41 : vector<128x1xf32>
    %43 = vector.broadcast %42 : vector<128x1xf32> to vector<128x128xf32>
    %44 = arith.subf %38, %43 : vector<128x128xf32>
    %45 = arith.mulf %44, %44 : vector<128x128xf32>
    %cst_20 = arith.constant dense<0.000000e+00> : vector<128xf32>
    %46 = vector.multi_reduction <add>, %45, %cst_20 [1] : vector<128x128xf32> to vector<128xf32>
    %47 = vector.shape_cast %46 : vector<128xf32> to vector<128x1xf32>
    %cst_21 = arith.constant 1.280000e+02 : f32
    %48 = vector.broadcast %cst_21 : f32 to vector<128x1xf32>
    %49 = arith.divf %47, %48 : vector<128x1xf32>
    %cst_22 = arith.constant 9.99999974E-6 : f32
    %50 = vector.broadcast %cst_22 : f32 to vector<128x1xf32>
    %51 = arith.addf %49, %50 : vector<128x1xf32>
    %52 = math.rsqrt %51 : vector<128x1xf32>
    %53 = vector.broadcast %52 : vector<128x1xf32> to vector<128x128xf32>
    %54 = arith.mulf %44, %53 : vector<128x128xf32>
    %55 = vector.broadcast %33 : vector<1x128xf32> to vector<128x128xf32>
    %56 = arith.mulf %54, %55 : vector<128x128xf32>
    %57 = vector.broadcast %34 : vector<1x128xf32> to vector<128x128xf32>
    %58 = arith.addf %56, %57 : vector<128x128xf32>
    %cst_23 = arith.constant 0.000000e+00 : f32
    %59 = vector.broadcast %cst_23 : f32 to vector<128x128xf32>
    %60 = arith.maximumf %58, %59 : vector<128x128xf32>
    %c384 = arith.constant 384 : index
    %c0_24 = arith.constant 0 : index
    %61 = vector.load %arg2[%c384, %c0_24] : memref<1536x128xbf16, #tpu.memory_space<vmem>>, vector<128x128xbf16>
    %c6 = arith.constant 6 : index
    %c0_25 = arith.constant 0 : index
    %62 = vector.load %arg5[%c6, %c0_25] : memref<40x768xf32, #tpu.memory_space<vmem>>, vector<1x128xf32>
    %c7 = arith.constant 7 : index
    %c0_26 = arith.constant 0 : index
    %63 = vector.load %arg5[%c7, %c0_26] : memref<40x768xf32, #tpu.memory_space<vmem>>, vector<1x128xf32>
    %c8 = arith.constant 8 : index
    %c0_27 = arith.constant 0 : index
    %64 = vector.load %arg5[%c8, %c0_27] : memref<40x768xf32, #tpu.memory_space<vmem>>, vector<1x128xf32>
    %65 = arith.truncf %60 : vector<128x128xf32> to vector<128x128xbf16>
    %cst_28 = arith.constant dense<0.000000e+00> : vector<128x128xf32>
    %66 = tpu.matmul %65, %61, %cst_28 {dimension_numbers = #tpu.dot_dimension_numbers<[1], [0], [0], [1], [0, 0, 1, 1], [], []>} : vector<128x128xbf16>, vector<128x128xbf16>, vector<128x128xf32> -> vector<128x128xf32>
    %67 = vector.broadcast %62 : vector<1x128xf32> to vector<128x128xf32>
    %68 = arith.addf %66, %67 : vector<128x128xf32>
    %cst_29 = arith.constant dense<0.000000e+00> : vector<128xf32>
    %69 = vector.multi_reduction <add>, %68, %cst_29 [1] : vector<128x128xf32> to vector<128xf32>
    %70 = vector.shape_cast %69 : vector<128xf32> to vector<128x1xf32>
    %cst_30 = arith.constant 1.280000e+02 : f32
    %71 = vector.broadcast %cst_30 : f32 to vector<128x1xf32>
    %72 = arith.divf %70, %71 : vector<128x1xf32>
    %73 = vector.broadcast %72 : vector<128x1xf32> to vector<128x128xf32>
    %74 = arith.subf %68, %73 : vector<128x128xf32>
    %75 = arith.mulf %74, %74 : vector<128x128xf32>
    %cst_31 = arith.constant dense<0.000000e+00> : vector<128xf32>
    %76 = vector.multi_reduction <add>, %75, %cst_31 [1] : vector<128x128xf32> to vector<128xf32>
    %77 = vector.shape_cast %76 : vector<128xf32> to vector<128x1xf32>
    %cst_32 = arith.constant 1.280000e+02 : f32
    %78 = vector.broadcast %cst_32 : f32 to vector<128x1xf32>
    %79 = arith.divf %77, %78 : vector<128x1xf32>
    %cst_33 = arith.constant 9.99999974E-6 : f32
    %80 = vector.broadcast %cst_33 : f32 to vector<128x1xf32>
    %81 = arith.addf %79, %80 : vector<128x1xf32>
    %82 = math.rsqrt %81 : vector<128x1xf32>
    %83 = vector.broadcast %82 : vector<128x1xf32> to vector<128x128xf32>
    %84 = arith.mulf %74, %83 : vector<128x128xf32>
    %85 = vector.broadcast %63 : vector<1x128xf32> to vector<128x128xf32>
    %86 = arith.mulf %84, %85 : vector<128x128xf32>
    %87 = vector.broadcast %64 : vector<1x128xf32> to vector<128x128xf32>
    %88 = arith.addf %86, %87 : vector<128x128xf32>
    %cst_34 = arith.constant 0.000000e+00 : f32
    %89 = vector.broadcast %cst_34 : f32 to vector<128x128xf32>
    %90 = arith.maximumf %88, %89 : vector<128x128xf32>
    %c0_35 = arith.constant 0 : index
    %c0_36 = arith.constant 0 : index
    %91 = vector.load %arg3[%c0_35, %c0_36] : memref<640x256xbf16, #tpu.memory_space<vmem>>, vector<128x256xbf16>
    %c9 = arith.constant 9 : index
    %c0_37 = arith.constant 0 : index
    %92 = vector.load %arg5[%c9, %c0_37] : memref<40x768xf32, #tpu.memory_space<vmem>>, vector<1x256xf32>
    %c10 = arith.constant 10 : index
    %c0_38 = arith.constant 0 : index
    %93 = vector.load %arg5[%c10, %c0_38] : memref<40x768xf32, #tpu.memory_space<vmem>>, vector<1x256xf32>
    %c11 = arith.constant 11 : index
    %c0_39 = arith.constant 0 : index
    %94 = vector.load %arg5[%c11, %c0_39] : memref<40x768xf32, #tpu.memory_space<vmem>>, vector<1x256xf32>
    %95 = arith.truncf %90 : vector<128x128xf32> to vector<128x128xbf16>
    %cst_40 = arith.constant dense<0.000000e+00> : vector<128x256xf32>
    %96 = tpu.matmul %95, %91, %cst_40 {dimension_numbers = #tpu.dot_dimension_numbers<[1], [0], [0], [1], [0, 0, 1, 1], [], []>} : vector<128x128xbf16>, vector<128x256xbf16>, vector<128x256xf32> -> vector<128x256xf32>
    %97 = vector.broadcast %92 : vector<1x256xf32> to vector<128x256xf32>
    %98 = arith.addf %96, %97 : vector<128x256xf32>
    %cst_41 = arith.constant dense<0.000000e+00> : vector<128xf32>
    %99 = vector.multi_reduction <add>, %98, %cst_41 [1] : vector<128x256xf32> to vector<128xf32>
    %100 = vector.shape_cast %99 : vector<128xf32> to vector<128x1xf32>
    %cst_42 = arith.constant 2.560000e+02 : f32
    %101 = vector.broadcast %cst_42 : f32 to vector<128x1xf32>
    %102 = arith.divf %100, %101 : vector<128x1xf32>
    %103 = vector.broadcast %102 : vector<128x1xf32> to vector<128x256xf32>
    %104 = arith.subf %98, %103 : vector<128x256xf32>
    %105 = arith.mulf %104, %104 : vector<128x256xf32>
    %cst_43 = arith.constant dense<0.000000e+00> : vector<128xf32>
    %106 = vector.multi_reduction <add>, %105, %cst_43 [1] : vector<128x256xf32> to vector<128xf32>
    %107 = vector.shape_cast %106 : vector<128xf32> to vector<128x1xf32>
    %cst_44 = arith.constant 2.560000e+02 : f32
    %108 = vector.broadcast %cst_44 : f32 to vector<128x1xf32>
    %109 = arith.divf %107, %108 : vector<128x1xf32>
    %cst_45 = arith.constant 9.99999974E-6 : f32
    %110 = vector.broadcast %cst_45 : f32 to vector<128x1xf32>
    %111 = arith.addf %109, %110 : vector<128x1xf32>
    %112 = math.rsqrt %111 : vector<128x1xf32>
    %113 = vector.broadcast %112 : vector<128x1xf32> to vector<128x256xf32>
    %114 = arith.mulf %104, %113 : vector<128x256xf32>
    %115 = vector.broadcast %93 : vector<1x256xf32> to vector<128x256xf32>
    %116 = arith.mulf %114, %115 : vector<128x256xf32>
    %117 = vector.broadcast %94 : vector<1x256xf32> to vector<128x256xf32>
    %118 = arith.addf %116, %117 : vector<128x256xf32>
    %cst_46 = arith.constant 0.000000e+00 : f32
    %119 = vector.broadcast %cst_46 : f32 to vector<128x256xf32>
    %120 = arith.maximumf %118, %119 : vector<128x256xf32>
    %c512 = arith.constant 512 : index
    %c0_47 = arith.constant 0 : index
    %121 = vector.load %arg2[%c512, %c0_47] : memref<1536x128xbf16, #tpu.memory_space<vmem>>, vector<256x128xbf16>
    %c12 = arith.constant 12 : index
    %c0_48 = arith.constant 0 : index
    %122 = vector.load %arg5[%c12, %c0_48] : memref<40x768xf32, #tpu.memory_space<vmem>>, vector<1x128xf32>
    %c13 = arith.constant 13 : index
    %c0_49 = arith.constant 0 : index
    %123 = vector.load %arg5[%c13, %c0_49] : memref<40x768xf32, #tpu.memory_space<vmem>>, vector<1x128xf32>
    %c14 = arith.constant 14 : index
    %c0_50 = arith.constant 0 : index
    %124 = vector.load %arg5[%c14, %c0_50] : memref<40x768xf32, #tpu.memory_space<vmem>>, vector<1x128xf32>
    %125 = arith.truncf %120 : vector<128x256xf32> to vector<128x256xbf16>
    %cst_51 = arith.constant dense<0.000000e+00> : vector<128x128xf32>
    %126 = tpu.matmul %125, %121, %cst_51 {dimension_numbers = #tpu.dot_dimension_numbers<[1], [0], [0], [1], [0, 0, 1, 1], [], []>} : vector<128x256xbf16>, vector<256x128xbf16>, vector<128x128xf32> -> vector<128x128xf32>
    %127 = vector.broadcast %122 : vector<1x128xf32> to vector<128x128xf32>
    %128 = arith.addf %126, %127 : vector<128x128xf32>
    %cst_52 = arith.constant dense<0.000000e+00> : vector<128xf32>
    %129 = vector.multi_reduction <add>, %128, %cst_52 [1] : vector<128x128xf32> to vector<128xf32>
    %130 = vector.shape_cast %129 : vector<128xf32> to vector<128x1xf32>
    %cst_53 = arith.constant 1.280000e+02 : f32
    %131 = vector.broadcast %cst_53 : f32 to vector<128x1xf32>
    %132 = arith.divf %130, %131 : vector<128x1xf32>
    %133 = vector.broadcast %132 : vector<128x1xf32> to vector<128x128xf32>
    %134 = arith.subf %128, %133 : vector<128x128xf32>
    %135 = arith.mulf %134, %134 : vector<128x128xf32>
    %cst_54 = arith.constant dense<0.000000e+00> : vector<128xf32>
    %136 = vector.multi_reduction <add>, %135, %cst_54 [1] : vector<128x128xf32> to vector<128xf32>
    %137 = vector.shape_cast %136 : vector<128xf32> to vector<128x1xf32>
    %cst_55 = arith.constant 1.280000e+02 : f32
    %138 = vector.broadcast %cst_55 : f32 to vector<128x1xf32>
    %139 = arith.divf %137, %138 : vector<128x1xf32>
    %cst_56 = arith.constant 9.99999974E-6 : f32
    %140 = vector.broadcast %cst_56 : f32 to vector<128x1xf32>
    %141 = arith.addf %139, %140 : vector<128x1xf32>
    %142 = math.rsqrt %141 : vector<128x1xf32>
    %143 = vector.broadcast %142 : vector<128x1xf32> to vector<128x128xf32>
    %144 = arith.mulf %134, %143 : vector<128x128xf32>
    %145 = vector.broadcast %123 : vector<1x128xf32> to vector<128x128xf32>
    %146 = arith.mulf %144, %145 : vector<128x128xf32>
    %147 = vector.broadcast %124 : vector<1x128xf32> to vector<128x128xf32>
    %148 = arith.addf %146, %147 : vector<128x128xf32>
    %cst_57 = arith.constant 0.000000e+00 : f32
    %149 = vector.broadcast %cst_57 : f32 to vector<128x128xf32>
    %150 = arith.maximumf %148, %149 : vector<128x128xf32>
    %c768 = arith.constant 768 : index
    %c0_58 = arith.constant 0 : index
    %151 = vector.load %arg2[%c768, %c0_58] : memref<1536x128xbf16, #tpu.memory_space<vmem>>, vector<128x128xbf16>
    %c15 = arith.constant 15 : index
    %c0_59 = arith.constant 0 : index
    %152 = vector.load %arg5[%c15, %c0_59] : memref<40x768xf32, #tpu.memory_space<vmem>>, vector<1x128xf32>
    %c16 = arith.constant 16 : index
    %c0_60 = arith.constant 0 : index
    %153 = vector.load %arg5[%c16, %c0_60] : memref<40x768xf32, #tpu.memory_space<vmem>>, vector<1x128xf32>
    %c17 = arith.constant 17 : index
    %c0_61 = arith.constant 0 : index
    %154 = vector.load %arg5[%c17, %c0_61] : memref<40x768xf32, #tpu.memory_space<vmem>>, vector<1x128xf32>
    %155 = arith.truncf %150 : vector<128x128xf32> to vector<128x128xbf16>
    %cst_62 = arith.constant dense<0.000000e+00> : vector<128x128xf32>
    %156 = tpu.matmul %155, %151, %cst_62 {dimension_numbers = #tpu.dot_dimension_numbers<[1], [0], [0], [1], [0, 0, 1, 1], [], []>} : vector<128x128xbf16>, vector<128x128xbf16>, vector<128x128xf32> -> vector<128x128xf32>
    %157 = vector.broadcast %152 : vector<1x128xf32> to vector<128x128xf32>
    %158 = arith.addf %156, %157 : vector<128x128xf32>
    %cst_63 = arith.constant dense<0.000000e+00> : vector<128xf32>
    %159 = vector.multi_reduction <add>, %158, %cst_63 [1] : vector<128x128xf32> to vector<128xf32>
    %160 = vector.shape_cast %159 : vector<128xf32> to vector<128x1xf32>
    %cst_64 = arith.constant 1.280000e+02 : f32
    %161 = vector.broadcast %cst_64 : f32 to vector<128x1xf32>
    %162 = arith.divf %160, %161 : vector<128x1xf32>
    %163 = vector.broadcast %162 : vector<128x1xf32> to vector<128x128xf32>
    %164 = arith.subf %158, %163 : vector<128x128xf32>
    %165 = arith.mulf %164, %164 : vector<128x128xf32>
    %cst_65 = arith.constant dense<0.000000e+00> : vector<128xf32>
    %166 = vector.multi_reduction <add>, %165, %cst_65 [1] : vector<128x128xf32> to vector<128xf32>
    %167 = vector.shape_cast %166 : vector<128xf32> to vector<128x1xf32>
    %cst_66 = arith.constant 1.280000e+02 : f32
    %168 = vector.broadcast %cst_66 : f32 to vector<128x1xf32>
    %169 = arith.divf %167, %168 : vector<128x1xf32>
    %cst_67 = arith.constant 9.99999974E-6 : f32
    %170 = vector.broadcast %cst_67 : f32 to vector<128x1xf32>
    %171 = arith.addf %169, %170 : vector<128x1xf32>
    %172 = math.rsqrt %171 : vector<128x1xf32>
    %173 = vector.broadcast %172 : vector<128x1xf32> to vector<128x128xf32>
    %174 = arith.mulf %164, %173 : vector<128x128xf32>
    %175 = vector.broadcast %153 : vector<1x128xf32> to vector<128x128xf32>
    %176 = arith.mulf %174, %175 : vector<128x128xf32>
    %177 = vector.broadcast %154 : vector<1x128xf32> to vector<128x128xf32>
    %178 = arith.addf %176, %177 : vector<128x128xf32>
    %cst_68 = arith.constant 0.000000e+00 : f32
    %179 = vector.broadcast %cst_68 : f32 to vector<128x128xf32>
    %180 = arith.maximumf %178, %179 : vector<128x128xf32>
    %c896 = arith.constant 896 : index
    %c0_69 = arith.constant 0 : index
    %181 = vector.load %arg2[%c896, %c0_69] : memref<1536x128xbf16, #tpu.memory_space<vmem>>, vector<128x128xbf16>
    %c18 = arith.constant 18 : index
    %c0_70 = arith.constant 0 : index
    %182 = vector.load %arg5[%c18, %c0_70] : memref<40x768xf32, #tpu.memory_space<vmem>>, vector<1x128xf32>
    %c19 = arith.constant 19 : index
    %c0_71 = arith.constant 0 : index
    %183 = vector.load %arg5[%c19, %c0_71] : memref<40x768xf32, #tpu.memory_space<vmem>>, vector<1x128xf32>
    %c20 = arith.constant 20 : index
    %c0_72 = arith.constant 0 : index
    %184 = vector.load %arg5[%c20, %c0_72] : memref<40x768xf32, #tpu.memory_space<vmem>>, vector<1x128xf32>
    %185 = arith.truncf %180 : vector<128x128xf32> to vector<128x128xbf16>
    %cst_73 = arith.constant dense<0.000000e+00> : vector<128x128xf32>
    %186 = tpu.matmul %185, %181, %cst_73 {dimension_numbers = #tpu.dot_dimension_numbers<[1], [0], [0], [1], [0, 0, 1, 1], [], []>} : vector<128x128xbf16>, vector<128x128xbf16>, vector<128x128xf32> -> vector<128x128xf32>
    %187 = vector.broadcast %182 : vector<1x128xf32> to vector<128x128xf32>
    %188 = arith.addf %186, %187 : vector<128x128xf32>
    %cst_74 = arith.constant dense<0.000000e+00> : vector<128xf32>
    %189 = vector.multi_reduction <add>, %188, %cst_74 [1] : vector<128x128xf32> to vector<128xf32>
    %190 = vector.shape_cast %189 : vector<128xf32> to vector<128x1xf32>
    %cst_75 = arith.constant 1.280000e+02 : f32
    %191 = vector.broadcast %cst_75 : f32 to vector<128x1xf32>
    %192 = arith.divf %190, %191 : vector<128x1xf32>
    %193 = vector.broadcast %192 : vector<128x1xf32> to vector<128x128xf32>
    %194 = arith.subf %188, %193 : vector<128x128xf32>
    %195 = arith.mulf %194, %194 : vector<128x128xf32>
    %cst_76 = arith.constant dense<0.000000e+00> : vector<128xf32>
    %196 = vector.multi_reduction <add>, %195, %cst_76 [1] : vector<128x128xf32> to vector<128xf32>
    %197 = vector.shape_cast %196 : vector<128xf32> to vector<128x1xf32>
    %cst_77 = arith.constant 1.280000e+02 : f32
    %198 = vector.broadcast %cst_77 : f32 to vector<128x1xf32>
    %199 = arith.divf %197, %198 : vector<128x1xf32>
    %cst_78 = arith.constant 9.99999974E-6 : f32
    %200 = vector.broadcast %cst_78 : f32 to vector<128x1xf32>
    %201 = arith.addf %199, %200 : vector<128x1xf32>
    %202 = math.rsqrt %201 : vector<128x1xf32>
    %203 = vector.broadcast %202 : vector<128x1xf32> to vector<128x128xf32>
    %204 = arith.mulf %194, %203 : vector<128x128xf32>
    %205 = vector.broadcast %183 : vector<1x128xf32> to vector<128x128xf32>
    %206 = arith.mulf %204, %205 : vector<128x128xf32>
    %207 = vector.broadcast %184 : vector<1x128xf32> to vector<128x128xf32>
    %208 = arith.addf %206, %207 : vector<128x128xf32>
    %cst_79 = arith.constant 0.000000e+00 : f32
    %209 = vector.broadcast %cst_79 : f32 to vector<128x128xf32>
    %210 = arith.maximumf %208, %209 : vector<128x128xf32>
    %c128 = arith.constant 128 : index
    %c0_80 = arith.constant 0 : index
    %211 = vector.load %arg3[%c128, %c0_80] : memref<640x256xbf16, #tpu.memory_space<vmem>>, vector<128x256xbf16>
    %c21 = arith.constant 21 : index
    %c0_81 = arith.constant 0 : index
    %212 = vector.load %arg5[%c21, %c0_81] : memref<40x768xf32, #tpu.memory_space<vmem>>, vector<1x256xf32>
    %c22 = arith.constant 22 : index
    %c0_82 = arith.constant 0 : index
    %213 = vector.load %arg5[%c22, %c0_82] : memref<40x768xf32, #tpu.memory_space<vmem>>, vector<1x256xf32>
    %c23 = arith.constant 23 : index
    %c0_83 = arith.constant 0 : index
    %214 = vector.load %arg5[%c23, %c0_83] : memref<40x768xf32, #tpu.memory_space<vmem>>, vector<1x256xf32>
    %215 = arith.truncf %210 : vector<128x128xf32> to vector<128x128xbf16>
    %cst_84 = arith.constant dense<0.000000e+00> : vector<128x256xf32>
    %216 = tpu.matmul %215, %211, %cst_84 {dimension_numbers = #tpu.dot_dimension_numbers<[1], [0], [0], [1], [0, 0, 1, 1], [], []>} : vector<128x128xbf16>, vector<128x256xbf16>, vector<128x256xf32> -> vector<128x256xf32>
    %217 = vector.broadcast %212 : vector<1x256xf32> to vector<128x256xf32>
    %218 = arith.addf %216, %217 : vector<128x256xf32>
    %cst_85 = arith.constant dense<0.000000e+00> : vector<128xf32>
    %219 = vector.multi_reduction <add>, %218, %cst_85 [1] : vector<128x256xf32> to vector<128xf32>
    %220 = vector.shape_cast %219 : vector<128xf32> to vector<128x1xf32>
    %cst_86 = arith.constant 2.560000e+02 : f32
    %221 = vector.broadcast %cst_86 : f32 to vector<128x1xf32>
    %222 = arith.divf %220, %221 : vector<128x1xf32>
    %223 = vector.broadcast %222 : vector<128x1xf32> to vector<128x256xf32>
    %224 = arith.subf %218, %223 : vector<128x256xf32>
    %225 = arith.mulf %224, %224 : vector<128x256xf32>
    %cst_87 = arith.constant dense<0.000000e+00> : vector<128xf32>
    %226 = vector.multi_reduction <add>, %225, %cst_87 [1] : vector<128x256xf32> to vector<128xf32>
    %227 = vector.shape_cast %226 : vector<128xf32> to vector<128x1xf32>
    %cst_88 = arith.constant 2.560000e+02 : f32
    %228 = vector.broadcast %cst_88 : f32 to vector<128x1xf32>
    %229 = arith.divf %227, %228 : vector<128x1xf32>
    %cst_89 = arith.constant 9.99999974E-6 : f32
    %230 = vector.broadcast %cst_89 : f32 to vector<128x1xf32>
    %231 = arith.addf %229, %230 : vector<128x1xf32>
    %232 = math.rsqrt %231 : vector<128x1xf32>
    %233 = vector.broadcast %232 : vector<128x1xf32> to vector<128x256xf32>
    %234 = arith.mulf %224, %233 : vector<128x256xf32>
    %235 = vector.broadcast %213 : vector<1x256xf32> to vector<128x256xf32>
    %236 = arith.mulf %234, %235 : vector<128x256xf32>
    %237 = vector.broadcast %214 : vector<1x256xf32> to vector<128x256xf32>
    %238 = arith.addf %236, %237 : vector<128x256xf32>
    %cst_90 = arith.constant 0.000000e+00 : f32
    %239 = vector.broadcast %cst_90 : f32 to vector<128x256xf32>
    %240 = arith.maximumf %238, %239 : vector<128x256xf32>
    %c1024 = arith.constant 1024 : index
    %c0_91 = arith.constant 0 : index
    %241 = vector.load %arg2[%c1024, %c0_91] : memref<1536x128xbf16, #tpu.memory_space<vmem>>, vector<256x128xbf16>
    %c24 = arith.constant 24 : index
    %c0_92 = arith.constant 0 : index
    %242 = vector.load %arg5[%c24, %c0_92] : memref<40x768xf32, #tpu.memory_space<vmem>>, vector<1x128xf32>
    %c25 = arith.constant 25 : index
    %c0_93 = arith.constant 0 : index
    %243 = vector.load %arg5[%c25, %c0_93] : memref<40x768xf32, #tpu.memory_space<vmem>>, vector<1x128xf32>
    %c26 = arith.constant 26 : index
    %c0_94 = arith.constant 0 : index
    %244 = vector.load %arg5[%c26, %c0_94] : memref<40x768xf32, #tpu.memory_space<vmem>>, vector<1x128xf32>
    %245 = arith.truncf %240 : vector<128x256xf32> to vector<128x256xbf16>
    %cst_95 = arith.constant dense<0.000000e+00> : vector<128x128xf32>
    %246 = tpu.matmul %245, %241, %cst_95 {dimension_numbers = #tpu.dot_dimension_numbers<[1], [0], [0], [1], [0, 0, 1, 1], [], []>} : vector<128x256xbf16>, vector<256x128xbf16>, vector<128x128xf32> -> vector<128x128xf32>
    %247 = vector.broadcast %242 : vector<1x128xf32> to vector<128x128xf32>
    %248 = arith.addf %246, %247 : vector<128x128xf32>
    %cst_96 = arith.constant dense<0.000000e+00> : vector<128xf32>
    %249 = vector.multi_reduction <add>, %248, %cst_96 [1] : vector<128x128xf32> to vector<128xf32>
    %250 = vector.shape_cast %249 : vector<128xf32> to vector<128x1xf32>
    %cst_97 = arith.constant 1.280000e+02 : f32
    %251 = vector.broadcast %cst_97 : f32 to vector<128x1xf32>
    %252 = arith.divf %250, %251 : vector<128x1xf32>
    %253 = vector.broadcast %252 : vector<128x1xf32> to vector<128x128xf32>
    %254 = arith.subf %248, %253 : vector<128x128xf32>
    %255 = arith.mulf %254, %254 : vector<128x128xf32>
    %cst_98 = arith.constant dense<0.000000e+00> : vector<128xf32>
    %256 = vector.multi_reduction <add>, %255, %cst_98 [1] : vector<128x128xf32> to vector<128xf32>
    %257 = vector.shape_cast %256 : vector<128xf32> to vector<128x1xf32>
    %cst_99 = arith.constant 1.280000e+02 : f32
    %258 = vector.broadcast %cst_99 : f32 to vector<128x1xf32>
    %259 = arith.divf %257, %258 : vector<128x1xf32>
    %cst_100 = arith.constant 9.99999974E-6 : f32
    %260 = vector.broadcast %cst_100 : f32 to vector<128x1xf32>
    %261 = arith.addf %259, %260 : vector<128x1xf32>
    %262 = math.rsqrt %261 : vector<128x1xf32>
    %263 = vector.broadcast %262 : vector<128x1xf32> to vector<128x128xf32>
    %264 = arith.mulf %254, %263 : vector<128x128xf32>
    %265 = vector.broadcast %243 : vector<1x128xf32> to vector<128x128xf32>
    %266 = arith.mulf %264, %265 : vector<128x128xf32>
    %267 = vector.broadcast %244 : vector<1x128xf32> to vector<128x128xf32>
    %268 = arith.addf %266, %267 : vector<128x128xf32>
    %cst_101 = arith.constant 0.000000e+00 : f32
    %269 = vector.broadcast %cst_101 : f32 to vector<128x128xf32>
    %270 = arith.maximumf %268, %269 : vector<128x128xf32>
    %c1280 = arith.constant 1280 : index
    %c0_102 = arith.constant 0 : index
    %271 = vector.load %arg2[%c1280, %c0_102] : memref<1536x128xbf16, #tpu.memory_space<vmem>>, vector<128x128xbf16>
    %c27 = arith.constant 27 : index
    %c0_103 = arith.constant 0 : index
    %272 = vector.load %arg5[%c27, %c0_103] : memref<40x768xf32, #tpu.memory_space<vmem>>, vector<1x128xf32>
    %c28 = arith.constant 28 : index
    %c0_104 = arith.constant 0 : index
    %273 = vector.load %arg5[%c28, %c0_104] : memref<40x768xf32, #tpu.memory_space<vmem>>, vector<1x128xf32>
    %c29 = arith.constant 29 : index
    %c0_105 = arith.constant 0 : index
    %274 = vector.load %arg5[%c29, %c0_105] : memref<40x768xf32, #tpu.memory_space<vmem>>, vector<1x128xf32>
    %275 = arith.truncf %270 : vector<128x128xf32> to vector<128x128xbf16>
    %cst_106 = arith.constant dense<0.000000e+00> : vector<128x128xf32>
    %276 = tpu.matmul %275, %271, %cst_106 {dimension_numbers = #tpu.dot_dimension_numbers<[1], [0], [0], [1], [0, 0, 1, 1], [], []>} : vector<128x128xbf16>, vector<128x128xbf16>, vector<128x128xf32> -> vector<128x128xf32>
    %277 = vector.broadcast %272 : vector<1x128xf32> to vector<128x128xf32>
    %278 = arith.addf %276, %277 : vector<128x128xf32>
    %cst_107 = arith.constant dense<0.000000e+00> : vector<128xf32>
    %279 = vector.multi_reduction <add>, %278, %cst_107 [1] : vector<128x128xf32> to vector<128xf32>
    %280 = vector.shape_cast %279 : vector<128xf32> to vector<128x1xf32>
    %cst_108 = arith.constant 1.280000e+02 : f32
    %281 = vector.broadcast %cst_108 : f32 to vector<128x1xf32>
    %282 = arith.divf %280, %281 : vector<128x1xf32>
    %283 = vector.broadcast %282 : vector<128x1xf32> to vector<128x128xf32>
    %284 = arith.subf %278, %283 : vector<128x128xf32>
    %285 = arith.mulf %284, %284 : vector<128x128xf32>
    %cst_109 = arith.constant dense<0.000000e+00> : vector<128xf32>
    %286 = vector.multi_reduction <add>, %285, %cst_109 [1] : vector<128x128xf32> to vector<128xf32>
    %287 = vector.shape_cast %286 : vector<128xf32> to vector<128x1xf32>
    %cst_110 = arith.constant 1.280000e+02 : f32
    %288 = vector.broadcast %cst_110 : f32 to vector<128x1xf32>
    %289 = arith.divf %287, %288 : vector<128x1xf32>
    %cst_111 = arith.constant 9.99999974E-6 : f32
    %290 = vector.broadcast %cst_111 : f32 to vector<128x1xf32>
    %291 = arith.addf %289, %290 : vector<128x1xf32>
    %292 = math.rsqrt %291 : vector<128x1xf32>
    %293 = vector.broadcast %292 : vector<128x1xf32> to vector<128x128xf32>
    %294 = arith.mulf %284, %293 : vector<128x128xf32>
    %295 = vector.broadcast %273 : vector<1x128xf32> to vector<128x128xf32>
    %296 = arith.mulf %294, %295 : vector<128x128xf32>
    %297 = vector.broadcast %274 : vector<1x128xf32> to vector<128x128xf32>
    %298 = arith.addf %296, %297 : vector<128x128xf32>
    %cst_112 = arith.constant 0.000000e+00 : f32
    %299 = vector.broadcast %cst_112 : f32 to vector<128x128xf32>
    %300 = arith.maximumf %298, %299 : vector<128x128xf32>
    %c1408 = arith.constant 1408 : index
    %c0_113 = arith.constant 0 : index
    %301 = vector.load %arg2[%c1408, %c0_113] : memref<1536x128xbf16, #tpu.memory_space<vmem>>, vector<128x128xbf16>
    %c30 = arith.constant 30 : index
    %c0_114 = arith.constant 0 : index
    %302 = vector.load %arg5[%c30, %c0_114] : memref<40x768xf32, #tpu.memory_space<vmem>>, vector<1x128xf32>
    %c31 = arith.constant 31 : index
    %c0_115 = arith.constant 0 : index
    %303 = vector.load %arg5[%c31, %c0_115] : memref<40x768xf32, #tpu.memory_space<vmem>>, vector<1x128xf32>
    %c32 = arith.constant 32 : index
    %c0_116 = arith.constant 0 : index
    %304 = vector.load %arg5[%c32, %c0_116] : memref<40x768xf32, #tpu.memory_space<vmem>>, vector<1x128xf32>
    %305 = arith.truncf %300 : vector<128x128xf32> to vector<128x128xbf16>
    %cst_117 = arith.constant dense<0.000000e+00> : vector<128x128xf32>
    %306 = tpu.matmul %305, %301, %cst_117 {dimension_numbers = #tpu.dot_dimension_numbers<[1], [0], [0], [1], [0, 0, 1, 1], [], []>} : vector<128x128xbf16>, vector<128x128xbf16>, vector<128x128xf32> -> vector<128x128xf32>
    %307 = vector.broadcast %302 : vector<1x128xf32> to vector<128x128xf32>
    %308 = arith.addf %306, %307 : vector<128x128xf32>
    %cst_118 = arith.constant dense<0.000000e+00> : vector<128xf32>
    %309 = vector.multi_reduction <add>, %308, %cst_118 [1] : vector<128x128xf32> to vector<128xf32>
    %310 = vector.shape_cast %309 : vector<128xf32> to vector<128x1xf32>
    %cst_119 = arith.constant 1.280000e+02 : f32
    %311 = vector.broadcast %cst_119 : f32 to vector<128x1xf32>
    %312 = arith.divf %310, %311 : vector<128x1xf32>
    %313 = vector.broadcast %312 : vector<128x1xf32> to vector<128x128xf32>
    %314 = arith.subf %308, %313 : vector<128x128xf32>
    %315 = arith.mulf %314, %314 : vector<128x128xf32>
    %cst_120 = arith.constant dense<0.000000e+00> : vector<128xf32>
    %316 = vector.multi_reduction <add>, %315, %cst_120 [1] : vector<128x128xf32> to vector<128xf32>
    %317 = vector.shape_cast %316 : vector<128xf32> to vector<128x1xf32>
    %cst_121 = arith.constant 1.280000e+02 : f32
    %318 = vector.broadcast %cst_121 : f32 to vector<128x1xf32>
    %319 = arith.divf %317, %318 : vector<128x1xf32>
    %cst_122 = arith.constant 9.99999974E-6 : f32
    %320 = vector.broadcast %cst_122 : f32 to vector<128x1xf32>
    %321 = arith.addf %319, %320 : vector<128x1xf32>
    %322 = math.rsqrt %321 : vector<128x1xf32>
    %323 = vector.broadcast %322 : vector<128x1xf32> to vector<128x128xf32>
    %324 = arith.mulf %314, %323 : vector<128x128xf32>
    %325 = vector.broadcast %303 : vector<1x128xf32> to vector<128x128xf32>
    %326 = arith.mulf %324, %325 : vector<128x128xf32>
    %327 = vector.broadcast %304 : vector<1x128xf32> to vector<128x128xf32>
    %328 = arith.addf %326, %327 : vector<128x128xf32>
    %cst_123 = arith.constant 0.000000e+00 : f32
    %329 = vector.broadcast %cst_123 : f32 to vector<128x128xf32>
    %330 = arith.maximumf %328, %329 : vector<128x128xf32>
    %c256_124 = arith.constant 256 : index
    %c0_125 = arith.constant 0 : index
    %331 = vector.load %arg3[%c256_124, %c0_125] : memref<640x256xbf16, #tpu.memory_space<vmem>>, vector<128x256xbf16>
    %c33 = arith.constant 33 : index
    %c0_126 = arith.constant 0 : index
    %332 = vector.load %arg5[%c33, %c0_126] : memref<40x768xf32, #tpu.memory_space<vmem>>, vector<1x256xf32>
    %c34 = arith.constant 34 : index
    %c0_127 = arith.constant 0 : index
    %333 = vector.load %arg5[%c34, %c0_127] : memref<40x768xf32, #tpu.memory_space<vmem>>, vector<1x256xf32>
    %c35 = arith.constant 35 : index
    %c0_128 = arith.constant 0 : index
    %334 = vector.load %arg5[%c35, %c0_128] : memref<40x768xf32, #tpu.memory_space<vmem>>, vector<1x256xf32>
    %335 = arith.truncf %330 : vector<128x128xf32> to vector<128x128xbf16>
    %cst_129 = arith.constant dense<0.000000e+00> : vector<128x256xf32>
    %336 = tpu.matmul %335, %331, %cst_129 {dimension_numbers = #tpu.dot_dimension_numbers<[1], [0], [0], [1], [0, 0, 1, 1], [], []>} : vector<128x128xbf16>, vector<128x256xbf16>, vector<128x256xf32> -> vector<128x256xf32>
    %337 = vector.broadcast %332 : vector<1x256xf32> to vector<128x256xf32>
    %338 = arith.addf %336, %337 : vector<128x256xf32>
    %cst_130 = arith.constant dense<0.000000e+00> : vector<128xf32>
    %339 = vector.multi_reduction <add>, %338, %cst_130 [1] : vector<128x256xf32> to vector<128xf32>
    %340 = vector.shape_cast %339 : vector<128xf32> to vector<128x1xf32>
    %cst_131 = arith.constant 2.560000e+02 : f32
    %341 = vector.broadcast %cst_131 : f32 to vector<128x1xf32>
    %342 = arith.divf %340, %341 : vector<128x1xf32>
    %343 = vector.broadcast %342 : vector<128x1xf32> to vector<128x256xf32>
    %344 = arith.subf %338, %343 : vector<128x256xf32>
    %345 = arith.mulf %344, %344 : vector<128x256xf32>
    %cst_132 = arith.constant dense<0.000000e+00> : vector<128xf32>
    %346 = vector.multi_reduction <add>, %345, %cst_132 [1] : vector<128x256xf32> to vector<128xf32>
    %347 = vector.shape_cast %346 : vector<128xf32> to vector<128x1xf32>
    %cst_133 = arith.constant 2.560000e+02 : f32
    %348 = vector.broadcast %cst_133 : f32 to vector<128x1xf32>
    %349 = arith.divf %347, %348 : vector<128x1xf32>
    %cst_134 = arith.constant 9.99999974E-6 : f32
    %350 = vector.broadcast %cst_134 : f32 to vector<128x1xf32>
    %351 = arith.addf %349, %350 : vector<128x1xf32>
    %352 = math.rsqrt %351 : vector<128x1xf32>
    %353 = vector.broadcast %352 : vector<128x1xf32> to vector<128x256xf32>
    %354 = arith.mulf %344, %353 : vector<128x256xf32>
    %355 = vector.broadcast %333 : vector<1x256xf32> to vector<128x256xf32>
    %356 = arith.mulf %354, %355 : vector<128x256xf32>
    %357 = vector.broadcast %334 : vector<1x256xf32> to vector<128x256xf32>
    %358 = arith.addf %356, %357 : vector<128x256xf32>
    %cst_135 = arith.constant 0.000000e+00 : f32
    %359 = vector.broadcast %cst_135 : f32 to vector<128x256xf32>
    %360 = arith.maximumf %358, %359 : vector<128x256xf32>
    %c0_136 = arith.constant 0 : index
    %c0_137 = arith.constant 0 : index
    %361 = vector.load %arg4[%c0_136, %c0_137] : memref<768x768xbf16, #tpu.memory_space<vmem>>, vector<256x768xbf16>
    %c36 = arith.constant 36 : index
    %c0_138 = arith.constant 0 : index
    %362 = vector.load %arg5[%c36, %c0_138] : memref<40x768xf32, #tpu.memory_space<vmem>>, vector<1x768xf32>
    %363 = arith.truncf %360 : vector<128x256xf32> to vector<128x256xbf16>
    %cst_139 = arith.constant dense<0.000000e+00> : vector<128x768xf32>
    %364 = tpu.matmul %363, %361, %cst_139 {dimension_numbers = #tpu.dot_dimension_numbers<[1], [0], [0], [1], [0, 0, 1, 1], [], []>} : vector<128x256xbf16>, vector<256x768xbf16>, vector<128x768xf32> -> vector<128x768xf32>
    %365 = vector.broadcast %362 : vector<1x768xf32> to vector<128x768xf32>
    %366 = arith.addf %364, %365 : vector<128x768xf32>
    %367 = vector.extract_strided_slice %366 {offsets = [0, 0], sizes = [128, 256], strides = [1, 1]} : vector<128x768xf32> to vector<128x256xf32>
    %368 = arith.negf %367 : vector<128x256xf32>
    %369 = math.exp %368 : vector<128x256xf32>
    %cst_140 = arith.constant 1.000000e+00 : f32
    %370 = vector.broadcast %cst_140 : f32 to vector<128x256xf32>
    %371 = arith.addf %370, %369 : vector<128x256xf32>
    %372 = arith.divf %370, %371 : vector<128x256xf32>
    %373 = vector.extract_strided_slice %366 {offsets = [0, 256], sizes = [128, 256], strides = [1, 1]} : vector<128x768xf32> to vector<128x256xf32>
    %374 = math.tanh %373 : vector<128x256xf32>
    %375 = vector.extract_strided_slice %366 {offsets = [0, 512], sizes = [128, 256], strides = [1, 1]} : vector<128x768xf32> to vector<128x256xf32>
    %376 = arith.negf %375 : vector<128x256xf32>
    %377 = math.exp %376 : vector<128x256xf32>
    %cst_141 = arith.constant 1.000000e+00 : f32
    %378 = vector.broadcast %cst_141 : f32 to vector<128x256xf32>
    %379 = arith.addf %378, %377 : vector<128x256xf32>
    %380 = arith.divf %378, %379 : vector<128x256xf32>
    %381 = arith.mulf %372, %374 : vector<128x256xf32>
    %382 = math.tanh %381 : vector<128x256xf32>
    %383 = arith.mulf %380, %382 : vector<128x256xf32>
    %c256_142 = arith.constant 256 : index
    %c0_143 = arith.constant 0 : index
    %384 = vector.load %arg4[%c256_142, %c0_143] : memref<768x768xbf16, #tpu.memory_space<vmem>>, vector<256x768xbf16>
    %c37 = arith.constant 37 : index
    %c0_144 = arith.constant 0 : index
    %385 = vector.load %arg5[%c37, %c0_144] : memref<40x768xf32, #tpu.memory_space<vmem>>, vector<1x768xf32>
    %386 = arith.truncf %383 : vector<128x256xf32> to vector<128x256xbf16>
    %cst_145 = arith.constant dense<0.000000e+00> : vector<128x768xf32>
    %387 = tpu.matmul %386, %384, %cst_145 {dimension_numbers = #tpu.dot_dimension_numbers<[1], [0], [0], [1], [0, 0, 1, 1], [], []>} : vector<128x256xbf16>, vector<256x768xbf16>, vector<128x768xf32> -> vector<128x768xf32>
    %388 = vector.broadcast %385 : vector<1x768xf32> to vector<128x768xf32>
    %389 = arith.addf %387, %388 : vector<128x768xf32>
    %390 = vector.extract_strided_slice %389 {offsets = [0, 0], sizes = [128, 256], strides = [1, 1]} : vector<128x768xf32> to vector<128x256xf32>
    %391 = arith.negf %390 : vector<128x256xf32>
    %392 = math.exp %391 : vector<128x256xf32>
    %cst_146 = arith.constant 1.000000e+00 : f32
    %393 = vector.broadcast %cst_146 : f32 to vector<128x256xf32>
    %394 = arith.addf %393, %392 : vector<128x256xf32>
    %395 = arith.divf %393, %394 : vector<128x256xf32>
    %396 = vector.extract_strided_slice %389 {offsets = [0, 256], sizes = [128, 256], strides = [1, 1]} : vector<128x768xf32> to vector<128x256xf32>
    %397 = math.tanh %396 : vector<128x256xf32>
    %398 = vector.extract_strided_slice %389 {offsets = [0, 512], sizes = [128, 256], strides = [1, 1]} : vector<128x768xf32> to vector<128x256xf32>
    %399 = arith.negf %398 : vector<128x256xf32>
    %400 = math.exp %399 : vector<128x256xf32>
    %cst_147 = arith.constant 1.000000e+00 : f32
    %401 = vector.broadcast %cst_147 : f32 to vector<128x256xf32>
    %402 = arith.addf %401, %400 : vector<128x256xf32>
    %403 = arith.divf %401, %402 : vector<128x256xf32>
    %404 = arith.mulf %395, %397 : vector<128x256xf32>
    %405 = math.tanh %404 : vector<128x256xf32>
    %406 = arith.mulf %403, %405 : vector<128x256xf32>
    %c512_148 = arith.constant 512 : index
    %c0_149 = arith.constant 0 : index
    %407 = vector.load %arg4[%c512_148, %c0_149] : memref<768x768xbf16, #tpu.memory_space<vmem>>, vector<256x768xbf16>
    %c38 = arith.constant 38 : index
    %c0_150 = arith.constant 0 : index
    %408 = vector.load %arg5[%c38, %c0_150] : memref<40x768xf32, #tpu.memory_space<vmem>>, vector<1x768xf32>
    %409 = arith.truncf %406 : vector<128x256xf32> to vector<128x256xbf16>
    %cst_151 = arith.constant dense<0.000000e+00> : vector<128x768xf32>
    %410 = tpu.matmul %409, %407, %cst_151 {dimension_numbers = #tpu.dot_dimension_numbers<[1], [0], [0], [1], [0, 0, 1, 1], [], []>} : vector<128x256xbf16>, vector<256x768xbf16>, vector<128x768xf32> -> vector<128x768xf32>
    %411 = vector.broadcast %408 : vector<1x768xf32> to vector<128x768xf32>
    %412 = arith.addf %410, %411 : vector<128x768xf32>
    %413 = vector.extract_strided_slice %412 {offsets = [0, 0], sizes = [128, 256], strides = [1, 1]} : vector<128x768xf32> to vector<128x256xf32>
    %414 = arith.negf %413 : vector<128x256xf32>
    %415 = math.exp %414 : vector<128x256xf32>
    %cst_152 = arith.constant 1.000000e+00 : f32
    %416 = vector.broadcast %cst_152 : f32 to vector<128x256xf32>
    %417 = arith.addf %416, %415 : vector<128x256xf32>
    %418 = arith.divf %416, %417 : vector<128x256xf32>
    %419 = vector.extract_strided_slice %412 {offsets = [0, 256], sizes = [128, 256], strides = [1, 1]} : vector<128x768xf32> to vector<128x256xf32>
    %420 = math.tanh %419 : vector<128x256xf32>
    %421 = vector.extract_strided_slice %412 {offsets = [0, 512], sizes = [128, 256], strides = [1, 1]} : vector<128x768xf32> to vector<128x256xf32>
    %422 = arith.negf %421 : vector<128x256xf32>
    %423 = math.exp %422 : vector<128x256xf32>
    %cst_153 = arith.constant 1.000000e+00 : f32
    %424 = vector.broadcast %cst_153 : f32 to vector<128x256xf32>
    %425 = arith.addf %424, %423 : vector<128x256xf32>
    %426 = arith.divf %424, %425 : vector<128x256xf32>
    %427 = arith.mulf %418, %420 : vector<128x256xf32>
    %428 = math.tanh %427 : vector<128x256xf32>
    %429 = arith.mulf %426, %428 : vector<128x256xf32>
    %c384_154 = arith.constant 384 : index
    %c0_155 = arith.constant 0 : index
    %430 = vector.load %arg3[%c384_154, %c0_155] : memref<640x256xbf16, #tpu.memory_space<vmem>>, vector<256x256xbf16>
    %c39 = arith.constant 39 : index
    %c0_156 = arith.constant 0 : index
    %431 = vector.load %arg5[%c39, %c0_156] : memref<40x768xf32, #tpu.memory_space<vmem>>, vector<1x256xf32>
    %432 = arith.truncf %429 : vector<128x256xf32> to vector<128x256xbf16>
    %cst_157 = arith.constant dense<0.000000e+00> : vector<128x256xf32>
    %433 = tpu.matmul %432, %430, %cst_157 {dimension_numbers = #tpu.dot_dimension_numbers<[1], [0], [0], [1], [0, 0, 1, 1], [], []>} : vector<128x256xbf16>, vector<256x256xbf16>, vector<128x256xf32> -> vector<128x256xf32>
    %434 = vector.broadcast %431 : vector<1x256xf32> to vector<128x256xf32>
    %435 = arith.addf %433, %434 : vector<128x256xf32>
    %c0_158 = arith.constant 0 : index
    %c0_159 = arith.constant 0 : index
    %436 = vector.load %arg6[%c0_158, %c0_159] : memref<128x256xf32, #tpu.memory_space<vmem>>, vector<128x256xf32>
    tpu.vector_store %arg6[%c0_158, %c0_159], %435 {strides = array<i32>} : memref<128x256xf32, #tpu.memory_space<vmem>>, vector<128x256xf32>,
    return
  }
  func.func @transform_0(%arg0: i32) -> (i32, i32) {
    %c0_i32 = arith.constant 0 : i32
    %c0_i32_0 = arith.constant 0 : i32
    return %arg0, %c0_i32 : i32, i32
  }
  func.func @transform_1(%arg0: i32) -> (i32, i32) {
    %c0_i32 = arith.constant 0 : i32
    %c0_i32_0 = arith.constant 0 : i32
    %c0_i32_1 = arith.constant 0 : i32
    return %c0_i32, %c0_i32_0 : i32, i32
  }
  func.func @transform_2(%arg0: i32) -> (i32, i32) {
    %c0_i32 = arith.constant 0 : i32
    %c0_i32_0 = arith.constant 0 : i32
    %c0_i32_1 = arith.constant 0 : i32
    return %c0_i32, %c0_i32_0 : i32, i32
  }
  func.func @transform_3(%arg0: i32) -> (i32, i32) {
    %c0_i32 = arith.constant 0 : i32
    %c0_i32_0 = arith.constant 0 : i32
    %c0_i32_1 = arith.constant 0 : i32
    return %c0_i32, %c0_i32_0 : i32, i32
  }
  func.func @transform_4(%arg0: i32) -> (i32, i32) {
    %c0_i32 = arith.constant 0 : i32
    %c0_i32_0 = arith.constant 0 : i32
    %c0_i32_1 = arith.constant 0 : i32
    return %c0_i32, %c0_i32_0 : i32, i32
  }
  func.func @transform_5(%arg0: i32) -> (i32, i32) {
    %c0_i32 = arith.constant 0 : i32
    %c0_i32_0 = arith.constant 0 : i32
    return %arg0, %c0_i32 : i32, i32
  }
}

</mosaic_0001>

<llo_original>
// kernel: tpu_custom_call.1
$region0: #{tpu_custom_call.1}
  #allocation0 [shape = 'u32[]', space=smem, size = 0x4, offset = 0x4, fixed_abs, tag = 'smem constant byte address 0x4 - core index']
  #allocation1 [shape = 'u32[144,128]{1,0:T(1,128)}', space=vmem, size = 0x12000, scoped, tag = 'internal scratch']
  %s0 = inlined_call_operand.hbm [shape: f32[256,256], index: 0, kind: input, shape index: {}]
  %s1 = inlined_call_operand.hbm [shape: bf16[1536,128], index: 1, kind: input, shape index: {}]
  %s2 = inlined_call_operand.hbm [shape: bf16[640,256], index: 2, kind: input, shape index: {}]
  %s3 = inlined_call_operand.hbm [shape: bf16[768,768], index: 3, kind: input, shape index: {}]
  %s4 = inlined_call_operand.hbm [shape: f32[40,768], index: 4, kind: input, shape index: {}]
  %s5 = inlined_call_operand.hbm [shape: f32[256,256], index: 5, kind: output, shape index: {}]
  %s6 = sld [smem:[#allocation0]]
  $region73: #{tpu_custom_call.1} parent=0
    _
  %s8 = ssub.s32 1, %s6
  %s9 = scalar_select 0, %s8, %s6
  $region1: #{tpu_custom_call.1} parent=0
    #allocation2 [shape = 'u8[262144]{0}', space=vmem, size = 0x40000, scoped, tag = 'input window, operand 0']
    #allocation3 [shape = 's32[2]{0}', space=sflag, size = 0x8, scoped, tag = 'scoped memory for tpu_custom_call.1']
    #allocation4 [shape = 's32[2]{0}', space=sflag, size = 0x8, scoped, tag = 'scoped memory for tpu_custom_call.1']
    #allocation5 [shape = 'u8[393216]{0}', space=vmem, size = 0x60000, scoped, tag = 'input window, operand 1, single buffered']
    #allocation6 [shape = 's32[1]{0}', space=sflag, size = 0x4, scoped, tag = 'scoped memory for tpu_custom_call.1']
    #allocation7 [shape = 'u8[327680]{0}', space=vmem, size = 0x50000, scoped, tag = 'input window, operand 2, single buffered']
    #allocation8 [shape = 'u8[1179648]{0}', space=vmem, size = 0x120000, scoped, tag = 'input window, operand 3, single buffered']
    #allocation9 [shape = 's32[1]{0}', space=sflag, size = 0x4, scoped, tag = 'scoped memory for tpu_custom_call.1']
    #allocation10 [shape = 'u8[122880]{0}', space=vmem, size = 0x1e000, scoped, tag = 'input window, operand 4, single buffered']
    #allocation11 [shape = 'u8[262144]{0}', space=vmem, size = 0x40000, scoped, tag = 'output window, operand 0']
    %10 = vsyncpa [#allocation3], 0
    %s11 = scalar_lea.sflag [#allocation3], 1
    %12 = vsyncpa %s11, 0
    %13 = vsyncpa [#allocation6], 0
    %14 = vsyncpa [#allocation9], 0
    %15 = vsyncpa [#allocation4], 0
    %s16 = scalar_lea.sflag [#allocation4], 1
    %17 = vsyncpa %s16, 0
    loop: start=0, step=1, limit=4
    $region2: #{tpu_custom_call.1} parent=1 // loop_pre_header
      _
    $region3: #{tpu_custom_call.1} parent=1 // loop_header
      %s19 = sphi 0, %s23
      %p20 = scmp.ge.s32.totalorder %s19, 4
      %s29 = sphi 0, %s31
      %s32 = sphi 0, %s29
      %s33 = sphi 0, %s32
      %s49 = sphi 0, %s33
      %s53 = sphi 0, %s53
      %s55 = sphi 0, %s53
      %s56 = sphi 0, %s55
      %s70 = sphi 0, %s56
      %s74 = sphi 0, %s74
      %s76 = sphi 0, %s74
      %s77 = sphi 0, %s76
      %s91 = sphi 0, %s77
      %s95 = sphi 0, %s95
      %s97 = sphi 0, %s95
      %s98 = sphi 0, %s97
      %s112 = sphi 0, %s98
      %s116 = sphi 0, %s116
      %s118 = sphi 0, %s116
      %s119 = sphi 0, %s118
      %s133 = sphi 0, %s119
      %s139 = sphi 0, %s141
      %s142 = sphi 0, %s139
      %s143 = sphi 0, %s142
      %s159 = sphi 0, %s143
    $region4: #{tpu_custom_call.1} parent=1 // loop_header_branch
      %22 = sbr.rel (%p20) target = $region8
    $region5: #{tpu_custom_call.1} parent=1 // loop_body
      %s24 = ssub.s32 %s19, 1
      %s25 = ssub.s32 %s19, 2
      %s26 = sadd.s32 %s19, 1
      %s27 = ssub.s32 %s19, %s26
      %p28 = scmp.eq.s32.totalorder %s27, 0
      %s30 = sadd.s32 %s29, 1
      %s31 = scalar_select %p28, %s29, %s30
      %p34 = pneg %p28
      %p35 = scmp.eq.s32.totalorder %s19, 1
      %p36 = por %p34, %p35
      %p37 = scmp.ne.s32.totalorder %s29, %s32
      %p38 = scmp.eq.s32.totalorder %s19, 0
      %p39 = por %p37, %p38
      %p40 = scmp.ne.s32.totalorder %s29, %s32
      %p41 = scmp.eq.s32.totalorder %s24, 1
      %p42 = por %p40, %p41
      %p43 = scmp.ne.s32.totalorder %s32, %s33
      %p44 = scmp.eq.s32.totalorder %s24, 0
      %p45 = por %p43, %p44
      %p46 = scmp.ne.s32.totalorder %s32, %s33
      %p47 = scmp.eq.s32.totalorder %s25, 1
      %p48 = por %p46, %p47
      %p50 = scmp.ne.s32.totalorder %s33, %s49
      %p51 = scmp.eq.s32.totalorder %s25, 0
      %p52 = por %p50, %p51
      %s54 = sadd.s32 %s53, 1
      %p57 = scmp.eq.s32.totalorder %s19, 1
      %p58 = scmp.ne.s32.totalorder %s53, %s55
      %p59 = scmp.eq.s32.totalorder %s19, 0
      %p60 = por %p58, %p59
      %p61 = scmp.ne.s32.totalorder %s53, %s55
      %p62 = scmp.eq.s32.totalorder %s24, 1
      %p63 = por %p61, %p62
      %p64 = scmp.ne.s32.totalorder %s55, %s56
      %p65 = scmp.eq.s32.totalorder %s24, 0
      %p66 = por %p64, %p65
      %p67 = scmp.ne.s32.totalorder %s55, %s56
      %p68 = scmp.eq.s32.totalorder %s25, 1
      %p69 = por %p67, %p68
      %p71 = scmp.ne.s32.totalorder %s56, %s70
      %p72 = scmp.eq.s32.totalorder %s25, 0
      %p73 = por %p71, %p72
      %s75 = sadd.s32 %s74, 1
      %p78 = scmp.eq.s32.totalorder %s19, 1
      %p79 = scmp.ne.s32.totalorder %s74, %s76
      %p80 = scmp.eq.s32.totalorder %s19, 0
      %p81 = por %p79, %p80
      %p82 = scmp.ne.s32.totalorder %s74, %s76
      %p83 = scmp.eq.s32.totalorder %s24, 1
      %p84 = por %p82, %p83
      %p85 = scmp.ne.s32.totalorder %s76, %s77
      %p86 = scmp.eq.s32.totalorder %s24, 0
      %p87 = por %p85, %p86
      %p88 = scmp.ne.s32.totalorder %s76, %s77
      %p89 = scmp.eq.s32.totalorder %s25, 1
      %p90 = por %p88, %p89
      %p92 = scmp.ne.s32.totalorder %s77, %s91
      %p93 = scmp.eq.s32.totalorder %s25, 0
      %p94 = por %p92, %p93
      %s96 = sadd.s32 %s95, 1
      %p99 = scmp.eq.s32.totalorder %s19, 1
      %p100 = scmp.ne.s32.totalorder %s95, %s97
      %p101 = scmp.eq.s32.totalorder %s19, 0
      %p102 = por %p100, %p101
      %p103 = scmp.ne.s32.totalorder %s95, %s97
      %p104 = scmp.eq.s32.totalorder %s24, 1
      %p105 = por %p103, %p104
      %p106 = scmp.ne.s32.totalorder %s97, %s98
      %p107 = scmp.eq.s32.totalorder %s24, 0
      %p108 = por %p106, %p107
      %p109 = scmp.ne.s32.totalorder %s97, %s98
      %p110 = scmp.eq.s32.totalorder %s25, 1
      %p111 = por %p109, %p110
      %p113 = scmp.ne.s32.totalorder %s98, %s112
      %p114 = scmp.eq.s32.totalorder %s25, 0
      %p115 = por %p113, %p114
      %s117 = sadd.s32 %s116, 1
      %p120 = scmp.eq.s32.totalorder %s19, 1
      %p121 = scmp.ne.s32.totalorder %s116, %s118
      %p122 = scmp.eq.s32.totalorder %s19, 0
      %p123 = por %p121, %p122
      %p124 = scmp.ne.s32.totalorder %s116, %s118
      %p125 = scmp.eq.s32.totalorder %s24, 1
      %p126 = por %p124, %p125
      %p127 = scmp.ne.s32.totalorder %s118, %s119
      %p128 = scmp.eq.s32.totalorder %s24, 0
      %p129 = por %p127, %p128
      %p130 = scmp.ne.s32.totalorder %s118, %s119
      %p131 = scmp.eq.s32.totalorder %s25, 1
      %p132 = por %p130, %p131
      %p134 = scmp.ne.s32.totalorder %s119, %s133
      %p135 = scmp.eq.s32.totalorder %s25, 0
      %p136 = por %p134, %p135
      %s137 = ssub.s32 %s19, %s26
      %p138 = scmp.eq.s32.totalorder %s137, 0
      %s140 = sadd.s32 %s139, 1
      %s141 = scalar_select %p138, %s139, %s140
      %p144 = pneg %p138
      %p145 = scmp.eq.s32.totalorder %s19, 1
      %p146 = por %p144, %p145
      %p147 = scmp.ne.s32.totalorder %s139, %s142
      %p148 = scmp.eq.s32.totalorder %s19, 0
      %p149 = por %p147, %p148
      %p150 = scmp.ne.s32.totalorder %s139, %s142
      %p151 = scmp.eq.s32.totalorder %s24, 1
      %p152 = por %p150, %p151
      %p153 = scmp.ne.s32.totalorder %s142, %s143
      %p154 = scmp.eq.s32.totalorder %s24, 0
      %p155 = por %p153, %p154
      %p156 = scmp.ne.s32.totalorder %s142, %s143
      %p157 = scmp.eq.s32.totalorder %s25, 1
      %p158 = por %p156, %p157
      %p160 = scmp.ne.s32.totalorder %s143, %s159
      %p161 = scmp.eq.s32.totalorder %s25, 0
      %p162 = por %p160, %p161
      %p163 = scmp.le.s32.totalorder 1, %s19
      %p164 = scmp.lt.s32.totalorder %s19, 3
      %p165 = pnand %p163, %p164
      %p166 = pneg %p165
      // Predicated region
      $region9: #{tpu_custom_call.1} parent=5 // pred_check
        _
      $region10: #{tpu_custom_call.1} parent=5 // pred_check_branch
        %168 = sbr.rel (%p165) target = $region12
      $region11: #{tpu_custom_call.1} parent=5 // pred_region
        %s169 = ssub.s32 %s19, 1
        // Predicated region
        $region13: #{tpu_custom_call.1} parent=11 // pred_check
          %p170 = pneg %p66
        $region14: #{tpu_custom_call.1} parent=11 // pred_check_branch
          %172 = sbr.rel (%p170) target = $region16
        $region15: #{tpu_custom_call.1} parent=11 // pred_region
          %s174 = ssub.s32 12288, 12288
          %175 = vsyncadd [#allocation6], %s174
          %s176 = sshll.u32 [#allocation5], 4
          %s177 = int_to_ptr.vmem [resolvable:$true] %s176
          %182 = dma.hbm_to_vmem [thread:$0]  %s1, 12288, %s177, [#allocation6], 64, 64, 4
        $region16: #{tpu_custom_call.1} parent=11 // pred_fallthru
          _
        // Predicated region
        $region17: #{tpu_custom_call.1} parent=11 // pred_check
          %p183 = pneg %p87
        $region18: #{tpu_custom_call.1} parent=11 // pred_check_branch
          %185 = sbr.rel (%p183) target = $region20
        $region19: #{tpu_custom_call.1} parent=11 // pred_region
          %s187 = ssub.s32 10240, 10240
          %188 = vsyncadd [#allocation6], %s187
          %s189 = sshll.u32 [#allocation7], 4
          %s190 = int_to_ptr.vmem [resolvable:$true] %s189
          %195 = dma.hbm_to_vmem [thread:$0]  %s2, 10240, %s190, [#allocation6], 128, 128, 8
        $region20: #{tpu_custom_call.1} parent=11 // pred_fallthru
          _
        // Predicated region
        $region21: #{tpu_custom_call.1} parent=11 // pred_check
          %p196 = pneg %p108
        $region22: #{tpu_custom_call.1} parent=11 // pred_check_branch
          %198 = sbr.rel (%p196) target = $region24
        $region23: #{tpu_custom_call.1} parent=11 // pred_region
          %s200 = ssub.s32 36864, 36864
          %201 = vsyncadd [#allocation9], %s200
          %s202 = sshll.u32 [#allocation8], 4
          %s203 = int_to_ptr.vmem [resolvable:$true] %s202
          %208 = dma.hbm_to_vmem [thread:$0]  %s3, 36864, %s203, [#allocation9], 384, 384, 24
        $region24: #{tpu_custom_call.1} parent=11 // pred_fallthru
          _
        // Predicated region
        $region25: #{tpu_custom_call.1} parent=11 // pred_check
          %p209 = pneg %p129
        $region26: #{tpu_custom_call.1} parent=11 // pred_check_branch
          %211 = sbr.rel (%p209) target = $region28
        $region27: #{tpu_custom_call.1} parent=11 // pred_region
          %s213 = ssub.s32 3840, 3840
          %214 = vsyncadd [#allocation9], %s213
          %s215 = sshll.u32 [#allocation10], 4
          %s216 = int_to_ptr.vmem [resolvable:$true] %s215
          %221 = dma.hbm_to_vmem [thread:$0]  %s4, 3840, %s216, [#allocation9], 768, 768, 48
        $region28: #{tpu_custom_call.1} parent=11 // pred_fallthru
          _
      $region12: #{tpu_custom_call.1} parent=5 // pred_fallthru
        _
      %p222 = scmp.lt.s32.totalorder %s19, 2
      // Predicated region
      $region29: #{tpu_custom_call.1} parent=5 // pred_check
        %p223 = pneg %p222
      $region30: #{tpu_custom_call.1} parent=5 // pred_check_branch
        %225 = sbr.rel (%p223) target = $region32
      $region31: #{tpu_custom_call.1} parent=5 // pred_region
        // Predicated region
        $region33: #{tpu_custom_call.1} parent=31 // pred_check
          %p226 = pneg %p39
        $region34: #{tpu_custom_call.1} parent=31 // pred_check_branch
          %228 = sbr.rel (%p226) target = $region36
        $region35: #{tpu_custom_call.1} parent=31 // pred_region
          %s229 = sand.u32 %s29, 1
          %s230 = scalar_lea.sflag [#allocation3], %s229
          %s231 = sand.u32 %s29, 1
          %s232 = smul.addr %s231, 256
          %s233 = scalar_lea.vmem [#allocation2], %s232
          %s234 = smul.u32 16, %s19
          %s236 = ssub.s32 4096, 4096
          %237 = vsyncadd %s230, %s236
          %s238 = smul.addr %s234, 2
          %s239 = smul.addr %s238, 128
          %s240 = scalar_lea.hbm %s0, %s239
          %s241 = sshll.u32 %s233, 4
          %s242 = int_to_ptr.vmem [resolvable:$true] %s241
          %247 = dma.hbm_to_vmem [thread:$0]  %s240, 4096, %s242, %s230, 256, 256, 16
        $region36: #{tpu_custom_call.1} parent=31 // pred_fallthru
          _
      $region32: #{tpu_custom_call.1} parent=5 // pred_fallthru
        _
      %p248 = scmp.le.s32.totalorder 1, %s19
      %p249 = scmp.lt.s32.totalorder %s19, 3
      %p250 = pnand %p248, %p249
      %p251 = pneg %p250
      // Predicated region
      $region37: #{tpu_custom_call.1} parent=5 // pred_check
        _
      $region38: #{tpu_custom_call.1} parent=5 // pred_check_branch
        %253 = sbr.rel (%p250) target = $region40
      $region39: #{tpu_custom_call.1} parent=5 // pred_region
        %s254 = ssub.s32 %s19, 1
        %s255 = sand.u32 %s32, 1
        %s256 = scalar_lea.sflag [#allocation3], %s255
        %s257 = sand.u32 %s32, 1
        %s258 = smul.addr %s257, 256
        %s259 = scalar_lea.vmem [#allocation2], %s258
        // Predicated region
        $region41: #{tpu_custom_call.1} parent=39 // pred_check
          %p260 = pneg %p45
        $region42: #{tpu_custom_call.1} parent=39 // pred_check_branch
          %262 = sbr.rel (%p260) target = $region44
        $region43: #{tpu_custom_call.1} parent=39 // pred_region
          %263 = dma.done %s256, 4096
        $region44: #{tpu_custom_call.1} parent=39 // pred_fallthru
          _
        // Predicated region
        $region45: #{tpu_custom_call.1} parent=39 // pred_check
          %p264 = pneg %p66
        $region46: #{tpu_custom_call.1} parent=39 // pred_check_branch
          %266 = sbr.rel (%p264) target = $region48
        $region47: #{tpu_custom_call.1} parent=39 // pred_region
          %267 = dma.done [#allocation6], 12288
        $region48: #{tpu_custom_call.1} parent=39 // pred_fallthru
          _
        // Predicated region
        $region49: #{tpu_custom_call.1} parent=39 // pred_check
          %p268 = pneg %p87
        $region50: #{tpu_custom_call.1} parent=39 // pred_check_branch
          %270 = sbr.rel (%p268) target = $region52
        $region51: #{tpu_custom_call.1} parent=39 // pred_region
          %271 = dma.done [#allocation6], 10240
        $region52: #{tpu_custom_call.1} parent=39 // pred_fallthru
          _
        // Predicated region
        $region53: #{tpu_custom_call.1} parent=39 // pred_check
          %p272 = pneg %p108
        $region54: #{tpu_custom_call.1} parent=39 // pred_check_branch
          %274 = sbr.rel (%p272) target = $region56
        $region55: #{tpu_custom_call.1} parent=39 // pred_region
          %275 = dma.done [#allocation9], 36864
        $region56: #{tpu_custom_call.1} parent=39 // pred_fallthru
          _
        // Predicated region
        $region57: #{tpu_custom_call.1} parent=39 // pred_check
          %p276 = pneg %p129
        $region58: #{tpu_custom_call.1} parent=39 // pred_check_branch
          %278 = sbr.rel (%p276) target = $region60
        $region59: #{tpu_custom_call.1} parent=39 // pred_region
          %279 = dma.done [#allocation9], 3840
        $region60: #{tpu_custom_call.1} parent=39 // pred_fallthru
          _
        %s280 = sand.u32 %s32, 1
        %s281 = scalar_lea.sflag [#allocation3], %s280
        %s282 = sand.u32 %s32, 1
        %s283 = smul.addr %s282, 256
        %s284 = scalar_lea.vmem [#allocation2], %s283
        %p285 = pneg %p45
        %p286 = pneg %p42
        %p287 = pneg %p66
        %p288 = pneg %p63
        %p289 = pneg %p87
        %p290 = pneg %p84
        %p291 = pneg %p108
        %p292 = pneg %p105
        %p293 = pneg %p129
        %p294 = pneg %p126
        %p295 = pneg %p155
        %p296 = pneg %p152
        %s297 = sand.u32 %s142, 1
        %s298 = scalar_lea.sflag [#allocation4], %s297
        %s299 = sand.u32 %s142, 1
        %s300 = smul.addr %s299, 256
        %s301 = scalar_lea.vmem [#allocation11], %s300
        %s302 = smul.u32 16, %s24
        %s303 = smul.u32 16, %s24
        %v305 = vld [vmem:[%s259] sm:$0xff]
        %v306 = vld [vmem:[%s259 + $0x8] sm:$0xff]
        %v307 = vld [vmem:[%s259 + $0x10] sm:$0xff]
        %v308 = vld [vmem:[%s259 + $0x18] sm:$0xff]
        %v309 = vld [vmem:[%s259 + $0x20] sm:$0xff]
        %v310 = vld [vmem:[%s259 + $0x28] sm:$0xff]
        %v311 = vld [vmem:[%s259 + $0x30] sm:$0xff]
        %v312 = vld [vmem:[%s259 + $0x38] sm:$0xff]
        %v313 = vld [vmem:[%s259 + $0x40] sm:$0xff]
        %v314 = vld [vmem:[%s259 + $0x48] sm:$0xff]
        %v315 = vld [vmem:[%s259 + $0x50] sm:$0xff]
        %v316 = vld [vmem:[%s259 + $0x58] sm:$0xff]
        %v317 = vld [vmem:[%s259 + $0x60] sm:$0xff]
        %v318 = vld [vmem:[%s259 + $0x68] sm:$0xff]
        %v319 = vld [vmem:[%s259 + $0x70] sm:$0xff]
        %v320 = vld [vmem:[%s259 + $0x78] sm:$0xff]
        %v321 = vld [vmem:[%s259 + $0x80] sm:$0xff]
        %v322 = vld [vmem:[%s259 + $0x88] sm:$0xff]
        %v323 = vld [vmem:[%s259 + $0x90] sm:$0xff]
        %v324 = vld [vmem:[%s259 + $0x98] sm:$0xff]
        %v325 = vld [vmem:[%s259 + $0xa0] sm:$0xff]
        %v326 = vld [vmem:[%s259 + $0xa8] sm:$0xff]
        %v327 = vld [vmem:[%s259 + $0xb0] sm:$0xff]
        %v328 = vld [vmem:[%s259 + $0xb8] sm:$0xff]
        %v329 = vld [vmem:[%s259 + $0xc0] sm:$0xff]
        %v330 = vld [vmem:[%s259 + $0xc8] sm:$0xff]
        %v331 = vld [vmem:[%s259 + $0xd0] sm:$0xff]
        %v332 = vld [vmem:[%s259 + $0xd8] sm:$0xff]
        %v333 = vld [vmem:[%s259 + $0xe0] sm:$0xff]
        %v334 = vld [vmem:[%s259 + $0xe8] sm:$0xff]
        %v335 = vld [vmem:[%s259 + $0xf0] sm:$0xff]
        %v336 = vld [vmem:[%s259 + $0xf8] sm:$0xff]
        %v337 = vld [vmem:[#allocation5] sm:$0xf]
        %v338 = vld [vmem:[#allocation5 + $0x4] sm:$0xf]
        %v339 = vld [vmem:[#allocation5 + $0x8] sm:$0xf]
        %v340 = vld [vmem:[#allocation5 + $0xc] sm:$0xf]
        %v341 = vld [vmem:[#allocation5 + $0x10] sm:$0xf]
        %v342 = vld [vmem:[#allocation5 + $0x14] sm:$0xf]
        %v343 = vld [vmem:[#allocation5 + $0x18] sm:$0xf]
        %v344 = vld [vmem:[#allocation5 + $0x1c] sm:$0xf]
        %v345 = vld [vmem:[#allocation5 + $0x20] sm:$0xf]
        %v346 = vld [vmem:[#allocation5 + $0x24] sm:$0xf]
        %v347 = vld [vmem:[#allocation5 + $0x28] sm:$0xf]
        %v348 = vld [vmem:[#allocation5 + $0x2c] sm:$0xf]
        %v349 = vld [vmem:[#allocation5 + $0x30] sm:$0xf]
        %v350 = vld [vmem:[#allocation5 + $0x34] sm:$0xf]
        %v351 = vld [vmem:[#allocation5 + $0x38] sm:$0xf]
        %v352 = vld [vmem:[#allocation5 + $0x3c] sm:$0xf]
        %v353 = vld [vmem:[#allocation5 + $0x40] sm:$0xf]
        %v354 = vld [vmem:[#allocation5 + $0x44] sm:$0xf]
        %v355 = vld [vmem:[#allocation5 + $0x48] sm:$0xf]
        %v356 = vld [vmem:[#allocation5 + $0x4c] sm:$0xf]
        %v357 = vld [vmem:[#allocation5 + $0x50] sm:$0xf]
        %v358 = vld [vmem:[#allocation5 + $0x54] sm:$0xf]
        %v359 = vld [vmem:[#allocation5 + $0x58] sm:$0xf]
        %v360 = vld [vmem:[#allocation5 + $0x5c] sm:$0xf]
        %v361 = vld [vmem:[#allocation5 + $0x60] sm:$0xf]
        %v362 = vld [vmem:[#allocation5 + $0x64] sm:$0xf]
        %v363 = vld [vmem:[#allocation5 + $0x68] sm:$0xf]
        %v364 = vld [vmem:[#allocation5 + $0x6c] sm:$0xf]
        %v365 = vld [vmem:[#allocation5 + $0x70] sm:$0xf]
        %v366 = vld [vmem:[#allocation5 + $0x74] sm:$0xf]
        %v367 = vld [vmem:[#allocation5 + $0x78] sm:$0xf]
        %v368 = vld [vmem:[#allocation5 + $0x7c] sm:$0xf]
        %v369 = vld [vmem:[#allocation10] ss:$0 sm:$0xff]
        %v370 = vld [vmem:[#allocation10 + $0x1] ss:$0 sm:$0xff]
        %v371 = vld [vmem:[#allocation10 + $0x2] ss:$0 sm:$0xff]
        %v372 = vpack.c.bf16 %v307, %v305
        %v373 = vpack.c.bf16 %v308, %v306
        %v374 = vpack.c.bf16 %v311, %v309
        %v375 = vpack.c.bf16 %v312, %v310
        %v376 = vpack.c.bf16 %v315, %v313
        %v377 = vpack.c.bf16 %v316, %v314
        %v378 = vpack.c.bf16 %v319, %v317
        %v379 = vpack.c.bf16 %v320, %v318
        %v380 = vpack.c.bf16 %v323, %v321
        %v381 = vpack.c.bf16 %v324, %v322
        %v382 = vpack.c.bf16 %v327, %v325
        %v383 = vpack.c.bf16 %v328, %v326
        %v384 = vpack.c.bf16 %v331, %v329
        %v385 = vpack.c.bf16 %v332, %v330
        %v386 = vpack.c.bf16 %v335, %v333
        %v387 = vpack.c.bf16 %v336, %v334
        %v420 = vunpack.c.l.b16 %v337
        %v421 = vunpack.c.l.b16 %v338
        %v422 = vunpack.c.l.b16 %v339
        %v423 = vunpack.c.l.b16 %v340
        %v424 = vunpack.c.l.b16 %v341
        %v425 = vunpack.c.l.b16 %v342
        %v426 = vunpack.c.l.b16 %v343
        %v427 = vunpack.c.l.b16 %v344
        %v428 = vunpack.c.l.b16 %v345
        %v429 = vunpack.c.l.b16 %v346
        %v430 = vunpack.c.l.b16 %v347
        %v431 = vunpack.c.l.b16 %v348
        %v432 = vunpack.c.l.b16 %v349
        %v433 = vunpack.c.l.b16 %v350
        %v434 = vunpack.c.l.b16 %v351
        %v435 = vunpack.c.l.b16 %v352
        %v436 = vunpack.c.l.b16 %v353
        %v437 = vunpack.c.l.b16 %v354
        %v438 = vunpack.c.l.b16 %v355
        %v439 = vunpack.c.l.b16 %v356
        %v440 = vunpack.c.l.b16 %v357
        %v441 = vunpack.c.l.b16 %v358
        %v442 = vunpack.c.l.b16 %v359
        %v443 = vunpack.c.l.b16 %v360
        %v444 = vunpack.c.l.b16 %v361
        %v445 = vunpack.c.l.b16 %v362
        %v446 = vunpack.c.l.b16 %v363
        %v447 = vunpack.c.l.b16 %v364
        %v448 = vunpack.c.l.b16 %v365
        %v449 = vunpack.c.l.b16 %v366
        %v450 = vunpack.c.l.b16 %v367
        %v451 = vunpack.c.l.b16 %v368
        %v452 = vpack.c.b16 %v421, %v420
        %v453 = vpack.c.b16 %v423, %v422
        %v454 = vpack.c.b16 %v425, %v424
        %v455 = vpack.c.b16 %v427, %v426
        %v456 = vpack.c.b16 %v429, %v428
        %v457 = vpack.c.b16 %v431, %v430
        %v458 = vpack.c.b16 %v433, %v432
        %v459 = vpack.c.b16 %v435, %v434
        %v460 = vpack.c.b16 %v437, %v436
        %v461 = vpack.c.b16 %v439, %v438
        %v462 = vpack.c.b16 %v441, %v440
        %v463 = vpack.c.b16 %v443, %v442
        %v464 = vpack.c.b16 %v445, %v444
        %v465 = vpack.c.b16 %v447, %v446
        %v466 = vpack.c.b16 %v449, %v448
        %v467 = vpack.c.b16 %v451, %v450
        %484 = vmatprep.subr.bf16.mxu0 0
        %485 = vmatpush1.bf16.msra.mxu0 %v459
        %486 = vmatprep.subr.bf16.mxu0 0
        %487 = vmatpush1.bf16.msra.mxu0 %v458
        %488 = vmatprep.subr.bf16.mxu0 0
        %489 = vmatpush1.bf16.msra.mxu0 %v457
        %490 = vmatprep.subr.bf16.mxu0 0
        %491 = vmatpush1.bf16.msra.mxu0 %v456
        %492 = vmatprep.subr.bf16.mxu0 0
        %493 = vmatpush1.bf16.msra.mxu0 %v455
        %494 = vmatprep.subr.bf16.mxu0 0
        %495 = vmatpush1.bf16.msra.mxu0 %v454
        %496 = vmatprep.subr.bf16.mxu0 0
        %497 = vmatpush1.bf16.msra.mxu0 %v453
        %498 = vmatprep.subr.bf16.mxu0 0
        %499 = vmatpush1.bf16.msra.mxu0 %v452
        %500 = vmatprep.subr.bf16.mxu0 0
        %501 = vmatpush2.bf16.msra.mxu0 %v467
        %502 = vmatprep.subr.bf16.mxu0 0
        %503 = vmatpush2.bf16.msra.mxu0 %v466
        %504 = vmatprep.subr.bf16.mxu0 0
        %505 = vmatpush2.bf16.msra.mxu0 %v465
        %506 = vmatprep.subr.bf16.mxu0 0
        %507 = vmatpush2.bf16.msra.mxu0 %v464
        %508 = vmatprep.subr.bf16.mxu0 0
        %509 = vmatpush2.bf16.msra.mxu0 %v463
        %510 = vmatprep.subr.bf16.mxu0 0
        %511 = vmatpush2.bf16.msra.mxu0 %v462
        %512 = vmatprep.subr.bf16.mxu0 0
        %513 = vmatpush2.bf16.msra.mxu0 %v461
        %514 = vmatprep.subr.bf16.mxu0 0
        %515 = vmatpush2.bf16.msra.mxu0 %v460
        %516 = vmatprep.mubr.bf16.mxu0 %v373
        %517 = vmatmul.mubr.bf16.gmra.mxu0 %v372
        %v518 = vpop.f32.mrf.mxu0
        %v519 = vadd.f32 %v369, %v518
        %v520 = vpop.f32.mrf.mxu0
        %v521 = vpop.f32.mrf.mxu0
        %v522 = vadd.f32 %v369, %v521
        %v523 = vpop.f32.mrf.mxu0
        %524 = vmatprep.mubr.bf16.mxu0 %v375
        %525 = vmatmul.mubr.bf16.gmra.mxu0 %v374
        %v526 = vpop.f32.mrf.mxu0
        %v527 = vadd.f32 %v369, %v526
        %v528 = vpop.f32.mrf.mxu0
        %v529 = vpop.f32.mrf.mxu0
        %v530 = vadd.f32 %v369, %v529
        %v531 = vpop.f32.mrf.mxu0
        %532 = vmatprep.mubr.bf16.mxu0 %v377
        %533 = vmatmul.mubr.bf16.gmra.mxu0 %v376
        %v534 = vpop.f32.mrf.mxu0
        %v535 = vadd.f32 %v369, %v534
        %v536 = vpop.f32.mrf.mxu0
        %v537 = vpop.f32.mrf.mxu0
        %v538 = vadd.f32 %v369, %v537
        %v539 = vpop.f32.mrf.mxu0
        %540 = vmatprep.mubr.bf16.mxu0 %v379
        %541 = vmatmul.mubr.bf16.gmra.mxu0 %v378
        %v542 = vpop.f32.mrf.mxu0
        %v543 = vadd.f32 %v369, %v542
        %v544 = vpop.f32.mrf.mxu0
        %v545 = vpop.f32.mrf.mxu0
        %v546 = vadd.f32 %v369, %v545
        %v547 = vpop.f32.mrf.mxu0
        %548 = vmatprep.mubr.bf16.mxu0 %v381
        %549 = vmatmul.mubr.bf16.gmra.mxu0 %v380
        %v550 = vpop.f32.mrf.mxu0
        %v551 = vadd.f32 %v369, %v550
        %v552 = vpop.f32.mrf.mxu0
        %v553 = vpop.f32.mrf.mxu0
        %v554 = vadd.f32 %v369, %v553
        %v555 = vpop.f32.mrf.mxu0
        %556 = vmatprep.mubr.bf16.mxu0 %v383
        %557 = vmatmul.mubr.bf16.gmra.mxu0 %v382
        %v558 = vpop.f32.mrf.mxu0
        %v559 = vadd.f32 %v369, %v558
        %v560 = vpop.f32.mrf.mxu0
        %v561 = vpop.f32.mrf.mxu0
        %v562 = vadd.f32 %v369, %v561
        %v563 = vpop.f32.mrf.mxu0
        %564 = vmatprep.mubr.bf16.mxu0 %v385
        %565 = vmatmul.mubr.bf16.gmra.mxu0 %v384
        %v566 = vpop.f32.mrf.mxu0
        %v567 = vadd.f32 %v369, %v566
        %v568 = vpop.f32.mrf.mxu0
        %v569 = vpop.f32.mrf.mxu0
        %v570 = vadd.f32 %v369, %v569
        %v571 = vpop.f32.mrf.mxu0
        %572 = vmatprep.mubr.bf16.mxu0 %v387
        %573 = vmatmul.mubr.bf16.gmra.mxu0 %v386
        %v574 = vpop.f32.mrf.mxu0
        %v575 = vadd.f32 %v369, %v574
        %v576 = vpop.f32.mrf.mxu0
        %v577 = vpop.f32.mrf.mxu0
        %v578 = vadd.f32 %v369, %v577
        %v579 = vpop.f32.mrf.mxu0
        %580 = vdwg.mxu0
        %581 = vadd.xlane.f32.xlu0 %v519
        %v582 = vpop.xlane.xlu0 %581
        %583 = vadd.xlane.f32.xlu0 %v522
        %v584 = vpop.xlane.xlu0 %583
        %585 = vadd.xlane.f32.xlu0 %v527
        %v586 = vpop.xlane.xlu0 %585
        %587 = vadd.xlane.f32.xlu0 %v530
        %v588 = vpop.xlane.xlu0 %587
        %589 = vadd.xlane.f32.xlu0 %v535
        %v590 = vpop.xlane.xlu0 %589
        %591 = vadd.xlane.f32.xlu0 %v538
        %v592 = vpop.xlane.xlu0 %591
        %593 = vadd.xlane.f32.xlu0 %v543
        %v594 = vpop.xlane.xlu0 %593
        %595 = vadd.xlane.f32.xlu0 %v546
        %v596 = vpop.xlane.xlu0 %595
        %597 = vadd.xlane.f32.xlu0 %v551
        %v598 = vpop.xlane.xlu0 %597
        %599 = vadd.xlane.f32.xlu0 %v554
        %v600 = vpop.xlane.xlu0 %599
        %601 = vadd.xlane.f32.xlu0 %v559
        %v602 = vpop.xlane.xlu0 %601
        %603 = vadd.xlane.f32.xlu0 %v562
        %v604 = vpop.xlane.xlu0 %603
        %605 = vadd.xlane.f32.xlu0 %v567
        %v606 = vpop.xlane.xlu0 %605
        %607 = vadd.xlane.f32.xlu0 %v570
        %v608 = vpop.xlane.xlu0 %607
        %609 = vadd.xlane.f32.xlu0 %v575
        %v610 = vpop.xlane.xlu0 %609
        %611 = vadd.xlane.f32.xlu0 %v578
        %v612 = vpop.xlane.xlu0 %611
        %v613 = vrcp.pop 128.0
        %v614 = vmul.f32 %v582, %v613
        %v615 = vmul.f32 %v584, %v613
        %v616 = vmul.f32 %v586, %v613
        %v617 = vmul.f32 %v588, %v613
        %v618 = vmul.f32 %v590, %v613
        %v619 = vmul.f32 %v592, %v613
        %v620 = vmul.f32 %v594, %v613
        %v621 = vmul.f32 %v596, %v613
        %v622 = vmul.f32 %v598, %v613
        %v623 = vmul.f32 %v600, %v613
        %v624 = vmul.f32 %v602, %v613
        %v625 = vmul.f32 %v604, %v613
        %v626 = vmul.f32 %v606, %v613
        %v627 = vmul.f32 %v608, %v613
        %v628 = vmul.f32 %v610, %v613
        %v629 = vmul.f32 %v612, %v613
        %v630 = vsub.f32 %v519, %v614
        %v631 = vsub.f32 %v522, %v615
        %v632 = vsub.f32 %v527, %v616
        %v633 = vsub.f32 %v530, %v617
        %v634 = vsub.f32 %v535, %v618
        %v635 = vsub.f32 %v538, %v619
        %v636 = vsub.f32 %v543, %v620
        %v637 = vsub.f32 %v546, %v621
        %v638 = vsub.f32 %v551, %v622
        %v639 = vsub.f32 %v554, %v623
        %v640 = vsub.f32 %v559, %v624
        %v641 = vsub.f32 %v562, %v625
        %v642 = vsub.f32 %v567, %v626
        %v643 = vsub.f32 %v570, %v627
        %v644 = vsub.f32 %v575, %v628
        %v645 = vsub.f32 %v578, %v629
        %v646 = vmul.f32 %v630, %v630
        %v647 = vmul.f32 %v631, %v631
        %v648 = vmul.f32 %v632, %v632
        %v649 = vmul.f32 %v633, %v633
        %v650 = vmul.f32 %v634, %v634
        %v651 = vmul.f32 %v635, %v635
        %v652 = vmul.f32 %v636, %v636
        %v653 = vmul.f32 %v637, %v637
        %v654 = vmul.f32 %v638, %v638
        %v655 = vmul.f32 %v639, %v639
        %v656 = vmul.f32 %v640, %v640
        %v657 = vmul.f32 %v641, %v641
        %v658 = vmul.f32 %v642, %v642
        %v659 = vmul.f32 %v643, %v643
        %v660 = vmul.f32 %v644, %v644
        %v661 = vmul.f32 %v645, %v645
        %662 = vadd.xlane.f32.xlu0 %v646
        %v663 = vpop.xlane.xlu0 %662
        %664 = vadd.xlane.f32.xlu0 %v647
        %v665 = vpop.xlane.xlu0 %664
        %666 = vadd.xlane.f32.xlu0 %v648
        %v667 = vpop.xlane.xlu0 %666
        %668 = vadd.xlane.f32.xlu0 %v649
        %v669 = vpop.xlane.xlu0 %668
        %670 = vadd.xlane.f32.xlu0 %v650
        %v671 = vpop.xlane.xlu0 %670
        %672 = vadd.xlane.f32.xlu0 %v651
        %v673 = vpop.xlane.xlu0 %672
        %674 = vadd.xlane.f32.xlu0 %v652
        %v675 = vpop.xlane.xlu0 %674
        %676 = vadd.xlane.f32.xlu0 %v653
        %v677 = vpop.xlane.xlu0 %676
        %678 = vadd.xlane.f32.xlu0 %v654
        %v679 = vpop.xlane.xlu0 %678
        %680 = vadd.xlane.f32.xlu0 %v655
        %v681 = vpop.xlane.xlu0 %680
        %682 = vadd.xlane.f32.xlu0 %v656
        %v683 = vpop.xlane.xlu0 %682
        %684 = vadd.xlane.f32.xlu0 %v657
        %v685 = vpop.xlane.xlu0 %684
        %686 = vadd.xlane.f32.xlu0 %v658
        %v687 = vpop.xlane.xlu0 %686
        %688 = vadd.xlane.f32.xlu0 %v659
        %v689 = vpop.xlane.xlu0 %688
        %690 = vadd.xlane.f32.xlu0 %v660
        %v691 = vpop.xlane.xlu0 %690
        %692 = vadd.xlane.f32.xlu0 %v661
        %v693 = vpop.xlane.xlu0 %692
        %v694 = vmul.f32 %v663, %v613
        %v695 = vmul.f32 %v665, %v613
        %v696 = vmul.f32 %v667, %v613
        %v697 = vmul.f32 %v669, %v613
        %v698 = vmul.f32 %v671, %v613
        %v699 = vmul.f32 %v673, %v613
        %v700 = vmul.f32 %v675, %v613
        %v701 = vmul.f32 %v677, %v613
        %v702 = vmul.f32 %v679, %v613
        %v703 = vmul.f32 %v681, %v613
        %v704 = vmul.f32 %v683, %v613
        %v705 = vmul.f32 %v685, %v613
        %v706 = vmul.f32 %v687, %v613
        %v707 = vmul.f32 %v689, %v613
        %v708 = vmul.f32 %v691, %v613
        %v709 = vmul.f32 %v693, %v613
        %v710 = vadd.f32 %v694, 1e-05
        %v711 = vadd.f32 %v695, 1e-05
        %v712 = vadd.f32 %v696, 1e-05
        %v713 = vadd.f32 %v697, 1e-05
        %v714 = vadd.f32 %v698, 1e-05
        %v715 = vadd.f32 %v699, 1e-05
        %v716 = vadd.f32 %v700, 1e-05
        %v717 = vadd.f32 %v701, 1e-05
        %v718 = vadd.f32 %v702, 1e-05
        %v719 = vadd.f32 %v703, 1e-05
        %v720 = vadd.f32 %v704, 1e-05
        %v721 = vadd.f32 %v705, 1e-05
        %v722 = vadd.f32 %v706, 1e-05
        %v723 = vadd.f32 %v707, 1e-05
        %v724 = vadd.f32 %v708, 1e-05
        %v725 = vadd.f32 %v709, 1e-05
        %v726 = vrsqrt.pop %v710
        %v727 = vrsqrt.pop %v711
        %v728 = vrsqrt.pop %v712
        %v729 = vrsqrt.pop %v713
        %v730 = vrsqrt.pop %v714
        %v731 = vrsqrt.pop %v715
        %v732 = vrsqrt.pop %v716
        %v733 = vrsqrt.pop %v717
        %v734 = vrsqrt.pop %v718
        %v735 = vrsqrt.pop %v719
        %v736 = vrsqrt.pop %v720
        %v737 = vrsqrt.pop %v721
        %v738 = vrsqrt.pop %v722
        %v739 = vrsqrt.pop %v723
        %v740 = vrsqrt.pop %v724
        %v741 = vrsqrt.pop %v725
        %v742 = vmul.f32 %v630, %v726
        %v743 = vmul.f32 %v631, %v727
        %v744 = vmul.f32 %v632, %v728
        %v745 = vmul.f32 %v633, %v729
        %v746 = vmul.f32 %v634, %v730
        %v747 = vmul.f32 %v635, %v731
        %v748 = vmul.f32 %v636, %v732
        %v749 = vmul.f32 %v637, %v733
        %v750 = vmul.f32 %v638, %v734
        %v751 = vmul.f32 %v639, %v735
        %v752 = vmul.f32 %v640, %v736
        %v753 = vmul.f32 %v641, %v737
        %v754 = vmul.f32 %v642, %v738
        %v755 = vmul.f32 %v643, %v739
        %v756 = vmul.f32 %v644, %v740
        %v757 = vmul.f32 %v645, %v741
        %v758 = vmul.f32 %v742, %v370
        %v759 = vmul.f32 %v743, %v370
        %v760 = vmul.f32 %v744, %v370
        %v761 = vmul.f32 %v745, %v370
        %v762 = vmul.f32 %v746, %v370
        %v763 = vmul.f32 %v747, %v370
        %v764 = vmul.f32 %v748, %v370
        %v765 = vmul.f32 %v749, %v370
        %v766 = vmul.f32 %v750, %v370
        %v767 = vmul.f32 %v751, %v370
        %v768 = vmul.f32 %v752, %v370
        %v769 = vmul.f32 %v753, %v370
        %v770 = vmul.f32 %v754, %v370
        %v771 = vmul.f32 %v755, %v370
        %v772 = vmul.f32 %v756, %v370
        %v773 = vmul.f32 %v757, %v370
        %v774 = vadd.f32 %v758, %v371
        %v775 = vadd.f32 %v759, %v371
        %v776 = vadd.f32 %v760, %v371
        %v777 = vadd.f32 %v761, %v371
        %v778 = vadd.f32 %v762, %v371
        %v779 = vadd.f32 %v763, %v371
        %v780 = vadd.f32 %v764, %v371
        %v781 = vadd.f32 %v765, %v371
        %v782 = vadd.f32 %v766, %v371
        %v783 = vadd.f32 %v767, %v371
        %v784 = vadd.f32 %v768, %v371
        %v785 = vadd.f32 %v769, %v371
        %v786 = vadd.f32 %v770, %v371
        %v787 = vadd.f32 %v771, %v371
        %v788 = vadd.f32 %v772, %v371
        %v789 = vadd.f32 %v773, %v371
        %v790 = vmax.f32 %v774, 0.0
        %v791 = vmax.f32 %v775, 0.0
        %v792 = vmax.f32 %v776, 0.0
        %v793 = vmax.f32 %v777, 0.0
        %v794 = vmax.f32 %v778, 0.0
        %v795 = vmax.f32 %v779, 0.0
        %v796 = vmax.f32 %v780, 0.0
        %v797 = vmax.f32 %v781, 0.0
        %v798 = vmax.f32 %v782, 0.0
        %v799 = vmax.f32 %v783, 0.0
        %v800 = vmax.f32 %v784, 0.0
        %v801 = vmax.f32 %v785, 0.0
        %v802 = vmax.f32 %v786, 0.0
        %v803 = vmax.f32 %v787, 0.0
        %v804 = vmax.f32 %v788, 0.0
        %v805 = vmax.f32 %v789, 0.0
        %v806 = vld [vmem:[#allocation5 + $0x80] sm:$0xf]
        %v807 = vld [vmem:[#allocation5 + $0x84] sm:$0xf]
        %v808 = vld [vmem:[#allocation5 + $0x88] sm:$0xf]
        %v809 = vld [vmem:[#allocation5 + $0x8c] sm:$0xf]
        %v810 = vld [vmem:[#allocation5 + $0x90] sm:$0xf]
        %v811 = vld [vmem:[#allocation5 + $0x94] sm:$0xf]
        %v812 = vld [vmem:[#allocation5 + $0x98] sm:$0xf]
        %v813 = vld [vmem:[#allocation5 + $0x9c] sm:$0xf]
        %v814 = vld [vmem:[#allocation5 + $0xa0] sm:$0xf]
        %v815 = vld [vmem:[#allocation5 + $0xa4] sm:$0xf]
        %v816 = vld [vmem:[#allocation5 + $0xa8] sm:$0xf]
        %v817 = vld [vmem:[#allocation5 + $0xac] sm:$0xf]
        %v818 = vld [vmem:[#allocation5 + $0xb0] sm:$0xf]
        %v819 = vld [vmem:[#allocation5 + $0xb4] sm:$0xf]
        %v820 = vld [vmem:[#allocation5 + $0xb8] sm:$0xf]
        %v821 = vld [vmem:[#allocation5 + $0xbc] sm:$0xf]
        %v822 = vld [vmem:[#allocation10 + $0x3] ss:$0 sm:$0xff]
        %v823 = vld [vmem:[#allocation10 + $0x4] ss:$0 sm:$0xff]
        %v824 = vld [vmem:[#allocation10 + $0x5] ss:$0 sm:$0xff]
        %v825 = vpack.c.bf16 %v791, %v790
        %v826 = vpack.c.bf16 %v793, %v792
        %v827 = vpack.c.bf16 %v795, %v794
        %v828 = vpack.c.bf16 %v797, %v796
        %v829 = vpack.c.bf16 %v799, %v798
        %v830 = vpack.c.bf16 %v801, %v800
        %v831 = vpack.c.bf16 %v803, %v802
        %v832 = vpack.c.bf16 %v805, %v804
        %v849 = vunpack.c.l.b16 %v806
        %v850 = vunpack.c.l.b16 %v807
        %v851 = vunpack.c.l.b16 %v808
        %v852 = vunpack.c.l.b16 %v809
        %v853 = vunpack.c.l.b16 %v810
        %v854 = vunpack.c.l.b16 %v811
        %v855 = vunpack.c.l.b16 %v812
        %v856 = vunpack.c.l.b16 %v813
        %v857 = vunpack.c.l.b16 %v814
        %v858 = vunpack.c.l.b16 %v815
        %v859 = vunpack.c.l.b16 %v816
        %v860 = vunpack.c.l.b16 %v817
        %v861 = vunpack.c.l.b16 %v818
        %v862 = vunpack.c.l.b16 %v819
        %v863 = vunpack.c.l.b16 %v820
        %v864 = vunpack.c.l.b16 %v821
        %v865 = vpack.c.b16 %v850, %v849
        %v866 = vpack.c.b16 %v852, %v851
        %v867 = vpack.c.b16 %v854, %v853
        %v868 = vpack.c.b16 %v856, %v855
        %v869 = vpack.c.b16 %v858, %v857
        %v870 = vpack.c.b16 %v860, %v859
        %v871 = vpack.c.b16 %v862, %v861
        %v872 = vpack.c.b16 %v864, %v863
        %881 = vmatprep.subr.bf16.mxu0 0
        %882 = vmatpush1.bf16.msra.mxu0 %v872
        %883 = vmatprep.subr.bf16.mxu0 0
        %884 = vmatpush1.bf16.msra.mxu0 %v871
        %885 = vmatprep.subr.bf16.mxu0 0
        %886 = vmatpush1.bf16.msra.mxu0 %v870
        %887 = vmatprep.subr.bf16.mxu0 0
        %888 = vmatpush1.bf16.msra.mxu0 %v869
        %889 = vmatprep.subr.bf16.mxu0 0
        %890 = vmatpush1.bf16.msra.mxu0 %v868
        %891 = vmatprep.subr.bf16.mxu0 0
        %892 = vmatpush1.bf16.msra.mxu0 %v867
        %893 = vmatprep.subr.bf16.mxu0 0
        %894 = vmatpush1.bf16.msra.mxu0 %v866
        %895 = vmatprep.subr.bf16.mxu0 0
        %896 = vmatpush1.bf16.msra.mxu0 %v865
        %897 = vmatprep.subr.bf16.mxu0 0
        %898 = vmatpush2.bf16.msra.mxu0 0
        %899 = vmatprep.subr.bf16.mxu0 0
        %900 = vmatpush2.bf16.msra.mxu0 0
        %901 = vmatprep.subr.bf16.mxu0 0
        %902 = vmatpush2.bf16.msra.mxu0 0
        %903 = vmatprep.subr.bf16.mxu0 0
        %904 = vmatpush2.bf16.msra.mxu0 0
        %905 = vmatprep.subr.bf16.mxu0 0
        %906 = vmatpush2.bf16.msra.mxu0 0
        %907 = vmatprep.subr.bf16.mxu0 0
        %908 = vmatpush2.bf16.msra.mxu0 0
        %909 = vmatprep.subr.bf16.mxu0 0
        %910 = vmatpush2.bf16.msra.mxu0 0
        %911 = vmatprep.subr.bf16.mxu0 0
        %912 = vmatpush2.bf16.msra.mxu0 0
        %913 = vmatprep.mubr.bf16.mxu0 0
        %914 = vmatmul.mubr.bf16.gmra.mxu0 %v825
        %v915 = vpop.f32.mrf.mxu0
        %v916 = vadd.f32 %v822, %v915
        %v917 = vpop.f32.mrf.mxu0
        %v918 = vpop.f32.mrf.mxu0
        %v919 = vadd.f32 %v822, %v918
        %v920 = vpop.f32.mrf.mxu0
        %921 = vmatprep.mubr.bf16.mxu0 0
        %922 = vmatmul.mubr.bf16.gmra.mxu0 %v826
        %v923 = vpop.f32.mrf.mxu0
        %v924 = vadd.f32 %v822, %v923
        %v925 = vpop.f32.mrf.mxu0
        %v926 = vpop.f32.mrf.mxu0
        %v927 = vadd.f32 %v822, %v926
        %v928 = vpop.f32.mrf.mxu0
        %929 = vmatprep.mubr.bf16.mxu0 0
        %930 = vmatmul.mubr.bf16.gmra.mxu0 %v827
        %v931 = vpop.f32.mrf.mxu0
        %v932 = vadd.f32 %v822, %v931
        %v933 = vpop.f32.mrf.mxu0
        %v934 = vpop.f32.mrf.mxu0
        %v935 = vadd.f32 %v822, %v934
        %v936 = vpop.f32.mrf.mxu0
        %937 = vmatprep.mubr.bf16.mxu0 0
        %938 = vmatmul.mubr.bf16.gmra.mxu0 %v828
        %v939 = vpop.f32.mrf.mxu0
        %v940 = vadd.f32 %v822, %v939
        %v941 = vpop.f32.mrf.mxu0
        %v942 = vpop.f32.mrf.mxu0
        %v943 = vadd.f32 %v822, %v942
        %v944 = vpop.f32.mrf.mxu0
        %945 = vmatprep.mubr.bf16.mxu0 0
        %946 = vmatmul.mubr.bf16.gmra.mxu0 %v829
        %v947 = vpop.f32.mrf.mxu0
        %v948 = vadd.f32 %v822, %v947
        %v949 = vpop.f32.mrf.mxu0
        %v950 = vpop.f32.mrf.mxu0
        %v951 = vadd.f32 %v822, %v950
        %v952 = vpop.f32.mrf.mxu0
        %953 = vmatprep.mubr.bf16.mxu0 0
        %954 = vmatmul.mubr.bf16.gmra.mxu0 %v830
        %v955 = vpop.f32.mrf.mxu0
        %v956 = vadd.f32 %v822, %v955
        %v957 = vpop.f32.mrf.mxu0
        %v958 = vpop.f32.mrf.mxu0
        %v959 = vadd.f32 %v822, %v958
        %v960 = vpop.f32.mrf.mxu0
        %961 = vmatprep.mubr.bf16.mxu0 0
        %962 = vmatmul.mubr.bf16.gmra.mxu0 %v831
        %v963 = vpop.f32.mrf.mxu0
        %v964 = vadd.f32 %v822, %v963
        %v965 = vpop.f32.mrf.mxu0
        %v966 = vpop.f32.mrf.mxu0
        %v967 = vadd.f32 %v822, %v966
        %v968 = vpop.f32.mrf.mxu0
        %969 = vmatprep.mubr.bf16.mxu0 0
        %970 = vmatmul.mubr.bf16.gmra.mxu0 %v832
        %v971 = vpop.f32.mrf.mxu0
        %v972 = vadd.f32 %v822, %v971
        %v973 = vpop.f32.mrf.mxu0
        %v974 = vpop.f32.mrf.mxu0
        %v975 = vadd.f32 %v822, %v974
        %v976 = vpop.f32.mrf.mxu0
        %977 = vdwg.mxu0
        %978 = vadd.xlane.f32.xlu0 %v916
        %v979 = vpop.xlane.xlu0 %978
        %980 = vadd.xlane.f32.xlu0 %v919
        %v981 = vpop.xlane.xlu0 %980
        %982 = vadd.xlane.f32.xlu0 %v924
        %v983 = vpop.xlane.xlu0 %982
        %984 = vadd.xlane.f32.xlu0 %v927
        %v985 = vpop.xlane.xlu0 %984
        %986 = vadd.xlane.f32.xlu0 %v932
        %v987 = vpop.xlane.xlu0 %986
        %988 = vadd.xlane.f32.xlu0 %v935
        %v989 = vpop.xlane.xlu0 %988
        %990 = vadd.xlane.f32.xlu0 %v940
        %v991 = vpop.xlane.xlu0 %990
        %992 = vadd.xlane.f32.xlu0 %v943
        %v993 = vpop.xlane.xlu0 %992
        %994 = vadd.xlane.f32.xlu0 %v948
        %v995 = vpop.xlane.xlu0 %994
        %996 = vadd.xlane.f32.xlu0 %v951
        %v997 = vpop.xlane.xlu0 %996
        %998 = vadd.xlane.f32.xlu0 %v956
        %v999 = vpop.xlane.xlu0 %998
        %1000 = vadd.xlane.f32.xlu0 %v959
        %v1001 = vpop.xlane.xlu0 %1000
        %1002 = vadd.xlane.f32.xlu0 %v964
        %v1003 = vpop.xlane.xlu0 %1002
        %1004 = vadd.xlane.f32.xlu0 %v967
        %v1005 = vpop.xlane.xlu0 %1004
        %1006 = vadd.xlane.f32.xlu0 %v972
        %v1007 = vpop.xlane.xlu0 %1006
        %1008 = vadd.xlane.f32.xlu0 %v975
        %v1009 = vpop.xlane.xlu0 %1008
        %v1010 = vmul.f32 %v979, %v613
        %v1011 = vmul.f32 %v981, %v613
        %v1012 = vmul.f32 %v983, %v613
        %v1013 = vmul.f32 %v985, %v613
        %v1014 = vmul.f32 %v987, %v613
        %v1015 = vmul.f32 %v989, %v613
        %v1016 = vmul.f32 %v991, %v613
        %v1017 = vmul.f32 %v993, %v613
        %v1018 = vmul.f32 %v995, %v613
        %v1019 = vmul.f32 %v997, %v613
        %v1020 = vmul.f32 %v999, %v613
        %v1021 = vmul.f32 %v1001, %v613
        %v1022 = vmul.f32 %v1003, %v613
        %v1023 = vmul.f32 %v1005, %v613
        %v1024 = vmul.f32 %v1007, %v613
        %v1025 = vmul.f32 %v1009, %v613
        %v1026 = vsub.f32 %v916, %v1010
        %v1027 = vsub.f32 %v919, %v1011
        %v1028 = vsub.f32 %v924, %v1012
        %v1029 = vsub.f32 %v927, %v1013
        %v1030 = vsub.f32 %v932, %v1014
        %v1031 = vsub.f32 %v935, %v1015
        %v1032 = vsub.f32 %v940, %v1016
        %v1033 = vsub.f32 %v943, %v1017
        %v1034 = vsub.f32 %v948, %v1018
        %v1035 = vsub.f32 %v951, %v1019
        %v1036 = vsub.f32 %v956, %v1020
        %v1037 = vsub.f32 %v959, %v1021
        %v1038 = vsub.f32 %v964, %v1022
        %v1039 = vsub.f32 %v967, %v1023
        %v1040 = vsub.f32 %v972, %v1024
        %v1041 = vsub.f32 %v975, %v1025
        %v1042 = vmul.f32 %v1026, %v1026
        %v1043 = vmul.f32 %v1027, %v1027
        %v1044 = vmul.f32 %v1028, %v1028
        %v1045 = vmul.f32 %v1029, %v1029
        %v1046 = vmul.f32 %v1030, %v1030
        %v1047 = vmul.f32 %v1031, %v1031
        %v1048 = vmul.f32 %v1032, %v1032
        %v1049 = vmul.f32 %v1033, %v1033
        %v1050 = vmul.f32 %v1034, %v1034
        %v1051 = vmul.f32 %v1035, %v1035
        %v1052 = vmul.f32 %v1036, %v1036
        %v1053 = vmul.f32 %v1037, %v1037
        %v1054 = vmul.f32 %v1038, %v1038
        %v1055 = vmul.f32 %v1039, %v1039
        %v1056 = vmul.f32 %v1040, %v1040
        %v1057 = vmul.f32 %v1041, %v1041
        %1058 = vadd.xlane.f32.xlu0 %v1042
        %v1059 = vpop.xlane.xlu0 %1058
        %1060 = vadd.xlane.f32.xlu0 %v1043
        %v1061 = vpop.xlane.xlu0 %1060
        %1062 = vadd.xlane.f32.xlu0 %v1044
        %v1063 = vpop.xlane.xlu0 %1062
        %1064 = vadd.xlane.f32.xlu0 %v1045
        %v1065 = vpop.xlane.xlu0 %1064
        %1066 = vadd.xlane.f32.xlu0 %v1046
        %v1067 = vpop.xlane.xlu0 %1066
        %1068 = vadd.xlane.f32.xlu0 %v1047
        %v1069 = vpop.xlane.xlu0 %1068
        %1070 = vadd.xlane.f32.xlu0 %v1048
        %v1071 = vpop.xlane.xlu0 %1070
        %1072 = vadd.xlane.f32.xlu0 %v1049
        %v1073 = vpop.xlane.xlu0 %1072
        %1074 = vadd.xlane.f32.xlu0 %v1050
        %v1075 = vpop.xlane.xlu0 %1074
        %1076 = vadd.xlane.f32.xlu0 %v1051
        %v1077 = vpop.xlane.xlu0 %1076
        %1078 = vadd.xlane.f32.xlu0 %v1052
        %v1079 = vpop.xlane.xlu0 %1078
        %1080 = vadd.xlane.f32.xlu0 %v1053
        %v1081 = vpop.xlane.xlu0 %1080
        %1082 = vadd.xlane.f32.xlu0 %v1054
        %v1083 = vpop.xlane.xlu0 %1082
        %1084 = vadd.xlane.f32.xlu0 %v1055
        %v1085 = vpop.xlane.xlu0 %1084
        %1086 = vadd.xlane.f32.xlu0 %v1056
        %v1087 = vpop.xlane.xlu0 %1086
        %1088 = vadd.xlane.f32.xlu0 %v1057
        %v1089 = vpop.xlane.xlu0 %1088
        %v1090 = vmul.f32 %v1059, %v613
        %v1091 = vmul.f32 %v1061, %v613
        %v1092 = vmul.f32 %v1063, %v613
        %v1093 = vmul.f32 %v1065, %v613
        %v1094 = vmul.f32 %v1067, %v613
        %v1095 = vmul.f32 %v1069, %v613
        %v1096 = vmul.f32 %v1071, %v613
        %v1097 = vmul.f32 %v1073, %v613
        %v1098 = vmul.f32 %v1075, %v613
        %v1099 = vmul.f32 %v1077, %v613
        %v1100 = vmul.f32 %v1079, %v613
        %v1101 = vmul.f32 %v1081, %v613
        %v1102 = vmul.f32 %v1083, %v613
        %v1103 = vmul.f32 %v1085, %v613
        %v1104 = vmul.f32 %v1087, %v613
        %v1105 = vmul.f32 %v1089, %v613
        %v1106 = vadd.f32 %v1090, 1e-05
        %v1107 = vadd.f32 %v1091, 1e-05
        %v1108 = vadd.f32 %v1092, 1e-05
        %v1109 = vadd.f32 %v1093, 1e-05
        %v1110 = vadd.f32 %v1094, 1e-05
        %v1111 = vadd.f32 %v1095, 1e-05
        %v1112 = vadd.f32 %v1096, 1e-05
        %v1113 = vadd.f32 %v1097, 1e-05
        %v1114 = vadd.f32 %v1098, 1e-05
        %v1115 = vadd.f32 %v1099, 1e-05
        %v1116 = vadd.f32 %v1100, 1e-05
        %v1117 = vadd.f32 %v1101, 1e-05
        %v1118 = vadd.f32 %v1102, 1e-05
        %v1119 = vadd.f32 %v1103, 1e-05
        %v1120 = vadd.f32 %v1104, 1e-05
        %v1121 = vadd.f32 %v1105, 1e-05
        %v1122 = vrsqrt.pop %v1106
        %v1123 = vrsqrt.pop %v1107
        %v1124 = vrsqrt.pop %v1108
        %v1125 = vrsqrt.pop %v1109
        %v1126 = vrsqrt.pop %v1110
        %v1127 = vrsqrt.pop %v1111
        %v1128 = vrsqrt.pop %v1112
        %v1129 = vrsqrt.pop %v1113
        %v1130 = vrsqrt.pop %v1114
        %v1131 = vrsqrt.pop %v1115
        %v1132 = vrsqrt.pop %v1116
        %v1133 = vrsqrt.pop %v1117
        %v1134 = vrsqrt.pop %v1118
        %v1135 = vrsqrt.pop %v1119
        %v1136 = vrsqrt.pop %v1120
        %v1137 = vrsqrt.pop %v1121
        %v1138 = vmul.f32 %v1026, %v1122
        %v1139 = vmul.f32 %v1027, %v1123
        %v1140 = vmul.f32 %v1028, %v1124
        %v1141 = vmul.f32 %v1029, %v1125
        %v1142 = vmul.f32 %v1030, %v1126
        %v1143 = vmul.f32 %v1031, %v1127
        %v1144 = vmul.f32 %v1032, %v1128
        %v1145 = vmul.f32 %v1033, %v1129
        %v1146 = vmul.f32 %v1034, %v1130
        %v1147 = vmul.f32 %v1035, %v1131
        %v1148 = vmul.f32 %v1036, %v1132
        %v1149 = vmul.f32 %v1037, %v1133
        %v1150 = vmul.f32 %v1038, %v1134
        %v1151 = vmul.f32 %v1039, %v1135
        %v1152 = vmul.f32 %v1040, %v1136
        %v1153 = vmul.f32 %v1041, %v1137
        %v1154 = vmul.f32 %v1138, %v823
        %v1155 = vmul.f32 %v1139, %v823
        %v1156 = vmul.f32 %v1140, %v823
        %v1157 = vmul.f32 %v1141, %v823
        %v1158 = vmul.f32 %v1142, %v823
        %v1159 = vmul.f32 %v1143, %v823
        %v1160 = vmul.f32 %v1144, %v823
        %v1161 = vmul.f32 %v1145, %v823
        %v1162 = vmul.f32 %v1146, %v823
        %v1163 = vmul.f32 %v1147, %v823
        %v1164 = vmul.f32 %v1148, %v823
        %v1165 = vmul.f32 %v1149, %v823
        %v1166 = vmul.f32 %v1150, %v823
        %v1167 = vmul.f32 %v1151, %v823
        %v1168 = vmul.f32 %v1152, %v823
        %v1169 = vmul.f32 %v1153, %v823
        %v1170 = vadd.f32 %v1154, %v824
        %v1171 = vadd.f32 %v1155, %v824
        %v1172 = vadd.f32 %v1156, %v824
        %v1173 = vadd.f32 %v1157, %v824
        %v1174 = vadd.f32 %v1158, %v824
        %v1175 = vadd.f32 %v1159, %v824
        %v1176 = vadd.f32 %v1160, %v824
        %v1177 = vadd.f32 %v1161, %v824
        %v1178 = vadd.f32 %v1162, %v824
        %v1179 = vadd.f32 %v1163, %v824
        %v1180 = vadd.f32 %v1164, %v824
        %v1181 = vadd.f32 %v1165, %v824
        %v1182 = vadd.f32 %v1166, %v824
        %v1183 = vadd.f32 %v1167, %v824
        %v1184 = vadd.f32 %v1168, %v824
        %v1185 = vadd.f32 %v1169, %v824
        %v1186 = vmax.f32 %v1170, 0.0
        %v1187 = vmax.f32 %v1171, 0.0
        %v1188 = vmax.f32 %v1172, 0.0
        %v1189 = vmax.f32 %v1173, 0.0
        %v1190 = vmax.f32 %v1174, 0.0
        %v1191 = vmax.f32 %v1175, 0.0
        %v1192 = vmax.f32 %v1176, 0.0
        %v1193 = vmax.f32 %v1177, 0.0
        %v1194 = vmax.f32 %v1178, 0.0
        %v1195 = vmax.f32 %v1179, 0.0
        %v1196 = vmax.f32 %v1180, 0.0
        %v1197 = vmax.f32 %v1181, 0.0
        %v1198 = vmax.f32 %v1182, 0.0
        %v1199 = vmax.f32 %v1183, 0.0
        %v1200 = vmax.f32 %v1184, 0.0
        %v1201 = vmax.f32 %v1185, 0.0
        %v1202 = vld [vmem:[#allocation5 + $0xc0] sm:$0xf]
        %v1203 = vld [vmem:[#allocation5 + $0xc4] sm:$0xf]
        %v1204 = vld [vmem:[#allocation5 + $0xc8] sm:$0xf]
        %v1205 = vld [vmem:[#allocation5 + $0xcc] sm:$0xf]
        %v1206 = vld [vmem:[#allocation5 + $0xd0] sm:$0xf]
        %v1207 = vld [vmem:[#allocation5 + $0xd4] sm:$0xf]
        %v1208 = vld [vmem:[#allocation5 + $0xd8] sm:$0xf]
        %v1209 = vld [vmem:[#allocation5 + $0xdc] sm:$0xf]
        %v1210 = vld [vmem:[#allocation5 + $0xe0] sm:$0xf]
        %v1211 = vld [vmem:[#allocation5 + $0xe4] sm:$0xf]
        %v1212 = vld [vmem:[#allocation5 + $0xe8] sm:$0xf]
        %v1213 = vld [vmem:[#allocation5 + $0xec] sm:$0xf]
        %v1214 = vld [vmem:[#allocation5 + $0xf0] sm:$0xf]
        %v1215 = vld [vmem:[#allocation5 + $0xf4] sm:$0xf]
        %v1216 = vld [vmem:[#allocation5 + $0xf8] sm:$0xf]
        %v1217 = vld [vmem:[#allocation5 + $0xfc] sm:$0xf]
        %v1218 = vld [vmem:[#allocation10 + $0x6] ss:$0 sm:$0xff]
        %v1219 = vld [vmem:[#allocation10 + $0x7] ss:$0 sm:$0xff]
        %v1220 = vld [vmem:[#allocation10 + $0x30] ss:$0 sm:$0xff]
        %v1221 = vpack.c.bf16 %v1187, %v1186
        %v1222 = vpack.c.bf16 %v1189, %v1188
        %v1223 = vpack.c.bf16 %v1191, %v1190
        %v1224 = vpack.c.bf16 %v1193, %v1192
        %v1225 = vpack.c.bf16 %v1195, %v1194
        %v1226 = vpack.c.bf16 %v1197, %v1196
        %v1227 = vpack.c.bf16 %v1199, %v1198
        %v1228 = vpack.c.bf16 %v1201, %v1200
        %v1245 = vunpack.c.l.b16 %v1202
        %v1246 = vunpack.c.l.b16 %v1203
        %v1247 = vunpack.c.l.b16 %v1204
        %v1248 = vunpack.c.l.b16 %v1205
        %v1249 = vunpack.c.l.b16 %v1206
        %v1250 = vunpack.c.l.b16 %v1207
        %v1251 = vunpack.c.l.b16 %v1208
        %v1252 = vunpack.c.l.b16 %v1209
        %v1253 = vunpack.c.l.b16 %v1210
        %v1254 = vunpack.c.l.b16 %v1211
        %v1255 = vunpack.c.l.b16 %v1212
        %v1256 = vunpack.c.l.b16 %v1213
        %v1257 = vunpack.c.l.b16 %v1214
        %v1258 = vunpack.c.l.b16 %v1215
        %v1259 = vunpack.c.l.b16 %v1216
        %v1260 = vunpack.c.l.b16 %v1217
        %v1261 = vpack.c.b16 %v1246, %v1245
        %v1262 = vpack.c.b16 %v1248, %v1247
        %v1263 = vpack.c.b16 %v1250, %v1249
        %v1264 = vpack.c.b16 %v1252, %v1251
        %v1265 = vpack.c.b16 %v1254, %v1253
        %v1266 = vpack.c.b16 %v1256, %v1255
        %v1267 = vpack.c.b16 %v1258, %v1257
        %v1268 = vpack.c.b16 %v1260, %v1259
        %1277 = vmatprep.subr.bf16.mxu0 0
        %1278 = vmatpush1.bf16.msra.mxu0 %v1268
        %1279 = vmatprep.subr.bf16.mxu0 0
        %1280 = vmatpush1.bf16.msra.mxu0 %v1267
        %1281 = vmatprep.subr.bf16.mxu0 0
        %1282 = vmatpush1.bf16.msra.mxu0 %v1266
        %1283 = vmatprep.subr.bf16.mxu0 0
        %1284 = vmatpush1.bf16.msra.mxu0 %v1265
        %1285 = vmatprep.subr.bf16.mxu0 0
        %1286 = vmatpush1.bf16.msra.mxu0 %v1264
        %1287 = vmatprep.subr.bf16.mxu0 0
        %1288 = vmatpush1.bf16.msra.mxu0 %v1263
        %1289 = vmatprep.subr.bf16.mxu0 0
        %1290 = vmatpush1.bf16.msra.mxu0 %v1262
        %1291 = vmatprep.subr.bf16.mxu0 0
        %1292 = vmatpush1.bf16.msra.mxu0 %v1261
        %1293 = vmatprep.subr.bf16.mxu0 0
        %1294 = vmatpush2.bf16.msra.mxu0 0
        %1295 = vmatprep.subr.bf16.mxu0 0
        %1296 = vmatpush2.bf16.msra.mxu0 0
        %1297 = vmatprep.subr.bf16.mxu0 0
        %1298 = vmatpush2.bf16.msra.mxu0 0
        %1299 = vmatprep.subr.bf16.mxu0 0
        %1300 = vmatpush2.bf16.msra.mxu0 0
        %1301 = vmatprep.subr.bf16.mxu0 0
        %1302 = vmatpush2.bf16.msra.mxu0 0
        %1303 = vmatprep.subr.bf16.mxu0 0
        %1304 = vmatpush2.bf16.msra.mxu0 0
        %1305 = vmatprep.subr.bf16.mxu0 0
        %1306 = vmatpush2.bf16.msra.mxu0 0
        %1307 = vmatprep.subr.bf16.mxu0 0
        %1308 = vmatpush2.bf16.msra.mxu0 0
        %1309 = vmatprep.mubr.bf16.mxu0 0
        %1310 = vmatmul.mubr.bf16.gmra.mxu0 %v1221
        %v1311 = vpop.f32.mrf.mxu0
        %v1312 = vadd.f32 %v1218, %v1311
        %v1313 = vpop.f32.mrf.mxu0
        %v1314 = vpop.f32.mrf.mxu0
        %v1315 = vadd.f32 %v1218, %v1314
        %v1316 = vpop.f32.mrf.mxu0
        %1317 = vmatprep.mubr.bf16.mxu0 0
        %1318 = vmatmul.mubr.bf16.gmra.mxu0 %v1222
        %v1319 = vpop.f32.mrf.mxu0
        %v1320 = vadd.f32 %v1218, %v1319
        %v1321 = vpop.f32.mrf.mxu0
        %v1322 = vpop.f32.mrf.mxu0
        %v1323 = vadd.f32 %v1218, %v1322
        %v1324 = vpop.f32.mrf.mxu0
        %1325 = vmatprep.mubr.bf16.mxu0 0
        %1326 = vmatmul.mubr.bf16.gmra.mxu0 %v1223
        %v1327 = vpop.f32.mrf.mxu0
        %v1328 = vadd.f32 %v1218, %v1327
        %v1329 = vpop.f32.mrf.mxu0
        %v1330 = vpop.f32.mrf.mxu0
        %v1331 = vadd.f32 %v1218, %v1330
        %v1332 = vpop.f32.mrf.mxu0
        %1333 = vmatprep.mubr.bf16.mxu0 0
        %1334 = vmatmul.mubr.bf16.gmra.mxu0 %v1224
        %v1335 = vpop.f32.mrf.mxu0
        %v1336 = vadd.f32 %v1218, %v1335
        %v1337 = vpop.f32.mrf.mxu0
        %v1338 = vpop.f32.mrf.mxu0
        %v1339 = vadd.f32 %v1218, %v1338
        %v1340 = vpop.f32.mrf.mxu0
        %1341 = vmatprep.mubr.bf16.mxu0 0
        %1342 = vmatmul.mubr.bf16.gmra.mxu0 %v1225
        %v1343 = vpop.f32.mrf.mxu0
        %v1344 = vadd.f32 %v1218, %v1343
        %v1345 = vpop.f32.mrf.mxu0
        %v1346 = vpop.f32.mrf.mxu0
        %v1347 = vadd.f32 %v1218, %v1346
        %v1348 = vpop.f32.mrf.mxu0
        %1349 = vmatprep.mubr.bf16.mxu0 0
        %1350 = vmatmul.mubr.bf16.gmra.mxu0 %v1226
        %v1351 = vpop.f32.mrf.mxu0
        %v1352 = vadd.f32 %v1218, %v1351
        %v1353 = vpop.f32.mrf.mxu0
        %v1354 = vpop.f32.mrf.mxu0
        %v1355 = vadd.f32 %v1218, %v1354
        %v1356 = vpop.f32.mrf.mxu0
        %1357 = vmatprep.mubr.bf16.mxu0 0
        %1358 = vmatmul.mubr.bf16.gmra.mxu0 %v1227
        %v1359 = vpop.f32.mrf.mxu0
        %v1360 = vadd.f32 %v1218, %v1359
        %v1361 = vpop.f32.mrf.mxu0
        %v1362 = vpop.f32.mrf.mxu0
        %v1363 = vadd.f32 %v1218, %v1362
        %v1364 = vpop.f32.mrf.mxu0
        %1365 = vmatprep.mubr.bf16.mxu0 0
        %1366 = vmatmul.mubr.bf16.gmra.mxu0 %v1228
        %v1367 = vpop.f32.mrf.mxu0
        %v1368 = vadd.f32 %v1218, %v1367
        %v1369 = vpop.f32.mrf.mxu0
        %v1370 = vpop.f32.mrf.mxu0
        %v1371 = vadd.f32 %v1218, %v1370
        %v1372 = vpop.f32.mrf.mxu0
        %1373 = vdwg.mxu0
        %1374 = vadd.xlane.f32.xlu0 %v1312
        %v1375 = vpop.xlane.xlu0 %1374
        %1376 = vadd.xlane.f32.xlu0 %v1315
        %v1377 = vpop.xlane.xlu0 %1376
        %1378 = vadd.xlane.f32.xlu0 %v1320
        %v1379 = vpop.xlane.xlu0 %1378
        %1380 = vadd.xlane.f32.xlu0 %v1323
        %v1381 = vpop.xlane.xlu0 %1380
        %1382 = vadd.xlane.f32.xlu0 %v1328
        %v1383 = vpop.xlane.xlu0 %1382
        %1384 = vadd.xlane.f32.xlu0 %v1331
        %v1385 = vpop.xlane.xlu0 %1384
        %1386 = vadd.xlane.f32.xlu0 %v1336
        %v1387 = vpop.xlane.xlu0 %1386
        %1388 = vadd.xlane.f32.xlu0 %v1339
        %v1389 = vpop.xlane.xlu0 %1388
        %1390 = vadd.xlane.f32.xlu0 %v1344
        %v1391 = vpop.xlane.xlu0 %1390
        %1392 = vadd.xlane.f32.xlu0 %v1347
        %v1393 = vpop.xlane.xlu0 %1392
        %1394 = vadd.xlane.f32.xlu0 %v1352
        %v1395 = vpop.xlane.xlu0 %1394
        %1396 = vadd.xlane.f32.xlu0 %v1355
        %v1397 = vpop.xlane.xlu0 %1396
        %1398 = vadd.xlane.f32.xlu0 %v1360
        %v1399 = vpop.xlane.xlu0 %1398
        %1400 = vadd.xlane.f32.xlu0 %v1363
        %v1401 = vpop.xlane.xlu0 %1400
        %1402 = vadd.xlane.f32.xlu0 %v1368
        %v1403 = vpop.xlane.xlu0 %1402
        %1404 = vadd.xlane.f32.xlu0 %v1371
        %v1405 = vpop.xlane.xlu0 %1404
        %v1406 = vmul.f32 %v1375, %v613
        %v1407 = vmul.f32 %v1377, %v613
        %v1408 = vmul.f32 %v1379, %v613
        %v1409 = vmul.f32 %v1381, %v613
        %v1410 = vmul.f32 %v1383, %v613
        %v1411 = vmul.f32 %v1385, %v613
        %v1412 = vmul.f32 %v1387, %v613
        %v1413 = vmul.f32 %v1389, %v613
        %v1414 = vmul.f32 %v1391, %v613
        %v1415 = vmul.f32 %v1393, %v613
        %v1416 = vmul.f32 %v1395, %v613
        %v1417 = vmul.f32 %v1397, %v613
        %v1418 = vmul.f32 %v1399, %v613
        %v1419 = vmul.f32 %v1401, %v613
        %v1420 = vmul.f32 %v1403, %v613
        %v1421 = vmul.f32 %v1405, %v613
        %v1422 = vsub.f32 %v1312, %v1406
        %v1423 = vsub.f32 %v1315, %v1407
        %v1424 = vsub.f32 %v1320, %v1408
        %v1425 = vsub.f32 %v1323, %v1409
        %v1426 = vsub.f32 %v1328, %v1410
        %v1427 = vsub.f32 %v1331, %v1411
        %v1428 = vsub.f32 %v1336, %v1412
        %v1429 = vsub.f32 %v1339, %v1413
        %v1430 = vsub.f32 %v1344, %v1414
        %v1431 = vsub.f32 %v1347, %v1415
        %v1432 = vsub.f32 %v1352, %v1416
        %v1433 = vsub.f32 %v1355, %v1417
        %v1434 = vsub.f32 %v1360, %v1418
        %v1435 = vsub.f32 %v1363, %v1419
        %v1436 = vsub.f32 %v1368, %v1420
        %v1437 = vsub.f32 %v1371, %v1421
        %v1438 = vmul.f32 %v1422, %v1422
        %v1439 = vmul.f32 %v1423, %v1423
        %v1440 = vmul.f32 %v1424, %v1424
        %v1441 = vmul.f32 %v1425, %v1425
        %v1442 = vmul.f32 %v1426, %v1426
        %v1443 = vmul.f32 %v1427, %v1427
        %v1444 = vmul.f32 %v1428, %v1428
        %v1445 = vmul.f32 %v1429, %v1429
        %v1446 = vmul.f32 %v1430, %v1430
        %v1447 = vmul.f32 %v1431, %v1431
        %v1448 = vmul.f32 %v1432, %v1432
        %v1449 = vmul.f32 %v1433, %v1433
        %v1450 = vmul.f32 %v1434, %v1434
        %v1451 = vmul.f32 %v1435, %v1435
        %v1452 = vmul.f32 %v1436, %v1436
        %v1453 = vmul.f32 %v1437, %v1437
        %1454 = vadd.xlane.f32.xlu0 %v1438
        %v1455 = vpop.xlane.xlu0 %1454
        %1456 = vadd.xlane.f32.xlu0 %v1439
        %v1457 = vpop.xlane.xlu0 %1456
        %1458 = vadd.xlane.f32.xlu0 %v1440
        %v1459 = vpop.xlane.xlu0 %1458
        %1460 = vadd.xlane.f32.xlu0 %v1441
        %v1461 = vpop.xlane.xlu0 %1460
        %1462 = vadd.xlane.f32.xlu0 %v1442
        %v1463 = vpop.xlane.xlu0 %1462
        %1464 = vadd.xlane.f32.xlu0 %v1443
        %v1465 = vpop.xlane.xlu0 %1464
        %1466 = vadd.xlane.f32.xlu0 %v1444
        %v1467 = vpop.xlane.xlu0 %1466
        %1468 = vadd.xlane.f32.xlu0 %v1445
        %v1469 = vpop.xlane.xlu0 %1468
        %1470 = vadd.xlane.f32.xlu0 %v1446
        %v1471 = vpop.xlane.xlu0 %1470
        %1472 = vadd.xlane.f32.xlu0 %v1447
        %v1473 = vpop.xlane.xlu0 %1472
        %1474 = vadd.xlane.f32.xlu0 %v1448
        %v1475 = vpop.xlane.xlu0 %1474
        %1476 = vadd.xlane.f32.xlu0 %v1449
        %v1477 = vpop.xlane.xlu0 %1476
        %1478 = vadd.xlane.f32.xlu0 %v1450
        %v1479 = vpop.xlane.xlu0 %1478
        %1480 = vadd.xlane.f32.xlu0 %v1451
        %v1481 = vpop.xlane.xlu0 %1480
        %1482 = vadd.xlane.f32.xlu0 %v1452
        %v1483 = vpop.xlane.xlu0 %1482
        %1484 = vadd.xlane.f32.xlu0 %v1453
        %v1485 = vpop.xlane.xlu0 %1484
        %v1486 = vmul.f32 %v1455, %v613
        %v1487 = vmul.f32 %v1457, %v613
        %v1488 = vmul.f32 %v1459, %v613
        %v1489 = vmul.f32 %v1461, %v613
        %v1490 = vmul.f32 %v1463, %v613
        %v1491 = vmul.f32 %v1465, %v613
        %v1492 = vmul.f32 %v1467, %v613
        %v1493 = vmul.f32 %v1469, %v613
        %v1494 = vmul.f32 %v1471, %v613
        %v1495 = vmul.f32 %v1473, %v613
        %v1496 = vmul.f32 %v1475, %v613
        %v1497 = vmul.f32 %v1477, %v613
        %v1498 = vmul.f32 %v1479, %v613
        %v1499 = vmul.f32 %v1481, %v613
        %v1500 = vmul.f32 %v1483, %v613
        %v1501 = vmul.f32 %v1485, %v613
        %v1502 = vadd.f32 %v1486, 1e-05
        %v1503 = vadd.f32 %v1487, 1e-05
        %v1504 = vadd.f32 %v1488, 1e-05
        %v1505 = vadd.f32 %v1489, 1e-05
        %v1506 = vadd.f32 %v1490, 1e-05
        %v1507 = vadd.f32 %v1491, 1e-05
        %v1508 = vadd.f32 %v1492, 1e-05
        %v1509 = vadd.f32 %v1493, 1e-05
        %v1510 = vadd.f32 %v1494, 1e-05
        %v1511 = vadd.f32 %v1495, 1e-05
        %v1512 = vadd.f32 %v1496, 1e-05
        %v1513 = vadd.f32 %v1497, 1e-05
        %v1514 = vadd.f32 %v1498, 1e-05
        %v1515 = vadd.f32 %v1499, 1e-05
        %v1516 = vadd.f32 %v1500, 1e-05
        %v1517 = vadd.f32 %v1501, 1e-05
        %v1518 = vrsqrt.pop %v1502
        %v1519 = vrsqrt.pop %v1503
        %v1520 = vrsqrt.pop %v1504
        %v1521 = vrsqrt.pop %v1505
        %v1522 = vrsqrt.pop %v1506
        %v1523 = vrsqrt.pop %v1507
        %v1524 = vrsqrt.pop %v1508
        %v1525 = vrsqrt.pop %v1509
        %v1526 = vrsqrt.pop %v1510
        %v1527 = vrsqrt.pop %v1511
        %v1528 = vrsqrt.pop %v1512
        %v1529 = vrsqrt.pop %v1513
        %v1530 = vrsqrt.pop %v1514
        %v1531 = vrsqrt.pop %v1515
        %v1532 = vrsqrt.pop %v1516
        %v1533 = vrsqrt.pop %v1517
        %v1534 = vmul.f32 %v1422, %v1518
        %v1535 = vmul.f32 %v1423, %v1519
        %v1536 = vmul.f32 %v1424, %v1520
        %v1537 = vmul.f32 %v1425, %v1521
        %v1538 = vmul.f32 %v1426, %v1522
        %v1539 = vmul.f32 %v1427, %v1523
        %v1540 = vmul.f32 %v1428, %v1524
        %v1541 = vmul.f32 %v1429, %v1525
        %v1542 = vmul.f32 %v1430, %v1526
        %v1543 = vmul.f32 %v1431, %v1527
        %v1544 = vmul.f32 %v1432, %v1528
        %v1545 = vmul.f32 %v1433, %v1529
        %v1546 = vmul.f32 %v1434, %v1530
        %v1547 = vmul.f32 %v1435, %v1531
        %v1548 = vmul.f32 %v1436, %v1532
        %v1549 = vmul.f32 %v1437, %v1533
        %v1550 = vmul.f32 %v1534, %v1219
        %v1551 = vmul.f32 %v1535, %v1219
        %v1552 = vmul.f32 %v1536, %v1219
        %v1553 = vmul.f32 %v1537, %v1219
        %v1554 = vmul.f32 %v1538, %v1219
        %v1555 = vmul.f32 %v1539, %v1219
        %v1556 = vmul.f32 %v1540, %v1219
        %v1557 = vmul.f32 %v1541, %v1219
        %v1558 = vmul.f32 %v1542, %v1219
        %v1559 = vmul.f32 %v1543, %v1219
        %v1560 = vmul.f32 %v1544, %v1219
        %v1561 = vmul.f32 %v1545, %v1219
        %v1562 = vmul.f32 %v1546, %v1219
        %v1563 = vmul.f32 %v1547, %v1219
        %v1564 = vmul.f32 %v1548, %v1219
        %v1565 = vmul.f32 %v1549, %v1219
        %v1566 = vadd.f32 %v1550, %v1220
        %v1567 = vadd.f32 %v1551, %v1220
        %v1568 = vadd.f32 %v1552, %v1220
        %v1569 = vadd.f32 %v1553, %v1220
        %v1570 = vadd.f32 %v1554, %v1220
        %v1571 = vadd.f32 %v1555, %v1220
        %v1572 = vadd.f32 %v1556, %v1220
        %v1573 = vadd.f32 %v1557, %v1220
        %v1574 = vadd.f32 %v1558, %v1220
        %v1575 = vadd.f32 %v1559, %v1220
        %v1576 = vadd.f32 %v1560, %v1220
        %v1577 = vadd.f32 %v1561, %v1220
        %v1578 = vadd.f32 %v1562, %v1220
        %v1579 = vadd.f32 %v1563, %v1220
        %v1580 = vadd.f32 %v1564, %v1220
        %v1581 = vadd.f32 %v1565, %v1220
        %v1582 = vmax.f32 %v1566, 0.0
        %v1583 = vmax.f32 %v1567, 0.0
        %v1584 = vmax.f32 %v1568, 0.0
        %v1585 = vmax.f32 %v1569, 0.0
        %v1586 = vmax.f32 %v1570, 0.0
        %v1587 = vmax.f32 %v1571, 0.0
        %v1588 = vmax.f32 %v1572, 0.0
        %v1589 = vmax.f32 %v1573, 0.0
        %v1590 = vmax.f32 %v1574, 0.0
        %v1591 = vmax.f32 %v1575, 0.0
        %v1592 = vmax.f32 %v1576, 0.0
        %v1593 = vmax.f32 %v1577, 0.0
        %v1594 = vmax.f32 %v1578, 0.0
        %v1595 = vmax.f32 %v1579, 0.0
        %v1596 = vmax.f32 %v1580, 0.0
        %v1597 = vmax.f32 %v1581, 0.0
        %v1598 = vld [vmem:[#allocation7] sm:$0xff]
        %v1599 = vld [vmem:[#allocation7 + $0x8] sm:$0xff]
        %v1600 = vld [vmem:[#allocation7 + $0x10] sm:$0xff]
        %v1601 = vld [vmem:[#allocation7 + $0x18] sm:$0xff]
        %v1602 = vld [vmem:[#allocation7 + $0x20] sm:$0xff]
        %v1603 = vld [vmem:[#allocation7 + $0x28] sm:$0xff]
        %v1604 = vld [vmem:[#allocation7 + $0x30] sm:$0xff]
        %v1605 = vld [vmem:[#allocation7 + $0x38] sm:$0xff]
        %v1606 = vld [vmem:[#allocation7 + $0x40] sm:$0xff]
        %v1607 = vld [vmem:[#allocation7 + $0x48] sm:$0xff]
        %v1608 = vld [vmem:[#allocation7 + $0x50] sm:$0xff]
        %v1609 = vld [vmem:[#allocation7 + $0x58] sm:$0xff]
        %v1610 = vld [vmem:[#allocation7 + $0x60] sm:$0xff]
        %v1611 = vld [vmem:[#allocation7 + $0x68] sm:$0xff]
        %v1612 = vld [vmem:[#allocation7 + $0x70] sm:$0xff]
        %v1613 = vld [vmem:[#allocation7 + $0x78] sm:$0xff]
        %s1614 = scalar_lea.vmem [#allocation10], 49
        %v1615 = vld [vmem:[%s1614] ss:$8 sm:$0x3]
        %s1616 = scalar_lea.vmem [#allocation10], 50
        %v1617 = vld [vmem:[%s1616] ss:$8 sm:$0x3]
        %s1618 = scalar_lea.vmem [#allocation10], 51
        %v1619 = vld [vmem:[%s1618] ss:$8 sm:$0x3]
        %v1620 = vpack.c.bf16 %v1583, %v1582
        %v1621 = vpack.c.bf16 %v1585, %v1584
        %v1622 = vpack.c.bf16 %v1587, %v1586
        %v1623 = vpack.c.bf16 %v1589, %v1588
        %v1624 = vpack.c.bf16 %v1591, %v1590
        %v1625 = vpack.c.bf16 %v1593, %v1592
        %v1626 = vpack.c.bf16 %v1595, %v1594
        %v1627 = vpack.c.bf16 %v1597, %v1596
        %v1629 = vlaneseq
        %v1630 = vshrl.u32 %v1629, 7
        %v1631 = vsub.s32 0, %v1630
        %v1632 = vrot.slane %v1615, %v1631
        %v1633 = vlaneseq
        %v1634 = vshrl.u32 %v1633, 7
        %v1635 = vsub.s32 1, %v1634
        %v1636 = vrot.slane %v1615, %v1635
        %v1655 = vunpack.c.l.b16 %v1598
        %v1656 = vunpack.c.h.b16 %v1598
        %v1657 = vunpack.c.l.b16 %v1599
        %v1658 = vunpack.c.h.b16 %v1599
        %v1659 = vunpack.c.l.b16 %v1600
        %v1660 = vunpack.c.h.b16 %v1600
        %v1661 = vunpack.c.l.b16 %v1601
        %v1662 = vunpack.c.h.b16 %v1601
        %v1663 = vunpack.c.l.b16 %v1602
        %v1664 = vunpack.c.h.b16 %v1602
        %v1665 = vunpack.c.l.b16 %v1603
        %v1666 = vunpack.c.h.b16 %v1603
        %v1667 = vunpack.c.l.b16 %v1604
        %v1668 = vunpack.c.h.b16 %v1604
        %v1669 = vunpack.c.l.b16 %v1605
        %v1670 = vunpack.c.h.b16 %v1605
        %v1671 = vunpack.c.l.b16 %v1606
        %v1672 = vunpack.c.h.b16 %v1606
        %v1673 = vunpack.c.l.b16 %v1607
        %v1674 = vunpack.c.h.b16 %v1607
        %v1675 = vunpack.c.l.b16 %v1608
        %v1676 = vunpack.c.h.b16 %v1608
        %v1677 = vunpack.c.l.b16 %v1609
        %v1678 = vunpack.c.h.b16 %v1609
        %v1679 = vunpack.c.l.b16 %v1610
        %v1680 = vunpack.c.h.b16 %v1610
        %v1681 = vunpack.c.l.b16 %v1611
        %v1682 = vunpack.c.h.b16 %v1611
        %v1683 = vunpack.c.l.b16 %v1612
        %v1684 = vunpack.c.h.b16 %v1612
        %v1685 = vunpack.c.l.b16 %v1613
        %v1686 = vunpack.c.h.b16 %v1613
        %v1687 = vpack.c.b16 %v1657, %v1655
        %v1688 = vpack.c.b16 %v1658, %v1656
        %v1689 = vpack.c.b16 %v1661, %v1659
        %v1690 = vpack.c.b16 %v1662, %v1660
        %v1691 = vpack.c.b16 %v1665, %v1663
        %v1692 = vpack.c.b16 %v1666, %v1664
        %v1693 = vpack.c.b16 %v1669, %v1667
        %v1694 = vpack.c.b16 %v1670, %v1668
        %v1695 = vpack.c.b16 %v1673, %v1671
        %v1696 = vpack.c.b16 %v1674, %v1672
        %v1697 = vpack.c.b16 %v1677, %v1675
        %v1698 = vpack.c.b16 %v1678, %v1676
        %v1699 = vpack.c.b16 %v1681, %v1679
        %v1700 = vpack.c.b16 %v1682, %v1680
        %v1701 = vpack.c.b16 %v1685, %v1683
        %v1702 = vpack.c.b16 %v1686, %v1684
        %1719 = vmatprep.subr.bf16.mxu0 %v1702
        %1720 = vmatpush1.bf16.msra.mxu0 %v1701
        %1721 = vmatprep.subr.bf16.mxu0 %v1700
        %1722 = vmatpush1.bf16.msra.mxu0 %v1699
        %1723 = vmatprep.subr.bf16.mxu0 %v1698
        %1724 = vmatpush1.bf16.msra.mxu0 %v1697
        %1725 = vmatprep.subr.bf16.mxu0 %v1696
        %1726 = vmatpush1.bf16.msra.mxu0 %v1695
        %1727 = vmatprep.subr.bf16.mxu0 %v1694
        %1728 = vmatpush1.bf16.msra.mxu0 %v1693
        %1729 = vmatprep.subr.bf16.mxu0 %v1692
        %1730 = vmatpush1.bf16.msra.mxu0 %v1691
        %1731 = vmatprep.subr.bf16.mxu0 %v1690
        %1732 = vmatpush1.bf16.msra.mxu0 %v1689
        %1733 = vmatprep.subr.bf16.mxu0 %v1688
        %1734 = vmatpush1.bf16.msra.mxu0 %v1687
        %1735 = vmatprep.subr.bf16.mxu0 0
        %1736 = vmatpush2.bf16.msra.mxu0 0
        %1737 = vmatprep.subr.bf16.mxu0 0
        %1738 = vmatpush2.bf16.msra.mxu0 0
        %1739 = vmatprep.subr.bf16.mxu0 0
        %1740 = vmatpush2.bf16.msra.mxu0 0
        %1741 = vmatprep.subr.bf16.mxu0 0
        %1742 = vmatpush2.bf16.msra.mxu0 0
        %1743 = vmatprep.subr.bf16.mxu0 0
        %1744 = vmatpush2.bf16.msra.mxu0 0
        %1745 = vmatprep.subr.bf16.mxu0 0
        %1746 = vmatpush2.bf16.msra.mxu0 0
        %1747 = vmatprep.subr.bf16.mxu0 0
        %1748 = vmatpush2.bf16.msra.mxu0 0
        %1749 = vmatprep.subr.bf16.mxu0 0
        %1750 = vmatpush2.bf16.msra.mxu0 0
        %1751 = vmatprep.mubr.bf16.mxu0 0
        %1752 = vmatmul.mubr.bf16.gmra.mxu0 %v1620
        %v1753 = vpop.f32.mrf.mxu0
        %v1754 = vadd.f32 %v1632, %v1753
        %v1755 = vpop.f32.mrf.mxu0
        %v1756 = vadd.f32 %v1636, %v1755
        %v1757 = vpop.f32.mrf.mxu0
        %v1758 = vadd.f32 %v1632, %v1757
        %v1759 = vpop.f32.mrf.mxu0
        %v1760 = vadd.f32 %v1636, %v1759
        %1761 = vmatprep.mubr.bf16.mxu0 0
        %1762 = vmatmul.mubr.bf16.gmra.mxu0 %v1621
        %v1763 = vpop.f32.mrf.mxu0
        %v1764 = vadd.f32 %v1632, %v1763
        %v1765 = vpop.f32.mrf.mxu0
        %v1766 = vadd.f32 %v1636, %v1765
        %v1767 = vpop.f32.mrf.mxu0
        %v1768 = vadd.f32 %v1632, %v1767
        %v1769 = vpop.f32.mrf.mxu0
        %v1770 = vadd.f32 %v1636, %v1769
        %1771 = vmatprep.mubr.bf16.mxu0 0
        %1772 = vmatmul.mubr.bf16.gmra.mxu0 %v1622
        %v1773 = vpop.f32.mrf.mxu0
        %v1774 = vadd.f32 %v1632, %v1773
        %v1775 = vpop.f32.mrf.mxu0
        %v1776 = vadd.f32 %v1636, %v1775
        %v1777 = vpop.f32.mrf.mxu0
        %v1778 = vadd.f32 %v1632, %v1777
        %v1779 = vpop.f32.mrf.mxu0
        %v1780 = vadd.f32 %v1636, %v1779
        %1781 = vmatprep.mubr.bf16.mxu0 0
        %1782 = vmatmul.mubr.bf16.gmra.mxu0 %v1623
        %v1783 = vpop.f32.mrf.mxu0
        %v1784 = vadd.f32 %v1632, %v1783
        %v1785 = vpop.f32.mrf.mxu0
        %v1786 = vadd.f32 %v1636, %v1785
        %v1787 = vpop.f32.mrf.mxu0
        %v1788 = vadd.f32 %v1632, %v1787
        %v1789 = vpop.f32.mrf.mxu0
        %v1790 = vadd.f32 %v1636, %v1789
        %1791 = vmatprep.mubr.bf16.mxu0 0
        %1792 = vmatmul.mubr.bf16.gmra.mxu0 %v1624
        %v1793 = vpop.f32.mrf.mxu0
        %v1794 = vadd.f32 %v1632, %v1793
        %v1795 = vpop.f32.mrf.mxu0
        %v1796 = vadd.f32 %v1636, %v1795
        %v1797 = vpop.f32.mrf.mxu0
        %v1798 = vadd.f32 %v1632, %v1797
        %v1799 = vpop.f32.mrf.mxu0
        %v1800 = vadd.f32 %v1636, %v1799
        %1801 = vmatprep.mubr.bf16.mxu0 0
        %1802 = vmatmul.mubr.bf16.gmra.mxu0 %v1625
        %v1803 = vpop.f32.mrf.mxu0
        %v1804 = vadd.f32 %v1632, %v1803
        %v1805 = vpop.f32.mrf.mxu0
        %v1806 = vadd.f32 %v1636, %v1805
        %v1807 = vpop.f32.mrf.mxu0
        %v1808 = vadd.f32 %v1632, %v1807
        %v1809 = vpop.f32.mrf.mxu0
        %v1810 = vadd.f32 %v1636, %v1809
        %1811 = vmatprep.mubr.bf16.mxu0 0
        %1812 = vmatmul.mubr.bf16.gmra.mxu0 %v1626
        %v1813 = vpop.f32.mrf.mxu0
        %v1814 = vadd.f32 %v1632, %v1813
        %v1815 = vpop.f32.mrf.mxu0
        %v1816 = vadd.f32 %v1636, %v1815
        %v1817 = vpop.f32.mrf.mxu0
        %v1818 = vadd.f32 %v1632, %v1817
        %v1819 = vpop.f32.mrf.mxu0
        %v1820 = vadd.f32 %v1636, %v1819
        %1821 = vmatprep.mubr.bf16.mxu0 0
        %1822 = vmatmul.mubr.bf16.gmra.mxu0 %v1627
        %v1823 = vpop.f32.mrf.mxu0
        %v1824 = vadd.f32 %v1632, %v1823
        %v1825 = vpop.f32.mrf.mxu0
        %v1826 = vadd.f32 %v1636, %v1825
        %v1827 = vpop.f32.mrf.mxu0
        %v1828 = vadd.f32 %v1632, %v1827
        %v1829 = vpop.f32.mrf.mxu0
        %v1830 = vadd.f32 %v1636, %v1829
        %1831 = vdwg.mxu0
        %v1832 = vadd.f32 %v1754, %v1756
        %1833 = vadd.xlane.f32.xlu0 %v1832
        %v1834 = vpop.xlane.xlu0 %1833
        %v1835 = vadd.f32 %v1758, %v1760
        %1836 = vadd.xlane.f32.xlu0 %v1835
        %v1837 = vpop.xlane.xlu0 %1836
        %v1838 = vadd.f32 %v1764, %v1766
        %1839 = vadd.xlane.f32.xlu0 %v1838
        %v1840 = vpop.xlane.xlu0 %1839
        %v1841 = vadd.f32 %v1768, %v1770
        %1842 = vadd.xlane.f32.xlu0 %v1841
        %v1843 = vpop.xlane.xlu0 %1842
        %v1844 = vadd.f32 %v1774, %v1776
        %1845 = vadd.xlane.f32.xlu0 %v1844
        %v1846 = vpop.xlane.xlu0 %1845
        %v1847 = vadd.f32 %v1778, %v1780
        %1848 = vadd.xlane.f32.xlu0 %v1847
        %v1849 = vpop.xlane.xlu0 %1848
        %v1850 = vadd.f32 %v1784, %v1786
        %1851 = vadd.xlane.f32.xlu0 %v1850
        %v1852 = vpop.xlane.xlu0 %1851
        %v1853 = vadd.f32 %v1788, %v1790
        %1854 = vadd.xlane.f32.xlu0 %v1853
        %v1855 = vpop.xlane.xlu0 %1854
        %v1856 = vadd.f32 %v1794, %v1796
        %1857 = vadd.xlane.f32.xlu0 %v1856
        %v1858 = vpop.xlane.xlu0 %1857
        %v1859 = vadd.f32 %v1798, %v1800
        %1860 = vadd.xlane.f32.xlu0 %v1859
        %v1861 = vpop.xlane.xlu0 %1860
        %v1862 = vadd.f32 %v1804, %v1806
        %1863 = vadd.xlane.f32.xlu0 %v1862
        %v1864 = vpop.xlane.xlu0 %1863
        %v1865 = vadd.f32 %v1808, %v1810
        %1866 = vadd.xlane.f32.xlu0 %v1865
        %v1867 = vpop.xlane.xlu0 %1866
        %v1868 = vadd.f32 %v1814, %v1816
        %1869 = vadd.xlane.f32.xlu0 %v1868
        %v1870 = vpop.xlane.xlu0 %1869
        %v1871 = vadd.f32 %v1818, %v1820
        %1872 = vadd.xlane.f32.xlu0 %v1871
        %v1873 = vpop.xlane.xlu0 %1872
        %v1874 = vadd.f32 %v1824, %v1826
        %1875 = vadd.xlane.f32.xlu0 %v1874
        %v1876 = vpop.xlane.xlu0 %1875
        %v1877 = vadd.f32 %v1828, %v1830
        %1878 = vadd.xlane.f32.xlu0 %v1877
        %v1879 = vpop.xlane.xlu0 %1878
        %v1880 = vrcp.pop 256.0
        %v1881 = vmul.f32 %v1834, %v1880
        %v1882 = vmul.f32 %v1837, %v1880
        %v1883 = vmul.f32 %v1840, %v1880
        %v1884 = vmul.f32 %v1843, %v1880
        %v1885 = vmul.f32 %v1846, %v1880
        %v1886 = vmul.f32 %v1849, %v1880
        %v1887 = vmul.f32 %v1852, %v1880
        %v1888 = vmul.f32 %v1855, %v1880
        %v1889 = vmul.f32 %v1858, %v1880
        %v1890 = vmul.f32 %v1861, %v1880
        %v1891 = vmul.f32 %v1864, %v1880
        %v1892 = vmul.f32 %v1867, %v1880
        %v1893 = vmul.f32 %v1870, %v1880
        %v1894 = vmul.f32 %v1873, %v1880
        %v1895 = vmul.f32 %v1876, %v1880
        %v1896 = vmul.f32 %v1879, %v1880
        %v1897 = vsub.f32 %v1754, %v1881
        %v1898 = vsub.f32 %v1756, %v1881
        %v1899 = vsub.f32 %v1758, %v1882
        %v1900 = vsub.f32 %v1760, %v1882
        %v1901 = vsub.f32 %v1764, %v1883
        %v1902 = vsub.f32 %v1766, %v1883
        %v1903 = vsub.f32 %v1768, %v1884
        %v1904 = vsub.f32 %v1770, %v1884
        %v1905 = vsub.f32 %v1774, %v1885
        %v1906 = vsub.f32 %v1776, %v1885
        %v1907 = vsub.f32 %v1778, %v1886
        %v1908 = vsub.f32 %v1780, %v1886
        %v1909 = vsub.f32 %v1784, %v1887
        %v1910 = vsub.f32 %v1786, %v1887
        %v1911 = vsub.f32 %v1788, %v1888
        %v1912 = vsub.f32 %v1790, %v1888
        %v1913 = vsub.f32 %v1794, %v1889
        %v1914 = vsub.f32 %v1796, %v1889
        %v1915 = vsub.f32 %v1798, %v1890
        %v1916 = vsub.f32 %v1800, %v1890
        %v1917 = vsub.f32 %v1804, %v1891
        %v1918 = vsub.f32 %v1806, %v1891
        %v1919 = vsub.f32 %v1808, %v1892
        %v1920 = vsub.f32 %v1810, %v1892
        %v1921 = vsub.f32 %v1814, %v1893
        %v1922 = vsub.f32 %v1816, %v1893
        %v1923 = vsub.f32 %v1818, %v1894
        %v1924 = vsub.f32 %v1820, %v1894
        %v1925 = vsub.f32 %v1824, %v1895
        %v1926 = vsub.f32 %v1826, %v1895
        %v1927 = vsub.f32 %v1828, %v1896
        %v1928 = vsub.f32 %v1830, %v1896
        %v1929 = vmul.f32 %v1897, %v1897
        %v1930 = vmul.f32 %v1898, %v1898
        %v1931 = vmul.f32 %v1899, %v1899
        %v1932 = vmul.f32 %v1900, %v1900
        %v1933 = vmul.f32 %v1901, %v1901
        %v1934 = vmul.f32 %v1902, %v1902
        %v1935 = vmul.f32 %v1903, %v1903
        %v1936 = vmul.f32 %v1904, %v1904
        %v1937 = vmul.f32 %v1905, %v1905
        %v1938 = vmul.f32 %v1906, %v1906
        %v1939 = vmul.f32 %v1907, %v1907
        %v1940 = vmul.f32 %v1908, %v1908
        %v1941 = vmul.f32 %v1909, %v1909
        %v1942 = vmul.f32 %v1910, %v1910
        %v1943 = vmul.f32 %v1911, %v1911
        %v1944 = vmul.f32 %v1912, %v1912
        %v1945 = vmul.f32 %v1913, %v1913
        %v1946 = vmul.f32 %v1914, %v1914
        %v1947 = vmul.f32 %v1915, %v1915
        %v1948 = vmul.f32 %v1916, %v1916
        %v1949 = vmul.f32 %v1917, %v1917
        %v1950 = vmul.f32 %v1918, %v1918
        %v1951 = vmul.f32 %v1919, %v1919
        %v1952 = vmul.f32 %v1920, %v1920
        %v1953 = vmul.f32 %v1921, %v1921
        %v1954 = vmul.f32 %v1922, %v1922
        %v1955 = vmul.f32 %v1923, %v1923
        %v1956 = vmul.f32 %v1924, %v1924
        %v1957 = vmul.f32 %v1925, %v1925
        %v1958 = vmul.f32 %v1926, %v1926
        %v1959 = vmul.f32 %v1927, %v1927
        %v1960 = vmul.f32 %v1928, %v1928
        %v1961 = vadd.f32 %v1929, %v1930
        %1962 = vadd.xlane.f32.xlu0 %v1961
        %v1963 = vpop.xlane.xlu0 %1962
        %v1964 = vadd.f32 %v1931, %v1932
        %1965 = vadd.xlane.f32.xlu0 %v1964
        %v1966 = vpop.xlane.xlu0 %1965
        %v1967 = vadd.f32 %v1933, %v1934
        %1968 = vadd.xlane.f32.xlu0 %v1967
        %v1969 = vpop.xlane.xlu0 %1968
        %v1970 = vadd.f32 %v1935, %v1936
        %1971 = vadd.xlane.f32.xlu0 %v1970
        %v1972 = vpop.xlane.xlu0 %1971
        %v1973 = vadd.f32 %v1937, %v1938
        %1974 = vadd.xlane.f32.xlu0 %v1973
        %v1975 = vpop.xlane.xlu0 %1974
        %v1976 = vadd.f32 %v1939, %v1940
        %1977 = vadd.xlane.f32.xlu0 %v1976
        %v1978 = vpop.xlane.xlu0 %1977
        %v1979 = vadd.f32 %v1941, %v1942
        %1980 = vadd.xlane.f32.xlu0 %v1979
        %v1981 = vpop.xlane.xlu0 %1980
        %v1982 = vadd.f32 %v1943, %v1944
        %1983 = vadd.xlane.f32.xlu0 %v1982
        %v1984 = vpop.xlane.xlu0 %1983
        %v1985 = vadd.f32 %v1945, %v1946
        %1986 = vadd.xlane.f32.xlu0 %v1985
        %v1987 = vpop.xlane.xlu0 %1986
        %v1988 = vadd.f32 %v1947, %v1948
        %1989 = vadd.xlane.f32.xlu0 %v1988
        %v1990 = vpop.xlane.xlu0 %1989
        %v1991 = vadd.f32 %v1949, %v1950
        %1992 = vadd.xlane.f32.xlu0 %v1991
        %v1993 = vpop.xlane.xlu0 %1992
        %v1994 = vadd.f32 %v1951, %v1952
        %1995 = vadd.xlane.f32.xlu0 %v1994
        %v1996 = vpop.xlane.xlu0 %1995
        %v1997 = vadd.f32 %v1953, %v1954
        %1998 = vadd.xlane.f32.xlu0 %v1997
        %v1999 = vpop.xlane.xlu0 %1998
        %v2000 = vadd.f32 %v1955, %v1956
        %2001 = vadd.xlane.f32.xlu0 %v2000
        %v2002 = vpop.xlane.xlu0 %2001
        %v2003 = vadd.f32 %v1957, %v1958
        %2004 = vadd.xlane.f32.xlu0 %v2003
        %v2005 = vpop.xlane.xlu0 %2004
        %v2006 = vadd.f32 %v1959, %v1960
        %2007 = vadd.xlane.f32.xlu0 %v2006
        %v2008 = vpop.xlane.xlu0 %2007
        %v2009 = vmul.f32 %v1963, %v1880
        %v2010 = vmul.f32 %v1966, %v1880
        %v2011 = vmul.f32 %v1969, %v1880
        %v2012 = vmul.f32 %v1972, %v1880
        %v2013 = vmul.f32 %v1975, %v1880
        %v2014 = vmul.f32 %v1978, %v1880
        %v2015 = vmul.f32 %v1981, %v1880
        %v2016 = vmul.f32 %v1984, %v1880
        %v2017 = vmul.f32 %v1987, %v1880
        %v2018 = vmul.f32 %v1990, %v1880
        %v2019 = vmul.f32 %v1993, %v1880
        %v2020 = vmul.f32 %v1996, %v1880
        %v2021 = vmul.f32 %v1999, %v1880
        %v2022 = vmul.f32 %v2002, %v1880
        %v2023 = vmul.f32 %v2005, %v1880
        %v2024 = vmul.f32 %v2008, %v1880
        %v2025 = vadd.f32 %v2009, 1e-05
        %v2026 = vadd.f32 %v2010, 1e-05
        %v2027 = vadd.f32 %v2011, 1e-05
        %v2028 = vadd.f32 %v2012, 1e-05
        %v2029 = vadd.f32 %v2013, 1e-05
        %v2030 = vadd.f32 %v2014, 1e-05
        %v2031 = vadd.f32 %v2015, 1e-05
        %v2032 = vadd.f32 %v2016, 1e-05
        %v2033 = vadd.f32 %v2017, 1e-05
        %v2034 = vadd.f32 %v2018, 1e-05
        %v2035 = vadd.f32 %v2019, 1e-05
        %v2036 = vadd.f32 %v2020, 1e-05
        %v2037 = vadd.f32 %v2021, 1e-05
        %v2038 = vadd.f32 %v2022, 1e-05
        %v2039 = vadd.f32 %v2023, 1e-05
        %v2040 = vadd.f32 %v2024, 1e-05
        %v2041 = vrsqrt.pop %v2025
        %v2042 = vrsqrt.pop %v2026
        %v2043 = vrsqrt.pop %v2027
        %v2044 = vrsqrt.pop %v2028
        %v2045 = vrsqrt.pop %v2029
        %v2046 = vrsqrt.pop %v2030
        %v2047 = vrsqrt.pop %v2031
        %v2048 = vrsqrt.pop %v2032
        %v2049 = vrsqrt.pop %v2033
        %v2050 = vrsqrt.pop %v2034
        %v2051 = vrsqrt.pop %v2035
        %v2052 = vrsqrt.pop %v2036
        %v2053 = vrsqrt.pop %v2037
        %v2054 = vrsqrt.pop %v2038
        %v2055 = vrsqrt.pop %v2039
        %v2056 = vrsqrt.pop %v2040
        %v2057 = vmul.f32 %v1897, %v2041
        %v2058 = vmul.f32 %v1898, %v2041
        %v2059 = vmul.f32 %v1899, %v2042
        %v2060 = vmul.f32 %v1900, %v2042
        %v2061 = vmul.f32 %v1901, %v2043
        %v2062 = vmul.f32 %v1902, %v2043
        %v2063 = vmul.f32 %v1903, %v2044
        %v2064 = vmul.f32 %v1904, %v2044
        %v2065 = vmul.f32 %v1905, %v2045
        %v2066 = vmul.f32 %v1906, %v2045
        %v2067 = vmul.f32 %v1907, %v2046
        %v2068 = vmul.f32 %v1908, %v2046
        %v2069 = vmul.f32 %v1909, %v2047
        %v2070 = vmul.f32 %v1910, %v2047
        %v2071 = vmul.f32 %v1911, %v2048
        %v2072 = vmul.f32 %v1912, %v2048
        %v2073 = vmul.f32 %v1913, %v2049
        %v2074 = vmul.f32 %v1914, %v2049
        %v2075 = vmul.f32 %v1915, %v2050
        %v2076 = vmul.f32 %v1916, %v2050
        %v2077 = vmul.f32 %v1917, %v2051
        %v2078 = vmul.f32 %v1918, %v2051
        %v2079 = vmul.f32 %v1919, %v2052
        %v2080 = vmul.f32 %v1920, %v2052
        %v2081 = vmul.f32 %v1921, %v2053
        %v2082 = vmul.f32 %v1922, %v2053
        %v2083 = vmul.f32 %v1923, %v2054
        %v2084 = vmul.f32 %v1924, %v2054
        %v2085 = vmul.f32 %v1925, %v2055
        %v2086 = vmul.f32 %v1926, %v2055
        %v2087 = vmul.f32 %v1927, %v2056
        %v2088 = vmul.f32 %v1928, %v2056
        %v2090 = vlaneseq
        %v2091 = vshrl.u32 %v2090, 7
        %v2092 = vsub.s32 0, %v2091
        %v2093 = vrot.slane %v1617, %v2092
        %v2094 = vlaneseq
        %v2095 = vshrl.u32 %v2094, 7
        %v2096 = vsub.s32 1, %v2095
        %v2097 = vrot.slane %v1617, %v2096
        %v2100 = vmul.f32 %v2057, %v2093
        %v2101 = vmul.f32 %v2058, %v2097
        %v2102 = vmul.f32 %v2059, %v2093
        %v2103 = vmul.f32 %v2060, %v2097
        %v2104 = vmul.f32 %v2061, %v2093
        %v2105 = vmul.f32 %v2062, %v2097
        %v2106 = vmul.f32 %v2063, %v2093
        %v2107 = vmul.f32 %v2064, %v2097
        %v2108 = vmul.f32 %v2065, %v2093
        %v2109 = vmul.f32 %v2066, %v2097
        %v2110 = vmul.f32 %v2067, %v2093
        %v2111 = vmul.f32 %v2068, %v2097
        %v2112 = vmul.f32 %v2069, %v2093
        %v2113 = vmul.f32 %v2070, %v2097
        %v2114 = vmul.f32 %v2071, %v2093
        %v2115 = vmul.f32 %v2072, %v2097
        %v2116 = vmul.f32 %v2073, %v2093
        %v2117 = vmul.f32 %v2074, %v2097
        %v2118 = vmul.f32 %v2075, %v2093
        %v2119 = vmul.f32 %v2076, %v2097
        %v2120 = vmul.f32 %v2077, %v2093
        %v2121 = vmul.f32 %v2078, %v2097
        %v2122 = vmul.f32 %v2079, %v2093
        %v2123 = vmul.f32 %v2080, %v2097
        %v2124 = vmul.f32 %v2081, %v2093
        %v2125 = vmul.f32 %v2082, %v2097
        %v2126 = vmul.f32 %v2083, %v2093
        %v2127 = vmul.f32 %v2084, %v2097
        %v2128 = vmul.f32 %v2085, %v2093
        %v2129 = vmul.f32 %v2086, %v2097
        %v2130 = vmul.f32 %v2087, %v2093
        %v2131 = vmul.f32 %v2088, %v2097
        %v2133 = vlaneseq
        %v2134 = vshrl.u32 %v2133, 7
        %v2135 = vsub.s32 0, %v2134
        %v2136 = vrot.slane %v1619, %v2135
        %v2137 = vlaneseq
        %v2138 = vshrl.u32 %v2137, 7
        %v2139 = vsub.s32 1, %v2138
        %v2140 = vrot.slane %v1619, %v2139
        %v2143 = vadd.f32 %v2100, %v2136
        %v2144 = vadd.f32 %v2101, %v2140
        %v2145 = vadd.f32 %v2102, %v2136
        %v2146 = vadd.f32 %v2103, %v2140
        %v2147 = vadd.f32 %v2104, %v2136
        %v2148 = vadd.f32 %v2105, %v2140
        %v2149 = vadd.f32 %v2106, %v2136
        %v2150 = vadd.f32 %v2107, %v2140
        %v2151 = vadd.f32 %v2108, %v2136
        %v2152 = vadd.f32 %v2109, %v2140
        %v2153 = vadd.f32 %v2110, %v2136
        %v2154 = vadd.f32 %v2111, %v2140
        %v2155 = vadd.f32 %v2112, %v2136
        %v2156 = vadd.f32 %v2113, %v2140
        %v2157 = vadd.f32 %v2114, %v2136
        %v2158 = vadd.f32 %v2115, %v2140
        %v2159 = vadd.f32 %v2116, %v2136
        %v2160 = vadd.f32 %v2117, %v2140
        %v2161 = vadd.f32 %v2118, %v2136
        %v2162 = vadd.f32 %v2119, %v2140
        %v2163 = vadd.f32 %v2120, %v2136
        %v2164 = vadd.f32 %v2121, %v2140
        %v2165 = vadd.f32 %v2122, %v2136
        %v2166 = vadd.f32 %v2123, %v2140
        %v2167 = vadd.f32 %v2124, %v2136
        %v2168 = vadd.f32 %v2125, %v2140
        %v2169 = vadd.f32 %v2126, %v2136
        %v2170 = vadd.f32 %v2127, %v2140
        %v2171 = vadd.f32 %v2128, %v2136
        %v2172 = vadd.f32 %v2129, %v2140
        %v2173 = vadd.f32 %v2130, %v2136
        %v2174 = vadd.f32 %v2131, %v2140
        %v2175 = vmax.f32 %v2143, 0.0
        %v2176 = vmax.f32 %v2144, 0.0
        %v2177 = vmax.f32 %v2145, 0.0
        %v2178 = vmax.f32 %v2146, 0.0
        %v2179 = vmax.f32 %v2147, 0.0
        %v2180 = vmax.f32 %v2148, 0.0
        %v2181 = vmax.f32 %v2149, 0.0
        %v2182 = vmax.f32 %v2150, 0.0
        %v2183 = vmax.f32 %v2151, 0.0
        %v2184 = vmax.f32 %v2152, 0.0
        %v2185 = vmax.f32 %v2153, 0.0
        %v2186 = vmax.f32 %v2154, 0.0
        %v2187 = vmax.f32 %v2155, 0.0
        %v2188 = vmax.f32 %v2156, 0.0
        %v2189 = vmax.f32 %v2157, 0.0
        %v2190 = vmax.f32 %v2158, 0.0
        %v2191 = vmax.f32 %v2159, 0.0
        %v2192 = vmax.f32 %v2160, 0.0
        %v2193 = vmax.f32 %v2161, 0.0
        %v2194 = vmax.f32 %v2162, 0.0
        %v2195 = vmax.f32 %v2163, 0.0
        %v2196 = vmax.f32 %v2164, 0.0
        %v2197 = vmax.f32 %v2165, 0.0
        %v2198 = vmax.f32 %v2166, 0.0
        %v2199 = vmax.f32 %v2167, 0.0
        %v2200 = vmax.f32 %v2168, 0.0
        %v2201 = vmax.f32 %v2169, 0.0
        %v2202 = vmax.f32 %v2170, 0.0
        %v2203 = vmax.f32 %v2171, 0.0
        %v2204 = vmax.f32 %v2172, 0.0
        %v2205 = vmax.f32 %v2173, 0.0
        %v2206 = vmax.f32 %v2174, 0.0
        %v2207 = vld [vmem:[#allocation5 + $0x100] sm:$0xf]
        %v2208 = vld [vmem:[#allocation5 + $0x104] sm:$0xf]
        %v2209 = vld [vmem:[#allocation5 + $0x108] sm:$0xf]
        %v2210 = vld [vmem:[#allocation5 + $0x10c] sm:$0xf]
        %v2211 = vld [vmem:[#allocation5 + $0x110] sm:$0xf]
        %v2212 = vld [vmem:[#allocation5 + $0x114] sm:$0xf]
        %v2213 = vld [vmem:[#allocation5 + $0x118] sm:$0xf]
        %v2214 = vld [vmem:[#allocation5 + $0x11c] sm:$0xf]
        %v2215 = vld [vmem:[#allocation5 + $0x120] sm:$0xf]
        %v2216 = vld [vmem:[#allocation5 + $0x124] sm:$0xf]
        %v2217 = vld [vmem:[#allocation5 + $0x128] sm:$0xf]
        %v2218 = vld [vmem:[#allocation5 + $0x12c] sm:$0xf]
        %v2219 = vld [vmem:[#allocation5 + $0x130] sm:$0xf]
        %v2220 = vld [vmem:[#allocation5 + $0x134] sm:$0xf]
        %v2221 = vld [vmem:[#allocation5 + $0x138] sm:$0xf]
        %v2222 = vld [vmem:[#allocation5 + $0x13c] sm:$0xf]
        %v2223 = vld [vmem:[#allocation5 + $0x140] sm:$0xf]
        %v2224 = vld [vmem:[#allocation5 + $0x144] sm:$0xf]
        %v2225 = vld [vmem:[#allocation5 + $0x148] sm:$0xf]
        %v2226 = vld [vmem:[#allocation5 + $0x14c] sm:$0xf]
        %v2227 = vld [vmem:[#allocation5 + $0x150] sm:$0xf]
        %v2228 = vld [vmem:[#allocation5 + $0x154] sm:$0xf]
        %v2229 = vld [vmem:[#allocation5 + $0x158] sm:$0xf]
        %v2230 = vld [vmem:[#allocation5 + $0x15c] sm:$0xf]
        %v2231 = vld [vmem:[#allocation5 + $0x160] sm:$0xf]
        %v2232 = vld [vmem:[#allocation5 + $0x164] sm:$0xf]
        %v2233 = vld [vmem:[#allocation5 + $0x168] sm:$0xf]
        %v2234 = vld [vmem:[#allocation5 + $0x16c] sm:$0xf]
        %v2235 = vld [vmem:[#allocation5 + $0x170] sm:$0xf]
        %v2236 = vld [vmem:[#allocation5 + $0x174] sm:$0xf]
        %v2237 = vld [vmem:[#allocation5 + $0x178] sm:$0xf]
        %v2238 = vld [vmem:[#allocation5 + $0x17c] sm:$0xf]
        %v2239 = vld [vmem:[#allocation10 + $0x34] ss:$0 sm:$0xff]
        %v2240 = vld [vmem:[#allocation10 + $0x35] ss:$0 sm:$0xff]
        %v2241 = vld [vmem:[#allocation10 + $0x36] ss:$0 sm:$0xff]
        %v2242 = vpack.c.bf16 %v2177, %v2175
        %v2243 = vpack.c.bf16 %v2178, %v2176
        %v2244 = vpack.c.bf16 %v2181, %v2179
        %v2245 = vpack.c.bf16 %v2182, %v2180
        %v2246 = vpack.c.bf16 %v2185, %v2183
        %v2247 = vpack.c.bf16 %v2186, %v2184
        %v2248 = vpack.c.bf16 %v2189, %v2187
        %v2249 = vpack.c.bf16 %v2190, %v2188
        %v2250 = vpack.c.bf16 %v2193, %v2191
        %v2251 = vpack.c.bf16 %v2194, %v2192
        %v2252 = vpack.c.bf16 %v2197, %v2195
        %v2253 = vpack.c.bf16 %v2198, %v2196
        %v2254 = vpack.c.bf16 %v2201, %v2199
        %v2255 = vpack.c.bf16 %v2202, %v2200
        %v2256 = vpack.c.bf16 %v2205, %v2203
        %v2257 = vpack.c.bf16 %v2206, %v2204
        %v2290 = vunpack.c.l.b16 %v2207
        %v2291 = vunpack.c.l.b16 %v2208
        %v2292 = vunpack.c.l.b16 %v2209
        %v2293 = vunpack.c.l.b16 %v2210
        %v2294 = vunpack.c.l.b16 %v2211
        %v2295 = vunpack.c.l.b16 %v2212
        %v2296 = vunpack.c.l.b16 %v2213
        %v2297 = vunpack.c.l.b16 %v2214
        %v2298 = vunpack.c.l.b16 %v2215
        %v2299 = vunpack.c.l.b16 %v2216
        %v2300 = vunpack.c.l.b16 %v2217
        %v2301 = vunpack.c.l.b16 %v2218
        %v2302 = vunpack.c.l.b16 %v2219
        %v2303 = vunpack.c.l.b16 %v2220
        %v2304 = vunpack.c.l.b16 %v2221
        %v2305 = vunpack.c.l.b16 %v2222
        %v2306 = vunpack.c.l.b16 %v2223
        %v2307 = vunpack.c.l.b16 %v2224
        %v2308 = vunpack.c.l.b16 %v2225
        %v2309 = vunpack.c.l.b16 %v2226
        %v2310 = vunpack.c.l.b16 %v2227
        %v2311 = vunpack.c.l.b16 %v2228
        %v2312 = vunpack.c.l.b16 %v2229
        %v2313 = vunpack.c.l.b16 %v2230
        %v2314 = vunpack.c.l.b16 %v2231
        %v2315 = vunpack.c.l.b16 %v2232
        %v2316 = vunpack.c.l.b16 %v2233
        %v2317 = vunpack.c.l.b16 %v2234
        %v2318 = vunpack.c.l.b16 %v2235
        %v2319 = vunpack.c.l.b16 %v2236
        %v2320 = vunpack.c.l.b16 %v2237
        %v2321 = vunpack.c.l.b16 %v2238
        %v2322 = vpack.c.b16 %v2291, %v2290
        %v2323 = vpack.c.b16 %v2293, %v2292
        %v2324 = vpack.c.b16 %v2295, %v2294
        %v2325 = vpack.c.b16 %v2297, %v2296
        %v2326 = vpack.c.b16 %v2299, %v2298
        %v2327 = vpack.c.b16 %v2301, %v2300
        %v2328 = vpack.c.b16 %v2303, %v2302
        %v2329 = vpack.c.b16 %v2305, %v2304
        %v2330 = vpack.c.b16 %v2307, %v2306
        %v2331 = vpack.c.b16 %v2309, %v2308
        %v2332 = vpack.c.b16 %v2311, %v2310
        %v2333 = vpack.c.b16 %v2313, %v2312
        %v2334 = vpack.c.b16 %v2315, %v2314
        %v2335 = vpack.c.b16 %v2317, %v2316
        %v2336 = vpack.c.b16 %v2319, %v2318
        %v2337 = vpack.c.b16 %v2321, %v2320
        %2354 = vmatprep.subr.bf16.mxu0 0
        %2355 = vmatpush1.bf16.msra.mxu0 %v2329
        %2356 = vmatprep.subr.bf16.mxu0 0
        %2357 = vmatpush1.bf16.msra.mxu0 %v2328
        %2358 = vmatprep.subr.bf16.mxu0 0
        %2359 = vmatpush1.bf16.msra.mxu0 %v2327
        %2360 = vmatprep.subr.bf16.mxu0 0
        %2361 = vmatpush1.bf16.msra.mxu0 %v2326
        %2362 = vmatprep.subr.bf16.mxu0 0
        %2363 = vmatpush1.bf16.msra.mxu0 %v2325
        %2364 = vmatprep.subr.bf16.mxu0 0
        %2365 = vmatpush1.bf16.msra.mxu0 %v2324
        %2366 = vmatprep.subr.bf16.mxu0 0
        %2367 = vmatpush1.bf16.msra.mxu0 %v2323
        %2368 = vmatprep.subr.bf16.mxu0 0
        %2369 = vmatpush1.bf16.msra.mxu0 %v2322
        %2370 = vmatprep.subr.bf16.mxu0 0
        %2371 = vmatpush2.bf16.msra.mxu0 %v2337
        %2372 = vmatprep.subr.bf16.mxu0 0
        %2373 = vmatpush2.bf16.msra.mxu0 %v2336
        %2374 = vmatprep.subr.bf16.mxu0 0
        %2375 = vmatpush2.bf16.msra.mxu0 %v2335
        %2376 = vmatprep.subr.bf16.mxu0 0
        %2377 = vmatpush2.bf16.msra.mxu0 %v2334
        %2378 = vmatprep.subr.bf16.mxu0 0
        %2379 = vmatpush2.bf16.msra.mxu0 %v2333
        %2380 = vmatprep.subr.bf16.mxu0 0
        %2381 = vmatpush2.bf16.msra.mxu0 %v2332
        %2382 = vmatprep.subr.bf16.mxu0 0
        %2383 = vmatpush2.bf16.msra.mxu0 %v2331
        %2384 = vmatprep.subr.bf16.mxu0 0
        %2385 = vmatpush2.bf16.msra.mxu0 %v2330
        %2386 = vmatprep.mubr.bf16.mxu0 %v2243
        %2387 = vmatmul.mubr.bf16.gmra.mxu0 %v2242
        %v2388 = vpop.f32.mrf.mxu0
        %v2389 = vadd.f32 %v2239, %v2388
        %v2390 = vpop.f32.mrf.mxu0
        %v2391 = vpop.f32.mrf.mxu0
        %v2392 = vadd.f32 %v2239, %v2391
        %v2393 = vpop.f32.mrf.mxu0
        %2394 = vmatprep.mubr.bf16.mxu0 %v2245
        %2395 = vmatmul.mubr.bf16.gmra.mxu0 %v2244
        %v2396 = vpop.f32.mrf.mxu0
        %v2397 = vadd.f32 %v2239, %v2396
        %v2398 = vpop.f32.mrf.mxu0
        %v2399 = vpop.f32.mrf.mxu0
        %v2400 = vadd.f32 %v2239, %v2399
        %v2401 = vpop.f32.mrf.mxu0
        %2402 = vmatprep.mubr.bf16.mxu0 %v2247
        %2403 = vmatmul.mubr.bf16.gmra.mxu0 %v2246
        %v2404 = vpop.f32.mrf.mxu0
        %v2405 = vadd.f32 %v2239, %v2404
        %v2406 = vpop.f32.mrf.mxu0
        %v2407 = vpop.f32.mrf.mxu0
        %v2408 = vadd.f32 %v2239, %v2407
        %v2409 = vpop.f32.mrf.mxu0
        %2410 = vmatprep.mubr.bf16.mxu0 %v2249
        %2411 = vmatmul.mubr.bf16.gmra.mxu0 %v2248
        %v2412 = vpop.f32.mrf.mxu0
        %v2413 = vadd.f32 %v2239, %v2412
        %v2414 = vpop.f32.mrf.mxu0
        %v2415 = vpop.f32.mrf.mxu0
        %v2416 = vadd.f32 %v2239, %v2415
        %v2417 = vpop.f32.mrf.mxu0
        %2418 = vmatprep.mubr.bf16.mxu0 %v2251
        %2419 = vmatmul.mubr.bf16.gmra.mxu0 %v2250
        %v2420 = vpop.f32.mrf.mxu0
        %v2421 = vadd.f32 %v2239, %v2420
        %v2422 = vpop.f32.mrf.mxu0
        %v2423 = vpop.f32.mrf.mxu0
        %v2424 = vadd.f32 %v2239, %v2423
        %v2425 = vpop.f32.mrf.mxu0
        %2426 = vmatprep.mubr.bf16.mxu0 %v2253
        %2427 = vmatmul.mubr.bf16.gmra.mxu0 %v2252
        %v2428 = vpop.f32.mrf.mxu0
        %v2429 = vadd.f32 %v2239, %v2428
        %v2430 = vpop.f32.mrf.mxu0
        %v2431 = vpop.f32.mrf.mxu0
        %v2432 = vadd.f32 %v2239, %v2431
        %v2433 = vpop.f32.mrf.mxu0
        %2434 = vmatprep.mubr.bf16.mxu0 %v2255
        %2435 = vmatmul.mubr.bf16.gmra.mxu0 %v2254
        %v2436 = vpop.f32.mrf.mxu0
        %v2437 = vadd.f32 %v2239, %v2436
        %v2438 = vpop.f32.mrf.mxu0
        %v2439 = vpop.f32.mrf.mxu0
        %v2440 = vadd.f32 %v2239, %v2439
        %v2441 = vpop.f32.mrf.mxu0
        %2442 = vmatprep.mubr.bf16.mxu0 %v2257
        %2443 = vmatmul.mubr.bf16.gmra.mxu0 %v2256
        %v2444 = vpop.f32.mrf.mxu0
        %v2445 = vadd.f32 %v2239, %v2444
        %v2446 = vpop.f32.mrf.mxu0
        %v2447 = vpop.f32.mrf.mxu0
        %v2448 = vadd.f32 %v2239, %v2447
        %v2449 = vpop.f32.mrf.mxu0
        %2450 = vdwg.mxu0
        %2451 = vadd.xlane.f32.xlu0 %v2389
        %v2452 = vpop.xlane.xlu0 %2451
        %2453 = vadd.xlane.f32.xlu0 %v2392
        %v2454 = vpop.xlane.xlu0 %2453
        %2455 = vadd.xlane.f32.xlu0 %v2397
        %v2456 = vpop.xlane.xlu0 %2455
        %2457 = vadd.xlane.f32.xlu0 %v2400
        %v2458 = vpop.xlane.xlu0 %2457
        %2459 = vadd.xlane.f32.xlu0 %v2405
        %v2460 = vpop.xlane.xlu0 %2459
        %2461 = vadd.xlane.f32.xlu0 %v2408
        %v2462 = vpop.xlane.xlu0 %2461
        %2463 = vadd.xlane.f32.xlu0 %v2413
        %v2464 = vpop.xlane.xlu0 %2463
        %2465 = vadd.xlane.f32.xlu0 %v2416
        %v2466 = vpop.xlane.xlu0 %2465
        %2467 = vadd.xlane.f32.xlu0 %v2421
        %v2468 = vpop.xlane.xlu0 %2467
        %2469 = vadd.xlane.f32.xlu0 %v2424
        %v2470 = vpop.xlane.xlu0 %2469
        %2471 = vadd.xlane.f32.xlu0 %v2429
        %v2472 = vpop.xlane.xlu0 %2471
        %2473 = vadd.xlane.f32.xlu0 %v2432
        %v2474 = vpop.xlane.xlu0 %2473
        %2475 = vadd.xlane.f32.xlu0 %v2437
        %v2476 = vpop.xlane.xlu0 %2475
        %2477 = vadd.xlane.f32.xlu0 %v2440
        %v2478 = vpop.xlane.xlu0 %2477
        %2479 = vadd.xlane.f32.xlu0 %v2445
        %v2480 = vpop.xlane.xlu0 %2479
        %2481 = vadd.xlane.f32.xlu0 %v2448
        %v2482 = vpop.xlane.xlu0 %2481
        %v2483 = vmul.f32 %v2452, %v613
        %v2484 = vmul.f32 %v2454, %v613
        %v2485 = vmul.f32 %v2456, %v613
        %v2486 = vmul.f32 %v2458, %v613
        %v2487 = vmul.f32 %v2460, %v613
        %v2488 = vmul.f32 %v2462, %v613
        %v2489 = vmul.f32 %v2464, %v613
        %v2490 = vmul.f32 %v2466, %v613
        %v2491 = vmul.f32 %v2468, %v613
        %v2492 = vmul.f32 %v2470, %v613
        %v2493 = vmul.f32 %v2472, %v613
        %v2494 = vmul.f32 %v2474, %v613
        %v2495 = vmul.f32 %v2476, %v613
        %v2496 = vmul.f32 %v2478, %v613
        %v2497 = vmul.f32 %v2480, %v613
        %v2498 = vmul.f32 %v2482, %v613
        %v2499 = vsub.f32 %v2389, %v2483
        %v2500 = vsub.f32 %v2392, %v2484
        %v2501 = vsub.f32 %v2397, %v2485
        %v2502 = vsub.f32 %v2400, %v2486
        %v2503 = vsub.f32 %v2405, %v2487
        %v2504 = vsub.f32 %v2408, %v2488
        %v2505 = vsub.f32 %v2413, %v2489
        %v2506 = vsub.f32 %v2416, %v2490
        %v2507 = vsub.f32 %v2421, %v2491
        %v2508 = vsub.f32 %v2424, %v2492
        %v2509 = vsub.f32 %v2429, %v2493
        %v2510 = vsub.f32 %v2432, %v2494
        %v2511 = vsub.f32 %v2437, %v2495
        %v2512 = vsub.f32 %v2440, %v2496
        %v2513 = vsub.f32 %v2445, %v2497
        %v2514 = vsub.f32 %v2448, %v2498
        %v2515 = vmul.f32 %v2499, %v2499
        %v2516 = vmul.f32 %v2500, %v2500
        %v2517 = vmul.f32 %v2501, %v2501
        %v2518 = vmul.f32 %v2502, %v2502
        %v2519 = vmul.f32 %v2503, %v2503
        %v2520 = vmul.f32 %v2504, %v2504
        %v2521 = vmul.f32 %v2505, %v2505
        %v2522 = vmul.f32 %v2506, %v2506
        %v2523 = vmul.f32 %v2507, %v2507
        %v2524 = vmul.f32 %v2508, %v2508
        %v2525 = vmul.f32 %v2509, %v2509
        %v2526 = vmul.f32 %v2510, %v2510
        %v2527 = vmul.f32 %v2511, %v2511
        %v2528 = vmul.f32 %v2512, %v2512
        %v2529 = vmul.f32 %v2513, %v2513
        %v2530 = vmul.f32 %v2514, %v2514
        %2531 = vadd.xlane.f32.xlu0 %v2515
        %v2532 = vpop.xlane.xlu0 %2531
        %2533 = vadd.xlane.f32.xlu0 %v2516
        %v2534 = vpop.xlane.xlu0 %2533
        %2535 = vadd.xlane.f32.xlu0 %v2517
        %v2536 = vpop.xlane.xlu0 %2535
        %2537 = vadd.xlane.f32.xlu0 %v2518
        %v2538 = vpop.xlane.xlu0 %2537
        %2539 = vadd.xlane.f32.xlu0 %v2519
        %v2540 = vpop.xlane.xlu0 %2539
        %2541 = vadd.xlane.f32.xlu0 %v2520
        %v2542 = vpop.xlane.xlu0 %2541
        %2543 = vadd.xlane.f32.xlu0 %v2521
        %v2544 = vpop.xlane.xlu0 %2543
        %2545 = vadd.xlane.f32.xlu0 %v2522
        %v2546 = vpop.xlane.xlu0 %2545
        %2547 = vadd.xlane.f32.xlu0 %v2523
        %v2548 = vpop.xlane.xlu0 %2547
        %2549 = vadd.xlane.f32.xlu0 %v2524
        %v2550 = vpop.xlane.xlu0 %2549
        %2551 = vadd.xlane.f32.xlu0 %v2525
        %v2552 = vpop.xlane.xlu0 %2551
        %2553 = vadd.xlane.f32.xlu0 %v2526
        %v2554 = vpop.xlane.xlu0 %2553
        %2555 = vadd.xlane.f32.xlu0 %v2527
        %v2556 = vpop.xlane.xlu0 %2555
        %2557 = vadd.xlane.f32.xlu0 %v2528
        %v2558 = vpop.xlane.xlu0 %2557
        %2559 = vadd.xlane.f32.xlu0 %v2529
        %v2560 = vpop.xlane.xlu0 %2559
        %2561 = vadd.xlane.f32.xlu0 %v2530
        %v2562 = vpop.xlane.xlu0 %2561
        %v2563 = vmul.f32 %v2532, %v613
        %v2564 = vmul.f32 %v2534, %v613
        %v2565 = vmul.f32 %v2536, %v613
        %v2566 = vmul.f32 %v2538, %v613
        %v2567 = vmul.f32 %v2540, %v613
        %v2568 = vmul.f32 %v2542, %v613
        %v2569 = vmul.f32 %v2544, %v613
        %v2570 = vmul.f32 %v2546, %v613
        %v2571 = vmul.f32 %v2548, %v613
        %v2572 = vmul.f32 %v2550, %v613
        %v2573 = vmul.f32 %v2552, %v613
        %v2574 = vmul.f32 %v2554, %v613
        %v2575 = vmul.f32 %v2556, %v613
        %v2576 = vmul.f32 %v2558, %v613
        %v2577 = vmul.f32 %v2560, %v613
        %v2578 = vmul.f32 %v2562, %v613
        %v2579 = vadd.f32 %v2563, 1e-05
        %v2580 = vadd.f32 %v2564, 1e-05
        %v2581 = vadd.f32 %v2565, 1e-05
        %v2582 = vadd.f32 %v2566, 1e-05
        %v2583 = vadd.f32 %v2567, 1e-05
        %v2584 = vadd.f32 %v2568, 1e-05
        %v2585 = vadd.f32 %v2569, 1e-05
        %v2586 = vadd.f32 %v2570, 1e-05
        %v2587 = vadd.f32 %v2571, 1e-05
        %v2588 = vadd.f32 %v2572, 1e-05
        %v2589 = vadd.f32 %v2573, 1e-05
        %v2590 = vadd.f32 %v2574, 1e-05
        %v2591 = vadd.f32 %v2575, 1e-05
        %v2592 = vadd.f32 %v2576, 1e-05
        %v2593 = vadd.f32 %v2577, 1e-05
        %v2594 = vadd.f32 %v2578, 1e-05
        %v2595 = vrsqrt.pop %v2579
        %v2596 = vrsqrt.pop %v2580
        %v2597 = vrsqrt.pop %v2581
        %v2598 = vrsqrt.pop %v2582
        %v2599 = vrsqrt.pop %v2583
        %v2600 = vrsqrt.pop %v2584
        %v2601 = vrsqrt.pop %v2585
        %v2602 = vrsqrt.pop %v2586
        %v2603 = vrsqrt.pop %v2587
        %v2604 = vrsqrt.pop %v2588
        %v2605 = vrsqrt.pop %v2589
        %v2606 = vrsqrt.pop %v2590
        %v2607 = vrsqrt.pop %v2591
        %v2608 = vrsqrt.pop %v2592
        %v2609 = vrsqrt.pop %v2593
        %v2610 = vrsqrt.pop %v2594
        %v2611 = vmul.f32 %v2499, %v2595
        %v2612 = vmul.f32 %v2500, %v2596
        %v2613 = vmul.f32 %v2501, %v2597
        %v2614 = vmul.f32 %v2502, %v2598
        %v2615 = vmul.f32 %v2503, %v2599
        %v2616 = vmul.f32 %v2504, %v2600
        %v2617 = vmul.f32 %v2505, %v2601
        %v2618 = vmul.f32 %v2506, %v2602
        %v2619 = vmul.f32 %v2507, %v2603
        %v2620 = vmul.f32 %v2508, %v2604
        %v2621 = vmul.f32 %v2509, %v2605
        %v2622 = vmul.f32 %v2510, %v2606
        %v2623 = vmul.f32 %v2511, %v2607
        %v2624 = vmul.f32 %v2512, %v2608
        %v2625 = vmul.f32 %v2513, %v2609
        %v2626 = vmul.f32 %v2514, %v2610
        %v2627 = vmul.f32 %v2611, %v2240
        %v2628 = vmul.f32 %v2612, %v2240
        %v2629 = vmul.f32 %v2613, %v2240
        %v2630 = vmul.f32 %v2614, %v2240
        %v2631 = vmul.f32 %v2615, %v2240
        %v2632 = vmul.f32 %v2616, %v2240
        %v2633 = vmul.f32 %v2617, %v2240
        %v2634 = vmul.f32 %v2618, %v2240
        %v2635 = vmul.f32 %v2619, %v2240
        %v2636 = vmul.f32 %v2620, %v2240
        %v2637 = vmul.f32 %v2621, %v2240
        %v2638 = vmul.f32 %v2622, %v2240
        %v2639 = vmul.f32 %v2623, %v2240
        %v2640 = vmul.f32 %v2624, %v2240
        %v2641 = vmul.f32 %v2625, %v2240
        %v2642 = vmul.f32 %v2626, %v2240
        %v2643 = vadd.f32 %v2627, %v2241
        %v2644 = vadd.f32 %v2628, %v2241
        %v2645 = vadd.f32 %v2629, %v2241
        %v2646 = vadd.f32 %v2630, %v2241
        %v2647 = vadd.f32 %v2631, %v2241
        %v2648 = vadd.f32 %v2632, %v2241
        %v2649 = vadd.f32 %v2633, %v2241
        %v2650 = vadd.f32 %v2634, %v2241
        %v2651 = vadd.f32 %v2635, %v2241
        %v2652 = vadd.f32 %v2636, %v2241
        %v2653 = vadd.f32 %v2637, %v2241
        %v2654 = vadd.f32 %v2638, %v2241
        %v2655 = vadd.f32 %v2639, %v2241
        %v2656 = vadd.f32 %v2640, %v2241
        %v2657 = vadd.f32 %v2641, %v2241
        %v2658 = vadd.f32 %v2642, %v2241
        %v2659 = vmax.f32 %v2643, 0.0
        %v2660 = vmax.f32 %v2644, 0.0
        %v2661 = vmax.f32 %v2645, 0.0
        %v2662 = vmax.f32 %v2646, 0.0
        %v2663 = vmax.f32 %v2647, 0.0
        %v2664 = vmax.f32 %v2648, 0.0
        %v2665 = vmax.f32 %v2649, 0.0
        %v2666 = vmax.f32 %v2650, 0.0
        %v2667 = vmax.f32 %v2651, 0.0
        %v2668 = vmax.f32 %v2652, 0.0
        %v2669 = vmax.f32 %v2653, 0.0
        %v2670 = vmax.f32 %v2654, 0.0
        %v2671 = vmax.f32 %v2655, 0.0
        %v2672 = vmax.f32 %v2656, 0.0
        %v2673 = vmax.f32 %v2657, 0.0
        %v2674 = vmax.f32 %v2658, 0.0
        %v2675 = vld [vmem:[#allocation5 + $0x180] sm:$0xf]
        %v2676 = vld [vmem:[#allocation5 + $0x184] sm:$0xf]
        %v2677 = vld [vmem:[#allocation5 + $0x188] sm:$0xf]
        %v2678 = vld [vmem:[#allocation5 + $0x18c] sm:$0xf]
        %v2679 = vld [vmem:[#allocation5 + $0x190] sm:$0xf]
        %v2680 = vld [vmem:[#allocation5 + $0x194] sm:$0xf]
        %v2681 = vld [vmem:[#allocation5 + $0x198] sm:$0xf]
        %v2682 = vld [vmem:[#allocation5 + $0x19c] sm:$0xf]
        %v2683 = vld [vmem:[#allocation5 + $0x1a0] sm:$0xf]
        %v2684 = vld [vmem:[#allocation5 + $0x1a4] sm:$0xf]
        %v2685 = vld [vmem:[#allocation5 + $0x1a8] sm:$0xf]
        %v2686 = vld [vmem:[#allocation5 + $0x1ac] sm:$0xf]
        %v2687 = vld [vmem:[#allocation5 + $0x1b0] sm:$0xf]
        %v2688 = vld [vmem:[#allocation5 + $0x1b4] sm:$0xf]
        %v2689 = vld [vmem:[#allocation5 + $0x1b8] sm:$0xf]
        %v2690 = vld [vmem:[#allocation5 + $0x1bc] sm:$0xf]
        %v2691 = vld [vmem:[#allocation10 + $0x37] ss:$0 sm:$0xff]
        %v2692 = vld [vmem:[#allocation10 + $0x60] ss:$0 sm:$0xff]
        %v2693 = vld [vmem:[#allocation10 + $0x61] ss:$0 sm:$0xff]
        %v2694 = vpack.c.bf16 %v2660, %v2659
        %v2695 = vpack.c.bf16 %v2662, %v2661
        %v2696 = vpack.c.bf16 %v2664, %v2663
        %v2697 = vpack.c.bf16 %v2666, %v2665
        %v2698 = vpack.c.bf16 %v2668, %v2667
        %v2699 = vpack.c.bf16 %v2670, %v2669
        %v2700 = vpack.c.bf16 %v2672, %v2671
        %v2701 = vpack.c.bf16 %v2674, %v2673
        %v2718 = vunpack.c.l.b16 %v2675
        %v2719 = vunpack.c.l.b16 %v2676
        %v2720 = vunpack.c.l.b16 %v2677
        %v2721 = vunpack.c.l.b16 %v2678
        %v2722 = vunpack.c.l.b16 %v2679
        %v2723 = vunpack.c.l.b16 %v2680
        %v2724 = vunpack.c.l.b16 %v2681
        %v2725 = vunpack.c.l.b16 %v2682
        %v2726 = vunpack.c.l.b16 %v2683
        %v2727 = vunpack.c.l.b16 %v2684
        %v2728 = vunpack.c.l.b16 %v2685
        %v2729 = vunpack.c.l.b16 %v2686
        %v2730 = vunpack.c.l.b16 %v2687
        %v2731 = vunpack.c.l.b16 %v2688
        %v2732 = vunpack.c.l.b16 %v2689
        %v2733 = vunpack.c.l.b16 %v2690
        %v2734 = vpack.c.b16 %v2719, %v2718
        %v2735 = vpack.c.b16 %v2721, %v2720
        %v2736 = vpack.c.b16 %v2723, %v2722
        %v2737 = vpack.c.b16 %v2725, %v2724
        %v2738 = vpack.c.b16 %v2727, %v2726
        %v2739 = vpack.c.b16 %v2729, %v2728
        %v2740 = vpack.c.b16 %v2731, %v2730
        %v2741 = vpack.c.b16 %v2733, %v2732
        %2750 = vmatprep.subr.bf16.mxu0 0
        %2751 = vmatpush1.bf16.msra.mxu0 %v2741
        %2752 = vmatprep.subr.bf16.mxu0 0
        %2753 = vmatpush1.bf16.msra.mxu0 %v2740
        %2754 = vmatprep.subr.bf16.mxu0 0
        %2755 = vmatpush1.bf16.msra.mxu0 %v2739
        %2756 = vmatprep.subr.bf16.mxu0 0
        %2757 = vmatpush1.bf16.msra.mxu0 %v2738
        %2758 = vmatprep.subr.bf16.mxu0 0
        %2759 = vmatpush1.bf16.msra.mxu0 %v2737
        %2760 = vmatprep.subr.bf16.mxu0 0
        %2761 = vmatpush1.bf16.msra.mxu0 %v2736
        %2762 = vmatprep.subr.bf16.mxu0 0
        %2763 = vmatpush1.bf16.msra.mxu0 %v2735
        %2764 = vmatprep.subr.bf16.mxu0 0
        %2765 = vmatpush1.bf16.msra.mxu0 %v2734
        %2766 = vmatprep.subr.bf16.mxu0 0
        %2767 = vmatpush2.bf16.msra.mxu0 0
        %2768 = vmatprep.subr.bf16.mxu0 0
        %2769 = vmatpush2.bf16.msra.mxu0 0
        %2770 = vmatprep.subr.bf16.mxu0 0
        %2771 = vmatpush2.bf16.msra.mxu0 0
        %2772 = vmatprep.subr.bf16.mxu0 0
        %2773 = vmatpush2.bf16.msra.mxu0 0
        %2774 = vmatprep.subr.bf16.mxu0 0
        %2775 = vmatpush2.bf16.msra.mxu0 0
        %2776 = vmatprep.subr.bf16.mxu0 0
        %2777 = vmatpush2.bf16.msra.mxu0 0
        %2778 = vmatprep.subr.bf16.mxu0 0
        %2779 = vmatpush2.bf16.msra.mxu0 0
        %2780 = vmatprep.subr.bf16.mxu0 0
        %2781 = vmatpush2.bf16.msra.mxu0 0
        %2782 = vmatprep.mubr.bf16.mxu0 0
        %2783 = vmatmul.mubr.bf16.gmra.mxu0 %v2694
        %v2784 = vpop.f32.mrf.mxu0
        %v2785 = vadd.f32 %v2691, %v2784
        %v2786 = vpop.f32.mrf.mxu0
        %v2787 = vpop.f32.mrf.mxu0
        %v2788 = vadd.f32 %v2691, %v2787
        %v2789 = vpop.f32.mrf.mxu0
        %2790 = vmatprep.mubr.bf16.mxu0 0
        %2791 = vmatmul.mubr.bf16.gmra.mxu0 %v2695
        %v2792 = vpop.f32.mrf.mxu0
        %v2793 = vadd.f32 %v2691, %v2792
        %v2794 = vpop.f32.mrf.mxu0
        %v2795 = vpop.f32.mrf.mxu0
        %v2796 = vadd.f32 %v2691, %v2795
        %v2797 = vpop.f32.mrf.mxu0
        %2798 = vmatprep.mubr.bf16.mxu0 0
        %2799 = vmatmul.mubr.bf16.gmra.mxu0 %v2696
        %v2800 = vpop.f32.mrf.mxu0
        %v2801 = vadd.f32 %v2691, %v2800
        %v2802 = vpop.f32.mrf.mxu0
        %v2803 = vpop.f32.mrf.mxu0
        %v2804 = vadd.f32 %v2691, %v2803
        %v2805 = vpop.f32.mrf.mxu0
        %2806 = vmatprep.mubr.bf16.mxu0 0
        %2807 = vmatmul.mubr.bf16.gmra.mxu0 %v2697
        %v2808 = vpop.f32.mrf.mxu0
        %v2809 = vadd.f32 %v2691, %v2808
        %v2810 = vpop.f32.mrf.mxu0
        %v2811 = vpop.f32.mrf.mxu0
        %v2812 = vadd.f32 %v2691, %v2811
        %v2813 = vpop.f32.mrf.mxu0
        %2814 = vmatprep.mubr.bf16.mxu0 0
        %2815 = vmatmul.mubr.bf16.gmra.mxu0 %v2698
        %v2816 = vpop.f32.mrf.mxu0
        %v2817 = vadd.f32 %v2691, %v2816
        %v2818 = vpop.f32.mrf.mxu0
        %v2819 = vpop.f32.mrf.mxu0
        %v2820 = vadd.f32 %v2691, %v2819
        %v2821 = vpop.f32.mrf.mxu0
        %2822 = vmatprep.mubr.bf16.mxu0 0
        %2823 = vmatmul.mubr.bf16.gmra.mxu0 %v2699
        %v2824 = vpop.f32.mrf.mxu0
        %v2825 = vadd.f32 %v2691, %v2824
        %v2826 = vpop.f32.mrf.mxu0
        %v2827 = vpop.f32.mrf.mxu0
        %v2828 = vadd.f32 %v2691, %v2827
        %v2829 = vpop.f32.mrf.mxu0
        %2830 = vmatprep.mubr.bf16.mxu0 0
        %2831 = vmatmul.mubr.bf16.gmra.mxu0 %v2700
        %v2832 = vpop.f32.mrf.mxu0
        %v2833 = vadd.f32 %v2691, %v2832
        %v2834 = vpop.f32.mrf.mxu0
        %v2835 = vpop.f32.mrf.mxu0
        %v2836 = vadd.f32 %v2691, %v2835
        %v2837 = vpop.f32.mrf.mxu0
        %2838 = vmatprep.mubr.bf16.mxu0 0
        %2839 = vmatmul.mubr.bf16.gmra.mxu0 %v2701
        %v2840 = vpop.f32.mrf.mxu0
        %v2841 = vadd.f32 %v2691, %v2840
        %v2842 = vpop.f32.mrf.mxu0
        %v2843 = vpop.f32.mrf.mxu0
        %v2844 = vadd.f32 %v2691, %v2843
        %v2845 = vpop.f32.mrf.mxu0
        %2846 = vdwg.mxu0
        %2847 = vadd.xlane.f32.xlu0 %v2785
        %v2848 = vpop.xlane.xlu0 %2847
        %2849 = vadd.xlane.f32.xlu0 %v2788
        %v2850 = vpop.xlane.xlu0 %2849
        %2851 = vadd.xlane.f32.xlu0 %v2793
        %v2852 = vpop.xlane.xlu0 %2851
        %2853 = vadd.xlane.f32.xlu0 %v2796
        %v2854 = vpop.xlane.xlu0 %2853
        %2855 = vadd.xlane.f32.xlu0 %v2801
        %v2856 = vpop.xlane.xlu0 %2855
        %2857 = vadd.xlane.f32.xlu0 %v2804
        %v2858 = vpop.xlane.xlu0 %2857
        %2859 = vadd.xlane.f32.xlu0 %v2809
        %v2860 = vpop.xlane.xlu0 %2859
        %2861 = vadd.xlane.f32.xlu0 %v2812
        %v2862 = vpop.xlane.xlu0 %2861
        %2863 = vadd.xlane.f32.xlu0 %v2817
        %v2864 = vpop.xlane.xlu0 %2863
        %2865 = vadd.xlane.f32.xlu0 %v2820
        %v2866 = vpop.xlane.xlu0 %2865
        %2867 = vadd.xlane.f32.xlu0 %v2825
        %v2868 = vpop.xlane.xlu0 %2867
        %2869 = vadd.xlane.f32.xlu0 %v2828
        %v2870 = vpop.xlane.xlu0 %2869
        %2871 = vadd.xlane.f32.xlu0 %v2833
        %v2872 = vpop.xlane.xlu0 %2871
        %2873 = vadd.xlane.f32.xlu0 %v2836
        %v2874 = vpop.xlane.xlu0 %2873
        %2875 = vadd.xlane.f32.xlu0 %v2841
        %v2876 = vpop.xlane.xlu0 %2875
        %2877 = vadd.xlane.f32.xlu0 %v2844
        %v2878 = vpop.xlane.xlu0 %2877
        %v2879 = vmul.f32 %v2848, %v613
        %v2880 = vmul.f32 %v2850, %v613
        %v2881 = vmul.f32 %v2852, %v613
        %v2882 = vmul.f32 %v2854, %v613
        %v2883 = vmul.f32 %v2856, %v613
        %v2884 = vmul.f32 %v2858, %v613
        %v2885 = vmul.f32 %v2860, %v613
        %v2886 = vmul.f32 %v2862, %v613
        %v2887 = vmul.f32 %v2864, %v613
        %v2888 = vmul.f32 %v2866, %v613
        %v2889 = vmul.f32 %v2868, %v613
        %v2890 = vmul.f32 %v2870, %v613
        %v2891 = vmul.f32 %v2872, %v613
        %v2892 = vmul.f32 %v2874, %v613
        %v2893 = vmul.f32 %v2876, %v613
        %v2894 = vmul.f32 %v2878, %v613
        %v2895 = vsub.f32 %v2785, %v2879
        %v2896 = vsub.f32 %v2788, %v2880
        %v2897 = vsub.f32 %v2793, %v2881
        %v2898 = vsub.f32 %v2796, %v2882
        %v2899 = vsub.f32 %v2801, %v2883
        %v2900 = vsub.f32 %v2804, %v2884
        %v2901 = vsub.f32 %v2809, %v2885
        %v2902 = vsub.f32 %v2812, %v2886
        %v2903 = vsub.f32 %v2817, %v2887
        %v2904 = vsub.f32 %v2820, %v2888
        %v2905 = vsub.f32 %v2825, %v2889
        %v2906 = vsub.f32 %v2828, %v2890
        %v2907 = vsub.f32 %v2833, %v2891
        %v2908 = vsub.f32 %v2836, %v2892
        %v2909 = vsub.f32 %v2841, %v2893
        %v2910 = vsub.f32 %v2844, %v2894
        %v2911 = vmul.f32 %v2895, %v2895
        %v2912 = vmul.f32 %v2896, %v2896
        %v2913 = vmul.f32 %v2897, %v2897
        %v2914 = vmul.f32 %v2898, %v2898
        %v2915 = vmul.f32 %v2899, %v2899
        %v2916 = vmul.f32 %v2900, %v2900
        %v2917 = vmul.f32 %v2901, %v2901
        %v2918 = vmul.f32 %v2902, %v2902
        %v2919 = vmul.f32 %v2903, %v2903
        %v2920 = vmul.f32 %v2904, %v2904
        %v2921 = vmul.f32 %v2905, %v2905
        %v2922 = vmul.f32 %v2906, %v2906
        %v2923 = vmul.f32 %v2907, %v2907
        %v2924 = vmul.f32 %v2908, %v2908
        %v2925 = vmul.f32 %v2909, %v2909
        %v2926 = vmul.f32 %v2910, %v2910
        %2927 = vadd.xlane.f32.xlu0 %v2911
        %v2928 = vpop.xlane.xlu0 %2927
        %2929 = vadd.xlane.f32.xlu0 %v2912
        %v2930 = vpop.xlane.xlu0 %2929
        %2931 = vadd.xlane.f32.xlu0 %v2913
        %v2932 = vpop.xlane.xlu0 %2931
        %2933 = vadd.xlane.f32.xlu0 %v2914
        %v2934 = vpop.xlane.xlu0 %2933
        %2935 = vadd.xlane.f32.xlu0 %v2915
        %v2936 = vpop.xlane.xlu0 %2935
        %2937 = vadd.xlane.f32.xlu0 %v2916
        %v2938 = vpop.xlane.xlu0 %2937
        %2939 = vadd.xlane.f32.xlu0 %v2917
        %v2940 = vpop.xlane.xlu0 %2939
        %2941 = vadd.xlane.f32.xlu0 %v2918
        %v2942 = vpop.xlane.xlu0 %2941
        %2943 = vadd.xlane.f32.xlu0 %v2919
        %v2944 = vpop.xlane.xlu0 %2943
        %2945 = vadd.xlane.f32.xlu0 %v2920
        %v2946 = vpop.xlane.xlu0 %2945
        %2947 = vadd.xlane.f32.xlu0 %v2921
        %v2948 = vpop.xlane.xlu0 %2947
        %2949 = vadd.xlane.f32.xlu0 %v2922
        %v2950 = vpop.xlane.xlu0 %2949
        %2951 = vadd.xlane.f32.xlu0 %v2923
        %v2952 = vpop.xlane.xlu0 %2951
        %2953 = vadd.xlane.f32.xlu0 %v2924
        %v2954 = vpop.xlane.xlu0 %2953
        %2955 = vadd.xlane.f32.xlu0 %v2925
        %v2956 = vpop.xlane.xlu0 %2955
        %2957 = vadd.xlane.f32.xlu0 %v2926
        %v2958 = vpop.xlane.xlu0 %2957
        %v2959 = vmul.f32 %v2928, %v613
        %v2960 = vmul.f32 %v2930, %v613
        %v2961 = vmul.f32 %v2932, %v613
        %v2962 = vmul.f32 %v2934, %v613
        %v2963 = vmul.f32 %v2936, %v613
        %v2964 = vmul.f32 %v2938, %v613
        %v2965 = vmul.f32 %v2940, %v613
        %v2966 = vmul.f32 %v2942, %v613
        %v2967 = vmul.f32 %v2944, %v613
        %v2968 = vmul.f32 %v2946, %v613
        %v2969 = vmul.f32 %v2948, %v613
        %v2970 = vmul.f32 %v2950, %v613
        %v2971 = vmul.f32 %v2952, %v613
        %v2972 = vmul.f32 %v2954, %v613
        %v2973 = vmul.f32 %v2956, %v613
        %v2974 = vmul.f32 %v2958, %v613
        %v2975 = vadd.f32 %v2959, 1e-05
        %v2976 = vadd.f32 %v2960, 1e-05
        %v2977 = vadd.f32 %v2961, 1e-05
        %v2978 = vadd.f32 %v2962, 1e-05
        %v2979 = vadd.f32 %v2963, 1e-05
        %v2980 = vadd.f32 %v2964, 1e-05
        %v2981 = vadd.f32 %v2965, 1e-05
        %v2982 = vadd.f32 %v2966, 1e-05
        %v2983 = vadd.f32 %v2967, 1e-05
        %v2984 = vadd.f32 %v2968, 1e-05
        %v2985 = vadd.f32 %v2969, 1e-05
        %v2986 = vadd.f32 %v2970, 1e-05
        %v2987 = vadd.f32 %v2971, 1e-05
        %v2988 = vadd.f32 %v2972, 1e-05
        %v2989 = vadd.f32 %v2973, 1e-05
        %v2990 = vadd.f32 %v2974, 1e-05
        %v2991 = vrsqrt.pop %v2975
        %v2992 = vrsqrt.pop %v2976
        %v2993 = vrsqrt.pop %v2977
        %v2994 = vrsqrt.pop %v2978
        %v2995 = vrsqrt.pop %v2979
        %v2996 = vrsqrt.pop %v2980
        %v2997 = vrsqrt.pop %v2981
        %v2998 = vrsqrt.pop %v2982
        %v2999 = vrsqrt.pop %v2983
        %v3000 = vrsqrt.pop %v2984
        %v3001 = vrsqrt.pop %v2985
        %v3002 = vrsqrt.pop %v2986
        %v3003 = vrsqrt.pop %v2987
        %v3004 = vrsqrt.pop %v2988
        %v3005 = vrsqrt.pop %v2989
        %v3006 = vrsqrt.pop %v2990
        %v3007 = vmul.f32 %v2895, %v2991
        %v3008 = vmul.f32 %v2896, %v2992
        %v3009 = vmul.f32 %v2897, %v2993
        %v3010 = vmul.f32 %v2898, %v2994
        %v3011 = vmul.f32 %v2899, %v2995
        %v3012 = vmul.f32 %v2900, %v2996
        %v3013 = vmul.f32 %v2901, %v2997
        %v3014 = vmul.f32 %v2902, %v2998
        %v3015 = vmul.f32 %v2903, %v2999
        %v3016 = vmul.f32 %v2904, %v3000
        %v3017 = vmul.f32 %v2905, %v3001
        %v3018 = vmul.f32 %v2906, %v3002
        %v3019 = vmul.f32 %v2907, %v3003
        %v3020 = vmul.f32 %v2908, %v3004
        %v3021 = vmul.f32 %v2909, %v3005
        %v3022 = vmul.f32 %v2910, %v3006
        %v3023 = vmul.f32 %v3007, %v2692
        %v3024 = vmul.f32 %v3008, %v2692
        %v3025 = vmul.f32 %v3009, %v2692
        %v3026 = vmul.f32 %v3010, %v2692
        %v3027 = vmul.f32 %v3011, %v2692
        %v3028 = vmul.f32 %v3012, %v2692
        %v3029 = vmul.f32 %v3013, %v2692
        %v3030 = vmul.f32 %v3014, %v2692
        %v3031 = vmul.f32 %v3015, %v2692
        %v3032 = vmul.f32 %v3016, %v2692
        %v3033 = vmul.f32 %v3017, %v2692
        %v3034 = vmul.f32 %v3018, %v2692
        %v3035 = vmul.f32 %v3019, %v2692
        %v3036 = vmul.f32 %v3020, %v2692
        %v3037 = vmul.f32 %v3021, %v2692
        %v3038 = vmul.f32 %v3022, %v2692
        %v3039 = vadd.f32 %v3023, %v2693
        %v3040 = vadd.f32 %v3024, %v2693
        %v3041 = vadd.f32 %v3025, %v2693
        %v3042 = vadd.f32 %v3026, %v2693
        %v3043 = vadd.f32 %v3027, %v2693
        %v3044 = vadd.f32 %v3028, %v2693
        %v3045 = vadd.f32 %v3029, %v2693
        %v3046 = vadd.f32 %v3030, %v2693
        %v3047 = vadd.f32 %v3031, %v2693
        %v3048 = vadd.f32 %v3032, %v2693
        %v3049 = vadd.f32 %v3033, %v2693
        %v3050 = vadd.f32 %v3034, %v2693
        %v3051 = vadd.f32 %v3035, %v2693
        %v3052 = vadd.f32 %v3036, %v2693
        %v3053 = vadd.f32 %v3037, %v2693
        %v3054 = vadd.f32 %v3038, %v2693
        %v3055 = vmax.f32 %v3039, 0.0
        %v3056 = vmax.f32 %v3040, 0.0
        %v3057 = vmax.f32 %v3041, 0.0
        %v3058 = vmax.f32 %v3042, 0.0
        %v3059 = vmax.f32 %v3043, 0.0
        %v3060 = vmax.f32 %v3044, 0.0
        %v3061 = vmax.f32 %v3045, 0.0
        %v3062 = vmax.f32 %v3046, 0.0
        %v3063 = vmax.f32 %v3047, 0.0
        %v3064 = vmax.f32 %v3048, 0.0
        %v3065 = vmax.f32 %v3049, 0.0
        %v3066 = vmax.f32 %v3050, 0.0
        %v3067 = vmax.f32 %v3051, 0.0
        %v3068 = vmax.f32 %v3052, 0.0
        %v3069 = vmax.f32 %v3053, 0.0
        %v3070 = vmax.f32 %v3054, 0.0
        %v3071 = vld [vmem:[#allocation5 + $0x1c0] sm:$0xf]
        %v3072 = vld [vmem:[#allocation5 + $0x1c4] sm:$0xf]
        %v3073 = vld [vmem:[#allocation5 + $0x1c8] sm:$0xf]
        %v3074 = vld [vmem:[#allocation5 + $0x1cc] sm:$0xf]
        %v3075 = vld [vmem:[#allocation5 + $0x1d0] sm:$0xf]
        %v3076 = vld [vmem:[#allocation5 + $0x1d4] sm:$0xf]
        %v3077 = vld [vmem:[#allocation5 + $0x1d8] sm:$0xf]
        %v3078 = vld [vmem:[#allocation5 + $0x1dc] sm:$0xf]
        %v3079 = vld [vmem:[#allocation5 + $0x1e0] sm:$0xf]
        %v3080 = vld [vmem:[#allocation5 + $0x1e4] sm:$0xf]
        %v3081 = vld [vmem:[#allocation5 + $0x1e8] sm:$0xf]
        %v3082 = vld [vmem:[#allocation5 + $0x1ec] sm:$0xf]
        %v3083 = vld [vmem:[#allocation5 + $0x1f0] sm:$0xf]
        %v3084 = vld [vmem:[#allocation5 + $0x1f4] sm:$0xf]
        %v3085 = vld [vmem:[#allocation5 + $0x1f8] sm:$0xf]
        %v3086 = vld [vmem:[#allocation5 + $0x1fc] sm:$0xf]
        %v3087 = vld [vmem:[#allocation10 + $0x62] ss:$0 sm:$0xff]
        %v3088 = vld [vmem:[#allocation10 + $0x63] ss:$0 sm:$0xff]
        %v3089 = vld [vmem:[#allocation10 + $0x64] ss:$0 sm:$0xff]
        %v3090 = vpack.c.bf16 %v3056, %v3055
        %v3091 = vpack.c.bf16 %v3058, %v3057
        %v3092 = vpack.c.bf16 %v3060, %v3059
        %v3093 = vpack.c.bf16 %v3062, %v3061
        %v3094 = vpack.c.bf16 %v3064, %v3063
        %v3095 = vpack.c.bf16 %v3066, %v3065
        %v3096 = vpack.c.bf16 %v3068, %v3067
        %v3097 = vpack.c.bf16 %v3070, %v3069
        %v3114 = vunpack.c.l.b16 %v3071
        %v3115 = vunpack.c.l.b16 %v3072
        %v3116 = vunpack.c.l.b16 %v3073
        %v3117 = vunpack.c.l.b16 %v3074
        %v3118 = vunpack.c.l.b16 %v3075
        %v3119 = vunpack.c.l.b16 %v3076
        %v3120 = vunpack.c.l.b16 %v3077
        %v3121 = vunpack.c.l.b16 %v3078
        %v3122 = vunpack.c.l.b16 %v3079
        %v3123 = vunpack.c.l.b16 %v3080
        %v3124 = vunpack.c.l.b16 %v3081
        %v3125 = vunpack.c.l.b16 %v3082
        %v3126 = vunpack.c.l.b16 %v3083
        %v3127 = vunpack.c.l.b16 %v3084
        %v3128 = vunpack.c.l.b16 %v3085
        %v3129 = vunpack.c.l.b16 %v3086
        %v3130 = vpack.c.b16 %v3115, %v3114
        %v3131 = vpack.c.b16 %v3117, %v3116
        %v3132 = vpack.c.b16 %v3119, %v3118
        %v3133 = vpack.c.b16 %v3121, %v3120
        %v3134 = vpack.c.b16 %v3123, %v3122
        %v3135 = vpack.c.b16 %v3125, %v3124
        %v3136 = vpack.c.b16 %v3127, %v3126
        %v3137 = vpack.c.b16 %v3129, %v3128
        %3146 = vmatprep.subr.bf16.mxu0 0
        %3147 = vmatpush1.bf16.msra.mxu0 %v3137
        %3148 = vmatprep.subr.bf16.mxu0 0
        %3149 = vmatpush1.bf16.msra.mxu0 %v3136
        %3150 = vmatprep.subr.bf16.mxu0 0
        %3151 = vmatpush1.bf16.msra.mxu0 %v3135
        %3152 = vmatprep.subr.bf16.mxu0 0
        %3153 = vmatpush1.bf16.msra.mxu0 %v3134
        %3154 = vmatprep.subr.bf16.mxu0 0
        %3155 = vmatpush1.bf16.msra.mxu0 %v3133
        %3156 = vmatprep.subr.bf16.mxu0 0
        %3157 = vmatpush1.bf16.msra.mxu0 %v3132
        %3158 = vmatprep.subr.bf16.mxu0 0
        %3159 = vmatpush1.bf16.msra.mxu0 %v3131
        %3160 = vmatprep.subr.bf16.mxu0 0
        %3161 = vmatpush1.bf16.msra.mxu0 %v3130
        %3162 = vmatprep.subr.bf16.mxu0 0
        %3163 = vmatpush2.bf16.msra.mxu0 0
        %3164 = vmatprep.subr.bf16.mxu0 0
        %3165 = vmatpush2.bf16.msra.mxu0 0
        %3166 = vmatprep.subr.bf16.mxu0 0
        %3167 = vmatpush2.bf16.msra.mxu0 0
        %3168 = vmatprep.subr.bf16.mxu0 0
        %3169 = vmatpush2.bf16.msra.mxu0 0
        %3170 = vmatprep.subr.bf16.mxu0 0
        %3171 = vmatpush2.bf16.msra.mxu0 0
        %3172 = vmatprep.subr.bf16.mxu0 0
        %3173 = vmatpush2.bf16.msra.mxu0 0
        %3174 = vmatprep.subr.bf16.mxu0 0
        %3175 = vmatpush2.bf16.msra.mxu0 0
        %3176 = vmatprep.subr.bf16.mxu0 0
        %3177 = vmatpush2.bf16.msra.mxu0 0
        %3178 = vmatprep.mubr.bf16.mxu0 0
        %3179 = vmatmul.mubr.bf16.gmra.mxu0 %v3090
        %v3180 = vpop.f32.mrf.mxu0
        %v3181 = vadd.f32 %v3087, %v3180
        %v3182 = vpop.f32.mrf.mxu0
        %v3183 = vpop.f32.mrf.mxu0
        %v3184 = vadd.f32 %v3087, %v3183
        %v3185 = vpop.f32.mrf.mxu0
        %3186 = vmatprep.mubr.bf16.mxu0 0
        %3187 = vmatmul.mubr.bf16.gmra.mxu0 %v3091
        %v3188 = vpop.f32.mrf.mxu0
        %v3189 = vadd.f32 %v3087, %v3188
        %v3190 = vpop.f32.mrf.mxu0
        %v3191 = vpop.f32.mrf.mxu0
        %v3192 = vadd.f32 %v3087, %v3191
        %v3193 = vpop.f32.mrf.mxu0
        %3194 = vmatprep.mubr.bf16.mxu0 0
        %3195 = vmatmul.mubr.bf16.gmra.mxu0 %v3092
        %v3196 = vpop.f32.mrf.mxu0
        %v3197 = vadd.f32 %v3087, %v3196
        %v3198 = vpop.f32.mrf.mxu0
        %v3199 = vpop.f32.mrf.mxu0
        %v3200 = vadd.f32 %v3087, %v3199
        %v3201 = vpop.f32.mrf.mxu0
        %3202 = vmatprep.mubr.bf16.mxu0 0
        %3203 = vmatmul.mubr.bf16.gmra.mxu0 %v3093
        %v3204 = vpop.f32.mrf.mxu0
        %v3205 = vadd.f32 %v3087, %v3204
        %v3206 = vpop.f32.mrf.mxu0
        %v3207 = vpop.f32.mrf.mxu0
        %v3208 = vadd.f32 %v3087, %v3207
        %v3209 = vpop.f32.mrf.mxu0
        %3210 = vmatprep.mubr.bf16.mxu0 0
        %3211 = vmatmul.mubr.bf16.gmra.mxu0 %v3094
        %v3212 = vpop.f32.mrf.mxu0
        %v3213 = vadd.f32 %v3087, %v3212
        %v3214 = vpop.f32.mrf.mxu0
        %v3215 = vpop.f32.mrf.mxu0
        %v3216 = vadd.f32 %v3087, %v3215
        %v3217 = vpop.f32.mrf.mxu0
        %3218 = vmatprep.mubr.bf16.mxu0 0
        %3219 = vmatmul.mubr.bf16.gmra.mxu0 %v3095
        %v3220 = vpop.f32.mrf.mxu0
        %v3221 = vadd.f32 %v3087, %v3220
        %v3222 = vpop.f32.mrf.mxu0
        %v3223 = vpop.f32.mrf.mxu0
        %v3224 = vadd.f32 %v3087, %v3223
        %v3225 = vpop.f32.mrf.mxu0
        %3226 = vmatprep.mubr.bf16.mxu0 0
        %3227 = vmatmul.mubr.bf16.gmra.mxu0 %v3096
        %v3228 = vpop.f32.mrf.mxu0
        %v3229 = vadd.f32 %v3087, %v3228
        %v3230 = vpop.f32.mrf.mxu0
        %v3231 = vpop.f32.mrf.mxu0
        %v3232 = vadd.f32 %v3087, %v3231
        %v3233 = vpop.f32.mrf.mxu0
        %3234 = vmatprep.mubr.bf16.mxu0 0
        %3235 = vmatmul.mubr.bf16.gmra.mxu0 %v3097
        %v3236 = vpop.f32.mrf.mxu0
        %v3237 = vadd.f32 %v3087, %v3236
        %v3238 = vpop.f32.mrf.mxu0
        %v3239 = vpop.f32.mrf.mxu0
        %v3240 = vadd.f32 %v3087, %v3239
        %v3241 = vpop.f32.mrf.mxu0
        %3242 = vdwg.mxu0
        %3243 = vadd.xlane.f32.xlu0 %v3181
        %v3244 = vpop.xlane.xlu0 %3243
        %3245 = vadd.xlane.f32.xlu0 %v3184
        %v3246 = vpop.xlane.xlu0 %3245
        %3247 = vadd.xlane.f32.xlu0 %v3189
        %v3248 = vpop.xlane.xlu0 %3247
        %3249 = vadd.xlane.f32.xlu0 %v3192
        %v3250 = vpop.xlane.xlu0 %3249
        %3251 = vadd.xlane.f32.xlu0 %v3197
        %v3252 = vpop.xlane.xlu0 %3251
        %3253 = vadd.xlane.f32.xlu0 %v3200
        %v3254 = vpop.xlane.xlu0 %3253
        %3255 = vadd.xlane.f32.xlu0 %v3205
        %v3256 = vpop.xlane.xlu0 %3255
        %3257 = vadd.xlane.f32.xlu0 %v3208
        %v3258 = vpop.xlane.xlu0 %3257
        %3259 = vadd.xlane.f32.xlu0 %v3213
        %v3260 = vpop.xlane.xlu0 %3259
        %3261 = vadd.xlane.f32.xlu0 %v3216
        %v3262 = vpop.xlane.xlu0 %3261
        %3263 = vadd.xlane.f32.xlu0 %v3221
        %v3264 = vpop.xlane.xlu0 %3263
        %3265 = vadd.xlane.f32.xlu0 %v3224
        %v3266 = vpop.xlane.xlu0 %3265
        %3267 = vadd.xlane.f32.xlu0 %v3229
        %v3268 = vpop.xlane.xlu0 %3267
        %3269 = vadd.xlane.f32.xlu0 %v3232
        %v3270 = vpop.xlane.xlu0 %3269
        %3271 = vadd.xlane.f32.xlu0 %v3237
        %v3272 = vpop.xlane.xlu0 %3271
        %3273 = vadd.xlane.f32.xlu0 %v3240
        %v3274 = vpop.xlane.xlu0 %3273
        %v3275 = vmul.f32 %v3244, %v613
        %v3276 = vmul.f32 %v3246, %v613
        %v3277 = vmul.f32 %v3248, %v613
        %v3278 = vmul.f32 %v3250, %v613
        %v3279 = vmul.f32 %v3252, %v613
        %v3280 = vmul.f32 %v3254, %v613
        %v3281 = vmul.f32 %v3256, %v613
        %v3282 = vmul.f32 %v3258, %v613
        %v3283 = vmul.f32 %v3260, %v613
        %v3284 = vmul.f32 %v3262, %v613
        %v3285 = vmul.f32 %v3264, %v613
        %v3286 = vmul.f32 %v3266, %v613
        %v3287 = vmul.f32 %v3268, %v613
        %v3288 = vmul.f32 %v3270, %v613
        %v3289 = vmul.f32 %v3272, %v613
        %v3290 = vmul.f32 %v3274, %v613
        %v3291 = vsub.f32 %v3181, %v3275
        %v3292 = vsub.f32 %v3184, %v3276
        %v3293 = vsub.f32 %v3189, %v3277
        %v3294 = vsub.f32 %v3192, %v3278
        %v3295 = vsub.f32 %v3197, %v3279
        %v3296 = vsub.f32 %v3200, %v3280
        %v3297 = vsub.f32 %v3205, %v3281
        %v3298 = vsub.f32 %v3208, %v3282
        %v3299 = vsub.f32 %v3213, %v3283
        %v3300 = vsub.f32 %v3216, %v3284
        %v3301 = vsub.f32 %v3221, %v3285
        %v3302 = vsub.f32 %v3224, %v3286
        %v3303 = vsub.f32 %v3229, %v3287
        %v3304 = vsub.f32 %v3232, %v3288
        %v3305 = vsub.f32 %v3237, %v3289
        %v3306 = vsub.f32 %v3240, %v3290
        %v3307 = vmul.f32 %v3291, %v3291
        %v3308 = vmul.f32 %v3292, %v3292
        %v3309 = vmul.f32 %v3293, %v3293
        %v3310 = vmul.f32 %v3294, %v3294
        %v3311 = vmul.f32 %v3295, %v3295
        %v3312 = vmul.f32 %v3296, %v3296
        %v3313 = vmul.f32 %v3297, %v3297
        %v3314 = vmul.f32 %v3298, %v3298
        %v3315 = vmul.f32 %v3299, %v3299
        %v3316 = vmul.f32 %v3300, %v3300
        %v3317 = vmul.f32 %v3301, %v3301
        %v3318 = vmul.f32 %v3302, %v3302
        %v3319 = vmul.f32 %v3303, %v3303
        %v3320 = vmul.f32 %v3304, %v3304
        %v3321 = vmul.f32 %v3305, %v3305
        %v3322 = vmul.f32 %v3306, %v3306
        %3323 = vadd.xlane.f32.xlu0 %v3307
        %v3324 = vpop.xlane.xlu0 %3323
        %3325 = vadd.xlane.f32.xlu0 %v3308
        %v3326 = vpop.xlane.xlu0 %3325
        %3327 = vadd.xlane.f32.xlu0 %v3309
        %v3328 = vpop.xlane.xlu0 %3327
        %3329 = vadd.xlane.f32.xlu0 %v3310
        %v3330 = vpop.xlane.xlu0 %3329
        %3331 = vadd.xlane.f32.xlu0 %v3311
        %v3332 = vpop.xlane.xlu0 %3331
        %3333 = vadd.xlane.f32.xlu0 %v3312
        %v3334 = vpop.xlane.xlu0 %3333
        %3335 = vadd.xlane.f32.xlu0 %v3313
        %v3336 = vpop.xlane.xlu0 %3335
        %3337 = vadd.xlane.f32.xlu0 %v3314
        %v3338 = vpop.xlane.xlu0 %3337
        %3339 = vadd.xlane.f32.xlu0 %v3315
        %v3340 = vpop.xlane.xlu0 %3339
        %3341 = vadd.xlane.f32.xlu0 %v3316
        %v3342 = vpop.xlane.xlu0 %3341
        %3343 = vadd.xlane.f32.xlu0 %v3317
        %v3344 = vpop.xlane.xlu0 %3343
        %3345 = vadd.xlane.f32.xlu0 %v3318
        %v3346 = vpop.xlane.xlu0 %3345
        %3347 = vadd.xlane.f32.xlu0 %v3319
        %v3348 = vpop.xlane.xlu0 %3347
        %3349 = vadd.xlane.f32.xlu0 %v3320
        %v3350 = vpop.xlane.xlu0 %3349
        %3351 = vadd.xlane.f32.xlu0 %v3321
        %v3352 = vpop.xlane.xlu0 %3351
        %3353 = vadd.xlane.f32.xlu0 %v3322
        %v3354 = vpop.xlane.xlu0 %3353
        %v3355 = vmul.f32 %v3324, %v613
        %v3356 = vmul.f32 %v3326, %v613
        %v3357 = vmul.f32 %v3328, %v613
        %v3358 = vmul.f32 %v3330, %v613
        %v3359 = vmul.f32 %v3332, %v613
        %v3360 = vmul.f32 %v3334, %v613
        %v3361 = vmul.f32 %v3336, %v613
        %v3362 = vmul.f32 %v3338, %v613
        %v3363 = vmul.f32 %v3340, %v613
        %v3364 = vmul.f32 %v3342, %v613
        %v3365 = vmul.f32 %v3344, %v613
        %v3366 = vmul.f32 %v3346, %v613
        %v3367 = vmul.f32 %v3348, %v613
        %v3368 = vmul.f32 %v3350, %v613
        %v3369 = vmul.f32 %v3352, %v613
        %v3370 = vmul.f32 %v3354, %v613
        %v3371 = vadd.f32 %v3355, 1e-05
        %v3372 = vadd.f32 %v3356, 1e-05
        %v3373 = vadd.f32 %v3357, 1e-05
        %v3374 = vadd.f32 %v3358, 1e-05
        %v3375 = vadd.f32 %v3359, 1e-05
        %v3376 = vadd.f32 %v3360, 1e-05
        %v3377 = vadd.f32 %v3361, 1e-05
        %v3378 = vadd.f32 %v3362, 1e-05
        %v3379 = vadd.f32 %v3363, 1e-05
        %v3380 = vadd.f32 %v3364, 1e-05
        %v3381 = vadd.f32 %v3365, 1e-05
        %v3382 = vadd.f32 %v3366, 1e-05
        %v3383 = vadd.f32 %v3367, 1e-05
        %v3384 = vadd.f32 %v3368, 1e-05
        %v3385 = vadd.f32 %v3369, 1e-05
        %v3386 = vadd.f32 %v3370, 1e-05
        %v3387 = vrsqrt.pop %v3371
        %v3388 = vrsqrt.pop %v3372
        %v3389 = vrsqrt.pop %v3373
        %v3390 = vrsqrt.pop %v3374
        %v3391 = vrsqrt.pop %v3375
        %v3392 = vrsqrt.pop %v3376
        %v3393 = vrsqrt.pop %v3377
        %v3394 = vrsqrt.pop %v3378
        %v3395 = vrsqrt.pop %v3379
        %v3396 = vrsqrt.pop %v3380
        %v3397 = vrsqrt.pop %v3381
        %v3398 = vrsqrt.pop %v3382
        %v3399 = vrsqrt.pop %v3383
        %v3400 = vrsqrt.pop %v3384
        %v3401 = vrsqrt.pop %v3385
        %v3402 = vrsqrt.pop %v3386
        %v3403 = vmul.f32 %v3291, %v3387
        %v3404 = vmul.f32 %v3292, %v3388
        %v3405 = vmul.f32 %v3293, %v3389
        %v3406 = vmul.f32 %v3294, %v3390
        %v3407 = vmul.f32 %v3295, %v3391
        %v3408 = vmul.f32 %v3296, %v3392
        %v3409 = vmul.f32 %v3297, %v3393
        %v3410 = vmul.f32 %v3298, %v3394
        %v3411 = vmul.f32 %v3299, %v3395
        %v3412 = vmul.f32 %v3300, %v3396
        %v3413 = vmul.f32 %v3301, %v3397
        %v3414 = vmul.f32 %v3302, %v3398
        %v3415 = vmul.f32 %v3303, %v3399
        %v3416 = vmul.f32 %v3304, %v3400
        %v3417 = vmul.f32 %v3305, %v3401
        %v3418 = vmul.f32 %v3306, %v3402
        %v3419 = vmul.f32 %v3403, %v3088
        %v3420 = vmul.f32 %v3404, %v3088
        %v3421 = vmul.f32 %v3405, %v3088
        %v3422 = vmul.f32 %v3406, %v3088
        %v3423 = vmul.f32 %v3407, %v3088
        %v3424 = vmul.f32 %v3408, %v3088
        %v3425 = vmul.f32 %v3409, %v3088
        %v3426 = vmul.f32 %v3410, %v3088
        %v3427 = vmul.f32 %v3411, %v3088
        %v3428 = vmul.f32 %v3412, %v3088
        %v3429 = vmul.f32 %v3413, %v3088
        %v3430 = vmul.f32 %v3414, %v3088
        %v3431 = vmul.f32 %v3415, %v3088
        %v3432 = vmul.f32 %v3416, %v3088
        %v3433 = vmul.f32 %v3417, %v3088
        %v3434 = vmul.f32 %v3418, %v3088
        %v3435 = vadd.f32 %v3419, %v3089
        %v3436 = vadd.f32 %v3420, %v3089
        %v3437 = vadd.f32 %v3421, %v3089
        %v3438 = vadd.f32 %v3422, %v3089
        %v3439 = vadd.f32 %v3423, %v3089
        %v3440 = vadd.f32 %v3424, %v3089
        %v3441 = vadd.f32 %v3425, %v3089
        %v3442 = vadd.f32 %v3426, %v3089
        %v3443 = vadd.f32 %v3427, %v3089
        %v3444 = vadd.f32 %v3428, %v3089
        %v3445 = vadd.f32 %v3429, %v3089
        %v3446 = vadd.f32 %v3430, %v3089
        %v3447 = vadd.f32 %v3431, %v3089
        %v3448 = vadd.f32 %v3432, %v3089
        %v3449 = vadd.f32 %v3433, %v3089
        %v3450 = vadd.f32 %v3434, %v3089
        %v3451 = vmax.f32 %v3435, 0.0
        %v3452 = vmax.f32 %v3436, 0.0
        %v3453 = vmax.f32 %v3437, 0.0
        %v3454 = vmax.f32 %v3438, 0.0
        %v3455 = vmax.f32 %v3439, 0.0
        %v3456 = vmax.f32 %v3440, 0.0
        %v3457 = vmax.f32 %v3441, 0.0
        %v3458 = vmax.f32 %v3442, 0.0
        %v3459 = vmax.f32 %v3443, 0.0
        %v3460 = vmax.f32 %v3444, 0.0
        %v3461 = vmax.f32 %v3445, 0.0
        %v3462 = vmax.f32 %v3446, 0.0
        %v3463 = vmax.f32 %v3447, 0.0
        %v3464 = vmax.f32 %v3448, 0.0
        %v3465 = vmax.f32 %v3449, 0.0
        %v3466 = vmax.f32 %v3450, 0.0
        %v3467 = vld [vmem:[#allocation7 + $0x80] sm:$0xff]
        %v3468 = vld [vmem:[#allocation7 + $0x88] sm:$0xff]
        %v3469 = vld [vmem:[#allocation7 + $0x90] sm:$0xff]
        %v3470 = vld [vmem:[#allocation7 + $0x98] sm:$0xff]
        %v3471 = vld [vmem:[#allocation7 + $0xa0] sm:$0xff]
        %v3472 = vld [vmem:[#allocation7 + $0xa8] sm:$0xff]
        %v3473 = vld [vmem:[#allocation7 + $0xb0] sm:$0xff]
        %v3474 = vld [vmem:[#allocation7 + $0xb8] sm:$0xff]
        %v3475 = vld [vmem:[#allocation7 + $0xc0] sm:$0xff]
        %v3476 = vld [vmem:[#allocation7 + $0xc8] sm:$0xff]
        %v3477 = vld [vmem:[#allocation7 + $0xd0] sm:$0xff]
        %v3478 = vld [vmem:[#allocation7 + $0xd8] sm:$0xff]
        %v3479 = vld [vmem:[#allocation7 + $0xe0] sm:$0xff]
        %v3480 = vld [vmem:[#allocation7 + $0xe8] sm:$0xff]
        %v3481 = vld [vmem:[#allocation7 + $0xf0] sm:$0xff]
        %v3482 = vld [vmem:[#allocation7 + $0xf8] sm:$0xff]
        %s3483 = scalar_lea.vmem [#allocation10], 101
        %v3484 = vld [vmem:[%s3483] ss:$8 sm:$0x3]
        %s3485 = scalar_lea.vmem [#allocation10], 102
        %v3486 = vld [vmem:[%s3485] ss:$8 sm:$0x3]
        %s3487 = scalar_lea.vmem [#allocation10], 103
        %v3488 = vld [vmem:[%s3487] ss:$8 sm:$0x3]
        %v3489 = vpack.c.bf16 %v3452, %v3451
        %v3490 = vpack.c.bf16 %v3454, %v3453
        %v3491 = vpack.c.bf16 %v3456, %v3455
        %v3492 = vpack.c.bf16 %v3458, %v3457
        %v3493 = vpack.c.bf16 %v3460, %v3459
        %v3494 = vpack.c.bf16 %v3462, %v3461
        %v3495 = vpack.c.bf16 %v3464, %v3463
        %v3496 = vpack.c.bf16 %v3466, %v3465
        %v3498 = vlaneseq
        %v3499 = vshrl.u32 %v3498, 7
        %v3500 = vsub.s32 0, %v3499
        %v3501 = vrot.slane %v3484, %v3500
        %v3502 = vlaneseq
        %v3503 = vshrl.u32 %v3502, 7
        %v3504 = vsub.s32 1, %v3503
        %v3505 = vrot.slane %v3484, %v3504
        %v3524 = vunpack.c.l.b16 %v3467
        %v3525 = vunpack.c.h.b16 %v3467
        %v3526 = vunpack.c.l.b16 %v3468
        %v3527 = vunpack.c.h.b16 %v3468
        %v3528 = vunpack.c.l.b16 %v3469
        %v3529 = vunpack.c.h.b16 %v3469
        %v3530 = vunpack.c.l.b16 %v3470
        %v3531 = vunpack.c.h.b16 %v3470
        %v3532 = vunpack.c.l.b16 %v3471
        %v3533 = vunpack.c.h.b16 %v3471
        %v3534 = vunpack.c.l.b16 %v3472
        %v3535 = vunpack.c.h.b16 %v3472
        %v3536 = vunpack.c.l.b16 %v3473
        %v3537 = vunpack.c.h.b16 %v3473
        %v3538 = vunpack.c.l.b16 %v3474
        %v3539 = vunpack.c.h.b16 %v3474
        %v3540 = vunpack.c.l.b16 %v3475
        %v3541 = vunpack.c.h.b16 %v3475
        %v3542 = vunpack.c.l.b16 %v3476
        %v3543 = vunpack.c.h.b16 %v3476
        %v3544 = vunpack.c.l.b16 %v3477
        %v3545 = vunpack.c.h.b16 %v3477
        %v3546 = vunpack.c.l.b16 %v3478
        %v3547 = vunpack.c.h.b16 %v3478
        %v3548 = vunpack.c.l.b16 %v3479
        %v3549 = vunpack.c.h.b16 %v3479
        %v3550 = vunpack.c.l.b16 %v3480
        %v3551 = vunpack.c.h.b16 %v3480
        %v3552 = vunpack.c.l.b16 %v3481
        %v3553 = vunpack.c.h.b16 %v3481
        %v3554 = vunpack.c.l.b16 %v3482
        %v3555 = vunpack.c.h.b16 %v3482
        %v3556 = vpack.c.b16 %v3526, %v3524
        %v3557 = vpack.c.b16 %v3527, %v3525
        %v3558 = vpack.c.b16 %v3530, %v3528
        %v3559 = vpack.c.b16 %v3531, %v3529
        %v3560 = vpack.c.b16 %v3534, %v3532
        %v3561 = vpack.c.b16 %v3535, %v3533
        %v3562 = vpack.c.b16 %v3538, %v3536
        %v3563 = vpack.c.b16 %v3539, %v3537
        %v3564 = vpack.c.b16 %v3542, %v3540
        %v3565 = vpack.c.b16 %v3543, %v3541
        %v3566 = vpack.c.b16 %v3546, %v3544
        %v3567 = vpack.c.b16 %v3547, %v3545
        %v3568 = vpack.c.b16 %v3550, %v3548
        %v3569 = vpack.c.b16 %v3551, %v3549
        %v3570 = vpack.c.b16 %v3554, %v3552
        %v3571 = vpack.c.b16 %v3555, %v3553
        %3588 = vmatprep.subr.bf16.mxu0 %v3571
        %3589 = vmatpush1.bf16.msra.mxu0 %v3570
        %3590 = vmatprep.subr.bf16.mxu0 %v3569
        %3591 = vmatpush1.bf16.msra.mxu0 %v3568
        %3592 = vmatprep.subr.bf16.mxu0 %v3567
        %3593 = vmatpush1.bf16.msra.mxu0 %v3566
        %3594 = vmatprep.subr.bf16.mxu0 %v3565
        %3595 = vmatpush1.bf16.msra.mxu0 %v3564
        %3596 = vmatprep.subr.bf16.mxu0 %v3563
        %3597 = vmatpush1.bf16.msra.mxu0 %v3562
        %3598 = vmatprep.subr.bf16.mxu0 %v3561
        %3599 = vmatpush1.bf16.msra.mxu0 %v3560
        %3600 = vmatprep.subr.bf16.mxu0 %v3559
        %3601 = vmatpush1.bf16.msra.mxu0 %v3558
        %3602 = vmatprep.subr.bf16.mxu0 %v3557
        %3603 = vmatpush1.bf16.msra.mxu0 %v3556
        %3604 = vmatprep.subr.bf16.mxu0 0
        %3605 = vmatpush2.bf16.msra.mxu0 0
        %3606 = vmatprep.subr.bf16.mxu0 0
        %3607 = vmatpush2.bf16.msra.mxu0 0
        %3608 = vmatprep.subr.bf16.mxu0 0
        %3609 = vmatpush2.bf16.msra.mxu0 0
        %3610 = vmatprep.subr.bf16.mxu0 0
        %3611 = vmatpush2.bf16.msra.mxu0 0
        %3612 = vmatprep.subr.bf16.mxu0 0
        %3613 = vmatpush2.bf16.msra.mxu0 0
        %3614 = vmatprep.subr.bf16.mxu0 0
        %3615 = vmatpush2.bf16.msra.mxu0 0
        %3616 = vmatprep.subr.bf16.mxu0 0
        %3617 = vmatpush2.bf16.msra.mxu0 0
        %3618 = vmatprep.subr.bf16.mxu0 0
        %3619 = vmatpush2.bf16.msra.mxu0 0
        %3620 = vmatprep.mubr.bf16.mxu0 0
        %3621 = vmatmul.mubr.bf16.gmra.mxu0 %v3489
        %v3622 = vpop.f32.mrf.mxu0
        %v3623 = vadd.f32 %v3501, %v3622
        %v3624 = vpop.f32.mrf.mxu0
        %v3625 = vadd.f32 %v3505, %v3624
        %v3626 = vpop.f32.mrf.mxu0
        %v3627 = vadd.f32 %v3501, %v3626
        %v3628 = vpop.f32.mrf.mxu0
        %v3629 = vadd.f32 %v3505, %v3628
        %3630 = vmatprep.mubr.bf16.mxu0 0
        %3631 = vmatmul.mubr.bf16.gmra.mxu0 %v3490
        %v3632 = vpop.f32.mrf.mxu0
        %v3633 = vadd.f32 %v3501, %v3632
        %v3634 = vpop.f32.mrf.mxu0
        %v3635 = vadd.f32 %v3505, %v3634
        %v3636 = vpop.f32.mrf.mxu0
        %v3637 = vadd.f32 %v3501, %v3636
        %v3638 = vpop.f32.mrf.mxu0
        %v3639 = vadd.f32 %v3505, %v3638
        %3640 = vmatprep.mubr.bf16.mxu0 0
        %3641 = vmatmul.mubr.bf16.gmra.mxu0 %v3491
        %v3642 = vpop.f32.mrf.mxu0
        %v3643 = vadd.f32 %v3501, %v3642
        %v3644 = vpop.f32.mrf.mxu0
        %v3645 = vadd.f32 %v3505, %v3644
        %v3646 = vpop.f32.mrf.mxu0
        %v3647 = vadd.f32 %v3501, %v3646
        %v3648 = vpop.f32.mrf.mxu0
        %v3649 = vadd.f32 %v3505, %v3648
        %3650 = vmatprep.mubr.bf16.mxu0 0
        %3651 = vmatmul.mubr.bf16.gmra.mxu0 %v3492
        %v3652 = vpop.f32.mrf.mxu0
        %v3653 = vadd.f32 %v3501, %v3652
        %v3654 = vpop.f32.mrf.mxu0
        %v3655 = vadd.f32 %v3505, %v3654
        %v3656 = vpop.f32.mrf.mxu0
        %v3657 = vadd.f32 %v3501, %v3656
        %v3658 = vpop.f32.mrf.mxu0
        %v3659 = vadd.f32 %v3505, %v3658
        %3660 = vmatprep.mubr.bf16.mxu0 0
        %3661 = vmatmul.mubr.bf16.gmra.mxu0 %v3493
        %v3662 = vpop.f32.mrf.mxu0
        %v3663 = vadd.f32 %v3501, %v3662
        %v3664 = vpop.f32.mrf.mxu0
        %v3665 = vadd.f32 %v3505, %v3664
        %v3666 = vpop.f32.mrf.mxu0
        %v3667 = vadd.f32 %v3501, %v3666
        %v3668 = vpop.f32.mrf.mxu0
        %v3669 = vadd.f32 %v3505, %v3668
        %3670 = vmatprep.mubr.bf16.mxu0 0
        %3671 = vmatmul.mubr.bf16.gmra.mxu0 %v3494
        %v3672 = vpop.f32.mrf.mxu0
        %v3673 = vadd.f32 %v3501, %v3672
        %v3674 = vpop.f32.mrf.mxu0
        %v3675 = vadd.f32 %v3505, %v3674
        %v3676 = vpop.f32.mrf.mxu0
        %v3677 = vadd.f32 %v3501, %v3676
        %v3678 = vpop.f32.mrf.mxu0
        %v3679 = vadd.f32 %v3505, %v3678
        %3680 = vmatprep.mubr.bf16.mxu0 0
        %3681 = vmatmul.mubr.bf16.gmra.mxu0 %v3495
        %v3682 = vpop.f32.mrf.mxu0
        %v3683 = vadd.f32 %v3501, %v3682
        %v3684 = vpop.f32.mrf.mxu0
        %v3685 = vadd.f32 %v3505, %v3684
        %v3686 = vpop.f32.mrf.mxu0
        %v3687 = vadd.f32 %v3501, %v3686
        %v3688 = vpop.f32.mrf.mxu0
        %v3689 = vadd.f32 %v3505, %v3688
        %3690 = vmatprep.mubr.bf16.mxu0 0
        %3691 = vmatmul.mubr.bf16.gmra.mxu0 %v3496
        %v3692 = vpop.f32.mrf.mxu0
        %v3693 = vadd.f32 %v3501, %v3692
        %v3694 = vpop.f32.mrf.mxu0
        %v3695 = vadd.f32 %v3505, %v3694
        %v3696 = vpop.f32.mrf.mxu0
        %v3697 = vadd.f32 %v3501, %v3696
        %v3698 = vpop.f32.mrf.mxu0
        %v3699 = vadd.f32 %v3505, %v3698
        %3700 = vdwg.mxu0
        %v3701 = vadd.f32 %v3623, %v3625
        %3702 = vadd.xlane.f32.xlu0 %v3701
        %v3703 = vpop.xlane.xlu0 %3702
        %v3704 = vadd.f32 %v3627, %v3629
        %3705 = vadd.xlane.f32.xlu0 %v3704
        %v3706 = vpop.xlane.xlu0 %3705
        %v3707 = vadd.f32 %v3633, %v3635
        %3708 = vadd.xlane.f32.xlu0 %v3707
        %v3709 = vpop.xlane.xlu0 %3708
        %v3710 = vadd.f32 %v3637, %v3639
        %3711 = vadd.xlane.f32.xlu0 %v3710
        %v3712 = vpop.xlane.xlu0 %3711
        %v3713 = vadd.f32 %v3643, %v3645
        %3714 = vadd.xlane.f32.xlu0 %v3713
        %v3715 = vpop.xlane.xlu0 %3714
        %v3716 = vadd.f32 %v3647, %v3649
        %3717 = vadd.xlane.f32.xlu0 %v3716
        %v3718 = vpop.xlane.xlu0 %3717
        %v3719 = vadd.f32 %v3653, %v3655
        %3720 = vadd.xlane.f32.xlu0 %v3719
        %v3721 = vpop.xlane.xlu0 %3720
        %v3722 = vadd.f32 %v3657, %v3659
        %3723 = vadd.xlane.f32.xlu0 %v3722
        %v3724 = vpop.xlane.xlu0 %3723
        %v3725 = vadd.f32 %v3663, %v3665
        %3726 = vadd.xlane.f32.xlu0 %v3725
        %v3727 = vpop.xlane.xlu0 %3726
        %v3728 = vadd.f32 %v3667, %v3669
        %3729 = vadd.xlane.f32.xlu0 %v3728
        %v3730 = vpop.xlane.xlu0 %3729
        %v3731 = vadd.f32 %v3673, %v3675
        %3732 = vadd.xlane.f32.xlu0 %v3731
        %v3733 = vpop.xlane.xlu0 %3732
        %v3734 = vadd.f32 %v3677, %v3679
        %3735 = vadd.xlane.f32.xlu0 %v3734
        %v3736 = vpop.xlane.xlu0 %3735
        %v3737 = vadd.f32 %v3683, %v3685
        %3738 = vadd.xlane.f32.xlu0 %v3737
        %v3739 = vpop.xlane.xlu0 %3738
        %v3740 = vadd.f32 %v3687, %v3689
        %3741 = vadd.xlane.f32.xlu0 %v3740
        %v3742 = vpop.xlane.xlu0 %3741
        %v3743 = vadd.f32 %v3693, %v3695
        %3744 = vadd.xlane.f32.xlu0 %v3743
        %v3745 = vpop.xlane.xlu0 %3744
        %v3746 = vadd.f32 %v3697, %v3699
        %3747 = vadd.xlane.f32.xlu0 %v3746
        %v3748 = vpop.xlane.xlu0 %3747
        %v3749 = vmul.f32 %v3703, %v1880
        %v3750 = vmul.f32 %v3706, %v1880
        %v3751 = vmul.f32 %v3709, %v1880
        %v3752 = vmul.f32 %v3712, %v1880
        %v3753 = vmul.f32 %v3715, %v1880
        %v3754 = vmul.f32 %v3718, %v1880
        %v3755 = vmul.f32 %v3721, %v1880
        %v3756 = vmul.f32 %v3724, %v1880
        %v3757 = vmul.f32 %v3727, %v1880
        %v3758 = vmul.f32 %v3730, %v1880
        %v3759 = vmul.f32 %v3733, %v1880
        %v3760 = vmul.f32 %v3736, %v1880
        %v3761 = vmul.f32 %v3739, %v1880
        %v3762 = vmul.f32 %v3742, %v1880
        %v3763 = vmul.f32 %v3745, %v1880
        %v3764 = vmul.f32 %v3748, %v1880
        %v3765 = vsub.f32 %v3623, %v3749
        %v3766 = vsub.f32 %v3625, %v3749
        %v3767 = vsub.f32 %v3627, %v3750
        %v3768 = vsub.f32 %v3629, %v3750
        %v3769 = vsub.f32 %v3633, %v3751
        %v3770 = vsub.f32 %v3635, %v3751
        %v3771 = vsub.f32 %v3637, %v3752
        %v3772 = vsub.f32 %v3639, %v3752
        %v3773 = vsub.f32 %v3643, %v3753
        %v3774 = vsub.f32 %v3645, %v3753
        %v3775 = vsub.f32 %v3647, %v3754
        %v3776 = vsub.f32 %v3649, %v3754
        %v3777 = vsub.f32 %v3653, %v3755
        %v3778 = vsub.f32 %v3655, %v3755
        %v3779 = vsub.f32 %v3657, %v3756
        %v3780 = vsub.f32 %v3659, %v3756
        %v3781 = vsub.f32 %v3663, %v3757
        %v3782 = vsub.f32 %v3665, %v3757
        %v3783 = vsub.f32 %v3667, %v3758
        %v3784 = vsub.f32 %v3669, %v3758
        %v3785 = vsub.f32 %v3673, %v3759
        %v3786 = vsub.f32 %v3675, %v3759
        %v3787 = vsub.f32 %v3677, %v3760
        %v3788 = vsub.f32 %v3679, %v3760
        %v3789 = vsub.f32 %v3683, %v3761
        %v3790 = vsub.f32 %v3685, %v3761
        %v3791 = vsub.f32 %v3687, %v3762
        %v3792 = vsub.f32 %v3689, %v3762
        %v3793 = vsub.f32 %v3693, %v3763
        %v3794 = vsub.f32 %v3695, %v3763
        %v3795 = vsub.f32 %v3697, %v3764
        %v3796 = vsub.f32 %v3699, %v3764
        %v3797 = vmul.f32 %v3765, %v3765
        %v3798 = vmul.f32 %v3766, %v3766
        %v3799 = vmul.f32 %v3767, %v3767
        %v3800 = vmul.f32 %v3768, %v3768
        %v3801 = vmul.f32 %v3769, %v3769
        %v3802 = vmul.f32 %v3770, %v3770
        %v3803 = vmul.f32 %v3771, %v3771
        %v3804 = vmul.f32 %v3772, %v3772
        %v3805 = vmul.f32 %v3773, %v3773
        %v3806 = vmul.f32 %v3774, %v3774
        %v3807 = vmul.f32 %v3775, %v3775
        %v3808 = vmul.f32 %v3776, %v3776
        %v3809 = vmul.f32 %v3777, %v3777
        %v3810 = vmul.f32 %v3778, %v3778
        %v3811 = vmul.f32 %v3779, %v3779
        %v3812 = vmul.f32 %v3780, %v3780
        %v3813 = vmul.f32 %v3781, %v3781
        %v3814 = vmul.f32 %v3782, %v3782
        %v3815 = vmul.f32 %v3783, %v3783
        %v3816 = vmul.f32 %v3784, %v3784
        %v3817 = vmul.f32 %v3785, %v3785
        %v3818 = vmul.f32 %v3786, %v3786
        %v3819 = vmul.f32 %v3787, %v3787
        %v3820 = vmul.f32 %v3788, %v3788
        %v3821 = vmul.f32 %v3789, %v3789
        %v3822 = vmul.f32 %v3790, %v3790
        %v3823 = vmul.f32 %v3791, %v3791
        %v3824 = vmul.f32 %v3792, %v3792
        %v3825 = vmul.f32 %v3793, %v3793
        %v3826 = vmul.f32 %v3794, %v3794
        %v3827 = vmul.f32 %v3795, %v3795
        %v3828 = vmul.f32 %v3796, %v3796
        %v3829 = vadd.f32 %v3797, %v3798
        %3830 = vadd.xlane.f32.xlu0 %v3829
        %v3831 = vpop.xlane.xlu0 %3830
        %v3832 = vadd.f32 %v3799, %v3800
        %3833 = vadd.xlane.f32.xlu0 %v3832
        %v3834 = vpop.xlane.xlu0 %3833
        %v3835 = vadd.f32 %v3801, %v3802
        %3836 = vadd.xlane.f32.xlu0 %v3835
        %v3837 = vpop.xlane.xlu0 %3836
        %v3838 = vadd.f32 %v3803, %v3804
        %3839 = vadd.xlane.f32.xlu0 %v3838
        %v3840 = vpop.xlane.xlu0 %3839
        %v3841 = vadd.f32 %v3805, %v3806
        %3842 = vadd.xlane.f32.xlu0 %v3841
        %v3843 = vpop.xlane.xlu0 %3842
        %v3844 = vadd.f32 %v3807, %v3808
        %3845 = vadd.xlane.f32.xlu0 %v3844
        %v3846 = vpop.xlane.xlu0 %3845
        %v3847 = vadd.f32 %v3809, %v3810
        %3848 = vadd.xlane.f32.xlu0 %v3847
        %v3849 = vpop.xlane.xlu0 %3848
        %v3850 = vadd.f32 %v3811, %v3812
        %3851 = vadd.xlane.f32.xlu0 %v3850
        %v3852 = vpop.xlane.xlu0 %3851
        %v3853 = vadd.f32 %v3813, %v3814
        %3854 = vadd.xlane.f32.xlu0 %v3853
        %v3855 = vpop.xlane.xlu0 %3854
        %v3856 = vadd.f32 %v3815, %v3816
        %3857 = vadd.xlane.f32.xlu0 %v3856
        %v3858 = vpop.xlane.xlu0 %3857
        %v3859 = vadd.f32 %v3817, %v3818
        %3860 = vadd.xlane.f32.xlu0 %v3859
        %v3861 = vpop.xlane.xlu0 %3860
        %v3862 = vadd.f32 %v3819, %v3820
        %3863 = vadd.xlane.f32.xlu0 %v3862
        %v3864 = vpop.xlane.xlu0 %3863
        %v3865 = vadd.f32 %v3821, %v3822
        %3866 = vadd.xlane.f32.xlu0 %v3865
        %v3867 = vpop.xlane.xlu0 %3866
        %v3868 = vadd.f32 %v3823, %v3824
        %3869 = vadd.xlane.f32.xlu0 %v3868
        %v3870 = vpop.xlane.xlu0 %3869
        %v3871 = vadd.f32 %v3825, %v3826
        %3872 = vadd.xlane.f32.xlu0 %v3871
        %v3873 = vpop.xlane.xlu0 %3872
        %v3874 = vadd.f32 %v3827, %v3828
        %3875 = vadd.xlane.f32.xlu0 %v3874
        %v3876 = vpop.xlane.xlu0 %3875
        %v3877 = vmul.f32 %v3831, %v1880
        %v3878 = vmul.f32 %v3834, %v1880
        %v3879 = vmul.f32 %v3837, %v1880
        %v3880 = vmul.f32 %v3840, %v1880
        %v3881 = vmul.f32 %v3843, %v1880
        %v3882 = vmul.f32 %v3846, %v1880
        %v3883 = vmul.f32 %v3849, %v1880
        %v3884 = vmul.f32 %v3852, %v1880
        %v3885 = vmul.f32 %v3855, %v1880
        %v3886 = vmul.f32 %v3858, %v1880
        %v3887 = vmul.f32 %v3861, %v1880
        %v3888 = vmul.f32 %v3864, %v1880
        %v3889 = vmul.f32 %v3867, %v1880
        %v3890 = vmul.f32 %v3870, %v1880
        %v3891 = vmul.f32 %v3873, %v1880
        %v3892 = vmul.f32 %v3876, %v1880
        %v3893 = vadd.f32 %v3877, 1e-05
        %v3894 = vadd.f32 %v3878, 1e-05
        %v3895 = vadd.f32 %v3879, 1e-05
        %v3896 = vadd.f32 %v3880, 1e-05
        %v3897 = vadd.f32 %v3881, 1e-05
        %v3898 = vadd.f32 %v3882, 1e-05
        %v3899 = vadd.f32 %v3883, 1e-05
        %v3900 = vadd.f32 %v3884, 1e-05
        %v3901 = vadd.f32 %v3885, 1e-05
        %v3902 = vadd.f32 %v3886, 1e-05
        %v3903 = vadd.f32 %v3887, 1e-05
        %v3904 = vadd.f32 %v3888, 1e-05
        %v3905 = vadd.f32 %v3889, 1e-05
        %v3906 = vadd.f32 %v3890, 1e-05
        %v3907 = vadd.f32 %v3891, 1e-05
        %v3908 = vadd.f32 %v3892, 1e-05
        %v3909 = vrsqrt.pop %v3893
        %v3910 = vrsqrt.pop %v3894
        %v3911 = vrsqrt.pop %v3895
        %v3912 = vrsqrt.pop %v3896
        %v3913 = vrsqrt.pop %v3897
        %v3914 = vrsqrt.pop %v3898
        %v3915 = vrsqrt.pop %v3899
        %v3916 = vrsqrt.pop %v3900
        %v3917 = vrsqrt.pop %v3901
        %v3918 = vrsqrt.pop %v3902
        %v3919 = vrsqrt.pop %v3903
        %v3920 = vrsqrt.pop %v3904
        %v3921 = vrsqrt.pop %v3905
        %v3922 = vrsqrt.pop %v3906
        %v3923 = vrsqrt.pop %v3907
        %v3924 = vrsqrt.pop %v3908
        %v3925 = vmul.f32 %v3765, %v3909
        %v3926 = vmul.f32 %v3766, %v3909
        %v3927 = vmul.f32 %v3767, %v3910
        %v3928 = vmul.f32 %v3768, %v3910
        %v3929 = vmul.f32 %v3769, %v3911
        %v3930 = vmul.f32 %v3770, %v3911
        %v3931 = vmul.f32 %v3771, %v3912
        %v3932 = vmul.f32 %v3772, %v3912
        %v3933 = vmul.f32 %v3773, %v3913
        %v3934 = vmul.f32 %v3774, %v3913
        %v3935 = vmul.f32 %v3775, %v3914
        %v3936 = vmul.f32 %v3776, %v3914
        %v3937 = vmul.f32 %v3777, %v3915
        %v3938 = vmul.f32 %v3778, %v3915
        %v3939 = vmul.f32 %v3779, %v3916
        %v3940 = vmul.f32 %v3780, %v3916
        %v3941 = vmul.f32 %v3781, %v3917
        %v3942 = vmul.f32 %v3782, %v3917
        %v3943 = vmul.f32 %v3783, %v3918
        %v3944 = vmul.f32 %v3784, %v3918
        %v3945 = vmul.f32 %v3785, %v3919
        %v3946 = vmul.f32 %v3786, %v3919
        %v3947 = vmul.f32 %v3787, %v3920
        %v3948 = vmul.f32 %v3788, %v3920
        %v3949 = vmul.f32 %v3789, %v3921
        %v3950 = vmul.f32 %v3790, %v3921
        %v3951 = vmul.f32 %v3791, %v3922
        %v3952 = vmul.f32 %v3792, %v3922
        %v3953 = vmul.f32 %v3793, %v3923
        %v3954 = vmul.f32 %v3794, %v3923
        %v3955 = vmul.f32 %v3795, %v3924
        %v3956 = vmul.f32 %v3796, %v3924
        %v3958 = vlaneseq
        %v3959 = vshrl.u32 %v3958, 7
        %v3960 = vsub.s32 0, %v3959
        %v3961 = vrot.slane %v3486, %v3960
        %v3962 = vlaneseq
        %v3963 = vshrl.u32 %v3962, 7
        %v3964 = vsub.s32 1, %v3963
        %v3965 = vrot.slane %v3486, %v3964
        %v3968 = vmul.f32 %v3925, %v3961
        %v3969 = vmul.f32 %v3926, %v3965
        %v3970 = vmul.f32 %v3927, %v3961
        %v3971 = vmul.f32 %v3928, %v3965
        %v3972 = vmul.f32 %v3929, %v3961
        %v3973 = vmul.f32 %v3930, %v3965
        %v3974 = vmul.f32 %v3931, %v3961
        %v3975 = vmul.f32 %v3932, %v3965
        %v3976 = vmul.f32 %v3933, %v3961
        %v3977 = vmul.f32 %v3934, %v3965
        %v3978 = vmul.f32 %v3935, %v3961
        %v3979 = vmul.f32 %v3936, %v3965
        %v3980 = vmul.f32 %v3937, %v3961
        %v3981 = vmul.f32 %v3938, %v3965
        %v3982 = vmul.f32 %v3939, %v3961
        %v3983 = vmul.f32 %v3940, %v3965
        %v3984 = vmul.f32 %v3941, %v3961
        %v3985 = vmul.f32 %v3942, %v3965
        %v3986 = vmul.f32 %v3943, %v3961
        %v3987 = vmul.f32 %v3944, %v3965
        %v3988 = vmul.f32 %v3945, %v3961
        %v3989 = vmul.f32 %v3946, %v3965
        %v3990 = vmul.f32 %v3947, %v3961
        %v3991 = vmul.f32 %v3948, %v3965
        %v3992 = vmul.f32 %v3949, %v3961
        %v3993 = vmul.f32 %v3950, %v3965
        %v3994 = vmul.f32 %v3951, %v3961
        %v3995 = vmul.f32 %v3952, %v3965
        %v3996 = vmul.f32 %v3953, %v3961
        %v3997 = vmul.f32 %v3954, %v3965
        %v3998 = vmul.f32 %v3955, %v3961
        %v3999 = vmul.f32 %v3956, %v3965
        %v4001 = vlaneseq
        %v4002 = vshrl.u32 %v4001, 7
        %v4003 = vsub.s32 0, %v4002
        %v4004 = vrot.slane %v3488, %v4003
        %v4005 = vlaneseq
        %v4006 = vshrl.u32 %v4005, 7
        %v4007 = vsub.s32 1, %v4006
        %v4008 = vrot.slane %v3488, %v4007
        %v4011 = vadd.f32 %v3968, %v4004
        %v4012 = vadd.f32 %v3969, %v4008
        %v4013 = vadd.f32 %v3970, %v4004
        %v4014 = vadd.f32 %v3971, %v4008
        %v4015 = vadd.f32 %v3972, %v4004
        %v4016 = vadd.f32 %v3973, %v4008
        %v4017 = vadd.f32 %v3974, %v4004
        %v4018 = vadd.f32 %v3975, %v4008
        %v4019 = vadd.f32 %v3976, %v4004
        %v4020 = vadd.f32 %v3977, %v4008
        %v4021 = vadd.f32 %v3978, %v4004
        %v4022 = vadd.f32 %v3979, %v4008
        %v4023 = vadd.f32 %v3980, %v4004
        %v4024 = vadd.f32 %v3981, %v4008
        %v4025 = vadd.f32 %v3982, %v4004
        %v4026 = vadd.f32 %v3983, %v4008
        %v4027 = vadd.f32 %v3984, %v4004
        %v4028 = vadd.f32 %v3985, %v4008
        %v4029 = vadd.f32 %v3986, %v4004
        %v4030 = vadd.f32 %v3987, %v4008
        %v4031 = vadd.f32 %v3988, %v4004
        %v4032 = vadd.f32 %v3989, %v4008
        %v4033 = vadd.f32 %v3990, %v4004
        %v4034 = vadd.f32 %v3991, %v4008
        %v4035 = vadd.f32 %v3992, %v4004
        %v4036 = vadd.f32 %v3993, %v4008
        %v4037 = vadd.f32 %v3994, %v4004
        %v4038 = vadd.f32 %v3995, %v4008
        %v4039 = vadd.f32 %v3996, %v4004
        %v4040 = vadd.f32 %v3997, %v4008
        %v4041 = vadd.f32 %v3998, %v4004
        %v4042 = vadd.f32 %v3999, %v4008
        %v4043 = vmax.f32 %v4011, 0.0
        %v4044 = vmax.f32 %v4012, 0.0
        %v4045 = vmax.f32 %v4013, 0.0
        %v4046 = vmax.f32 %v4014, 0.0
        %v4047 = vmax.f32 %v4015, 0.0
        %v4048 = vmax.f32 %v4016, 0.0
        %v4049 = vmax.f32 %v4017, 0.0
        %v4050 = vmax.f32 %v4018, 0.0
        %v4051 = vmax.f32 %v4019, 0.0
        %v4052 = vmax.f32 %v4020, 0.0
        %v4053 = vmax.f32 %v4021, 0.0
        %v4054 = vmax.f32 %v4022, 0.0
        %v4055 = vmax.f32 %v4023, 0.0
        %v4056 = vmax.f32 %v4024, 0.0
        %v4057 = vmax.f32 %v4025, 0.0
        %v4058 = vmax.f32 %v4026, 0.0
        %v4059 = vmax.f32 %v4027, 0.0
        %v4060 = vmax.f32 %v4028, 0.0
        %v4061 = vmax.f32 %v4029, 0.0
        %v4062 = vmax.f32 %v4030, 0.0
        %v4063 = vmax.f32 %v4031, 0.0
        %v4064 = vmax.f32 %v4032, 0.0
        %v4065 = vmax.f32 %v4033, 0.0
        %v4066 = vmax.f32 %v4034, 0.0
        %v4067 = vmax.f32 %v4035, 0.0
        %v4068 = vmax.f32 %v4036, 0.0
        %v4069 = vmax.f32 %v4037, 0.0
        %v4070 = vmax.f32 %v4038, 0.0
        %v4071 = vmax.f32 %v4039, 0.0
        %v4072 = vmax.f32 %v4040, 0.0
        %v4073 = vmax.f32 %v4041, 0.0
        %v4074 = vmax.f32 %v4042, 0.0
        %v4075 = vld [vmem:[#allocation5 + $0x200] sm:$0xf]
        %v4076 = vld [vmem:[#allocation5 + $0x204] sm:$0xf]
        %v4077 = vld [vmem:[#allocation5 + $0x208] sm:$0xf]
        %v4078 = vld [vmem:[#allocation5 + $0x20c] sm:$0xf]
        %v4079 = vld [vmem:[#allocation5 + $0x210] sm:$0xf]
        %v4080 = vld [vmem:[#allocation5 + $0x214] sm:$0xf]
        %v4081 = vld [vmem:[#allocation5 + $0x218] sm:$0xf]
        %v4082 = vld [vmem:[#allocation5 + $0x21c] sm:$0xf]
        %v4083 = vld [vmem:[#allocation5 + $0x220] sm:$0xf]
        %v4084 = vld [vmem:[#allocation5 + $0x224] sm:$0xf]
        %v4085 = vld [vmem:[#allocation5 + $0x228] sm:$0xf]
        %v4086 = vld [vmem:[#allocation5 + $0x22c] sm:$0xf]
        %v4087 = vld [vmem:[#allocation5 + $0x230] sm:$0xf]
        %v4088 = vld [vmem:[#allocation5 + $0x234] sm:$0xf]
        %v4089 = vld [vmem:[#allocation5 + $0x238] sm:$0xf]
        %v4090 = vld [vmem:[#allocation5 + $0x23c] sm:$0xf]
        %v4091 = vld [vmem:[#allocation5 + $0x240] sm:$0xf]
        %v4092 = vld [vmem:[#allocation5 + $0x244] sm:$0xf]
        %v4093 = vld [vmem:[#allocation5 + $0x248] sm:$0xf]
        %v4094 = vld [vmem:[#allocation5 + $0x24c] sm:$0xf]
        %v4095 = vld [vmem:[#allocation5 + $0x250] sm:$0xf]
        %v4096 = vld [vmem:[#allocation5 + $0x254] sm:$0xf]
        %v4097 = vld [vmem:[#allocation5 + $0x258] sm:$0xf]
        %v4098 = vld [vmem:[#allocation5 + $0x25c] sm:$0xf]
        %v4099 = vld [vmem:[#allocation5 + $0x260] sm:$0xf]
        %v4100 = vld [vmem:[#allocation5 + $0x264] sm:$0xf]
        %v4101 = vld [vmem:[#allocation5 + $0x268] sm:$0xf]
        %v4102 = vld [vmem:[#allocation5 + $0x26c] sm:$0xf]
        %v4103 = vld [vmem:[#allocation5 + $0x270] sm:$0xf]
        %v4104 = vld [vmem:[#allocation5 + $0x274] sm:$0xf]
        %v4105 = vld [vmem:[#allocation5 + $0x278] sm:$0xf]
        %v4106 = vld [vmem:[#allocation5 + $0x27c] sm:$0xf]
        %v4107 = vld [vmem:[#allocation10 + $0x90] ss:$0 sm:$0xff]
        %v4108 = vld [vmem:[#allocation10 + $0x91] ss:$0 sm:$0xff]
        %v4109 = vld [vmem:[#allocation10 + $0x92] ss:$0 sm:$0xff]
        %v4110 = vpack.c.bf16 %v4045, %v4043
        %v4111 = vpack.c.bf16 %v4046, %v4044
        %v4112 = vpack.c.bf16 %v4049, %v4047
        %v4113 = vpack.c.bf16 %v4050, %v4048
        %v4114 = vpack.c.bf16 %v4053, %v4051
        %v4115 = vpack.c.bf16 %v4054, %v4052
        %v4116 = vpack.c.bf16 %v4057, %v4055
        %v4117 = vpack.c.bf16 %v4058, %v4056
        %v4118 = vpack.c.bf16 %v4061, %v4059
        %v4119 = vpack.c.bf16 %v4062, %v4060
        %v4120 = vpack.c.bf16 %v4065, %v4063
        %v4121 = vpack.c.bf16 %v4066, %v4064
        %v4122 = vpack.c.bf16 %v4069, %v4067
        %v4123 = vpack.c.bf16 %v4070, %v4068
        %v4124 = vpack.c.bf16 %v4073, %v4071
        %v4125 = vpack.c.bf16 %v4074, %v4072
        %v4158 = vunpack.c.l.b16 %v4075
        %v4159 = vunpack.c.l.b16 %v4076
        %v4160 = vunpack.c.l.b16 %v4077
        %v4161 = vunpack.c.l.b16 %v4078
        %v4162 = vunpack.c.l.b16 %v4079
        %v4163 = vunpack.c.l.b16 %v4080
        %v4164 = vunpack.c.l.b16 %v4081
        %v4165 = vunpack.c.l.b16 %v4082
        %v4166 = vunpack.c.l.b16 %v4083
        %v4167 = vunpack.c.l.b16 %v4084
        %v4168 = vunpack.c.l.b16 %v4085
        %v4169 = vunpack.c.l.b16 %v4086
        %v4170 = vunpack.c.l.b16 %v4087
        %v4171 = vunpack.c.l.b16 %v4088
        %v4172 = vunpack.c.l.b16 %v4089
        %v4173 = vunpack.c.l.b16 %v4090
        %v4174 = vunpack.c.l.b16 %v4091
        %v4175 = vunpack.c.l.b16 %v4092
        %v4176 = vunpack.c.l.b16 %v4093
        %v4177 = vunpack.c.l.b16 %v4094
        %v4178 = vunpack.c.l.b16 %v4095
        %v4179 = vunpack.c.l.b16 %v4096
        %v4180 = vunpack.c.l.b16 %v4097
        %v4181 = vunpack.c.l.b16 %v4098
        %v4182 = vunpack.c.l.b16 %v4099
        %v4183 = vunpack.c.l.b16 %v4100
        %v4184 = vunpack.c.l.b16 %v4101
        %v4185 = vunpack.c.l.b16 %v4102
        %v4186 = vunpack.c.l.b16 %v4103
        %v4187 = vunpack.c.l.b16 %v4104
        %v4188 = vunpack.c.l.b16 %v4105
        %v4189 = vunpack.c.l.b16 %v4106
        %v4190 = vpack.c.b16 %v4159, %v4158
        %v4191 = vpack.c.b16 %v4161, %v4160
        %v4192 = vpack.c.b16 %v4163, %v4162
        %v4193 = vpack.c.b16 %v4165, %v4164
        %v4194 = vpack.c.b16 %v4167, %v4166
        %v4195 = vpack.c.b16 %v4169, %v4168
        %v4196 = vpack.c.b16 %v4171, %v4170
        %v4197 = vpack.c.b16 %v4173, %v4172
        %v4198 = vpack.c.b16 %v4175, %v4174
        %v4199 = vpack.c.b16 %v4177, %v4176
        %v4200 = vpack.c.b16 %v4179, %v4178
        %v4201 = vpack.c.b16 %v4181, %v4180
        %v4202 = vpack.c.b16 %v4183, %v4182
        %v4203 = vpack.c.b16 %v4185, %v4184
        %v4204 = vpack.c.b16 %v4187, %v4186
        %v4205 = vpack.c.b16 %v4189, %v4188
        %4222 = vmatprep.subr.bf16.mxu0 0
        %4223 = vmatpush1.bf16.msra.mxu0 %v4197
        %4224 = vmatprep.subr.bf16.mxu0 0
        %4225 = vmatpush1.bf16.msra.mxu0 %v4196
        %4226 = vmatprep.subr.bf16.mxu0 0
        %4227 = vmatpush1.bf16.msra.mxu0 %v4195
        %4228 = vmatprep.subr.bf16.mxu0 0
        %4229 = vmatpush1.bf16.msra.mxu0 %v4194
        %4230 = vmatprep.subr.bf16.mxu0 0
        %4231 = vmatpush1.bf16.msra.mxu0 %v4193
        %4232 = vmatprep.subr.bf16.mxu0 0
        %4233 = vmatpush1.bf16.msra.mxu0 %v4192
        %4234 = vmatprep.subr.bf16.mxu0 0
        %4235 = vmatpush1.bf16.msra.mxu0 %v4191
        %4236 = vmatprep.subr.bf16.mxu0 0
        %4237 = vmatpush1.bf16.msra.mxu0 %v4190
        %4238 = vmatprep.subr.bf16.mxu0 0
        %4239 = vmatpush2.bf16.msra.mxu0 %v4205
        %4240 = vmatprep.subr.bf16.mxu0 0
        %4241 = vmatpush2.bf16.msra.mxu0 %v4204
        %4242 = vmatprep.subr.bf16.mxu0 0
        %4243 = vmatpush2.bf16.msra.mxu0 %v4203
        %4244 = vmatprep.subr.bf16.mxu0 0
        %4245 = vmatpush2.bf16.msra.mxu0 %v4202
        %4246 = vmatprep.subr.bf16.mxu0 0
        %4247 = vmatpush2.bf16.msra.mxu0 %v4201
        %4248 = vmatprep.subr.bf16.mxu0 0
        %4249 = vmatpush2.bf16.msra.mxu0 %v4200
        %4250 = vmatprep.subr.bf16.mxu0 0
        %4251 = vmatpush2.bf16.msra.mxu0 %v4199
        %4252 = vmatprep.subr.bf16.mxu0 0
        %4253 = vmatpush2.bf16.msra.mxu0 %v4198
        %4254 = vmatprep.mubr.bf16.mxu0 %v4111
        %4255 = vmatmul.mubr.bf16.gmra.mxu0 %v4110
        %v4256 = vpop.f32.mrf.mxu0
        %v4257 = vadd.f32 %v4107, %v4256
        %v4258 = vpop.f32.mrf.mxu0
        %v4259 = vpop.f32.mrf.mxu0
        %v4260 = vadd.f32 %v4107, %v4259
        %v4261 = vpop.f32.mrf.mxu0
        %4262 = vmatprep.mubr.bf16.mxu0 %v4113
        %4263 = vmatmul.mubr.bf16.gmra.mxu0 %v4112
        %v4264 = vpop.f32.mrf.mxu0
        %v4265 = vadd.f32 %v4107, %v4264
        %v4266 = vpop.f32.mrf.mxu0
        %v4267 = vpop.f32.mrf.mxu0
        %v4268 = vadd.f32 %v4107, %v4267
        %v4269 = vpop.f32.mrf.mxu0
        %4270 = vmatprep.mubr.bf16.mxu0 %v4115
        %4271 = vmatmul.mubr.bf16.gmra.mxu0 %v4114
        %v4272 = vpop.f32.mrf.mxu0
        %v4273 = vadd.f32 %v4107, %v4272
        %v4274 = vpop.f32.mrf.mxu0
        %v4275 = vpop.f32.mrf.mxu0
        %v4276 = vadd.f32 %v4107, %v4275
        %v4277 = vpop.f32.mrf.mxu0
        %4278 = vmatprep.mubr.bf16.mxu0 %v4117
        %4279 = vmatmul.mubr.bf16.gmra.mxu0 %v4116
        %v4280 = vpop.f32.mrf.mxu0
        %v4281 = vadd.f32 %v4107, %v4280
        %v4282 = vpop.f32.mrf.mxu0
        %v4283 = vpop.f32.mrf.mxu0
        %v4284 = vadd.f32 %v4107, %v4283
        %v4285 = vpop.f32.mrf.mxu0
        %4286 = vmatprep.mubr.bf16.mxu0 %v4119
        %4287 = vmatmul.mubr.bf16.gmra.mxu0 %v4118
        %v4288 = vpop.f32.mrf.mxu0
        %v4289 = vadd.f32 %v4107, %v4288
        %v4290 = vpop.f32.mrf.mxu0
        %v4291 = vpop.f32.mrf.mxu0
        %v4292 = vadd.f32 %v4107, %v4291
        %v4293 = vpop.f32.mrf.mxu0
        %4294 = vmatprep.mubr.bf16.mxu0 %v4121
        %4295 = vmatmul.mubr.bf16.gmra.mxu0 %v4120
        %v4296 = vpop.f32.mrf.mxu0
        %v4297 = vadd.f32 %v4107, %v4296
        %v4298 = vpop.f32.mrf.mxu0
        %v4299 = vpop.f32.mrf.mxu0
        %v4300 = vadd.f32 %v4107, %v4299
        %v4301 = vpop.f32.mrf.mxu0
        %4302 = vmatprep.mubr.bf16.mxu0 %v4123
        %4303 = vmatmul.mubr.bf16.gmra.mxu0 %v4122
        %v4304 = vpop.f32.mrf.mxu0
        %v4305 = vadd.f32 %v4107, %v4304
        %v4306 = vpop.f32.mrf.mxu0
        %v4307 = vpop.f32.mrf.mxu0
        %v4308 = vadd.f32 %v4107, %v4307
        %v4309 = vpop.f32.mrf.mxu0
        %4310 = vmatprep.mubr.bf16.mxu0 %v4125
        %4311 = vmatmul.mubr.bf16.gmra.mxu0 %v4124
        %v4312 = vpop.f32.mrf.mxu0
        %v4313 = vadd.f32 %v4107, %v4312
        %v4314 = vpop.f32.mrf.mxu0
        %v4315 = vpop.f32.mrf.mxu0
        %v4316 = vadd.f32 %v4107, %v4315
        %v4317 = vpop.f32.mrf.mxu0
        %4318 = vdwg.mxu0
        %4319 = vadd.xlane.f32.xlu0 %v4257
        %v4320 = vpop.xlane.xlu0 %4319
        %4321 = vadd.xlane.f32.xlu0 %v4260
        %v4322 = vpop.xlane.xlu0 %4321
        %4323 = vadd.xlane.f32.xlu0 %v4265
        %v4324 = vpop.xlane.xlu0 %4323
        %4325 = vadd.xlane.f32.xlu0 %v4268
        %v4326 = vpop.xlane.xlu0 %4325
        %4327 = vadd.xlane.f32.xlu0 %v4273
        %v4328 = vpop.xlane.xlu0 %4327
        %4329 = vadd.xlane.f32.xlu0 %v4276
        %v4330 = vpop.xlane.xlu0 %4329
        %4331 = vadd.xlane.f32.xlu0 %v4281
        %v4332 = vpop.xlane.xlu0 %4331
        %4333 = vadd.xlane.f32.xlu0 %v4284
        %v4334 = vpop.xlane.xlu0 %4333
        %4335 = vadd.xlane.f32.xlu0 %v4289
        %v4336 = vpop.xlane.xlu0 %4335
        %4337 = vadd.xlane.f32.xlu0 %v4292
        %v4338 = vpop.xlane.xlu0 %4337
        %4339 = vadd.xlane.f32.xlu0 %v4297
        %v4340 = vpop.xlane.xlu0 %4339
        %4341 = vadd.xlane.f32.xlu0 %v4300
        %v4342 = vpop.xlane.xlu0 %4341
        %4343 = vadd.xlane.f32.xlu0 %v4305
        %v4344 = vpop.xlane.xlu0 %4343
        %4345 = vadd.xlane.f32.xlu0 %v4308
        %v4346 = vpop.xlane.xlu0 %4345
        %4347 = vadd.xlane.f32.xlu0 %v4313
        %v4348 = vpop.xlane.xlu0 %4347
        %4349 = vadd.xlane.f32.xlu0 %v4316
        %v4350 = vpop.xlane.xlu0 %4349
        %v4351 = vmul.f32 %v4320, %v613
        %v4352 = vmul.f32 %v4322, %v613
        %v4353 = vmul.f32 %v4324, %v613
        %v4354 = vmul.f32 %v4326, %v613
        %v4355 = vmul.f32 %v4328, %v613
        %v4356 = vmul.f32 %v4330, %v613
        %v4357 = vmul.f32 %v4332, %v613
        %v4358 = vmul.f32 %v4334, %v613
        %v4359 = vmul.f32 %v4336, %v613
        %v4360 = vmul.f32 %v4338, %v613
        %v4361 = vmul.f32 %v4340, %v613
        %v4362 = vmul.f32 %v4342, %v613
        %v4363 = vmul.f32 %v4344, %v613
        %v4364 = vmul.f32 %v4346, %v613
        %v4365 = vmul.f32 %v4348, %v613
        %v4366 = vmul.f32 %v4350, %v613
        %v4367 = vsub.f32 %v4257, %v4351
        %v4368 = vsub.f32 %v4260, %v4352
        %v4369 = vsub.f32 %v4265, %v4353
        %v4370 = vsub.f32 %v4268, %v4354
        %v4371 = vsub.f32 %v4273, %v4355
        %v4372 = vsub.f32 %v4276, %v4356
        %v4373 = vsub.f32 %v4281, %v4357
        %v4374 = vsub.f32 %v4284, %v4358
        %v4375 = vsub.f32 %v4289, %v4359
        %v4376 = vsub.f32 %v4292, %v4360
        %v4377 = vsub.f32 %v4297, %v4361
        %v4378 = vsub.f32 %v4300, %v4362
        %v4379 = vsub.f32 %v4305, %v4363
        %v4380 = vsub.f32 %v4308, %v4364
        %v4381 = vsub.f32 %v4313, %v4365
        %v4382 = vsub.f32 %v4316, %v4366
        %v4383 = vmul.f32 %v4367, %v4367
        %v4384 = vmul.f32 %v4368, %v4368
        %v4385 = vmul.f32 %v4369, %v4369
        %v4386 = vmul.f32 %v4370, %v4370
        %v4387 = vmul.f32 %v4371, %v4371
        %v4388 = vmul.f32 %v4372, %v4372
        %v4389 = vmul.f32 %v4373, %v4373
        %v4390 = vmul.f32 %v4374, %v4374
        %v4391 = vmul.f32 %v4375, %v4375
        %v4392 = vmul.f32 %v4376, %v4376
        %v4393 = vmul.f32 %v4377, %v4377
        %v4394 = vmul.f32 %v4378, %v4378
        %v4395 = vmul.f32 %v4379, %v4379
        %v4396 = vmul.f32 %v4380, %v4380
        %v4397 = vmul.f32 %v4381, %v4381
        %v4398 = vmul.f32 %v4382, %v4382
        %4399 = vadd.xlane.f32.xlu0 %v4383
        %v4400 = vpop.xlane.xlu0 %4399
        %4401 = vadd.xlane.f32.xlu0 %v4384
        %v4402 = vpop.xlane.xlu0 %4401
        %4403 = vadd.xlane.f32.xlu0 %v4385
        %v4404 = vpop.xlane.xlu0 %4403
        %4405 = vadd.xlane.f32.xlu0 %v4386
        %v4406 = vpop.xlane.xlu0 %4405
        %4407 = vadd.xlane.f32.xlu0 %v4387
        %v4408 = vpop.xlane.xlu0 %4407
        %4409 = vadd.xlane.f32.xlu0 %v4388
        %v4410 = vpop.xlane.xlu0 %4409
        %4411 = vadd.xlane.f32.xlu0 %v4389
        %v4412 = vpop.xlane.xlu0 %4411
        %4413 = vadd.xlane.f32.xlu0 %v4390
        %v4414 = vpop.xlane.xlu0 %4413
        %4415 = vadd.xlane.f32.xlu0 %v4391
        %v4416 = vpop.xlane.xlu0 %4415
        %4417 = vadd.xlane.f32.xlu0 %v4392
        %v4418 = vpop.xlane.xlu0 %4417
        %4419 = vadd.xlane.f32.xlu0 %v4393
        %v4420 = vpop.xlane.xlu0 %4419
        %4421 = vadd.xlane.f32.xlu0 %v4394
        %v4422 = vpop.xlane.xlu0 %4421
        %4423 = vadd.xlane.f32.xlu0 %v4395
        %v4424 = vpop.xlane.xlu0 %4423
        %4425 = vadd.xlane.f32.xlu0 %v4396
        %v4426 = vpop.xlane.xlu0 %4425
        %4427 = vadd.xlane.f32.xlu0 %v4397
        %v4428 = vpop.xlane.xlu0 %4427
        %4429 = vadd.xlane.f32.xlu0 %v4398
        %v4430 = vpop.xlane.xlu0 %4429
        %v4431 = vmul.f32 %v4400, %v613
        %v4432 = vmul.f32 %v4402, %v613
        %v4433 = vmul.f32 %v4404, %v613
        %v4434 = vmul.f32 %v4406, %v613
        %v4435 = vmul.f32 %v4408, %v613
        %v4436 = vmul.f32 %v4410, %v613
        %v4437 = vmul.f32 %v4412, %v613
        %v4438 = vmul.f32 %v4414, %v613
        %v4439 = vmul.f32 %v4416, %v613
        %v4440 = vmul.f32 %v4418, %v613
        %v4441 = vmul.f32 %v4420, %v613
        %v4442 = vmul.f32 %v4422, %v613
        %v4443 = vmul.f32 %v4424, %v613
        %v4444 = vmul.f32 %v4426, %v613
        %v4445 = vmul.f32 %v4428, %v613
        %v4446 = vmul.f32 %v4430, %v613
        %v4447 = vadd.f32 %v4431, 1e-05
        %v4448 = vadd.f32 %v4432, 1e-05
        %v4449 = vadd.f32 %v4433, 1e-05
        %v4450 = vadd.f32 %v4434, 1e-05
        %v4451 = vadd.f32 %v4435, 1e-05
        %v4452 = vadd.f32 %v4436, 1e-05
        %v4453 = vadd.f32 %v4437, 1e-05
        %v4454 = vadd.f32 %v4438, 1e-05
        %v4455 = vadd.f32 %v4439, 1e-05
        %v4456 = vadd.f32 %v4440, 1e-05
        %v4457 = vadd.f32 %v4441, 1e-05
        %v4458 = vadd.f32 %v4442, 1e-05
        %v4459 = vadd.f32 %v4443, 1e-05
        %v4460 = vadd.f32 %v4444, 1e-05
        %v4461 = vadd.f32 %v4445, 1e-05
        %v4462 = vadd.f32 %v4446, 1e-05
        %v4463 = vrsqrt.pop %v4447
        %v4464 = vrsqrt.pop %v4448
        %v4465 = vrsqrt.pop %v4449
        %v4466 = vrsqrt.pop %v4450
        %v4467 = vrsqrt.pop %v4451
        %v4468 = vrsqrt.pop %v4452
        %v4469 = vrsqrt.pop %v4453
        %v4470 = vrsqrt.pop %v4454
        %v4471 = vrsqrt.pop %v4455
        %v4472 = vrsqrt.pop %v4456
        %v4473 = vrsqrt.pop %v4457
        %v4474 = vrsqrt.pop %v4458
        %v4475 = vrsqrt.pop %v4459
        %v4476 = vrsqrt.pop %v4460
        %v4477 = vrsqrt.pop %v4461
        %v4478 = vrsqrt.pop %v4462
        %v4479 = vmul.f32 %v4367, %v4463
        %v4480 = vmul.f32 %v4368, %v4464
        %v4481 = vmul.f32 %v4369, %v4465
        %v4482 = vmul.f32 %v4370, %v4466
        %v4483 = vmul.f32 %v4371, %v4467
        %v4484 = vmul.f32 %v4372, %v4468
        %v4485 = vmul.f32 %v4373, %v4469
        %v4486 = vmul.f32 %v4374, %v4470
        %v4487 = vmul.f32 %v4375, %v4471
        %v4488 = vmul.f32 %v4376, %v4472
        %v4489 = vmul.f32 %v4377, %v4473
        %v4490 = vmul.f32 %v4378, %v4474
        %v4491 = vmul.f32 %v4379, %v4475
        %v4492 = vmul.f32 %v4380, %v4476
        %v4493 = vmul.f32 %v4381, %v4477
        %v4494 = vmul.f32 %v4382, %v4478
        %v4495 = vmul.f32 %v4479, %v4108
        %v4496 = vmul.f32 %v4480, %v4108
        %v4497 = vmul.f32 %v4481, %v4108
        %v4498 = vmul.f32 %v4482, %v4108
        %v4499 = vmul.f32 %v4483, %v4108
        %v4500 = vmul.f32 %v4484, %v4108
        %v4501 = vmul.f32 %v4485, %v4108
        %v4502 = vmul.f32 %v4486, %v4108
        %v4503 = vmul.f32 %v4487, %v4108
        %v4504 = vmul.f32 %v4488, %v4108
        %v4505 = vmul.f32 %v4489, %v4108
        %v4506 = vmul.f32 %v4490, %v4108
        %v4507 = vmul.f32 %v4491, %v4108
        %v4508 = vmul.f32 %v4492, %v4108
        %v4509 = vmul.f32 %v4493, %v4108
        %v4510 = vmul.f32 %v4494, %v4108
        %v4511 = vadd.f32 %v4495, %v4109
        %v4512 = vadd.f32 %v4496, %v4109
        %v4513 = vadd.f32 %v4497, %v4109
        %v4514 = vadd.f32 %v4498, %v4109
        %v4515 = vadd.f32 %v4499, %v4109
        %v4516 = vadd.f32 %v4500, %v4109
        %v4517 = vadd.f32 %v4501, %v4109
        %v4518 = vadd.f32 %v4502, %v4109
        %v4519 = vadd.f32 %v4503, %v4109
        %v4520 = vadd.f32 %v4504, %v4109
        %v4521 = vadd.f32 %v4505, %v4109
        %v4522 = vadd.f32 %v4506, %v4109
        %v4523 = vadd.f32 %v4507, %v4109
        %v4524 = vadd.f32 %v4508, %v4109
        %v4525 = vadd.f32 %v4509, %v4109
        %v4526 = vadd.f32 %v4510, %v4109
        %v4527 = vmax.f32 %v4511, 0.0
        %v4528 = vmax.f32 %v4512, 0.0
        %v4529 = vmax.f32 %v4513, 0.0
        %v4530 = vmax.f32 %v4514, 0.0
        %v4531 = vmax.f32 %v4515, 0.0
        %v4532 = vmax.f32 %v4516, 0.0
        %v4533 = vmax.f32 %v4517, 0.0
        %v4534 = vmax.f32 %v4518, 0.0
        %v4535 = vmax.f32 %v4519, 0.0
        %v4536 = vmax.f32 %v4520, 0.0
        %v4537 = vmax.f32 %v4521, 0.0
        %v4538 = vmax.f32 %v4522, 0.0
        %v4539 = vmax.f32 %v4523, 0.0
        %v4540 = vmax.f32 %v4524, 0.0
        %v4541 = vmax.f32 %v4525, 0.0
        %v4542 = vmax.f32 %v4526, 0.0
        %v4543 = vld [vmem:[#allocation5 + $0x280] sm:$0xf]
        %v4544 = vld [vmem:[#allocation5 + $0x284] sm:$0xf]
        %v4545 = vld [vmem:[#allocation5 + $0x288] sm:$0xf]
        %v4546 = vld [vmem:[#allocation5 + $0x28c] sm:$0xf]
        %v4547 = vld [vmem:[#allocation5 + $0x290] sm:$0xf]
        %v4548 = vld [vmem:[#allocation5 + $0x294] sm:$0xf]
        %v4549 = vld [vmem:[#allocation5 + $0x298] sm:$0xf]
        %v4550 = vld [vmem:[#allocation5 + $0x29c] sm:$0xf]
        %v4551 = vld [vmem:[#allocation5 + $0x2a0] sm:$0xf]
        %v4552 = vld [vmem:[#allocation5 + $0x2a4] sm:$0xf]
        %v4553 = vld [vmem:[#allocation5 + $0x2a8] sm:$0xf]
        %v4554 = vld [vmem:[#allocation5 + $0x2ac] sm:$0xf]
        %v4555 = vld [vmem:[#allocation5 + $0x2b0] sm:$0xf]
        %v4556 = vld [vmem:[#allocation5 + $0x2b4] sm:$0xf]
        %v4557 = vld [vmem:[#allocation5 + $0x2b8] sm:$0xf]
        %v4558 = vld [vmem:[#allocation5 + $0x2bc] sm:$0xf]
        %v4559 = vld [vmem:[#allocation10 + $0x93] ss:$0 sm:$0xff]
        %v4560 = vld [vmem:[#allocation10 + $0x94] ss:$0 sm:$0xff]
        %v4561 = vld [vmem:[#allocation10 + $0x95] ss:$0 sm:$0xff]
        %v4562 = vpack.c.bf16 %v4528, %v4527
        %v4563 = vpack.c.bf16 %v4530, %v4529
        %v4564 = vpack.c.bf16 %v4532, %v4531
        %v4565 = vpack.c.bf16 %v4534, %v4533
        %v4566 = vpack.c.bf16 %v4536, %v4535
        %v4567 = vpack.c.bf16 %v4538, %v4537
        %v4568 = vpack.c.bf16 %v4540, %v4539
        %v4569 = vpack.c.bf16 %v4542, %v4541
        %v4586 = vunpack.c.l.b16 %v4543
        %v4587 = vunpack.c.l.b16 %v4544
        %v4588 = vunpack.c.l.b16 %v4545
        %v4589 = vunpack.c.l.b16 %v4546
        %v4590 = vunpack.c.l.b16 %v4547
        %v4591 = vunpack.c.l.b16 %v4548
        %v4592 = vunpack.c.l.b16 %v4549
        %v4593 = vunpack.c.l.b16 %v4550
        %v4594 = vunpack.c.l.b16 %v4551
        %v4595 = vunpack.c.l.b16 %v4552
        %v4596 = vunpack.c.l.b16 %v4553
        %v4597 = vunpack.c.l.b16 %v4554
        %v4598 = vunpack.c.l.b16 %v4555
        %v4599 = vunpack.c.l.b16 %v4556
        %v4600 = vunpack.c.l.b16 %v4557
        %v4601 = vunpack.c.l.b16 %v4558
        %v4602 = vpack.c.b16 %v4587, %v4586
        %v4603 = vpack.c.b16 %v4589, %v4588
        %v4604 = vpack.c.b16 %v4591, %v4590
        %v4605 = vpack.c.b16 %v4593, %v4592
        %v4606 = vpack.c.b16 %v4595, %v4594
        %v4607 = vpack.c.b16 %v4597, %v4596
        %v4608 = vpack.c.b16 %v4599, %v4598
        %v4609 = vpack.c.b16 %v4601, %v4600
        %4618 = vmatprep.subr.bf16.mxu0 0
        %4619 = vmatpush1.bf16.msra.mxu0 %v4609
        %4620 = vmatprep.subr.bf16.mxu0 0
        %4621 = vmatpush1.bf16.msra.mxu0 %v4608
        %4622 = vmatprep.subr.bf16.mxu0 0
        %4623 = vmatpush1.bf16.msra.mxu0 %v4607
        %4624 = vmatprep.subr.bf16.mxu0 0
        %4625 = vmatpush1.bf16.msra.mxu0 %v4606
        %4626 = vmatprep.subr.bf16.mxu0 0
        %4627 = vmatpush1.bf16.msra.mxu0 %v4605
        %4628 = vmatprep.subr.bf16.mxu0 0
        %4629 = vmatpush1.bf16.msra.mxu0 %v4604
        %4630 = vmatprep.subr.bf16.mxu0 0
        %4631 = vmatpush1.bf16.msra.mxu0 %v4603
        %4632 = vmatprep.subr.bf16.mxu0 0
        %4633 = vmatpush1.bf16.msra.mxu0 %v4602
        %4634 = vmatprep.subr.bf16.mxu0 0
        %4635 = vmatpush2.bf16.msra.mxu0 0
        %4636 = vmatprep.subr.bf16.mxu0 0
        %4637 = vmatpush2.bf16.msra.mxu0 0
        %4638 = vmatprep.subr.bf16.mxu0 0
        %4639 = vmatpush2.bf16.msra.mxu0 0
        %4640 = vmatprep.subr.bf16.mxu0 0
        %4641 = vmatpush2.bf16.msra.mxu0 0
        %4642 = vmatprep.subr.bf16.mxu0 0
        %4643 = vmatpush2.bf16.msra.mxu0 0
        %4644 = vmatprep.subr.bf16.mxu0 0
        %4645 = vmatpush2.bf16.msra.mxu0 0
        %4646 = vmatprep.subr.bf16.mxu0 0
        %4647 = vmatpush2.bf16.msra.mxu0 0
        %4648 = vmatprep.subr.bf16.mxu0 0
        %4649 = vmatpush2.bf16.msra.mxu0 0
        %4650 = vmatprep.mubr.bf16.mxu0 0
        %4651 = vmatmul.mubr.bf16.gmra.mxu0 %v4562
        %v4652 = vpop.f32.mrf.mxu0
        %v4653 = vadd.f32 %v4559, %v4652
        %v4654 = vpop.f32.mrf.mxu0
        %v4655 = vpop.f32.mrf.mxu0
        %v4656 = vadd.f32 %v4559, %v4655
        %v4657 = vpop.f32.mrf.mxu0
        %4658 = vmatprep.mubr.bf16.mxu0 0
        %4659 = vmatmul.mubr.bf16.gmra.mxu0 %v4563
        %v4660 = vpop.f32.mrf.mxu0
        %v4661 = vadd.f32 %v4559, %v4660
        %v4662 = vpop.f32.mrf.mxu0
        %v4663 = vpop.f32.mrf.mxu0
        %v4664 = vadd.f32 %v4559, %v4663
        %v4665 = vpop.f32.mrf.mxu0
        %4666 = vmatprep.mubr.bf16.mxu0 0
        %4667 = vmatmul.mubr.bf16.gmra.mxu0 %v4564
        %v4668 = vpop.f32.mrf.mxu0
        %v4669 = vadd.f32 %v4559, %v4668
        %v4670 = vpop.f32.mrf.mxu0
        %v4671 = vpop.f32.mrf.mxu0
        %v4672 = vadd.f32 %v4559, %v4671
        %v4673 = vpop.f32.mrf.mxu0
        %4674 = vmatprep.mubr.bf16.mxu0 0
        %4675 = vmatmul.mubr.bf16.gmra.mxu0 %v4565
        %v4676 = vpop.f32.mrf.mxu0
        %v4677 = vadd.f32 %v4559, %v4676
        %v4678 = vpop.f32.mrf.mxu0
        %v4679 = vpop.f32.mrf.mxu0
        %v4680 = vadd.f32 %v4559, %v4679
        %v4681 = vpop.f32.mrf.mxu0
        %4682 = vmatprep.mubr.bf16.mxu0 0
        %4683 = vmatmul.mubr.bf16.gmra.mxu0 %v4566
        %v4684 = vpop.f32.mrf.mxu0
        %v4685 = vadd.f32 %v4559, %v4684
        %v4686 = vpop.f32.mrf.mxu0
        %v4687 = vpop.f32.mrf.mxu0
        %v4688 = vadd.f32 %v4559, %v4687
        %v4689 = vpop.f32.mrf.mxu0
        %4690 = vmatprep.mubr.bf16.mxu0 0
        %4691 = vmatmul.mubr.bf16.gmra.mxu0 %v4567
        %v4692 = vpop.f32.mrf.mxu0
        %v4693 = vadd.f32 %v4559, %v4692
        %v4694 = vpop.f32.mrf.mxu0
        %v4695 = vpop.f32.mrf.mxu0
        %v4696 = vadd.f32 %v4559, %v4695
        %v4697 = vpop.f32.mrf.mxu0
        %4698 = vmatprep.mubr.bf16.mxu0 0
        %4699 = vmatmul.mubr.bf16.gmra.mxu0 %v4568
        %v4700 = vpop.f32.mrf.mxu0
        %v4701 = vadd.f32 %v4559, %v4700
        %v4702 = vpop.f32.mrf.mxu0
        %v4703 = vpop.f32.mrf.mxu0
        %v4704 = vadd.f32 %v4559, %v4703
        %v4705 = vpop.f32.mrf.mxu0
        %4706 = vmatprep.mubr.bf16.mxu0 0
        %4707 = vmatmul.mubr.bf16.gmra.mxu0 %v4569
        %v4708 = vpop.f32.mrf.mxu0
        %v4709 = vadd.f32 %v4559, %v4708
        %v4710 = vpop.f32.mrf.mxu0
        %v4711 = vpop.f32.mrf.mxu0
        %v4712 = vadd.f32 %v4559, %v4711
        %v4713 = vpop.f32.mrf.mxu0
        %4714 = vdwg.mxu0
        %4715 = vadd.xlane.f32.xlu0 %v4653
        %v4716 = vpop.xlane.xlu0 %4715
        %4717 = vadd.xlane.f32.xlu0 %v4656
        %v4718 = vpop.xlane.xlu0 %4717
        %4719 = vadd.xlane.f32.xlu0 %v4661
        %v4720 = vpop.xlane.xlu0 %4719
        %4721 = vadd.xlane.f32.xlu0 %v4664
        %v4722 = vpop.xlane.xlu0 %4721
        %4723 = vadd.xlane.f32.xlu0 %v4669
        %v4724 = vpop.xlane.xlu0 %4723
        %4725 = vadd.xlane.f32.xlu0 %v4672
        %v4726 = vpop.xlane.xlu0 %4725
        %4727 = vadd.xlane.f32.xlu0 %v4677
        %v4728 = vpop.xlane.xlu0 %4727
        %4729 = vadd.xlane.f32.xlu0 %v4680
        %v4730 = vpop.xlane.xlu0 %4729
        %4731 = vadd.xlane.f32.xlu0 %v4685
        %v4732 = vpop.xlane.xlu0 %4731
        %4733 = vadd.xlane.f32.xlu0 %v4688
        %v4734 = vpop.xlane.xlu0 %4733
        %4735 = vadd.xlane.f32.xlu0 %v4693
        %v4736 = vpop.xlane.xlu0 %4735
        %4737 = vadd.xlane.f32.xlu0 %v4696
        %v4738 = vpop.xlane.xlu0 %4737
        %4739 = vadd.xlane.f32.xlu0 %v4701
        %v4740 = vpop.xlane.xlu0 %4739
        %4741 = vadd.xlane.f32.xlu0 %v4704
        %v4742 = vpop.xlane.xlu0 %4741
        %4743 = vadd.xlane.f32.xlu0 %v4709
        %v4744 = vpop.xlane.xlu0 %4743
        %4745 = vadd.xlane.f32.xlu0 %v4712
        %v4746 = vpop.xlane.xlu0 %4745
        %v4747 = vmul.f32 %v4716, %v613
        %v4748 = vmul.f32 %v4718, %v613
        %v4749 = vmul.f32 %v4720, %v613
        %v4750 = vmul.f32 %v4722, %v613
        %v4751 = vmul.f32 %v4724, %v613
        %v4752 = vmul.f32 %v4726, %v613
        %v4753 = vmul.f32 %v4728, %v613
        %v4754 = vmul.f32 %v4730, %v613
        %v4755 = vmul.f32 %v4732, %v613
        %v4756 = vmul.f32 %v4734, %v613
        %v4757 = vmul.f32 %v4736, %v613
        %v4758 = vmul.f32 %v4738, %v613
        %v4759 = vmul.f32 %v4740, %v613
        %v4760 = vmul.f32 %v4742, %v613
        %v4761 = vmul.f32 %v4744, %v613
        %v4762 = vmul.f32 %v4746, %v613
        %v4763 = vsub.f32 %v4653, %v4747
        %v4764 = vsub.f32 %v4656, %v4748
        %v4765 = vsub.f32 %v4661, %v4749
        %v4766 = vsub.f32 %v4664, %v4750
        %v4767 = vsub.f32 %v4669, %v4751
        %v4768 = vsub.f32 %v4672, %v4752
        %v4769 = vsub.f32 %v4677, %v4753
        %v4770 = vsub.f32 %v4680, %v4754
        %v4771 = vsub.f32 %v4685, %v4755
        %v4772 = vsub.f32 %v4688, %v4756
        %v4773 = vsub.f32 %v4693, %v4757
        %v4774 = vsub.f32 %v4696, %v4758
        %v4775 = vsub.f32 %v4701, %v4759
        %v4776 = vsub.f32 %v4704, %v4760
        %v4777 = vsub.f32 %v4709, %v4761
        %v4778 = vsub.f32 %v4712, %v4762
        %v4779 = vmul.f32 %v4763, %v4763
        %v4780 = vmul.f32 %v4764, %v4764
        %v4781 = vmul.f32 %v4765, %v4765
        %v4782 = vmul.f32 %v4766, %v4766
        %v4783 = vmul.f32 %v4767, %v4767
        %v4784 = vmul.f32 %v4768, %v4768
        %v4785 = vmul.f32 %v4769, %v4769
        %v4786 = vmul.f32 %v4770, %v4770
        %v4787 = vmul.f32 %v4771, %v4771
        %v4788 = vmul.f32 %v4772, %v4772
        %v4789 = vmul.f32 %v4773, %v4773
        %v4790 = vmul.f32 %v4774, %v4774
        %v4791 = vmul.f32 %v4775, %v4775
        %v4792 = vmul.f32 %v4776, %v4776
        %v4793 = vmul.f32 %v4777, %v4777
        %v4794 = vmul.f32 %v4778, %v4778
        %4795 = vadd.xlane.f32.xlu0 %v4779
        %v4796 = vpop.xlane.xlu0 %4795
        %4797 = vadd.xlane.f32.xlu0 %v4780
        %v4798 = vpop.xlane.xlu0 %4797
        %4799 = vadd.xlane.f32.xlu0 %v4781
        %v4800 = vpop.xlane.xlu0 %4799
        %4801 = vadd.xlane.f32.xlu0 %v4782
        %v4802 = vpop.xlane.xlu0 %4801
        %4803 = vadd.xlane.f32.xlu0 %v4783
        %v4804 = vpop.xlane.xlu0 %4803
        %4805 = vadd.xlane.f32.xlu0 %v4784
        %v4806 = vpop.xlane.xlu0 %4805
        %4807 = vadd.xlane.f32.xlu0 %v4785
        %v4808 = vpop.xlane.xlu0 %4807
        %4809 = vadd.xlane.f32.xlu0 %v4786
        %v4810 = vpop.xlane.xlu0 %4809
        %4811 = vadd.xlane.f32.xlu0 %v4787
        %v4812 = vpop.xlane.xlu0 %4811
        %4813 = vadd.xlane.f32.xlu0 %v4788
        %v4814 = vpop.xlane.xlu0 %4813
        %4815 = vadd.xlane.f32.xlu0 %v4789
        %v4816 = vpop.xlane.xlu0 %4815
        %4817 = vadd.xlane.f32.xlu0 %v4790
        %v4818 = vpop.xlane.xlu0 %4817
        %4819 = vadd.xlane.f32.xlu0 %v4791
        %v4820 = vpop.xlane.xlu0 %4819
        %4821 = vadd.xlane.f32.xlu0 %v4792
        %v4822 = vpop.xlane.xlu0 %4821
        %4823 = vadd.xlane.f32.xlu0 %v4793
        %v4824 = vpop.xlane.xlu0 %4823
        %4825 = vadd.xlane.f32.xlu0 %v4794
        %v4826 = vpop.xlane.xlu0 %4825
        %v4827 = vmul.f32 %v4796, %v613
        %v4828 = vmul.f32 %v4798, %v613
        %v4829 = vmul.f32 %v4800, %v613
        %v4830 = vmul.f32 %v4802, %v613
        %v4831 = vmul.f32 %v4804, %v613
        %v4832 = vmul.f32 %v4806, %v613
        %v4833 = vmul.f32 %v4808, %v613
        %v4834 = vmul.f32 %v4810, %v613
        %v4835 = vmul.f32 %v4812, %v613
        %v4836 = vmul.f32 %v4814, %v613
        %v4837 = vmul.f32 %v4816, %v613
        %v4838 = vmul.f32 %v4818, %v613
        %v4839 = vmul.f32 %v4820, %v613
        %v4840 = vmul.f32 %v4822, %v613
        %v4841 = vmul.f32 %v4824, %v613
        %v4842 = vmul.f32 %v4826, %v613
        %v4843 = vadd.f32 %v4827, 1e-05
        %v4844 = vadd.f32 %v4828, 1e-05
        %v4845 = vadd.f32 %v4829, 1e-05
        %v4846 = vadd.f32 %v4830, 1e-05
        %v4847 = vadd.f32 %v4831, 1e-05
        %v4848 = vadd.f32 %v4832, 1e-05
        %v4849 = vadd.f32 %v4833, 1e-05
        %v4850 = vadd.f32 %v4834, 1e-05
        %v4851 = vadd.f32 %v4835, 1e-05
        %v4852 = vadd.f32 %v4836, 1e-05
        %v4853 = vadd.f32 %v4837, 1e-05
        %v4854 = vadd.f32 %v4838, 1e-05
        %v4855 = vadd.f32 %v4839, 1e-05
        %v4856 = vadd.f32 %v4840, 1e-05
        %v4857 = vadd.f32 %v4841, 1e-05
        %v4858 = vadd.f32 %v4842, 1e-05
        %v4859 = vrsqrt.pop %v4843
        %v4860 = vrsqrt.pop %v4844
        %v4861 = vrsqrt.pop %v4845
        %v4862 = vrsqrt.pop %v4846
        %v4863 = vrsqrt.pop %v4847
        %v4864 = vrsqrt.pop %v4848
        %v4865 = vrsqrt.pop %v4849
        %v4866 = vrsqrt.pop %v4850
        %v4867 = vrsqrt.pop %v4851
        %v4868 = vrsqrt.pop %v4852
        %v4869 = vrsqrt.pop %v4853
        %v4870 = vrsqrt.pop %v4854
        %v4871 = vrsqrt.pop %v4855
        %v4872 = vrsqrt.pop %v4856
        %v4873 = vrsqrt.pop %v4857
        %v4874 = vrsqrt.pop %v4858
        %v4875 = vmul.f32 %v4763, %v4859
        %v4876 = vmul.f32 %v4764, %v4860
        %v4877 = vmul.f32 %v4765, %v4861
        %v4878 = vmul.f32 %v4766, %v4862
        %v4879 = vmul.f32 %v4767, %v4863
        %v4880 = vmul.f32 %v4768, %v4864
        %v4881 = vmul.f32 %v4769, %v4865
        %v4882 = vmul.f32 %v4770, %v4866
        %v4883 = vmul.f32 %v4771, %v4867
        %v4884 = vmul.f32 %v4772, %v4868
        %v4885 = vmul.f32 %v4773, %v4869
        %v4886 = vmul.f32 %v4774, %v4870
        %v4887 = vmul.f32 %v4775, %v4871
        %v4888 = vmul.f32 %v4776, %v4872
        %v4889 = vmul.f32 %v4777, %v4873
        %v4890 = vmul.f32 %v4778, %v4874
        %v4891 = vmul.f32 %v4875, %v4560
        %v4892 = vmul.f32 %v4876, %v4560
        %v4893 = vmul.f32 %v4877, %v4560
        %v4894 = vmul.f32 %v4878, %v4560
        %v4895 = vmul.f32 %v4879, %v4560
        %v4896 = vmul.f32 %v4880, %v4560
        %v4897 = vmul.f32 %v4881, %v4560
        %v4898 = vmul.f32 %v4882, %v4560
        %v4899 = vmul.f32 %v4883, %v4560
        %v4900 = vmul.f32 %v4884, %v4560
        %v4901 = vmul.f32 %v4885, %v4560
        %v4902 = vmul.f32 %v4886, %v4560
        %v4903 = vmul.f32 %v4887, %v4560
        %v4904 = vmul.f32 %v4888, %v4560
        %v4905 = vmul.f32 %v4889, %v4560
        %v4906 = vmul.f32 %v4890, %v4560
        %v4907 = vadd.f32 %v4891, %v4561
        %v4908 = vadd.f32 %v4892, %v4561
        %v4909 = vadd.f32 %v4893, %v4561
        %v4910 = vadd.f32 %v4894, %v4561
        %v4911 = vadd.f32 %v4895, %v4561
        %v4912 = vadd.f32 %v4896, %v4561
        %v4913 = vadd.f32 %v4897, %v4561
        %v4914 = vadd.f32 %v4898, %v4561
        %v4915 = vadd.f32 %v4899, %v4561
        %v4916 = vadd.f32 %v4900, %v4561
        %v4917 = vadd.f32 %v4901, %v4561
        %v4918 = vadd.f32 %v4902, %v4561
        %v4919 = vadd.f32 %v4903, %v4561
        %v4920 = vadd.f32 %v4904, %v4561
        %v4921 = vadd.f32 %v4905, %v4561
        %v4922 = vadd.f32 %v4906, %v4561
        %v4923 = vmax.f32 %v4907, 0.0
        %v4924 = vmax.f32 %v4908, 0.0
        %v4925 = vmax.f32 %v4909, 0.0
        %v4926 = vmax.f32 %v4910, 0.0
        %v4927 = vmax.f32 %v4911, 0.0
        %v4928 = vmax.f32 %v4912, 0.0
        %v4929 = vmax.f32 %v4913, 0.0
        %v4930 = vmax.f32 %v4914, 0.0
        %v4931 = vmax.f32 %v4915, 0.0
        %v4932 = vmax.f32 %v4916, 0.0
        %v4933 = vmax.f32 %v4917, 0.0
        %v4934 = vmax.f32 %v4918, 0.0
        %v4935 = vmax.f32 %v4919, 0.0
        %v4936 = vmax.f32 %v4920, 0.0
        %v4937 = vmax.f32 %v4921, 0.0
        %v4938 = vmax.f32 %v4922, 0.0
        %v4939 = vld [vmem:[#allocation5 + $0x2c0] sm:$0xf]
        %v4940 = vld [vmem:[#allocation5 + $0x2c4] sm:$0xf]
        %v4941 = vld [vmem:[#allocation5 + $0x2c8] sm:$0xf]
        %v4942 = vld [vmem:[#allocation5 + $0x2cc] sm:$0xf]
        %v4943 = vld [vmem:[#allocation5 + $0x2d0] sm:$0xf]
        %v4944 = vld [vmem:[#allocation5 + $0x2d4] sm:$0xf]
        %v4945 = vld [vmem:[#allocation5 + $0x2d8] sm:$0xf]
        %v4946 = vld [vmem:[#allocation5 + $0x2dc] sm:$0xf]
        %v4947 = vld [vmem:[#allocation5 + $0x2e0] sm:$0xf]
        %v4948 = vld [vmem:[#allocation5 + $0x2e4] sm:$0xf]
        %v4949 = vld [vmem:[#allocation5 + $0x2e8] sm:$0xf]
        %v4950 = vld [vmem:[#allocation5 + $0x2ec] sm:$0xf]
        %v4951 = vld [vmem:[#allocation5 + $0x2f0] sm:$0xf]
        %v4952 = vld [vmem:[#allocation5 + $0x2f4] sm:$0xf]
        %v4953 = vld [vmem:[#allocation5 + $0x2f8] sm:$0xf]
        %v4954 = vld [vmem:[#allocation5 + $0x2fc] sm:$0xf]
        %v4955 = vld [vmem:[#allocation10 + $0x96] ss:$0 sm:$0xff]
        %v4956 = vld [vmem:[#allocation10 + $0x97] ss:$0 sm:$0xff]
        %v4957 = vld [vmem:[#allocation10 + $0xc0] ss:$0 sm:$0xff]
        %v4958 = vpack.c.bf16 %v4924, %v4923
        %v4959 = vpack.c.bf16 %v4926, %v4925
        %v4960 = vpack.c.bf16 %v4928, %v4927
        %v4961 = vpack.c.bf16 %v4930, %v4929
        %v4962 = vpack.c.bf16 %v4932, %v4931
        %v4963 = vpack.c.bf16 %v4934, %v4933
        %v4964 = vpack.c.bf16 %v4936, %v4935
        %v4965 = vpack.c.bf16 %v4938, %v4937
        %v4982 = vunpack.c.l.b16 %v4939
        %v4983 = vunpack.c.l.b16 %v4940
        %v4984 = vunpack.c.l.b16 %v4941
        %v4985 = vunpack.c.l.b16 %v4942
        %v4986 = vunpack.c.l.b16 %v4943
        %v4987 = vunpack.c.l.b16 %v4944
        %v4988 = vunpack.c.l.b16 %v4945
        %v4989 = vunpack.c.l.b16 %v4946
        %v4990 = vunpack.c.l.b16 %v4947
        %v4991 = vunpack.c.l.b16 %v4948
        %v4992 = vunpack.c.l.b16 %v4949
        %v4993 = vunpack.c.l.b16 %v4950
        %v4994 = vunpack.c.l.b16 %v4951
        %v4995 = vunpack.c.l.b16 %v4952
        %v4996 = vunpack.c.l.b16 %v4953
        %v4997 = vunpack.c.l.b16 %v4954
        %v4998 = vpack.c.b16 %v4983, %v4982
        %v4999 = vpack.c.b16 %v4985, %v4984
        %v5000 = vpack.c.b16 %v4987, %v4986
        %v5001 = vpack.c.b16 %v4989, %v4988
        %v5002 = vpack.c.b16 %v4991, %v4990
        %v5003 = vpack.c.b16 %v4993, %v4992
        %v5004 = vpack.c.b16 %v4995, %v4994
        %v5005 = vpack.c.b16 %v4997, %v4996
        %5014 = vmatprep.subr.bf16.mxu0 0
        %5015 = vmatpush1.bf16.msra.mxu0 %v5005
        %5016 = vmatprep.subr.bf16.mxu0 0
        %5017 = vmatpush1.bf16.msra.mxu0 %v5004
        %5018 = vmatprep.subr.bf16.mxu0 0
        %5019 = vmatpush1.bf16.msra.mxu0 %v5003
        %5020 = vmatprep.subr.bf16.mxu0 0
        %5021 = vmatpush1.bf16.msra.mxu0 %v5002
        %5022 = vmatprep.subr.bf16.mxu0 0
        %5023 = vmatpush1.bf16.msra.mxu0 %v5001
        %5024 = vmatprep.subr.bf16.mxu0 0
        %5025 = vmatpush1.bf16.msra.mxu0 %v5000
        %5026 = vmatprep.subr.bf16.mxu0 0
        %5027 = vmatpush1.bf16.msra.mxu0 %v4999
        %5028 = vmatprep.subr.bf16.mxu0 0
        %5029 = vmatpush1.bf16.msra.mxu0 %v4998
        %5030 = vmatprep.subr.bf16.mxu0 0
        %5031 = vmatpush2.bf16.msra.mxu0 0
        %5032 = vmatprep.subr.bf16.mxu0 0
        %5033 = vmatpush2.bf16.msra.mxu0 0
        %5034 = vmatprep.subr.bf16.mxu0 0
        %5035 = vmatpush2.bf16.msra.mxu0 0
        %5036 = vmatprep.subr.bf16.mxu0 0
        %5037 = vmatpush2.bf16.msra.mxu0 0
        %5038 = vmatprep.subr.bf16.mxu0 0
        %5039 = vmatpush2.bf16.msra.mxu0 0
        %5040 = vmatprep.subr.bf16.mxu0 0
        %5041 = vmatpush2.bf16.msra.mxu0 0
        %5042 = vmatprep.subr.bf16.mxu0 0
        %5043 = vmatpush2.bf16.msra.mxu0 0
        %5044 = vmatprep.subr.bf16.mxu0 0
        %5045 = vmatpush2.bf16.msra.mxu0 0
        %5046 = vmatprep.mubr.bf16.mxu0 0
        %5047 = vmatmul.mubr.bf16.gmra.mxu0 %v4958
        %v5048 = vpop.f32.mrf.mxu0
        %v5049 = vadd.f32 %v4955, %v5048
        %v5050 = vpop.f32.mrf.mxu0
        %v5051 = vpop.f32.mrf.mxu0
        %v5052 = vadd.f32 %v4955, %v5051
        %v5053 = vpop.f32.mrf.mxu0
        %5054 = vmatprep.mubr.bf16.mxu0 0
        %5055 = vmatmul.mubr.bf16.gmra.mxu0 %v4959
        %v5056 = vpop.f32.mrf.mxu0
        %v5057 = vadd.f32 %v4955, %v5056
        %v5058 = vpop.f32.mrf.mxu0
        %v5059 = vpop.f32.mrf.mxu0
        %v5060 = vadd.f32 %v4955, %v5059
        %v5061 = vpop.f32.mrf.mxu0
        %5062 = vmatprep.mubr.bf16.mxu0 0
        %5063 = vmatmul.mubr.bf16.gmra.mxu0 %v4960
        %v5064 = vpop.f32.mrf.mxu0
        %v5065 = vadd.f32 %v4955, %v5064
        %v5066 = vpop.f32.mrf.mxu0
        %v5067 = vpop.f32.mrf.mxu0
        %v5068 = vadd.f32 %v4955, %v5067
        %v5069 = vpop.f32.mrf.mxu0
        %5070 = vmatprep.mubr.bf16.mxu0 0
        %5071 = vmatmul.mubr.bf16.gmra.mxu0 %v4961
        %v5072 = vpop.f32.mrf.mxu0
        %v5073 = vadd.f32 %v4955, %v5072
        %v5074 = vpop.f32.mrf.mxu0
        %v5075 = vpop.f32.mrf.mxu0
        %v5076 = vadd.f32 %v4955, %v5075
        %v5077 = vpop.f32.mrf.mxu0
        %5078 = vmatprep.mubr.bf16.mxu0 0
        %5079 = vmatmul.mubr.bf16.gmra.mxu0 %v4962
        %v5080 = vpop.f32.mrf.mxu0
        %v5081 = vadd.f32 %v4955, %v5080
        %v5082 = vpop.f32.mrf.mxu0
        %v5083 = vpop.f32.mrf.mxu0
        %v5084 = vadd.f32 %v4955, %v5083
        %v5085 = vpop.f32.mrf.mxu0
        %5086 = vmatprep.mubr.bf16.mxu0 0
        %5087 = vmatmul.mubr.bf16.gmra.mxu0 %v4963
        %v5088 = vpop.f32.mrf.mxu0
        %v5089 = vadd.f32 %v4955, %v5088
        %v5090 = vpop.f32.mrf.mxu0
        %v5091 = vpop.f32.mrf.mxu0
        %v5092 = vadd.f32 %v4955, %v5091
        %v5093 = vpop.f32.mrf.mxu0
        %5094 = vmatprep.mubr.bf16.mxu0 0
        %5095 = vmatmul.mubr.bf16.gmra.mxu0 %v4964
        %v5096 = vpop.f32.mrf.mxu0
        %v5097 = vadd.f32 %v4955, %v5096
        %v5098 = vpop.f32.mrf.mxu0
        %v5099 = vpop.f32.mrf.mxu0
        %v5100 = vadd.f32 %v4955, %v5099
        %v5101 = vpop.f32.mrf.mxu0
        %5102 = vmatprep.mubr.bf16.mxu0 0
        %5103 = vmatmul.mubr.bf16.gmra.mxu0 %v4965
        %v5104 = vpop.f32.mrf.mxu0
        %v5105 = vadd.f32 %v4955, %v5104
        %v5106 = vpop.f32.mrf.mxu0
        %v5107 = vpop.f32.mrf.mxu0
        %v5108 = vadd.f32 %v4955, %v5107
        %v5109 = vpop.f32.mrf.mxu0
        %5110 = vdwg.mxu0
        %5111 = vadd.xlane.f32.xlu0 %v5049
        %v5112 = vpop.xlane.xlu0 %5111
        %5113 = vadd.xlane.f32.xlu0 %v5052
        %v5114 = vpop.xlane.xlu0 %5113
        %5115 = vadd.xlane.f32.xlu0 %v5057
        %v5116 = vpop.xlane.xlu0 %5115
        %5117 = vadd.xlane.f32.xlu0 %v5060
        %v5118 = vpop.xlane.xlu0 %5117
        %5119 = vadd.xlane.f32.xlu0 %v5065
        %v5120 = vpop.xlane.xlu0 %5119
        %5121 = vadd.xlane.f32.xlu0 %v5068
        %v5122 = vpop.xlane.xlu0 %5121
        %5123 = vadd.xlane.f32.xlu0 %v5073
        %v5124 = vpop.xlane.xlu0 %5123
        %5125 = vadd.xlane.f32.xlu0 %v5076
        %v5126 = vpop.xlane.xlu0 %5125
        %5127 = vadd.xlane.f32.xlu0 %v5081
        %v5128 = vpop.xlane.xlu0 %5127
        %5129 = vadd.xlane.f32.xlu0 %v5084
        %v5130 = vpop.xlane.xlu0 %5129
        %5131 = vadd.xlane.f32.xlu0 %v5089
        %v5132 = vpop.xlane.xlu0 %5131
        %5133 = vadd.xlane.f32.xlu0 %v5092
        %v5134 = vpop.xlane.xlu0 %5133
        %5135 = vadd.xlane.f32.xlu0 %v5097
        %v5136 = vpop.xlane.xlu0 %5135
        %5137 = vadd.xlane.f32.xlu0 %v5100
        %v5138 = vpop.xlane.xlu0 %5137
        %5139 = vadd.xlane.f32.xlu0 %v5105
        %v5140 = vpop.xlane.xlu0 %5139
        %5141 = vadd.xlane.f32.xlu0 %v5108
        %v5142 = vpop.xlane.xlu0 %5141
        %v5143 = vmul.f32 %v5112, %v613
        %v5144 = vmul.f32 %v5114, %v613
        %v5145 = vmul.f32 %v5116, %v613
        %v5146 = vmul.f32 %v5118, %v613
        %v5147 = vmul.f32 %v5120, %v613
        %v5148 = vmul.f32 %v5122, %v613
        %v5149 = vmul.f32 %v5124, %v613
        %v5150 = vmul.f32 %v5126, %v613
        %v5151 = vmul.f32 %v5128, %v613
        %v5152 = vmul.f32 %v5130, %v613
        %v5153 = vmul.f32 %v5132, %v613
        %v5154 = vmul.f32 %v5134, %v613
        %v5155 = vmul.f32 %v5136, %v613
        %v5156 = vmul.f32 %v5138, %v613
        %v5157 = vmul.f32 %v5140, %v613
        %v5158 = vmul.f32 %v5142, %v613
        %v5159 = vsub.f32 %v5049, %v5143
        %v5160 = vsub.f32 %v5052, %v5144
        %v5161 = vsub.f32 %v5057, %v5145
        %v5162 = vsub.f32 %v5060, %v5146
        %v5163 = vsub.f32 %v5065, %v5147
        %v5164 = vsub.f32 %v5068, %v5148
        %v5165 = vsub.f32 %v5073, %v5149
        %v5166 = vsub.f32 %v5076, %v5150
        %v5167 = vsub.f32 %v5081, %v5151
        %v5168 = vsub.f32 %v5084, %v5152
        %v5169 = vsub.f32 %v5089, %v5153
        %v5170 = vsub.f32 %v5092, %v5154
        %v5171 = vsub.f32 %v5097, %v5155
        %v5172 = vsub.f32 %v5100, %v5156
        %v5173 = vsub.f32 %v5105, %v5157
        %v5174 = vsub.f32 %v5108, %v5158
        %v5175 = vmul.f32 %v5159, %v5159
        %v5176 = vmul.f32 %v5160, %v5160
        %v5177 = vmul.f32 %v5161, %v5161
        %v5178 = vmul.f32 %v5162, %v5162
        %v5179 = vmul.f32 %v5163, %v5163
        %v5180 = vmul.f32 %v5164, %v5164
        %v5181 = vmul.f32 %v5165, %v5165
        %v5182 = vmul.f32 %v5166, %v5166
        %v5183 = vmul.f32 %v5167, %v5167
        %v5184 = vmul.f32 %v5168, %v5168
        %v5185 = vmul.f32 %v5169, %v5169
        %v5186 = vmul.f32 %v5170, %v5170
        %v5187 = vmul.f32 %v5171, %v5171
        %v5188 = vmul.f32 %v5172, %v5172
        %v5189 = vmul.f32 %v5173, %v5173
        %v5190 = vmul.f32 %v5174, %v5174
        %5191 = vadd.xlane.f32.xlu0 %v5175
        %v5192 = vpop.xlane.xlu0 %5191
        %5193 = vadd.xlane.f32.xlu0 %v5176
        %v5194 = vpop.xlane.xlu0 %5193
        %5195 = vadd.xlane.f32.xlu0 %v5177
        %v5196 = vpop.xlane.xlu0 %5195
        %5197 = vadd.xlane.f32.xlu0 %v5178
        %v5198 = vpop.xlane.xlu0 %5197
        %5199 = vadd.xlane.f32.xlu0 %v5179
        %v5200 = vpop.xlane.xlu0 %5199
        %5201 = vadd.xlane.f32.xlu0 %v5180
        %v5202 = vpop.xlane.xlu0 %5201
        %5203 = vadd.xlane.f32.xlu0 %v5181
        %v5204 = vpop.xlane.xlu0 %5203
        %5205 = vadd.xlane.f32.xlu0 %v5182
        %v5206 = vpop.xlane.xlu0 %5205
        %5207 = vadd.xlane.f32.xlu0 %v5183
        %v5208 = vpop.xlane.xlu0 %5207
        %5209 = vadd.xlane.f32.xlu0 %v5184
        %v5210 = vpop.xlane.xlu0 %5209
        %5211 = vadd.xlane.f32.xlu0 %v5185
        %v5212 = vpop.xlane.xlu0 %5211
        %5213 = vadd.xlane.f32.xlu0 %v5186
        %v5214 = vpop.xlane.xlu0 %5213
        %5215 = vadd.xlane.f32.xlu0 %v5187
        %v5216 = vpop.xlane.xlu0 %5215
        %5217 = vadd.xlane.f32.xlu0 %v5188
        %v5218 = vpop.xlane.xlu0 %5217
        %5219 = vadd.xlane.f32.xlu0 %v5189
        %v5220 = vpop.xlane.xlu0 %5219
        %5221 = vadd.xlane.f32.xlu0 %v5190
        %v5222 = vpop.xlane.xlu0 %5221
        %v5223 = vmul.f32 %v5192, %v613
        %v5224 = vmul.f32 %v5194, %v613
        %v5225 = vmul.f32 %v5196, %v613
        %v5226 = vmul.f32 %v5198, %v613
        %v5227 = vmul.f32 %v5200, %v613
        %v5228 = vmul.f32 %v5202, %v613
        %v5229 = vmul.f32 %v5204, %v613
        %v5230 = vmul.f32 %v5206, %v613
        %v5231 = vmul.f32 %v5208, %v613
        %v5232 = vmul.f32 %v5210, %v613
        %v5233 = vmul.f32 %v5212, %v613
        %v5234 = vmul.f32 %v5214, %v613
        %v5235 = vmul.f32 %v5216, %v613
        %v5236 = vmul.f32 %v5218, %v613
        %v5237 = vmul.f32 %v5220, %v613
        %v5238 = vmul.f32 %v5222, %v613
        %v5239 = vadd.f32 %v5223, 1e-05
        %v5240 = vadd.f32 %v5224, 1e-05
        %v5241 = vadd.f32 %v5225, 1e-05
        %v5242 = vadd.f32 %v5226, 1e-05
        %v5243 = vadd.f32 %v5227, 1e-05
        %v5244 = vadd.f32 %v5228, 1e-05
        %v5245 = vadd.f32 %v5229, 1e-05
        %v5246 = vadd.f32 %v5230, 1e-05
        %v5247 = vadd.f32 %v5231, 1e-05
        %v5248 = vadd.f32 %v5232, 1e-05
        %v5249 = vadd.f32 %v5233, 1e-05
        %v5250 = vadd.f32 %v5234, 1e-05
        %v5251 = vadd.f32 %v5235, 1e-05
        %v5252 = vadd.f32 %v5236, 1e-05
        %v5253 = vadd.f32 %v5237, 1e-05
        %v5254 = vadd.f32 %v5238, 1e-05
        %v5255 = vrsqrt.pop %v5239
        %v5256 = vrsqrt.pop %v5240
        %v5257 = vrsqrt.pop %v5241
        %v5258 = vrsqrt.pop %v5242
        %v5259 = vrsqrt.pop %v5243
        %v5260 = vrsqrt.pop %v5244
        %v5261 = vrsqrt.pop %v5245
        %v5262 = vrsqrt.pop %v5246
        %v5263 = vrsqrt.pop %v5247
        %v5264 = vrsqrt.pop %v5248
        %v5265 = vrsqrt.pop %v5249
        %v5266 = vrsqrt.pop %v5250
        %v5267 = vrsqrt.pop %v5251
        %v5268 = vrsqrt.pop %v5252
        %v5269 = vrsqrt.pop %v5253
        %v5270 = vrsqrt.pop %v5254
        %v5271 = vmul.f32 %v5159, %v5255
        %v5272 = vmul.f32 %v5160, %v5256
        %v5273 = vmul.f32 %v5161, %v5257
        %v5274 = vmul.f32 %v5162, %v5258
        %v5275 = vmul.f32 %v5163, %v5259
        %v5276 = vmul.f32 %v5164, %v5260
        %v5277 = vmul.f32 %v5165, %v5261
        %v5278 = vmul.f32 %v5166, %v5262
        %v5279 = vmul.f32 %v5167, %v5263
        %v5280 = vmul.f32 %v5168, %v5264
        %v5281 = vmul.f32 %v5169, %v5265
        %v5282 = vmul.f32 %v5170, %v5266
        %v5283 = vmul.f32 %v5171, %v5267
        %v5284 = vmul.f32 %v5172, %v5268
        %v5285 = vmul.f32 %v5173, %v5269
        %v5286 = vmul.f32 %v5174, %v5270
        %v5287 = vmul.f32 %v5271, %v4956
        %v5288 = vmul.f32 %v5272, %v4956
        %v5289 = vmul.f32 %v5273, %v4956
        %v5290 = vmul.f32 %v5274, %v4956
        %v5291 = vmul.f32 %v5275, %v4956
        %v5292 = vmul.f32 %v5276, %v4956
        %v5293 = vmul.f32 %v5277, %v4956
        %v5294 = vmul.f32 %v5278, %v4956
        %v5295 = vmul.f32 %v5279, %v4956
        %v5296 = vmul.f32 %v5280, %v4956
        %v5297 = vmul.f32 %v5281, %v4956
        %v5298 = vmul.f32 %v5282, %v4956
        %v5299 = vmul.f32 %v5283, %v4956
        %v5300 = vmul.f32 %v5284, %v4956
        %v5301 = vmul.f32 %v5285, %v4956
        %v5302 = vmul.f32 %v5286, %v4956
        %v5303 = vadd.f32 %v5287, %v4957
        %v5304 = vadd.f32 %v5288, %v4957
        %v5305 = vadd.f32 %v5289, %v4957
        %v5306 = vadd.f32 %v5290, %v4957
        %v5307 = vadd.f32 %v5291, %v4957
        %v5308 = vadd.f32 %v5292, %v4957
        %v5309 = vadd.f32 %v5293, %v4957
        %v5310 = vadd.f32 %v5294, %v4957
        %v5311 = vadd.f32 %v5295, %v4957
        %v5312 = vadd.f32 %v5296, %v4957
        %v5313 = vadd.f32 %v5297, %v4957
        %v5314 = vadd.f32 %v5298, %v4957
        %v5315 = vadd.f32 %v5299, %v4957
        %v5316 = vadd.f32 %v5300, %v4957
        %v5317 = vadd.f32 %v5301, %v4957
        %v5318 = vadd.f32 %v5302, %v4957
        %v5319 = vmax.f32 %v5303, 0.0
        %v5320 = vmax.f32 %v5304, 0.0
        %v5321 = vmax.f32 %v5305, 0.0
        %v5322 = vmax.f32 %v5306, 0.0
        %v5323 = vmax.f32 %v5307, 0.0
        %v5324 = vmax.f32 %v5308, 0.0
        %v5325 = vmax.f32 %v5309, 0.0
        %v5326 = vmax.f32 %v5310, 0.0
        %v5327 = vmax.f32 %v5311, 0.0
        %v5328 = vmax.f32 %v5312, 0.0
        %v5329 = vmax.f32 %v5313, 0.0
        %v5330 = vmax.f32 %v5314, 0.0
        %v5331 = vmax.f32 %v5315, 0.0
        %v5332 = vmax.f32 %v5316, 0.0
        %v5333 = vmax.f32 %v5317, 0.0
        %v5334 = vmax.f32 %v5318, 0.0
        %v5335 = vld [vmem:[#allocation7 + $0x100] sm:$0xff]
        %v5336 = vld [vmem:[#allocation7 + $0x108] sm:$0xff]
        %v5337 = vld [vmem:[#allocation7 + $0x110] sm:$0xff]
        %v5338 = vld [vmem:[#allocation7 + $0x118] sm:$0xff]
        %v5339 = vld [vmem:[#allocation7 + $0x120] sm:$0xff]
        %v5340 = vld [vmem:[#allocation7 + $0x128] sm:$0xff]
        %v5341 = vld [vmem:[#allocation7 + $0x130] sm:$0xff]
        %v5342 = vld [vmem:[#allocation7 + $0x138] sm:$0xff]
        %v5343 = vld [vmem:[#allocation7 + $0x140] sm:$0xff]
        %v5344 = vld [vmem:[#allocation7 + $0x148] sm:$0xff]
        %v5345 = vld [vmem:[#allocation7 + $0x150] sm:$0xff]
        %v5346 = vld [vmem:[#allocation7 + $0x158] sm:$0xff]
        %v5347 = vld [vmem:[#allocation7 + $0x160] sm:$0xff]
        %v5348 = vld [vmem:[#allocation7 + $0x168] sm:$0xff]
        %v5349 = vld [vmem:[#allocation7 + $0x170] sm:$0xff]
        %v5350 = vld [vmem:[#allocation7 + $0x178] sm:$0xff]
        %s5351 = scalar_lea.vmem [#allocation10], 193
        %v5352 = vld [vmem:[%s5351] ss:$8 sm:$0x3]
        %s5353 = scalar_lea.vmem [#allocation10], 194
        %v5354 = vld [vmem:[%s5353] ss:$8 sm:$0x3]
        %s5355 = scalar_lea.vmem [#allocation10], 195
        %v5356 = vld [vmem:[%s5355] ss:$8 sm:$0x3]
        %v5357 = vpack.c.bf16 %v5320, %v5319
        %v5358 = vpack.c.bf16 %v5322, %v5321
        %v5359 = vpack.c.bf16 %v5324, %v5323
        %v5360 = vpack.c.bf16 %v5326, %v5325
        %v5361 = vpack.c.bf16 %v5328, %v5327
        %v5362 = vpack.c.bf16 %v5330, %v5329
        %v5363 = vpack.c.bf16 %v5332, %v5331
        %v5364 = vpack.c.bf16 %v5334, %v5333
        %v5366 = vlaneseq
        %v5367 = vshrl.u32 %v5366, 7
        %v5368 = vsub.s32 0, %v5367
        %v5369 = vrot.slane %v5352, %v5368
        %v5370 = vlaneseq
        %v5371 = vshrl.u32 %v5370, 7
        %v5372 = vsub.s32 1, %v5371
        %v5373 = vrot.slane %v5352, %v5372
        %v5392 = vunpack.c.l.b16 %v5335
        %v5393 = vunpack.c.h.b16 %v5335
        %v5394 = vunpack.c.l.b16 %v5336
        %v5395 = vunpack.c.h.b16 %v5336
        %v5396 = vunpack.c.l.b16 %v5337
        %v5397 = vunpack.c.h.b16 %v5337
        %v5398 = vunpack.c.l.b16 %v5338
        %v5399 = vunpack.c.h.b16 %v5338
        %v5400 = vunpack.c.l.b16 %v5339
        %v5401 = vunpack.c.h.b16 %v5339
        %v5402 = vunpack.c.l.b16 %v5340
        %v5403 = vunpack.c.h.b16 %v5340
        %v5404 = vunpack.c.l.b16 %v5341
        %v5405 = vunpack.c.h.b16 %v5341
        %v5406 = vunpack.c.l.b16 %v5342
        %v5407 = vunpack.c.h.b16 %v5342
        %v5408 = vunpack.c.l.b16 %v5343
        %v5409 = vunpack.c.h.b16 %v5343
        %v5410 = vunpack.c.l.b16 %v5344
        %v5411 = vunpack.c.h.b16 %v5344
        %v5412 = vunpack.c.l.b16 %v5345
        %v5413 = vunpack.c.h.b16 %v5345
        %v5414 = vunpack.c.l.b16 %v5346
        %v5415 = vunpack.c.h.b16 %v5346
        %v5416 = vunpack.c.l.b16 %v5347
        %v5417 = vunpack.c.h.b16 %v5347
        %v5418 = vunpack.c.l.b16 %v5348
        %v5419 = vunpack.c.h.b16 %v5348
        %v5420 = vunpack.c.l.b16 %v5349
        %v5421 = vunpack.c.h.b16 %v5349
        %v5422 = vunpack.c.l.b16 %v5350
        %v5423 = vunpack.c.h.b16 %v5350
        %v5424 = vpack.c.b16 %v5394, %v5392
        %v5425 = vpack.c.b16 %v5395, %v5393
        %v5426 = vpack.c.b16 %v5398, %v5396
        %v5427 = vpack.c.b16 %v5399, %v5397
        %v5428 = vpack.c.b16 %v5402, %v5400
        %v5429 = vpack.c.b16 %v5403, %v5401
        %v5430 = vpack.c.b16 %v5406, %v5404
        %v5431 = vpack.c.b16 %v5407, %v5405
        %v5432 = vpack.c.b16 %v5410, %v5408
        %v5433 = vpack.c.b16 %v5411, %v5409
        %v5434 = vpack.c.b16 %v5414, %v5412
        %v5435 = vpack.c.b16 %v5415, %v5413
        %v5436 = vpack.c.b16 %v5418, %v5416
        %v5437 = vpack.c.b16 %v5419, %v5417
        %v5438 = vpack.c.b16 %v5422, %v5420
        %v5439 = vpack.c.b16 %v5423, %v5421
        %5456 = vmatprep.subr.bf16.mxu0 %v5439
        %5457 = vmatpush1.bf16.msra.mxu0 %v5438
        %5458 = vmatprep.subr.bf16.mxu0 %v5437
        %5459 = vmatpush1.bf16.msra.mxu0 %v5436
        %5460 = vmatprep.subr.bf16.mxu0 %v5435
        %5461 = vmatpush1.bf16.msra.mxu0 %v5434
        %5462 = vmatprep.subr.bf16.mxu0 %v5433
        %5463 = vmatpush1.bf16.msra.mxu0 %v5432
        %5464 = vmatprep.subr.bf16.mxu0 %v5431
        %5465 = vmatpush1.bf16.msra.mxu0 %v5430
        %5466 = vmatprep.subr.bf16.mxu0 %v5429
        %5467 = vmatpush1.bf16.msra.mxu0 %v5428
        %5468 = vmatprep.subr.bf16.mxu0 %v5427
        %5469 = vmatpush1.bf16.msra.mxu0 %v5426
        %5470 = vmatprep.subr.bf16.mxu0 %v5425
        %5471 = vmatpush1.bf16.msra.mxu0 %v5424
        %5472 = vmatprep.subr.bf16.mxu0 0
        %5473 = vmatpush2.bf16.msra.mxu0 0
        %5474 = vmatprep.subr.bf16.mxu0 0
        %5475 = vmatpush2.bf16.msra.mxu0 0
        %5476 = vmatprep.subr.bf16.mxu0 0
        %5477 = vmatpush2.bf16.msra.mxu0 0
        %5478 = vmatprep.subr.bf16.mxu0 0
        %5479 = vmatpush2.bf16.msra.mxu0 0
        %5480 = vmatprep.subr.bf16.mxu0 0
        %5481 = vmatpush2.bf16.msra.mxu0 0
        %5482 = vmatprep.subr.bf16.mxu0 0
        %5483 = vmatpush2.bf16.msra.mxu0 0
        %5484 = vmatprep.subr.bf16.mxu0 0
        %5485 = vmatpush2.bf16.msra.mxu0 0
        %5486 = vmatprep.subr.bf16.mxu0 0
        %5487 = vmatpush2.bf16.msra.mxu0 0
        %5488 = vmatprep.mubr.bf16.mxu0 0
        %5489 = vmatmul.mubr.bf16.gmra.mxu0 %v5357
        %v5490 = vpop.f32.mrf.mxu0
        %v5491 = vadd.f32 %v5369, %v5490
        %v5492 = vpop.f32.mrf.mxu0
        %v5493 = vadd.f32 %v5373, %v5492
        %v5494 = vpop.f32.mrf.mxu0
        %v5495 = vadd.f32 %v5369, %v5494
        %v5496 = vpop.f32.mrf.mxu0
        %v5497 = vadd.f32 %v5373, %v5496
        %5498 = vmatprep.mubr.bf16.mxu0 0
        %5499 = vmatmul.mubr.bf16.gmra.mxu0 %v5358
        %v5500 = vpop.f32.mrf.mxu0
        %v5501 = vadd.f32 %v5369, %v5500
        %v5502 = vpop.f32.mrf.mxu0
        %v5503 = vadd.f32 %v5373, %v5502
        %v5504 = vpop.f32.mrf.mxu0
        %v5505 = vadd.f32 %v5369, %v5504
        %v5506 = vpop.f32.mrf.mxu0
        %v5507 = vadd.f32 %v5373, %v5506
        %5508 = vmatprep.mubr.bf16.mxu0 0
        %5509 = vmatmul.mubr.bf16.gmra.mxu0 %v5359
        %v5510 = vpop.f32.mrf.mxu0
        %v5511 = vadd.f32 %v5369, %v5510
        %v5512 = vpop.f32.mrf.mxu0
        %v5513 = vadd.f32 %v5373, %v5512
        %v5514 = vpop.f32.mrf.mxu0
        %v5515 = vadd.f32 %v5369, %v5514
        %v5516 = vpop.f32.mrf.mxu0
        %v5517 = vadd.f32 %v5373, %v5516
        %5518 = vmatprep.mubr.bf16.mxu0 0
        %5519 = vmatmul.mubr.bf16.gmra.mxu0 %v5360
        %v5520 = vpop.f32.mrf.mxu0
        %v5521 = vadd.f32 %v5369, %v5520
        %v5522 = vpop.f32.mrf.mxu0
        %v5523 = vadd.f32 %v5373, %v5522
        %v5524 = vpop.f32.mrf.mxu0
        %v5525 = vadd.f32 %v5369, %v5524
        %v5526 = vpop.f32.mrf.mxu0
        %v5527 = vadd.f32 %v5373, %v5526
        %5528 = vmatprep.mubr.bf16.mxu0 0
        %5529 = vmatmul.mubr.bf16.gmra.mxu0 %v5361
        %v5530 = vpop.f32.mrf.mxu0
        %v5531 = vadd.f32 %v5369, %v5530
        %v5532 = vpop.f32.mrf.mxu0
        %v5533 = vadd.f32 %v5373, %v5532
        %v5534 = vpop.f32.mrf.mxu0
        %v5535 = vadd.f32 %v5369, %v5534
        %v5536 = vpop.f32.mrf.mxu0
        %v5537 = vadd.f32 %v5373, %v5536
        %5538 = vmatprep.mubr.bf16.mxu0 0
        %5539 = vmatmul.mubr.bf16.gmra.mxu0 %v5362
        %v5540 = vpop.f32.mrf.mxu0
        %v5541 = vadd.f32 %v5369, %v5540
        %v5542 = vpop.f32.mrf.mxu0
        %v5543 = vadd.f32 %v5373, %v5542
        %v5544 = vpop.f32.mrf.mxu0
        %v5545 = vadd.f32 %v5369, %v5544
        %v5546 = vpop.f32.mrf.mxu0
        %v5547 = vadd.f32 %v5373, %v5546
        %5548 = vmatprep.mubr.bf16.mxu0 0
        %5549 = vmatmul.mubr.bf16.gmra.mxu0 %v5363
        %v5550 = vpop.f32.mrf.mxu0
        %v5551 = vadd.f32 %v5369, %v5550
        %v5552 = vpop.f32.mrf.mxu0
        %v5553 = vadd.f32 %v5373, %v5552
        %v5554 = vpop.f32.mrf.mxu0
        %v5555 = vadd.f32 %v5369, %v5554
        %v5556 = vpop.f32.mrf.mxu0
        %v5557 = vadd.f32 %v5373, %v5556
        %5558 = vmatprep.mubr.bf16.mxu0 0
        %5559 = vmatmul.mubr.bf16.gmra.mxu0 %v5364
        %v5560 = vpop.f32.mrf.mxu0
        %v5561 = vadd.f32 %v5369, %v5560
        %v5562 = vpop.f32.mrf.mxu0
        %v5563 = vadd.f32 %v5373, %v5562
        %v5564 = vpop.f32.mrf.mxu0
        %v5565 = vadd.f32 %v5369, %v5564
        %v5566 = vpop.f32.mrf.mxu0
        %v5567 = vadd.f32 %v5373, %v5566
        %5568 = vdwg.mxu0
        %v5569 = vadd.f32 %v5491, %v5493
        %5570 = vadd.xlane.f32.xlu0 %v5569
        %v5571 = vpop.xlane.xlu0 %5570
        %v5572 = vadd.f32 %v5495, %v5497
        %5573 = vadd.xlane.f32.xlu0 %v5572
        %v5574 = vpop.xlane.xlu0 %5573
        %v5575 = vadd.f32 %v5501, %v5503
        %5576 = vadd.xlane.f32.xlu0 %v5575
        %v5577 = vpop.xlane.xlu0 %5576
        %v5578 = vadd.f32 %v5505, %v5507
        %5579 = vadd.xlane.f32.xlu0 %v5578
        %v5580 = vpop.xlane.xlu0 %5579
        %v5581 = vadd.f32 %v5511, %v5513
        %5582 = vadd.xlane.f32.xlu0 %v5581
        %v5583 = vpop.xlane.xlu0 %5582
        %v5584 = vadd.f32 %v5515, %v5517
        %5585 = vadd.xlane.f32.xlu0 %v5584
        %v5586 = vpop.xlane.xlu0 %5585
        %v5587 = vadd.f32 %v5521, %v5523
        %5588 = vadd.xlane.f32.xlu0 %v5587
        %v5589 = vpop.xlane.xlu0 %5588
        %v5590 = vadd.f32 %v5525, %v5527
        %5591 = vadd.xlane.f32.xlu0 %v5590
        %v5592 = vpop.xlane.xlu0 %5591
        %v5593 = vadd.f32 %v5531, %v5533
        %5594 = vadd.xlane.f32.xlu0 %v5593
        %v5595 = vpop.xlane.xlu0 %5594
        %v5596 = vadd.f32 %v5535, %v5537
        %5597 = vadd.xlane.f32.xlu0 %v5596
        %v5598 = vpop.xlane.xlu0 %5597
        %v5599 = vadd.f32 %v5541, %v5543
        %5600 = vadd.xlane.f32.xlu0 %v5599
        %v5601 = vpop.xlane.xlu0 %5600
        %v5602 = vadd.f32 %v5545, %v5547
        %5603 = vadd.xlane.f32.xlu0 %v5602
        %v5604 = vpop.xlane.xlu0 %5603
        %v5605 = vadd.f32 %v5551, %v5553
        %5606 = vadd.xlane.f32.xlu0 %v5605
        %v5607 = vpop.xlane.xlu0 %5606
        %v5608 = vadd.f32 %v5555, %v5557
        %5609 = vadd.xlane.f32.xlu0 %v5608
        %v5610 = vpop.xlane.xlu0 %5609
        %v5611 = vadd.f32 %v5561, %v5563
        %5612 = vadd.xlane.f32.xlu0 %v5611
        %v5613 = vpop.xlane.xlu0 %5612
        %v5614 = vadd.f32 %v5565, %v5567
        %5615 = vadd.xlane.f32.xlu0 %v5614
        %v5616 = vpop.xlane.xlu0 %5615
        %v5617 = vmul.f32 %v5571, %v1880
        %v5618 = vmul.f32 %v5574, %v1880
        %v5619 = vmul.f32 %v5577, %v1880
        %v5620 = vmul.f32 %v5580, %v1880
        %v5621 = vmul.f32 %v5583, %v1880
        %v5622 = vmul.f32 %v5586, %v1880
        %v5623 = vmul.f32 %v5589, %v1880
        %v5624 = vmul.f32 %v5592, %v1880
        %v5625 = vmul.f32 %v5595, %v1880
        %v5626 = vmul.f32 %v5598, %v1880
        %v5627 = vmul.f32 %v5601, %v1880
        %v5628 = vmul.f32 %v5604, %v1880
        %v5629 = vmul.f32 %v5607, %v1880
        %v5630 = vmul.f32 %v5610, %v1880
        %v5631 = vmul.f32 %v5613, %v1880
        %v5632 = vmul.f32 %v5616, %v1880
        %v5633 = vsub.f32 %v5491, %v5617
        %v5634 = vsub.f32 %v5493, %v5617
        %v5635 = vsub.f32 %v5495, %v5618
        %v5636 = vsub.f32 %v5497, %v5618
        %v5637 = vsub.f32 %v5501, %v5619
        %v5638 = vsub.f32 %v5503, %v5619
        %v5639 = vsub.f32 %v5505, %v5620
        %v5640 = vsub.f32 %v5507, %v5620
        %v5641 = vsub.f32 %v5511, %v5621
        %v5642 = vsub.f32 %v5513, %v5621
        %v5643 = vsub.f32 %v5515, %v5622
        %v5644 = vsub.f32 %v5517, %v5622
        %v5645 = vsub.f32 %v5521, %v5623
        %v5646 = vsub.f32 %v5523, %v5623
        %v5647 = vsub.f32 %v5525, %v5624
        %v5648 = vsub.f32 %v5527, %v5624
        %v5649 = vsub.f32 %v5531, %v5625
        %v5650 = vsub.f32 %v5533, %v5625
        %v5651 = vsub.f32 %v5535, %v5626
        %v5652 = vsub.f32 %v5537, %v5626
        %v5653 = vsub.f32 %v5541, %v5627
        %v5654 = vsub.f32 %v5543, %v5627
        %v5655 = vsub.f32 %v5545, %v5628
        %v5656 = vsub.f32 %v5547, %v5628
        %v5657 = vsub.f32 %v5551, %v5629
        %v5658 = vsub.f32 %v5553, %v5629
        %v5659 = vsub.f32 %v5555, %v5630
        %v5660 = vsub.f32 %v5557, %v5630
        %v5661 = vsub.f32 %v5561, %v5631
        %v5662 = vsub.f32 %v5563, %v5631
        %v5663 = vsub.f32 %v5565, %v5632
        %v5664 = vsub.f32 %v5567, %v5632
        %v5665 = vmul.f32 %v5633, %v5633
        %v5666 = vmul.f32 %v5634, %v5634
        %v5667 = vmul.f32 %v5635, %v5635
        %v5668 = vmul.f32 %v5636, %v5636
        %v5669 = vmul.f32 %v5637, %v5637
        %v5670 = vmul.f32 %v5638, %v5638
        %v5671 = vmul.f32 %v5639, %v5639
        %v5672 = vmul.f32 %v5640, %v5640
        %v5673 = vmul.f32 %v5641, %v5641
        %v5674 = vmul.f32 %v5642, %v5642
        %v5675 = vmul.f32 %v5643, %v5643
        %v5676 = vmul.f32 %v5644, %v5644
        %v5677 = vmul.f32 %v5645, %v5645
        %v5678 = vmul.f32 %v5646, %v5646
        %v5679 = vmul.f32 %v5647, %v5647
        %v5680 = vmul.f32 %v5648, %v5648
        %v5681 = vmul.f32 %v5649, %v5649
        %v5682 = vmul.f32 %v5650, %v5650
        %v5683 = vmul.f32 %v5651, %v5651
        %v5684 = vmul.f32 %v5652, %v5652
        %v5685 = vmul.f32 %v5653, %v5653
        %v5686 = vmul.f32 %v5654, %v5654
        %v5687 = vmul.f32 %v5655, %v5655
        %v5688 = vmul.f32 %v5656, %v5656
        %v5689 = vmul.f32 %v5657, %v5657
        %v5690 = vmul.f32 %v5658, %v5658
        %v5691 = vmul.f32 %v5659, %v5659
        %v5692 = vmul.f32 %v5660, %v5660
        %v5693 = vmul.f32 %v5661, %v5661
        %v5694 = vmul.f32 %v5662, %v5662
        %v5695 = vmul.f32 %v5663, %v5663
        %v5696 = vmul.f32 %v5664, %v5664
        %v5697 = vadd.f32 %v5665, %v5666
        %5698 = vadd.xlane.f32.xlu0 %v5697
        %v5699 = vpop.xlane.xlu0 %5698
        %v5700 = vadd.f32 %v5667, %v5668
        %5701 = vadd.xlane.f32.xlu0 %v5700
        %v5702 = vpop.xlane.xlu0 %5701
        %v5703 = vadd.f32 %v5669, %v5670
        %5704 = vadd.xlane.f32.xlu0 %v5703
        %v5705 = vpop.xlane.xlu0 %5704
        %v5706 = vadd.f32 %v5671, %v5672
        %5707 = vadd.xlane.f32.xlu0 %v5706
        %v5708 = vpop.xlane.xlu0 %5707
        %v5709 = vadd.f32 %v5673, %v5674
        %5710 = vadd.xlane.f32.xlu0 %v5709
        %v5711 = vpop.xlane.xlu0 %5710
        %v5712 = vadd.f32 %v5675, %v5676
        %5713 = vadd.xlane.f32.xlu0 %v5712
        %v5714 = vpop.xlane.xlu0 %5713
        %v5715 = vadd.f32 %v5677, %v5678
        %5716 = vadd.xlane.f32.xlu0 %v5715
        %v5717 = vpop.xlane.xlu0 %5716
        %v5718 = vadd.f32 %v5679, %v5680
        %5719 = vadd.xlane.f32.xlu0 %v5718
        %v5720 = vpop.xlane.xlu0 %5719
        %v5721 = vadd.f32 %v5681, %v5682
        %5722 = vadd.xlane.f32.xlu0 %v5721
        %v5723 = vpop.xlane.xlu0 %5722
        %v5724 = vadd.f32 %v5683, %v5684
        %5725 = vadd.xlane.f32.xlu0 %v5724
        %v5726 = vpop.xlane.xlu0 %5725
        %v5727 = vadd.f32 %v5685, %v5686
        %5728 = vadd.xlane.f32.xlu0 %v5727
        %v5729 = vpop.xlane.xlu0 %5728
        %v5730 = vadd.f32 %v5687, %v5688
        %5731 = vadd.xlane.f32.xlu0 %v5730
        %v5732 = vpop.xlane.xlu0 %5731
        %v5733 = vadd.f32 %v5689, %v5690
        %5734 = vadd.xlane.f32.xlu0 %v5733
        %v5735 = vpop.xlane.xlu0 %5734
        %v5736 = vadd.f32 %v5691, %v5692
        %5737 = vadd.xlane.f32.xlu0 %v5736
        %v5738 = vpop.xlane.xlu0 %5737
        %v5739 = vadd.f32 %v5693, %v5694
        %5740 = vadd.xlane.f32.xlu0 %v5739
        %v5741 = vpop.xlane.xlu0 %5740
        %v5742 = vadd.f32 %v5695, %v5696
        %5743 = vadd.xlane.f32.xlu0 %v5742
        %v5744 = vpop.xlane.xlu0 %5743
        %v5745 = vmul.f32 %v5699, %v1880
        %v5746 = vmul.f32 %v5702, %v1880
        %v5747 = vmul.f32 %v5705, %v1880
        %v5748 = vmul.f32 %v5708, %v1880
        %v5749 = vmul.f32 %v5711, %v1880
        %v5750 = vmul.f32 %v5714, %v1880
        %v5751 = vmul.f32 %v5717, %v1880
        %v5752 = vmul.f32 %v5720, %v1880
        %v5753 = vmul.f32 %v5723, %v1880
        %v5754 = vmul.f32 %v5726, %v1880
        %v5755 = vmul.f32 %v5729, %v1880
        %v5756 = vmul.f32 %v5732, %v1880
        %v5757 = vmul.f32 %v5735, %v1880
        %v5758 = vmul.f32 %v5738, %v1880
        %v5759 = vmul.f32 %v5741, %v1880
        %v5760 = vmul.f32 %v5744, %v1880
        %v5761 = vadd.f32 %v5745, 1e-05
        %v5762 = vadd.f32 %v5746, 1e-05
        %v5763 = vadd.f32 %v5747, 1e-05
        %v5764 = vadd.f32 %v5748, 1e-05
        %v5765 = vadd.f32 %v5749, 1e-05
        %v5766 = vadd.f32 %v5750, 1e-05
        %v5767 = vadd.f32 %v5751, 1e-05
        %v5768 = vadd.f32 %v5752, 1e-05
        %v5769 = vadd.f32 %v5753, 1e-05
        %v5770 = vadd.f32 %v5754, 1e-05
        %v5771 = vadd.f32 %v5755, 1e-05
        %v5772 = vadd.f32 %v5756, 1e-05
        %v5773 = vadd.f32 %v5757, 1e-05
        %v5774 = vadd.f32 %v5758, 1e-05
        %v5775 = vadd.f32 %v5759, 1e-05
        %v5776 = vadd.f32 %v5760, 1e-05
        %v5777 = vrsqrt.pop %v5761
        %v5778 = vrsqrt.pop %v5762
        %v5779 = vrsqrt.pop %v5763
        %v5780 = vrsqrt.pop %v5764
        %v5781 = vrsqrt.pop %v5765
        %v5782 = vrsqrt.pop %v5766
        %v5783 = vrsqrt.pop %v5767
        %v5784 = vrsqrt.pop %v5768
        %v5785 = vrsqrt.pop %v5769
        %v5786 = vrsqrt.pop %v5770
        %v5787 = vrsqrt.pop %v5771
        %v5788 = vrsqrt.pop %v5772
        %v5789 = vrsqrt.pop %v5773
        %v5790 = vrsqrt.pop %v5774
        %v5791 = vrsqrt.pop %v5775
        %v5792 = vrsqrt.pop %v5776
        %v5793 = vmul.f32 %v5633, %v5777
        %v5794 = vmul.f32 %v5634, %v5777
        %v5795 = vmul.f32 %v5635, %v5778
        %v5796 = vmul.f32 %v5636, %v5778
        %v5797 = vmul.f32 %v5637, %v5779
        %v5798 = vmul.f32 %v5638, %v5779
        %v5799 = vmul.f32 %v5639, %v5780
        %v5800 = vmul.f32 %v5640, %v5780
        %v5801 = vmul.f32 %v5641, %v5781
        %v5802 = vmul.f32 %v5642, %v5781
        %v5803 = vmul.f32 %v5643, %v5782
        %v5804 = vmul.f32 %v5644, %v5782
        %v5805 = vmul.f32 %v5645, %v5783
        %v5806 = vmul.f32 %v5646, %v5783
        %v5807 = vmul.f32 %v5647, %v5784
        %v5808 = vmul.f32 %v5648, %v5784
        %v5809 = vmul.f32 %v5649, %v5785
        %v5810 = vmul.f32 %v5650, %v5785
        %v5811 = vmul.f32 %v5651, %v5786
        %v5812 = vmul.f32 %v5652, %v5786
        %v5813 = vmul.f32 %v5653, %v5787
        %v5814 = vmul.f32 %v5654, %v5787
        %v5815 = vmul.f32 %v5655, %v5788
        %v5816 = vmul.f32 %v5656, %v5788
        %v5817 = vmul.f32 %v5657, %v5789
        %v5818 = vmul.f32 %v5658, %v5789
        %v5819 = vmul.f32 %v5659, %v5790
        %v5820 = vmul.f32 %v5660, %v5790
        %v5821 = vmul.f32 %v5661, %v5791
        %v5822 = vmul.f32 %v5662, %v5791
        %v5823 = vmul.f32 %v5663, %v5792
        %v5824 = vmul.f32 %v5664, %v5792
        %v5826 = vlaneseq
        %v5827 = vshrl.u32 %v5826, 7
        %v5828 = vsub.s32 0, %v5827
        %v5829 = vrot.slane %v5354, %v5828
        %v5830 = vlaneseq
        %v5831 = vshrl.u32 %v5830, 7
        %v5832 = vsub.s32 1, %v5831
        %v5833 = vrot.slane %v5354, %v5832
        %v5836 = vmul.f32 %v5793, %v5829
        %v5837 = vmul.f32 %v5794, %v5833
        %v5838 = vmul.f32 %v5795, %v5829
        %v5839 = vmul.f32 %v5796, %v5833
        %v5840 = vmul.f32 %v5797, %v5829
        %v5841 = vmul.f32 %v5798, %v5833
        %v5842 = vmul.f32 %v5799, %v5829
        %v5843 = vmul.f32 %v5800, %v5833
        %v5844 = vmul.f32 %v5801, %v5829
        %v5845 = vmul.f32 %v5802, %v5833
        %v5846 = vmul.f32 %v5803, %v5829
        %v5847 = vmul.f32 %v5804, %v5833
        %v5848 = vmul.f32 %v5805, %v5829
        %v5849 = vmul.f32 %v5806, %v5833
        %v5850 = vmul.f32 %v5807, %v5829
        %v5851 = vmul.f32 %v5808, %v5833
        %v5852 = vmul.f32 %v5809, %v5829
        %v5853 = vmul.f32 %v5810, %v5833
        %v5854 = vmul.f32 %v5811, %v5829
        %v5855 = vmul.f32 %v5812, %v5833
        %v5856 = vmul.f32 %v5813, %v5829
        %v5857 = vmul.f32 %v5814, %v5833
        %v5858 = vmul.f32 %v5815, %v5829
        %v5859 = vmul.f32 %v5816, %v5833
        %v5860 = vmul.f32 %v5817, %v5829
        %v5861 = vmul.f32 %v5818, %v5833
        %v5862 = vmul.f32 %v5819, %v5829
        %v5863 = vmul.f32 %v5820, %v5833
        %v5864 = vmul.f32 %v5821, %v5829
        %v5865 = vmul.f32 %v5822, %v5833
        %v5866 = vmul.f32 %v5823, %v5829
        %v5867 = vmul.f32 %v5824, %v5833
        %v5869 = vlaneseq
        %v5870 = vshrl.u32 %v5869, 7
        %v5871 = vsub.s32 0, %v5870
        %v5872 = vrot.slane %v5356, %v5871
        %v5873 = vlaneseq
        %v5874 = vshrl.u32 %v5873, 7
        %v5875 = vsub.s32 1, %v5874
        %v5876 = vrot.slane %v5356, %v5875
        %v5879 = vadd.f32 %v5836, %v5872
        %v5880 = vadd.f32 %v5837, %v5876
        %v5881 = vadd.f32 %v5838, %v5872
        %v5882 = vadd.f32 %v5839, %v5876
        %v5883 = vadd.f32 %v5840, %v5872
        %v5884 = vadd.f32 %v5841, %v5876
        %v5885 = vadd.f32 %v5842, %v5872
        %v5886 = vadd.f32 %v5843, %v5876
        %v5887 = vadd.f32 %v5844, %v5872
        %v5888 = vadd.f32 %v5845, %v5876
        %v5889 = vadd.f32 %v5846, %v5872
        %v5890 = vadd.f32 %v5847, %v5876
        %v5891 = vadd.f32 %v5848, %v5872
        %v5892 = vadd.f32 %v5849, %v5876
        %v5893 = vadd.f32 %v5850, %v5872
        %v5894 = vadd.f32 %v5851, %v5876
        %v5895 = vadd.f32 %v5852, %v5872
        %v5896 = vadd.f32 %v5853, %v5876
        %v5897 = vadd.f32 %v5854, %v5872
        %v5898 = vadd.f32 %v5855, %v5876
        %v5899 = vadd.f32 %v5856, %v5872
        %v5900 = vadd.f32 %v5857, %v5876
        %v5901 = vadd.f32 %v5858, %v5872
        %v5902 = vadd.f32 %v5859, %v5876
        %v5903 = vadd.f32 %v5860, %v5872
        %v5904 = vadd.f32 %v5861, %v5876
        %v5905 = vadd.f32 %v5862, %v5872
        %v5906 = vadd.f32 %v5863, %v5876
        %v5907 = vadd.f32 %v5864, %v5872
        %v5908 = vadd.f32 %v5865, %v5876
        %v5909 = vadd.f32 %v5866, %v5872
        %v5910 = vadd.f32 %v5867, %v5876
        %v5911 = vmax.f32 %v5879, 0.0
        %v5912 = vmax.f32 %v5880, 0.0
        %v5913 = vmax.f32 %v5881, 0.0
        %v5914 = vmax.f32 %v5882, 0.0
        %v5915 = vmax.f32 %v5883, 0.0
        %v5916 = vmax.f32 %v5884, 0.0
        %v5917 = vmax.f32 %v5885, 0.0
        %v5918 = vmax.f32 %v5886, 0.0
        %v5919 = vmax.f32 %v5887, 0.0
        %v5920 = vmax.f32 %v5888, 0.0
        %v5921 = vmax.f32 %v5889, 0.0
        %v5922 = vmax.f32 %v5890, 0.0
        %v5923 = vmax.f32 %v5891, 0.0
        %v5924 = vmax.f32 %v5892, 0.0
        %v5925 = vmax.f32 %v5893, 0.0
        %v5926 = vmax.f32 %v5894, 0.0
        %v5927 = vmax.f32 %v5895, 0.0
        %v5928 = vmax.f32 %v5896, 0.0
        %v5929 = vmax.f32 %v5897, 0.0
        %v5930 = vmax.f32 %v5898, 0.0
        %v5931 = vmax.f32 %v5899, 0.0
        %v5932 = vmax.f32 %v5900, 0.0
        %v5933 = vmax.f32 %v5901, 0.0
        %v5934 = vmax.f32 %v5902, 0.0
        %v5935 = vmax.f32 %v5903, 0.0
        %v5936 = vmax.f32 %v5904, 0.0
        %v5937 = vmax.f32 %v5905, 0.0
        %v5938 = vmax.f32 %v5906, 0.0
        %v5939 = vmax.f32 %v5907, 0.0
        %v5940 = vmax.f32 %v5908, 0.0
        %v5941 = vmax.f32 %v5909, 0.0
        %v5942 = vmax.f32 %v5910, 0.0
        %v5943 = vld [vmem:[#allocation8] sm:$0xff]
        %v5944 = vld [vmem:[#allocation8 + $0x8] sm:$0xff]
        %v5945 = vld [vmem:[#allocation8 + $0x10] sm:$0xff]
        %v5946 = vld [vmem:[#allocation8 + $0x18] sm:$0xff]
        %v5947 = vld [vmem:[#allocation8 + $0x20] sm:$0xff]
        %v5948 = vld [vmem:[#allocation8 + $0x28] sm:$0xff]
        %v5949 = vld [vmem:[#allocation8 + $0x30] sm:$0xff]
        %v5950 = vld [vmem:[#allocation8 + $0x38] sm:$0xff]
        %v5951 = vld [vmem:[#allocation8 + $0x40] sm:$0xff]
        %v5952 = vld [vmem:[#allocation8 + $0x48] sm:$0xff]
        %v5953 = vld [vmem:[#allocation8 + $0x50] sm:$0xff]
        %v5954 = vld [vmem:[#allocation8 + $0x58] sm:$0xff]
        %v5955 = vld [vmem:[#allocation8 + $0x60] sm:$0xff]
        %v5956 = vld [vmem:[#allocation8 + $0x68] sm:$0xff]
        %v5957 = vld [vmem:[#allocation8 + $0x70] sm:$0xff]
        %v5958 = vld [vmem:[#allocation8 + $0x78] sm:$0xff]
        %v5959 = vld [vmem:[#allocation8 + $0x80] sm:$0xff]
        %v5960 = vld [vmem:[#allocation8 + $0x88] sm:$0xff]
        %v5961 = vld [vmem:[#allocation8 + $0x90] sm:$0xff]
        %v5962 = vld [vmem:[#allocation8 + $0x98] sm:$0xff]
        %v5963 = vld [vmem:[#allocation8 + $0xa0] sm:$0xff]
        %v5964 = vld [vmem:[#allocation8 + $0xa8] sm:$0xff]
        %v5965 = vld [vmem:[#allocation8 + $0xb0] sm:$0xff]
        %v5966 = vld [vmem:[#allocation8 + $0xb8] sm:$0xff]
        %v5967 = vld [vmem:[#allocation8 + $0xc0] sm:$0xff]
        %v5968 = vld [vmem:[#allocation8 + $0xc8] sm:$0xff]
        %v5969 = vld [vmem:[#allocation8 + $0xd0] sm:$0xff]
        %v5970 = vld [vmem:[#allocation8 + $0xd8] sm:$0xff]
        %v5971 = vld [vmem:[#allocation8 + $0xe0] sm:$0xff]
        %v5972 = vld [vmem:[#allocation8 + $0xe8] sm:$0xff]
        %v5973 = vld [vmem:[#allocation8 + $0xf0] sm:$0xff]
        %v5974 = vld [vmem:[#allocation8 + $0xf8] sm:$0xff]
        %v5975 = vld [vmem:[#allocation8 + $0x100] sm:$0xff]
        %v5976 = vld [vmem:[#allocation8 + $0x108] sm:$0xff]
        %v5977 = vld [vmem:[#allocation8 + $0x110] sm:$0xff]
        %v5978 = vld [vmem:[#allocation8 + $0x118] sm:$0xff]
        %v5979 = vld [vmem:[#allocation8 + $0x120] sm:$0xff]
        %v5980 = vld [vmem:[#allocation8 + $0x128] sm:$0xff]
        %v5981 = vld [vmem:[#allocation8 + $0x130] sm:$0xff]
        %v5982 = vld [vmem:[#allocation8 + $0x138] sm:$0xff]
        %v5983 = vld [vmem:[#allocation8 + $0x140] sm:$0xff]
        %v5984 = vld [vmem:[#allocation8 + $0x148] sm:$0xff]
        %v5985 = vld [vmem:[#allocation8 + $0x150] sm:$0xff]
        %v5986 = vld [vmem:[#allocation8 + $0x158] sm:$0xff]
        %v5987 = vld [vmem:[#allocation8 + $0x160] sm:$0xff]
        %v5988 = vld [vmem:[#allocation8 + $0x168] sm:$0xff]
        %v5989 = vld [vmem:[#allocation8 + $0x170] sm:$0xff]
        %v5990 = vld [vmem:[#allocation8 + $0x178] sm:$0xff]
        %v5991 = vld [vmem:[#allocation8 + $0x180] sm:$0xff]
        %v5992 = vld [vmem:[#allocation8 + $0x188] sm:$0xff]
        %v5993 = vld [vmem:[#allocation8 + $0x190] sm:$0xff]
        %v5994 = vld [vmem:[#allocation8 + $0x198] sm:$0xff]
        %v5995 = vld [vmem:[#allocation8 + $0x1a0] sm:$0xff]
        %v5996 = vld [vmem:[#allocation8 + $0x1a8] sm:$0xff]
        %v5997 = vld [vmem:[#allocation8 + $0x1b0] sm:$0xff]
        %v5998 = vld [vmem:[#allocation8 + $0x1b8] sm:$0xff]
        %v5999 = vld [vmem:[#allocation8 + $0x1c0] sm:$0xff]
        %v6000 = vld [vmem:[#allocation8 + $0x1c8] sm:$0xff]
        %v6001 = vld [vmem:[#allocation8 + $0x1d0] sm:$0xff]
        %v6002 = vld [vmem:[#allocation8 + $0x1d8] sm:$0xff]
        %v6003 = vld [vmem:[#allocation8 + $0x1e0] sm:$0xff]
        %v6004 = vld [vmem:[#allocation8 + $0x1e8] sm:$0xff]
        %v6005 = vld [vmem:[#allocation8 + $0x1f0] sm:$0xff]
        %v6006 = vld [vmem:[#allocation8 + $0x1f8] sm:$0xff]
        %v6007 = vld [vmem:[#allocation8 + $0x200] sm:$0xff]
        %v6008 = vld [vmem:[#allocation8 + $0x208] sm:$0xff]
        %v6009 = vld [vmem:[#allocation8 + $0x210] sm:$0xff]
        %v6010 = vld [vmem:[#allocation8 + $0x218] sm:$0xff]
        %v6011 = vld [vmem:[#allocation8 + $0x220] sm:$0xff]
        %v6012 = vld [vmem:[#allocation8 + $0x228] sm:$0xff]
        %v6013 = vld [vmem:[#allocation8 + $0x230] sm:$0xff]
        %v6014 = vld [vmem:[#allocation8 + $0x238] sm:$0xff]
        %v6015 = vld [vmem:[#allocation8 + $0x240] sm:$0xff]
        %v6016 = vld [vmem:[#allocation8 + $0x248] sm:$0xff]
        %v6017 = vld [vmem:[#allocation8 + $0x250] sm:$0xff]
        %v6018 = vld [vmem:[#allocation8 + $0x258] sm:$0xff]
        %v6019 = vld [vmem:[#allocation8 + $0x260] sm:$0xff]
        %v6020 = vld [vmem:[#allocation8 + $0x268] sm:$0xff]
        %v6021 = vld [vmem:[#allocation8 + $0x270] sm:$0xff]
        %v6022 = vld [vmem:[#allocation8 + $0x278] sm:$0xff]
        %v6023 = vld [vmem:[#allocation8 + $0x280] sm:$0xff]
        %v6024 = vld [vmem:[#allocation8 + $0x288] sm:$0xff]
        %v6025 = vld [vmem:[#allocation8 + $0x290] sm:$0xff]
        %v6026 = vld [vmem:[#allocation8 + $0x298] sm:$0xff]
        %v6027 = vld [vmem:[#allocation8 + $0x2a0] sm:$0xff]
        %v6028 = vld [vmem:[#allocation8 + $0x2a8] sm:$0xff]
        %v6029 = vld [vmem:[#allocation8 + $0x2b0] sm:$0xff]
        %v6030 = vld [vmem:[#allocation8 + $0x2b8] sm:$0xff]
        %v6031 = vld [vmem:[#allocation8 + $0x2c0] sm:$0xff]
        %v6032 = vld [vmem:[#allocation8 + $0x2c8] sm:$0xff]
        %v6033 = vld [vmem:[#allocation8 + $0x2d0] sm:$0xff]
        %v6034 = vld [vmem:[#allocation8 + $0x2d8] sm:$0xff]
        %v6035 = vld [vmem:[#allocation8 + $0x2e0] sm:$0xff]
        %v6036 = vld [vmem:[#allocation8 + $0x2e8] sm:$0xff]
        %v6037 = vld [vmem:[#allocation8 + $0x2f0] sm:$0xff]
        %v6038 = vld [vmem:[#allocation8 + $0x2f8] sm:$0xff]
        %s6039 = scalar_lea.vmem [#allocation10], 196
        %v6040 = vld [vmem:[%s6039] ss:$8 sm:$0xf]
        %v6041 = vld [vmem:[%s6039] ss:$8 sm:$0x30]
        %v6042 = vor.u32 %v6040, %v6041
        %v6043 = vpack.c.bf16 %v5913, %v5911
        %v6044 = vpack.c.bf16 %v5914, %v5912
        %v6045 = vpack.c.bf16 %v5917, %v5915
        %v6046 = vpack.c.bf16 %v5918, %v5916
        %v6047 = vpack.c.bf16 %v5921, %v5919
        %v6048 = vpack.c.bf16 %v5922, %v5920
        %v6049 = vpack.c.bf16 %v5925, %v5923
        %v6050 = vpack.c.bf16 %v5926, %v5924
        %v6051 = vpack.c.bf16 %v5929, %v5927
        %v6052 = vpack.c.bf16 %v5930, %v5928
        %v6053 = vpack.c.bf16 %v5933, %v5931
        %v6054 = vpack.c.bf16 %v5934, %v5932
        %v6055 = vpack.c.bf16 %v5937, %v5935
        %v6056 = vpack.c.bf16 %v5938, %v5936
        %v6057 = vpack.c.bf16 %v5941, %v5939
        %v6058 = vpack.c.bf16 %v5942, %v5940
        %v6060 = vlaneseq
        %v6061 = vshrl.u32 %v6060, 7
        %v6062 = vsub.s32 0, %v6061
        %v6063 = vrot.slane %v6042, %v6062
        %v6064 = vlaneseq
        %v6065 = vshrl.u32 %v6064, 7
        %v6066 = vsub.s32 1, %v6065
        %v6067 = vrot.slane %v6042, %v6066
        %v6068 = vlaneseq
        %v6069 = vshrl.u32 %v6068, 7
        %v6070 = vsub.s32 2, %v6069
        %v6071 = vrot.slane %v6042, %v6070
        %v6072 = vlaneseq
        %v6073 = vshrl.u32 %v6072, 7
        %v6074 = vsub.s32 3, %v6073
        %v6075 = vrot.slane %v6042, %v6074
        %v6076 = vlaneseq
        %v6077 = vshrl.u32 %v6076, 7
        %v6078 = vsub.s32 4, %v6077
        %v6079 = vrot.slane %v6042, %v6078
        %v6080 = vlaneseq
        %v6081 = vshrl.u32 %v6080, 7
        %v6082 = vsub.s32 5, %v6081
        %v6083 = vrot.slane %v6042, %v6082
        %v6186 = vunpack.c.l.b16 %v5943
        %v6187 = vunpack.c.h.b16 %v5943
        %v6188 = vunpack.c.l.b16 %v5944
        %v6189 = vunpack.c.h.b16 %v5944
        %v6190 = vunpack.c.l.b16 %v5945
        %v6191 = vunpack.c.h.b16 %v5945
        %v6192 = vunpack.c.l.b16 %v5946
        %v6193 = vunpack.c.h.b16 %v5946
        %v6194 = vunpack.c.l.b16 %v5947
        %v6195 = vunpack.c.h.b16 %v5947
        %v6196 = vunpack.c.l.b16 %v5948
        %v6197 = vunpack.c.h.b16 %v5948
        %v6198 = vunpack.c.l.b16 %v5949
        %v6199 = vunpack.c.h.b16 %v5949
        %v6200 = vunpack.c.l.b16 %v5950
        %v6201 = vunpack.c.h.b16 %v5950
        %v6202 = vunpack.c.l.b16 %v5951
        %v6203 = vunpack.c.h.b16 %v5951
        %v6204 = vunpack.c.l.b16 %v5952
        %v6205 = vunpack.c.h.b16 %v5952
        %v6206 = vunpack.c.l.b16 %v5953
        %v6207 = vunpack.c.h.b16 %v5953
        %v6208 = vunpack.c.l.b16 %v5954
        %v6209 = vunpack.c.h.b16 %v5954
        %v6210 = vunpack.c.l.b16 %v5955
        %v6211 = vunpack.c.h.b16 %v5955
        %v6212 = vunpack.c.l.b16 %v5956
        %v6213 = vunpack.c.h.b16 %v5956
        %v6214 = vunpack.c.l.b16 %v5957
        %v6215 = vunpack.c.h.b16 %v5957
        %v6216 = vunpack.c.l.b16 %v5958
        %v6217 = vunpack.c.h.b16 %v5958
        %v6218 = vunpack.c.l.b16 %v5959
        %v6219 = vunpack.c.h.b16 %v5959
        %v6220 = vunpack.c.l.b16 %v5960
        %v6221 = vunpack.c.h.b16 %v5960
        %v6222 = vunpack.c.l.b16 %v5961
        %v6223 = vunpack.c.h.b16 %v5961
        %v6224 = vunpack.c.l.b16 %v5962
        %v6225 = vunpack.c.h.b16 %v5962
        %v6226 = vunpack.c.l.b16 %v5963
        %v6227 = vunpack.c.h.b16 %v5963
        %v6228 = vunpack.c.l.b16 %v5964
        %v6229 = vunpack.c.h.b16 %v5964
        %v6230 = vunpack.c.l.b16 %v5965
        %v6231 = vunpack.c.h.b16 %v5965
        %v6232 = vunpack.c.l.b16 %v5966
        %v6233 = vunpack.c.h.b16 %v5966
        %v6234 = vunpack.c.l.b16 %v5967
        %v6235 = vunpack.c.h.b16 %v5967
        %v6236 = vunpack.c.l.b16 %v5968
        %v6237 = vunpack.c.h.b16 %v5968
        %v6238 = vunpack.c.l.b16 %v5969
        %v6239 = vunpack.c.h.b16 %v5969
        %v6240 = vunpack.c.l.b16 %v5970
        %v6241 = vunpack.c.h.b16 %v5970
        %v6242 = vunpack.c.l.b16 %v5971
        %v6243 = vunpack.c.h.b16 %v5971
        %v6244 = vunpack.c.l.b16 %v5972
        %v6245 = vunpack.c.h.b16 %v5972
        %v6246 = vunpack.c.l.b16 %v5973
        %v6247 = vunpack.c.h.b16 %v5973
        %v6248 = vunpack.c.l.b16 %v5974
        %v6249 = vunpack.c.h.b16 %v5974
        %v6250 = vunpack.c.l.b16 %v5975
        %v6251 = vunpack.c.h.b16 %v5975
        %v6252 = vunpack.c.l.b16 %v5976
        %v6253 = vunpack.c.h.b16 %v5976
        %v6254 = vunpack.c.l.b16 %v5977
        %v6255 = vunpack.c.h.b16 %v5977
        %v6256 = vunpack.c.l.b16 %v5978
        %v6257 = vunpack.c.h.b16 %v5978
        %v6258 = vunpack.c.l.b16 %v5979
        %v6259 = vunpack.c.h.b16 %v5979
        %v6260 = vunpack.c.l.b16 %v5980
        %v6261 = vunpack.c.h.b16 %v5980
        %v6262 = vunpack.c.l.b16 %v5981
        %v6263 = vunpack.c.h.b16 %v5981
        %v6264 = vunpack.c.l.b16 %v5982
        %v6265 = vunpack.c.h.b16 %v5982
        %v6266 = vunpack.c.l.b16 %v5983
        %v6267 = vunpack.c.h.b16 %v5983
        %v6268 = vunpack.c.l.b16 %v5984
        %v6269 = vunpack.c.h.b16 %v5984
        %v6270 = vunpack.c.l.b16 %v5985
        %v6271 = vunpack.c.h.b16 %v5985
        %v6272 = vunpack.c.l.b16 %v5986
        %v6273 = vunpack.c.h.b16 %v5986
        %v6274 = vunpack.c.l.b16 %v5987
        %v6275 = vunpack.c.h.b16 %v5987
        %v6276 = vunpack.c.l.b16 %v5988
        %v6277 = vunpack.c.h.b16 %v5988
        %v6278 = vunpack.c.l.b16 %v5989
        %v6279 = vunpack.c.h.b16 %v5989
        %v6280 = vunpack.c.l.b16 %v5990
        %v6281 = vunpack.c.h.b16 %v5990
        %v6282 = vunpack.c.l.b16 %v5991
        %v6283 = vunpack.c.h.b16 %v5991
        %v6284 = vunpack.c.l.b16 %v5992
        %v6285 = vunpack.c.h.b16 %v5992
        %v6286 = vunpack.c.l.b16 %v5993
        %v6287 = vunpack.c.h.b16 %v5993
        %v6288 = vunpack.c.l.b16 %v5994
        %v6289 = vunpack.c.h.b16 %v5994
        %v6290 = vunpack.c.l.b16 %v5995
        %v6291 = vunpack.c.h.b16 %v5995
        %v6292 = vunpack.c.l.b16 %v5996
        %v6293 = vunpack.c.h.b16 %v5996
        %v6294 = vunpack.c.l.b16 %v5997
        %v6295 = vunpack.c.h.b16 %v5997
        %v6296 = vunpack.c.l.b16 %v5998
        %v6297 = vunpack.c.h.b16 %v5998
        %v6298 = vunpack.c.l.b16 %v5999
        %v6299 = vunpack.c.h.b16 %v5999
        %v6300 = vunpack.c.l.b16 %v6000
        %v6301 = vunpack.c.h.b16 %v6000
        %v6302 = vunpack.c.l.b16 %v6001
        %v6303 = vunpack.c.h.b16 %v6001
        %v6304 = vunpack.c.l.b16 %v6002
        %v6305 = vunpack.c.h.b16 %v6002
        %v6306 = vunpack.c.l.b16 %v6003
        %v6307 = vunpack.c.h.b16 %v6003
        %v6308 = vunpack.c.l.b16 %v6004
        %v6309 = vunpack.c.h.b16 %v6004
        %v6310 = vunpack.c.l.b16 %v6005
        %v6311 = vunpack.c.h.b16 %v6005
        %v6312 = vunpack.c.l.b16 %v6006
        %v6313 = vunpack.c.h.b16 %v6006
        %v6314 = vunpack.c.l.b16 %v6007
        %v6315 = vunpack.c.h.b16 %v6007
        %v6316 = vunpack.c.l.b16 %v6008
        %v6317 = vunpack.c.h.b16 %v6008
        %v6318 = vunpack.c.l.b16 %v6009
        %v6319 = vunpack.c.h.b16 %v6009
        %v6320 = vunpack.c.l.b16 %v6010
        %v6321 = vunpack.c.h.b16 %v6010
        %v6322 = vunpack.c.l.b16 %v6011
        %v6323 = vunpack.c.h.b16 %v6011
        %v6324 = vunpack.c.l.b16 %v6012
        %v6325 = vunpack.c.h.b16 %v6012
        %v6326 = vunpack.c.l.b16 %v6013
        %v6327 = vunpack.c.h.b16 %v6013
        %v6328 = vunpack.c.l.b16 %v6014
        %v6329 = vunpack.c.h.b16 %v6014
        %v6330 = vunpack.c.l.b16 %v6015
        %v6331 = vunpack.c.h.b16 %v6015
        %v6332 = vunpack.c.l.b16 %v6016
        %v6333 = vunpack.c.h.b16 %v6016
        %v6334 = vunpack.c.l.b16 %v6017
        %v6335 = vunpack.c.h.b16 %v6017
        %v6336 = vunpack.c.l.b16 %v6018
        %v6337 = vunpack.c.h.b16 %v6018
        %v6338 = vunpack.c.l.b16 %v6019
        %v6339 = vunpack.c.h.b16 %v6019
        %v6340 = vunpack.c.l.b16 %v6020
        %v6341 = vunpack.c.h.b16 %v6020
        %v6342 = vunpack.c.l.b16 %v6021
        %v6343 = vunpack.c.h.b16 %v6021
        %v6344 = vunpack.c.l.b16 %v6022
        %v6345 = vunpack.c.h.b16 %v6022
        %v6346 = vunpack.c.l.b16 %v6023
        %v6347 = vunpack.c.h.b16 %v6023
        %v6348 = vunpack.c.l.b16 %v6024
        %v6349 = vunpack.c.h.b16 %v6024
        %v6350 = vunpack.c.l.b16 %v6025
        %v6351 = vunpack.c.h.b16 %v6025
        %v6352 = vunpack.c.l.b16 %v6026
        %v6353 = vunpack.c.h.b16 %v6026
        %v6354 = vunpack.c.l.b16 %v6027
        %v6355 = vunpack.c.h.b16 %v6027
        %v6356 = vunpack.c.l.b16 %v6028
        %v6357 = vunpack.c.h.b16 %v6028
        %v6358 = vunpack.c.l.b16 %v6029
        %v6359 = vunpack.c.h.b16 %v6029
        %v6360 = vunpack.c.l.b16 %v6030
        %v6361 = vunpack.c.h.b16 %v6030
        %v6362 = vunpack.c.l.b16 %v6031
        %v6363 = vunpack.c.h.b16 %v6031
        %v6364 = vunpack.c.l.b16 %v6032
        %v6365 = vunpack.c.h.b16 %v6032
        %v6366 = vunpack.c.l.b16 %v6033
        %v6367 = vunpack.c.h.b16 %v6033
        %v6368 = vunpack.c.l.b16 %v6034
        %v6369 = vunpack.c.h.b16 %v6034
        %v6370 = vunpack.c.l.b16 %v6035
        %v6371 = vunpack.c.h.b16 %v6035
        %v6372 = vunpack.c.l.b16 %v6036
        %v6373 = vunpack.c.h.b16 %v6036
        %v6374 = vunpack.c.l.b16 %v6037
        %v6375 = vunpack.c.h.b16 %v6037
        %v6376 = vunpack.c.l.b16 %v6038
        %v6377 = vunpack.c.h.b16 %v6038
        %v6378 = vpack.c.b16 %v6192, %v6186
        %v6379 = vpack.c.b16 %v6193, %v6187
        %v6380 = vpack.c.b16 %v6194, %v6188
        %v6381 = vpack.c.b16 %v6195, %v6189
        %v6382 = vpack.c.b16 %v6196, %v6190
        %v6383 = vpack.c.b16 %v6197, %v6191
        %v6384 = vpack.c.b16 %v6204, %v6198
        %v6385 = vpack.c.b16 %v6205, %v6199
        %v6386 = vpack.c.b16 %v6206, %v6200
        %v6387 = vpack.c.b16 %v6207, %v6201
        %v6388 = vpack.c.b16 %v6208, %v6202
        %v6389 = vpack.c.b16 %v6209, %v6203
        %v6390 = vpack.c.b16 %v6216, %v6210
        %v6391 = vpack.c.b16 %v6217, %v6211
        %v6392 = vpack.c.b16 %v6218, %v6212
        %v6393 = vpack.c.b16 %v6219, %v6213
        %v6394 = vpack.c.b16 %v6220, %v6214
        %v6395 = vpack.c.b16 %v6221, %v6215
        %v6396 = vpack.c.b16 %v6228, %v6222
        %v6397 = vpack.c.b16 %v6229, %v6223
        %v6398 = vpack.c.b16 %v6230, %v6224
        %v6399 = vpack.c.b16 %v6231, %v6225
        %v6400 = vpack.c.b16 %v6232, %v6226
        %v6401 = vpack.c.b16 %v6233, %v6227
        %v6402 = vpack.c.b16 %v6240, %v6234
        %v6403 = vpack.c.b16 %v6241, %v6235
        %v6404 = vpack.c.b16 %v6242, %v6236
        %v6405 = vpack.c.b16 %v6243, %v6237
        %v6406 = vpack.c.b16 %v6244, %v6238
        %v6407 = vpack.c.b16 %v6245, %v6239
        %v6408 = vpack.c.b16 %v6252, %v6246
        %v6409 = vpack.c.b16 %v6253, %v6247
        %v6410 = vpack.c.b16 %v6254, %v6248
        %v6411 = vpack.c.b16 %v6255, %v6249
        %v6412 = vpack.c.b16 %v6256, %v6250
        %v6413 = vpack.c.b16 %v6257, %v6251
        %v6414 = vpack.c.b16 %v6264, %v6258
        %v6415 = vpack.c.b16 %v6265, %v6259
        %v6416 = vpack.c.b16 %v6266, %v6260
        %v6417 = vpack.c.b16 %v6267, %v6261
        %v6418 = vpack.c.b16 %v6268, %v6262
        %v6419 = vpack.c.b16 %v6269, %v6263
        %v6420 = vpack.c.b16 %v6276, %v6270
        %v6421 = vpack.c.b16 %v6277, %v6271
        %v6422 = vpack.c.b16 %v6278, %v6272
        %v6423 = vpack.c.b16 %v6279, %v6273
        %v6424 = vpack.c.b16 %v6280, %v6274
        %v6425 = vpack.c.b16 %v6281, %v6275
        %v6426 = vpack.c.b16 %v6288, %v6282
        %v6427 = vpack.c.b16 %v6289, %v6283
        %v6428 = vpack.c.b16 %v6290, %v6284
        %v6429 = vpack.c.b16 %v6291, %v6285
        %v6430 = vpack.c.b16 %v6292, %v6286
        %v6431 = vpack.c.b16 %v6293, %v6287
        %v6432 = vpack.c.b16 %v6300, %v6294
        %v6433 = vpack.c.b16 %v6301, %v6295
        %v6434 = vpack.c.b16 %v6302, %v6296
        %v6435 = vpack.c.b16 %v6303, %v6297
        %v6436 = vpack.c.b16 %v6304, %v6298
        %v6437 = vpack.c.b16 %v6305, %v6299
        %v6438 = vpack.c.b16 %v6312, %v6306
        %v6439 = vpack.c.b16 %v6313, %v6307
        %v6440 = vpack.c.b16 %v6314, %v6308
        %v6441 = vpack.c.b16 %v6315, %v6309
        %v6442 = vpack.c.b16 %v6316, %v6310
        %v6443 = vpack.c.b16 %v6317, %v6311
        %v6444 = vpack.c.b16 %v6324, %v6318
        %v6445 = vpack.c.b16 %v6325, %v6319
        %v6446 = vpack.c.b16 %v6326, %v6320
        %v6447 = vpack.c.b16 %v6327, %v6321
        %v6448 = vpack.c.b16 %v6328, %v6322
        %v6449 = vpack.c.b16 %v6329, %v6323
        %v6450 = vpack.c.b16 %v6336, %v6330
        %v6451 = vpack.c.b16 %v6337, %v6331
        %v6452 = vpack.c.b16 %v6338, %v6332
        %v6453 = vpack.c.b16 %v6339, %v6333
        %v6454 = vpack.c.b16 %v6340, %v6334
        %v6455 = vpack.c.b16 %v6341, %v6335
        %v6456 = vpack.c.b16 %v6348, %v6342
        %v6457 = vpack.c.b16 %v6349, %v6343
        %v6458 = vpack.c.b16 %v6350, %v6344
        %v6459 = vpack.c.b16 %v6351, %v6345
        %v6460 = vpack.c.b16 %v6352, %v6346
        %v6461 = vpack.c.b16 %v6353, %v6347
        %v6462 = vpack.c.b16 %v6360, %v6354
        %v6463 = vpack.c.b16 %v6361, %v6355
        %v6464 = vpack.c.b16 %v6362, %v6356
        %v6465 = vpack.c.b16 %v6363, %v6357
        %v6466 = vpack.c.b16 %v6364, %v6358
        %v6467 = vpack.c.b16 %v6365, %v6359
        %v6468 = vpack.c.b16 %v6372, %v6366
        %v6469 = vpack.c.b16 %v6373, %v6367
        %v6470 = vpack.c.b16 %v6374, %v6368
        %v6471 = vpack.c.b16 %v6375, %v6369
        %v6472 = vpack.c.b16 %v6376, %v6370
        %v6473 = vpack.c.b16 %v6377, %v6371
        %6570 = vmatprep.subr.bf16.mxu0 %v6421
        %6571 = vmatpush1.bf16.msra.mxu0 %v6420
        %6572 = vmatprep.subr.bf16.mxu0 %v6415
        %6573 = vmatpush1.bf16.msra.mxu0 %v6414
        %6574 = vmatprep.subr.bf16.mxu0 %v6409
        %6575 = vmatpush1.bf16.msra.mxu0 %v6408
        %6576 = vmatprep.subr.bf16.mxu0 %v6403
        %6577 = vmatpush1.bf16.msra.mxu0 %v6402
        %6578 = vmatprep.subr.bf16.mxu0 %v6397
        %6579 = vmatpush1.bf16.msra.mxu0 %v6396
        %6580 = vmatprep.subr.bf16.mxu0 %v6391
        %6581 = vmatpush1.bf16.msra.mxu0 %v6390
        %6582 = vmatprep.subr.bf16.mxu0 %v6385
        %6583 = vmatpush1.bf16.msra.mxu0 %v6384
        %6584 = vmatprep.subr.bf16.mxu0 %v6379
        %6585 = vmatpush1.bf16.msra.mxu0 %v6378
        %6586 = vmatprep.subr.bf16.mxu0 %v6469
        %6587 = vmatpush2.bf16.msra.mxu0 %v6468
        %6588 = vmatprep.subr.bf16.mxu0 %v6463
        %6589 = vmatpush2.bf16.msra.mxu0 %v6462
        %6590 = vmatprep.subr.bf16.mxu0 %v6457
        %6591 = vmatpush2.bf16.msra.mxu0 %v6456
        %6592 = vmatprep.subr.bf16.mxu0 %v6451
        %6593 = vmatpush2.bf16.msra.mxu0 %v6450
        %6594 = vmatprep.subr.bf16.mxu0 %v6445
        %6595 = vmatpush2.bf16.msra.mxu0 %v6444
        %6596 = vmatprep.subr.bf16.mxu0 %v6439
        %6597 = vmatpush2.bf16.msra.mxu0 %v6438
        %6598 = vmatprep.subr.bf16.mxu0 %v6433
        %6599 = vmatpush2.bf16.msra.mxu0 %v6432
        %6600 = vmatprep.subr.bf16.mxu0 %v6427
        %6601 = vmatpush2.bf16.msra.mxu0 %v6426
        %6602 = vmatprep.mubr.bf16.mxu0 %v6044
        %6603 = vmatmul.mubr.bf16.gmra.mxu0 %v6043
        %v6604 = vpop.f32.mrf.mxu0
        %v6605 = vadd.f32 %v6063, %v6604
        %v6606 = vpop.f32.mrf.mxu0
        %v6607 = vadd.f32 %v6067, %v6606
        %v6608 = vpop.f32.mrf.mxu0
        %v6609 = vadd.f32 %v6063, %v6608
        %v6610 = vpop.f32.mrf.mxu0
        %v6611 = vadd.f32 %v6067, %v6610
        %6612 = vmatprep.mubr.bf16.mxu0 %v6046
        %6613 = vmatmul.mubr.bf16.gmra.mxu0 %v6045
        %v6614 = vpop.f32.mrf.mxu0
        %v6615 = vadd.f32 %v6063, %v6614
        %v6616 = vpop.f32.mrf.mxu0
        %v6617 = vadd.f32 %v6067, %v6616
        %v6618 = vpop.f32.mrf.mxu0
        %v6619 = vadd.f32 %v6063, %v6618
        %v6620 = vpop.f32.mrf.mxu0
        %v6621 = vadd.f32 %v6067, %v6620
        %6622 = vmatprep.mubr.bf16.mxu0 %v6048
        %6623 = vmatmul.mubr.bf16.gmra.mxu0 %v6047
        %v6624 = vpop.f32.mrf.mxu0
        %v6625 = vadd.f32 %v6063, %v6624
        %v6626 = vpop.f32.mrf.mxu0
        %v6627 = vadd.f32 %v6067, %v6626
        %v6628 = vpop.f32.mrf.mxu0
        %v6629 = vadd.f32 %v6063, %v6628
        %v6630 = vpop.f32.mrf.mxu0
        %v6631 = vadd.f32 %v6067, %v6630
        %6632 = vmatprep.mubr.bf16.mxu0 %v6050
        %6633 = vmatmul.mubr.bf16.gmra.mxu0 %v6049
        %v6634 = vpop.f32.mrf.mxu0
        %v6635 = vadd.f32 %v6063, %v6634
        %v6636 = vpop.f32.mrf.mxu0
        %v6637 = vadd.f32 %v6067, %v6636
        %v6638 = vpop.f32.mrf.mxu0
        %v6639 = vadd.f32 %v6063, %v6638
        %v6640 = vpop.f32.mrf.mxu0
        %v6641 = vadd.f32 %v6067, %v6640
        %6642 = vmatprep.mubr.bf16.mxu0 %v6052
        %6643 = vmatmul.mubr.bf16.gmra.mxu0 %v6051
        %v6644 = vpop.f32.mrf.mxu0
        %v6645 = vadd.f32 %v6063, %v6644
        %v6646 = vpop.f32.mrf.mxu0
        %v6647 = vadd.f32 %v6067, %v6646
        %v6648 = vpop.f32.mrf.mxu0
        %v6649 = vadd.f32 %v6063, %v6648
        %v6650 = vpop.f32.mrf.mxu0
        %v6651 = vadd.f32 %v6067, %v6650
        %6652 = vmatprep.mubr.bf16.mxu0 %v6054
        %6653 = vmatmul.mubr.bf16.gmra.mxu0 %v6053
        %v6654 = vpop.f32.mrf.mxu0
        %v6655 = vadd.f32 %v6063, %v6654
        %v6656 = vpop.f32.mrf.mxu0
        %v6657 = vadd.f32 %v6067, %v6656
        %v6658 = vpop.f32.mrf.mxu0
        %v6659 = vadd.f32 %v6063, %v6658
        %v6660 = vpop.f32.mrf.mxu0
        %v6661 = vadd.f32 %v6067, %v6660
        %6662 = vmatprep.mubr.bf16.mxu0 %v6056
        %6663 = vmatmul.mubr.bf16.gmra.mxu0 %v6055
        %v6664 = vpop.f32.mrf.mxu0
        %v6665 = vadd.f32 %v6063, %v6664
        %v6666 = vpop.f32.mrf.mxu0
        %v6667 = vadd.f32 %v6067, %v6666
        %v6668 = vpop.f32.mrf.mxu0
        %v6669 = vadd.f32 %v6063, %v6668
        %v6670 = vpop.f32.mrf.mxu0
        %v6671 = vadd.f32 %v6067, %v6670
        %6672 = vmatprep.mubr.bf16.mxu0 %v6058
        %6673 = vmatmul.mubr.bf16.gmra.mxu0 %v6057
        %v6674 = vpop.f32.mrf.mxu0
        %v6675 = vadd.f32 %v6063, %v6674
        %v6676 = vpop.f32.mrf.mxu0
        %v6677 = vadd.f32 %v6067, %v6676
        %v6678 = vpop.f32.mrf.mxu0
        %v6679 = vadd.f32 %v6063, %v6678
        %v6680 = vpop.f32.mrf.mxu0
        %v6681 = vadd.f32 %v6067, %v6680
        %6682 = vdwg.mxu0
        %6683 = vmatprep.subr.bf16.mxu0 %v6423
        %6684 = vmatpush1.bf16.msra.mxu0 %v6422
        %6685 = vmatprep.subr.bf16.mxu0 %v6417
        %6686 = vmatpush1.bf16.msra.mxu0 %v6416
        %6687 = vmatprep.subr.bf16.mxu0 %v6411
        %6688 = vmatpush1.bf16.msra.mxu0 %v6410
        %6689 = vmatprep.subr.bf16.mxu0 %v6405
        %6690 = vmatpush1.bf16.msra.mxu0 %v6404
        %6691 = vmatprep.subr.bf16.mxu0 %v6399
        %6692 = vmatpush1.bf16.msra.mxu0 %v6398
        %6693 = vmatprep.subr.bf16.mxu0 %v6393
        %6694 = vmatpush1.bf16.msra.mxu0 %v6392
        %6695 = vmatprep.subr.bf16.mxu0 %v6387
        %6696 = vmatpush1.bf16.msra.mxu0 %v6386
        %6697 = vmatprep.subr.bf16.mxu0 %v6381
        %6698 = vmatpush1.bf16.msra.mxu0 %v6380
        %6699 = vmatprep.subr.bf16.mxu0 %v6471
        %6700 = vmatpush2.bf16.msra.mxu0 %v6470
        %6701 = vmatprep.subr.bf16.mxu0 %v6465
        %6702 = vmatpush2.bf16.msra.mxu0 %v6464
        %6703 = vmatprep.subr.bf16.mxu0 %v6459
        %6704 = vmatpush2.bf16.msra.mxu0 %v6458
        %6705 = vmatprep.subr.bf16.mxu0 %v6453
        %6706 = vmatpush2.bf16.msra.mxu0 %v6452
        %6707 = vmatprep.subr.bf16.mxu0 %v6447
        %6708 = vmatpush2.bf16.msra.mxu0 %v6446
        %6709 = vmatprep.subr.bf16.mxu0 %v6441
        %6710 = vmatpush2.bf16.msra.mxu0 %v6440
        %6711 = vmatprep.subr.bf16.mxu0 %v6435
        %6712 = vmatpush2.bf16.msra.mxu0 %v6434
        %6713 = vmatprep.subr.bf16.mxu0 %v6429
        %6714 = vmatpush2.bf16.msra.mxu0 %v6428
        %6715 = vmatprep.mubr.bf16.mxu0 %v6044
        %6716 = vmatmul.mubr.bf16.gmra.mxu0 %v6043
        %v6717 = vpop.f32.mrf.mxu0
        %v6718 = vadd.f32 %v6071, %v6717
        %v6719 = vpop.f32.mrf.mxu0
        %v6720 = vadd.f32 %v6075, %v6719
        %v6721 = vpop.f32.mrf.mxu0
        %v6722 = vadd.f32 %v6071, %v6721
        %v6723 = vpop.f32.mrf.mxu0
        %v6724 = vadd.f32 %v6075, %v6723
        %6725 = vmatprep.mubr.bf16.mxu0 %v6046
        %6726 = vmatmul.mubr.bf16.gmra.mxu0 %v6045
        %v6727 = vpop.f32.mrf.mxu0
        %v6728 = vadd.f32 %v6071, %v6727
        %v6729 = vpop.f32.mrf.mxu0
        %v6730 = vadd.f32 %v6075, %v6729
        %v6731 = vpop.f32.mrf.mxu0
        %v6732 = vadd.f32 %v6071, %v6731
        %v6733 = vpop.f32.mrf.mxu0
        %v6734 = vadd.f32 %v6075, %v6733
        %6735 = vmatprep.mubr.bf16.mxu0 %v6048
        %6736 = vmatmul.mubr.bf16.gmra.mxu0 %v6047
        %v6737 = vpop.f32.mrf.mxu0
        %v6738 = vadd.f32 %v6071, %v6737
        %v6739 = vpop.f32.mrf.mxu0
        %v6740 = vadd.f32 %v6075, %v6739
        %v6741 = vpop.f32.mrf.mxu0
        %v6742 = vadd.f32 %v6071, %v6741
        %v6743 = vpop.f32.mrf.mxu0
        %v6744 = vadd.f32 %v6075, %v6743
        %6745 = vmatprep.mubr.bf16.mxu0 %v6050
        %6746 = vmatmul.mubr.bf16.gmra.mxu0 %v6049
        %v6747 = vpop.f32.mrf.mxu0
        %v6748 = vadd.f32 %v6071, %v6747
        %v6749 = vpop.f32.mrf.mxu0
        %v6750 = vadd.f32 %v6075, %v6749
        %v6751 = vpop.f32.mrf.mxu0
        %v6752 = vadd.f32 %v6071, %v6751
        %v6753 = vpop.f32.mrf.mxu0
        %v6754 = vadd.f32 %v6075, %v6753
        %6755 = vmatprep.mubr.bf16.mxu0 %v6052
        %6756 = vmatmul.mubr.bf16.gmra.mxu0 %v6051
        %v6757 = vpop.f32.mrf.mxu0
        %v6758 = vadd.f32 %v6071, %v6757
        %v6759 = vpop.f32.mrf.mxu0
        %v6760 = vadd.f32 %v6075, %v6759
        %v6761 = vpop.f32.mrf.mxu0
        %v6762 = vadd.f32 %v6071, %v6761
        %v6763 = vpop.f32.mrf.mxu0
        %v6764 = vadd.f32 %v6075, %v6763
        %6765 = vmatprep.mubr.bf16.mxu0 %v6054
        %6766 = vmatmul.mubr.bf16.gmra.mxu0 %v6053
        %v6767 = vpop.f32.mrf.mxu0
        %v6768 = vadd.f32 %v6071, %v6767
        %v6769 = vpop.f32.mrf.mxu0
        %v6770 = vadd.f32 %v6075, %v6769
        %v6771 = vpop.f32.mrf.mxu0
        %v6772 = vadd.f32 %v6071, %v6771
        %v6773 = vpop.f32.mrf.mxu0
        %v6774 = vadd.f32 %v6075, %v6773
        %6775 = vmatprep.mubr.bf16.mxu0 %v6056
        %6776 = vmatmul.mubr.bf16.gmra.mxu0 %v6055
        %v6777 = vpop.f32.mrf.mxu0
        %v6778 = vadd.f32 %v6071, %v6777
        %v6779 = vpop.f32.mrf.mxu0
        %v6780 = vadd.f32 %v6075, %v6779
        %v6781 = vpop.f32.mrf.mxu0
        %v6782 = vadd.f32 %v6071, %v6781
        %v6783 = vpop.f32.mrf.mxu0
        %v6784 = vadd.f32 %v6075, %v6783
        %6785 = vmatprep.mubr.bf16.mxu0 %v6058
        %6786 = vmatmul.mubr.bf16.gmra.mxu0 %v6057
        %v6787 = vpop.f32.mrf.mxu0
        %v6788 = vadd.f32 %v6071, %v6787
        %v6789 = vpop.f32.mrf.mxu0
        %v6790 = vadd.f32 %v6075, %v6789
        %v6791 = vpop.f32.mrf.mxu0
        %v6792 = vadd.f32 %v6071, %v6791
        %v6793 = vpop.f32.mrf.mxu0
        %v6794 = vadd.f32 %v6075, %v6793
        %6795 = vdwg.mxu0
        %6796 = vmatprep.subr.bf16.mxu0 %v6425
        %6797 = vmatpush1.bf16.msra.mxu0 %v6424
        %6798 = vmatprep.subr.bf16.mxu0 %v6419
        %6799 = vmatpush1.bf16.msra.mxu0 %v6418
        %6800 = vmatprep.subr.bf16.mxu0 %v6413
        %6801 = vmatpush1.bf16.msra.mxu0 %v6412
        %6802 = vmatprep.subr.bf16.mxu0 %v6407
        %6803 = vmatpush1.bf16.msra.mxu0 %v6406
        %6804 = vmatprep.subr.bf16.mxu0 %v6401
        %6805 = vmatpush1.bf16.msra.mxu0 %v6400
        %6806 = vmatprep.subr.bf16.mxu0 %v6395
        %6807 = vmatpush1.bf16.msra.mxu0 %v6394
        %6808 = vmatprep.subr.bf16.mxu0 %v6389
        %6809 = vmatpush1.bf16.msra.mxu0 %v6388
        %6810 = vmatprep.subr.bf16.mxu0 %v6383
        %6811 = vmatpush1.bf16.msra.mxu0 %v6382
        %6812 = vmatprep.subr.bf16.mxu0 %v6473
        %6813 = vmatpush2.bf16.msra.mxu0 %v6472
        %6814 = vmatprep.subr.bf16.mxu0 %v6467
        %6815 = vmatpush2.bf16.msra.mxu0 %v6466
        %6816 = vmatprep.subr.bf16.mxu0 %v6461
        %6817 = vmatpush2.bf16.msra.mxu0 %v6460
        %6818 = vmatprep.subr.bf16.mxu0 %v6455
        %6819 = vmatpush2.bf16.msra.mxu0 %v6454
        %6820 = vmatprep.subr.bf16.mxu0 %v6449
        %6821 = vmatpush2.bf16.msra.mxu0 %v6448
        %6822 = vmatprep.subr.bf16.mxu0 %v6443
        %6823 = vmatpush2.bf16.msra.mxu0 %v6442
        %6824 = vmatprep.subr.bf16.mxu0 %v6437
        %6825 = vmatpush2.bf16.msra.mxu0 %v6436
        %6826 = vmatprep.subr.bf16.mxu0 %v6431
        %6827 = vmatpush2.bf16.msra.mxu0 %v6430
        %6828 = vmatprep.mubr.bf16.mxu0 %v6044
        %6829 = vmatmul.mubr.bf16.gmra.mxu0 %v6043
        %v6830 = vpop.f32.mrf.mxu0
        %v6831 = vadd.f32 %v6079, %v6830
        %v6832 = vpop.f32.mrf.mxu0
        %v6833 = vadd.f32 %v6083, %v6832
        %v6834 = vpop.f32.mrf.mxu0
        %v6835 = vadd.f32 %v6079, %v6834
        %v6836 = vpop.f32.mrf.mxu0
        %v6837 = vadd.f32 %v6083, %v6836
        %6838 = vmatprep.mubr.bf16.mxu0 %v6046
        %6839 = vmatmul.mubr.bf16.gmra.mxu0 %v6045
        %v6840 = vpop.f32.mrf.mxu0
        %v6841 = vadd.f32 %v6079, %v6840
        %v6842 = vpop.f32.mrf.mxu0
        %v6843 = vadd.f32 %v6083, %v6842
        %v6844 = vpop.f32.mrf.mxu0
        %v6845 = vadd.f32 %v6079, %v6844
        %v6846 = vpop.f32.mrf.mxu0
        %v6847 = vadd.f32 %v6083, %v6846
        %6848 = vmatprep.mubr.bf16.mxu0 %v6048
        %6849 = vmatmul.mubr.bf16.gmra.mxu0 %v6047
        %v6850 = vpop.f32.mrf.mxu0
        %v6851 = vadd.f32 %v6079, %v6850
        %v6852 = vpop.f32.mrf.mxu0
        %v6853 = vadd.f32 %v6083, %v6852
        %v6854 = vpop.f32.mrf.mxu0
        %v6855 = vadd.f32 %v6079, %v6854
        %v6856 = vpop.f32.mrf.mxu0
        %v6857 = vadd.f32 %v6083, %v6856
        %6858 = vmatprep.mubr.bf16.mxu0 %v6050
        %6859 = vmatmul.mubr.bf16.gmra.mxu0 %v6049
        %v6860 = vpop.f32.mrf.mxu0
        %v6861 = vadd.f32 %v6079, %v6860
        %v6862 = vpop.f32.mrf.mxu0
        %v6863 = vadd.f32 %v6083, %v6862
        %v6864 = vpop.f32.mrf.mxu0
        %v6865 = vadd.f32 %v6079, %v6864
        %v6866 = vpop.f32.mrf.mxu0
        %v6867 = vadd.f32 %v6083, %v6866
        %6868 = vmatprep.mubr.bf16.mxu0 %v6052
        %6869 = vmatmul.mubr.bf16.gmra.mxu0 %v6051
        %v6870 = vpop.f32.mrf.mxu0
        %v6871 = vadd.f32 %v6079, %v6870
        %v6872 = vpop.f32.mrf.mxu0
        %v6873 = vadd.f32 %v6083, %v6872
        %v6874 = vpop.f32.mrf.mxu0
        %v6875 = vadd.f32 %v6079, %v6874
        %v6876 = vpop.f32.mrf.mxu0
        %v6877 = vadd.f32 %v6083, %v6876
        %6878 = vmatprep.mubr.bf16.mxu0 %v6054
        %6879 = vmatmul.mubr.bf16.gmra.mxu0 %v6053
        %v6880 = vpop.f32.mrf.mxu0
        %v6881 = vadd.f32 %v6079, %v6880
        %v6882 = vpop.f32.mrf.mxu0
        %v6883 = vadd.f32 %v6083, %v6882
        %v6884 = vpop.f32.mrf.mxu0
        %v6885 = vadd.f32 %v6079, %v6884
        %v6886 = vpop.f32.mrf.mxu0
        %v6887 = vadd.f32 %v6083, %v6886
        %6888 = vmatprep.mubr.bf16.mxu0 %v6056
        %6889 = vmatmul.mubr.bf16.gmra.mxu0 %v6055
        %v6890 = vpop.f32.mrf.mxu0
        %v6891 = vadd.f32 %v6079, %v6890
        %v6892 = vpop.f32.mrf.mxu0
        %v6893 = vadd.f32 %v6083, %v6892
        %v6894 = vpop.f32.mrf.mxu0
        %v6895 = vadd.f32 %v6079, %v6894
        %v6896 = vpop.f32.mrf.mxu0
        %v6897 = vadd.f32 %v6083, %v6896
        %6898 = vmatprep.mubr.bf16.mxu0 %v6058
        %6899 = vmatmul.mubr.bf16.gmra.mxu0 %v6057
        %v6900 = vpop.f32.mrf.mxu0
        %v6901 = vadd.f32 %v6079, %v6900
        %v6902 = vpop.f32.mrf.mxu0
        %v6903 = vadd.f32 %v6083, %v6902
        %v6904 = vpop.f32.mrf.mxu0
        %v6905 = vadd.f32 %v6079, %v6904
        %v6906 = vpop.f32.mrf.mxu0
        %v6907 = vadd.f32 %v6083, %v6906
        %6908 = vdwg.mxu0
        %v6909 = vxor.u32 %v6605, 2147483648
        %v6910 = vxor.u32 %v6607, 2147483648
        %v6911 = vxor.u32 %v6609, 2147483648
        %v6912 = vxor.u32 %v6611, 2147483648
        %v6913 = vxor.u32 %v6615, 2147483648
        %v6914 = vxor.u32 %v6617, 2147483648
        %v6915 = vxor.u32 %v6619, 2147483648
        %v6916 = vxor.u32 %v6621, 2147483648
        %v6917 = vxor.u32 %v6625, 2147483648
        %v6918 = vxor.u32 %v6627, 2147483648
        %v6919 = vxor.u32 %v6629, 2147483648
        %v6920 = vxor.u32 %v6631, 2147483648
        %v6921 = vxor.u32 %v6635, 2147483648
        %v6922 = vxor.u32 %v6637, 2147483648
        %v6923 = vxor.u32 %v6639, 2147483648
        %v6924 = vxor.u32 %v6641, 2147483648
        %v6925 = vxor.u32 %v6645, 2147483648
        %v6926 = vxor.u32 %v6647, 2147483648
        %v6927 = vxor.u32 %v6649, 2147483648
        %v6928 = vxor.u32 %v6651, 2147483648
        %v6929 = vxor.u32 %v6655, 2147483648
        %v6930 = vxor.u32 %v6657, 2147483648
        %v6931 = vxor.u32 %v6659, 2147483648
        %v6932 = vxor.u32 %v6661, 2147483648
        %v6933 = vxor.u32 %v6665, 2147483648
        %v6934 = vxor.u32 %v6667, 2147483648
        %v6935 = vxor.u32 %v6669, 2147483648
        %v6936 = vxor.u32 %v6671, 2147483648
        %v6937 = vxor.u32 %v6675, 2147483648
        %v6938 = vxor.u32 %v6677, 2147483648
        %v6939 = vxor.u32 %v6679, 2147483648
        %v6940 = vxor.u32 %v6681, 2147483648
        %v6941 = vmul.f32 %v6909, 1.442695
        %v6942 = vpow.pop %v6941
        %v6943 = vmul.f32 %v6910, 1.442695
        %v6944 = vpow.pop %v6943
        %v6945 = vmul.f32 %v6911, 1.442695
        %v6946 = vpow.pop %v6945
        %v6947 = vmul.f32 %v6912, 1.442695
        %v6948 = vpow.pop %v6947
        %v6949 = vmul.f32 %v6913, 1.442695
        %v6950 = vpow.pop %v6949
        %v6951 = vmul.f32 %v6914, 1.442695
        %v6952 = vpow.pop %v6951
        %v6953 = vmul.f32 %v6915, 1.442695
        %v6954 = vpow.pop %v6953
        %v6955 = vmul.f32 %v6916, 1.442695
        %v6956 = vpow.pop %v6955
        %v6957 = vmul.f32 %v6917, 1.442695
        %v6958 = vpow.pop %v6957
        %v6959 = vmul.f32 %v6918, 1.442695
        %v6960 = vpow.pop %v6959
        %v6961 = vmul.f32 %v6919, 1.442695
        %v6962 = vpow.pop %v6961
        %v6963 = vmul.f32 %v6920, 1.442695
        %v6964 = vpow.pop %v6963
        %v6965 = vmul.f32 %v6921, 1.442695
        %v6966 = vpow.pop %v6965
        %v6967 = vmul.f32 %v6922, 1.442695
        %v6968 = vpow.pop %v6967
        %v6969 = vmul.f32 %v6923, 1.442695
        %v6970 = vpow.pop %v6969
        %v6971 = vmul.f32 %v6924, 1.442695
        %v6972 = vpow.pop %v6971
        %v6973 = vmul.f32 %v6925, 1.442695
        %v6974 = vpow.pop %v6973
        %v6975 = vmul.f32 %v6926, 1.442695
        %v6976 = vpow.pop %v6975
        %v6977 = vmul.f32 %v6927, 1.442695
        %v6978 = vpow.pop %v6977
        %v6979 = vmul.f32 %v6928, 1.442695
        %v6980 = vpow.pop %v6979
        %v6981 = vmul.f32 %v6929, 1.442695
        %v6982 = vpow.pop %v6981
        %v6983 = vmul.f32 %v6930, 1.442695
        %v6984 = vpow.pop %v6983
        %v6985 = vmul.f32 %v6931, 1.442695
        %v6986 = vpow.pop %v6985
        %v6987 = vmul.f32 %v6932, 1.442695
        %v6988 = vpow.pop %v6987
        %v6989 = vmul.f32 %v6933, 1.442695
        %v6990 = vpow.pop %v6989
        %v6991 = vmul.f32 %v6934, 1.442695
        %v6992 = vpow.pop %v6991
        %v6993 = vmul.f32 %v6935, 1.442695
        %v6994 = vpow.pop %v6993
        %v6995 = vmul.f32 %v6936, 1.442695
        %v6996 = vpow.pop %v6995
        %v6997 = vmul.f32 %v6937, 1.442695
        %v6998 = vpow.pop %v6997
        %v6999 = vmul.f32 %v6938, 1.442695
        %v7000 = vpow.pop %v6999
        %v7001 = vmul.f32 %v6939, 1.442695
        %v7002 = vpow.pop %v7001
        %v7003 = vmul.f32 %v6940, 1.442695
        %v7004 = vpow.pop %v7003
        %v7005 = vadd.f32 %v6942, 1.0
        %v7006 = vadd.f32 %v6944, 1.0
        %v7007 = vadd.f32 %v6946, 1.0
        %v7008 = vadd.f32 %v6948, 1.0
        %v7009 = vadd.f32 %v6950, 1.0
        %v7010 = vadd.f32 %v6952, 1.0
        %v7011 = vadd.f32 %v6954, 1.0
        %v7012 = vadd.f32 %v6956, 1.0
        %v7013 = vadd.f32 %v6958, 1.0
        %v7014 = vadd.f32 %v6960, 1.0
        %v7015 = vadd.f32 %v6962, 1.0
        %v7016 = vadd.f32 %v6964, 1.0
        %v7017 = vadd.f32 %v6966, 1.0
        %v7018 = vadd.f32 %v6968, 1.0
        %v7019 = vadd.f32 %v6970, 1.0
        %v7020 = vadd.f32 %v6972, 1.0
        %v7021 = vadd.f32 %v6974, 1.0
        %v7022 = vadd.f32 %v6976, 1.0
        %v7023 = vadd.f32 %v6978, 1.0
        %v7024 = vadd.f32 %v6980, 1.0
        %v7025 = vadd.f32 %v6982, 1.0
        %v7026 = vadd.f32 %v6984, 1.0
        %v7027 = vadd.f32 %v6986, 1.0
        %v7028 = vadd.f32 %v6988, 1.0
        %v7029 = vadd.f32 %v6990, 1.0
        %v7030 = vadd.f32 %v6992, 1.0
        %v7031 = vadd.f32 %v6994, 1.0
        %v7032 = vadd.f32 %v6996, 1.0
        %v7033 = vadd.f32 %v6998, 1.0
        %v7034 = vadd.f32 %v7000, 1.0
        %v7035 = vadd.f32 %v7002, 1.0
        %v7036 = vadd.f32 %v7004, 1.0
        %v7037 = vrcp.pop %v7005
        %v7038 = vmul.f32 1.0, %v7037
        %v7039 = vrcp.pop %v7006
        %v7040 = vmul.f32 1.0, %v7039
        %v7041 = vrcp.pop %v7007
        %v7042 = vmul.f32 1.0, %v7041
        %v7043 = vrcp.pop %v7008
        %v7044 = vmul.f32 1.0, %v7043
        %v7045 = vrcp.pop %v7009
        %v7046 = vmul.f32 1.0, %v7045
        %v7047 = vrcp.pop %v7010
        %v7048 = vmul.f32 1.0, %v7047
        %v7049 = vrcp.pop %v7011
        %v7050 = vmul.f32 1.0, %v7049
        %v7051 = vrcp.pop %v7012
        %v7052 = vmul.f32 1.0, %v7051
        %v7053 = vrcp.pop %v7013
        %v7054 = vmul.f32 1.0, %v7053
        %v7055 = vrcp.pop %v7014
        %v7056 = vmul.f32 1.0, %v7055
        %v7057 = vrcp.pop %v7015
        %v7058 = vmul.f32 1.0, %v7057
        %v7059 = vrcp.pop %v7016
        %v7060 = vmul.f32 1.0, %v7059
        %v7061 = vrcp.pop %v7017
        %v7062 = vmul.f32 1.0, %v7061
        %v7063 = vrcp.pop %v7018
        %v7064 = vmul.f32 1.0, %v7063
        %v7065 = vrcp.pop %v7019
        %v7066 = vmul.f32 1.0, %v7065
        %v7067 = vrcp.pop %v7020
        %v7068 = vmul.f32 1.0, %v7067
        %v7069 = vrcp.pop %v7021
        %v7070 = vmul.f32 1.0, %v7069
        %v7071 = vrcp.pop %v7022
        %v7072 = vmul.f32 1.0, %v7071
        %v7073 = vrcp.pop %v7023
        %v7074 = vmul.f32 1.0, %v7073
        %v7075 = vrcp.pop %v7024
        %v7076 = vmul.f32 1.0, %v7075
        %v7077 = vrcp.pop %v7025
        %v7078 = vmul.f32 1.0, %v7077
        %v7079 = vrcp.pop %v7026
        %v7080 = vmul.f32 1.0, %v7079
        %v7081 = vrcp.pop %v7027
        %v7082 = vmul.f32 1.0, %v7081
        %v7083 = vrcp.pop %v7028
        %v7084 = vmul.f32 1.0, %v7083
        %v7085 = vrcp.pop %v7029
        %v7086 = vmul.f32 1.0, %v7085
        %v7087 = vrcp.pop %v7030
        %v7088 = vmul.f32 1.0, %v7087
        %v7089 = vrcp.pop %v7031
        %v7090 = vmul.f32 1.0, %v7089
        %v7091 = vrcp.pop %v7032
        %v7092 = vmul.f32 1.0, %v7091
        %v7093 = vrcp.pop %v7033
        %v7094 = vmul.f32 1.0, %v7093
        %v7095 = vrcp.pop %v7034
        %v7096 = vmul.f32 1.0, %v7095
        %v7097 = vrcp.pop %v7035
        %v7098 = vmul.f32 1.0, %v7097
        %v7099 = vrcp.pop %v7036
        %v7100 = vmul.f32 1.0, %v7099
        %v7101 = vtanh.pop %v6718
        %v7102 = vtanh.pop %v6720
        %v7103 = vtanh.pop %v6722
        %v7104 = vtanh.pop %v6724
        %v7105 = vtanh.pop %v6728
        %v7106 = vtanh.pop %v6730
        %v7107 = vtanh.pop %v6732
        %v7108 = vtanh.pop %v6734
        %v7109 = vtanh.pop %v6738
        %v7110 = vtanh.pop %v6740
        %v7111 = vtanh.pop %v6742
        %v7112 = vtanh.pop %v6744
        %v7113 = vtanh.pop %v6748
        %v7114 = vtanh.pop %v6750
        %v7115 = vtanh.pop %v6752
        %v7116 = vtanh.pop %v6754
        %v7117 = vtanh.pop %v6758
        %v7118 = vtanh.pop %v6760
        %v7119 = vtanh.pop %v6762
        %v7120 = vtanh.pop %v6764
        %v7121 = vtanh.pop %v6768
        %v7122 = vtanh.pop %v6770
        %v7123 = vtanh.pop %v6772
        %v7124 = vtanh.pop %v6774
        %v7125 = vtanh.pop %v6778
        %v7126 = vtanh.pop %v6780
        %v7127 = vtanh.pop %v6782
        %v7128 = vtanh.pop %v6784
        %v7129 = vtanh.pop %v6788
        %v7130 = vtanh.pop %v6790
        %v7131 = vtanh.pop %v6792
        %v7132 = vtanh.pop %v6794
        %v7133 = vxor.u32 %v6831, 2147483648
        %v7134 = vxor.u32 %v6833, 2147483648
        %v7135 = vxor.u32 %v6835, 2147483648
        %v7136 = vxor.u32 %v6837, 2147483648
        %v7137 = vxor.u32 %v6841, 2147483648
        %v7138 = vxor.u32 %v6843, 2147483648
        %v7139 = vxor.u32 %v6845, 2147483648
        %v7140 = vxor.u32 %v6847, 2147483648
        %v7141 = vxor.u32 %v6851, 2147483648
        %v7142 = vxor.u32 %v6853, 2147483648
        %v7143 = vxor.u32 %v6855, 2147483648
        %v7144 = vxor.u32 %v6857, 2147483648
        %v7145 = vxor.u32 %v6861, 2147483648
        %v7146 = vxor.u32 %v6863, 2147483648
        %v7147 = vxor.u32 %v6865, 2147483648
        %v7148 = vxor.u32 %v6867, 2147483648
        %v7149 = vxor.u32 %v6871, 2147483648
        %v7150 = vxor.u32 %v6873, 2147483648
        %v7151 = vxor.u32 %v6875, 2147483648
        %v7152 = vxor.u32 %v6877, 2147483648
        %v7153 = vxor.u32 %v6881, 2147483648
        %v7154 = vxor.u32 %v6883, 2147483648
        %v7155 = vxor.u32 %v6885, 2147483648
        %v7156 = vxor.u32 %v6887, 2147483648
        %v7157 = vxor.u32 %v6891, 2147483648
        %v7158 = vxor.u32 %v6893, 2147483648
        %v7159 = vxor.u32 %v6895, 2147483648
        %v7160 = vxor.u32 %v6897, 2147483648
        %v7161 = vxor.u32 %v6901, 2147483648
        %v7162 = vxor.u32 %v6903, 2147483648
        %v7163 = vxor.u32 %v6905, 2147483648
        %v7164 = vxor.u32 %v6907, 2147483648
        %v7165 = vmul.f32 %v7133, 1.442695
        %v7166 = vpow.pop %v7165
        %v7167 = vmul.f32 %v7134, 1.442695
        %v7168 = vpow.pop %v7167
        %v7169 = vmul.f32 %v7135, 1.442695
        %v7170 = vpow.pop %v7169
        %v7171 = vmul.f32 %v7136, 1.442695
        %v7172 = vpow.pop %v7171
        %v7173 = vmul.f32 %v7137, 1.442695
        %v7174 = vpow.pop %v7173
        %v7175 = vmul.f32 %v7138, 1.442695
        %v7176 = vpow.pop %v7175
        %v7177 = vmul.f32 %v7139, 1.442695
        %v7178 = vpow.pop %v7177
        %v7179 = vmul.f32 %v7140, 1.442695
        %v7180 = vpow.pop %v7179
        %v7181 = vmul.f32 %v7141, 1.442695
        %v7182 = vpow.pop %v7181
        %v7183 = vmul.f32 %v7142, 1.442695
        %v7184 = vpow.pop %v7183
        %v7185 = vmul.f32 %v7143, 1.442695
        %v7186 = vpow.pop %v7185
        %v7187 = vmul.f32 %v7144, 1.442695
        %v7188 = vpow.pop %v7187
        %v7189 = vmul.f32 %v7145, 1.442695
        %v7190 = vpow.pop %v7189
        %v7191 = vmul.f32 %v7146, 1.442695
        %v7192 = vpow.pop %v7191
        %v7193 = vmul.f32 %v7147, 1.442695
        %v7194 = vpow.pop %v7193
        %v7195 = vmul.f32 %v7148, 1.442695
        %v7196 = vpow.pop %v7195
        %v7197 = vmul.f32 %v7149, 1.442695
        %v7198 = vpow.pop %v7197
        %v7199 = vmul.f32 %v7150, 1.442695
        %v7200 = vpow.pop %v7199
        %v7201 = vmul.f32 %v7151, 1.442695
        %v7202 = vpow.pop %v7201
        %v7203 = vmul.f32 %v7152, 1.442695
        %v7204 = vpow.pop %v7203
        %v7205 = vmul.f32 %v7153, 1.442695
        %v7206 = vpow.pop %v7205
        %v7207 = vmul.f32 %v7154, 1.442695
        %v7208 = vpow.pop %v7207
        %v7209 = vmul.f32 %v7155, 1.442695
        %v7210 = vpow.pop %v7209
        %v7211 = vmul.f32 %v7156, 1.442695
        %v7212 = vpow.pop %v7211
        %v7213 = vmul.f32 %v7157, 1.442695
        %v7214 = vpow.pop %v7213
        %v7215 = vmul.f32 %v7158, 1.442695
        %v7216 = vpow.pop %v7215
        %v7217 = vmul.f32 %v7159, 1.442695
        %v7218 = vpow.pop %v7217
        %v7219 = vmul.f32 %v7160, 1.442695
        %v7220 = vpow.pop %v7219
        %v7221 = vmul.f32 %v7161, 1.442695
        %v7222 = vpow.pop %v7221
        %v7223 = vmul.f32 %v7162, 1.442695
        %v7224 = vpow.pop %v7223
        %v7225 = vmul.f32 %v7163, 1.442695
        %v7226 = vpow.pop %v7225
        %v7227 = vmul.f32 %v7164, 1.442695
        %v7228 = vpow.pop %v7227
        %v7229 = vadd.f32 %v7166, 1.0
        %v7230 = vadd.f32 %v7168, 1.0
        %v7231 = vadd.f32 %v7170, 1.0
        %v7232 = vadd.f32 %v7172, 1.0
        %v7233 = vadd.f32 %v7174, 1.0
        %v7234 = vadd.f32 %v7176, 1.0
        %v7235 = vadd.f32 %v7178, 1.0
        %v7236 = vadd.f32 %v7180, 1.0
        %v7237 = vadd.f32 %v7182, 1.0
        %v7238 = vadd.f32 %v7184, 1.0
        %v7239 = vadd.f32 %v7186, 1.0
        %v7240 = vadd.f32 %v7188, 1.0
        %v7241 = vadd.f32 %v7190, 1.0
        %v7242 = vadd.f32 %v7192, 1.0
        %v7243 = vadd.f32 %v7194, 1.0
        %v7244 = vadd.f32 %v7196, 1.0
        %v7245 = vadd.f32 %v7198, 1.0
        %v7246 = vadd.f32 %v7200, 1.0
        %v7247 = vadd.f32 %v7202, 1.0
        %v7248 = vadd.f32 %v7204, 1.0
        %v7249 = vadd.f32 %v7206, 1.0
        %v7250 = vadd.f32 %v7208, 1.0
        %v7251 = vadd.f32 %v7210, 1.0
        %v7252 = vadd.f32 %v7212, 1.0
        %v7253 = vadd.f32 %v7214, 1.0
        %v7254 = vadd.f32 %v7216, 1.0
        %v7255 = vadd.f32 %v7218, 1.0
        %v7256 = vadd.f32 %v7220, 1.0
        %v7257 = vadd.f32 %v7222, 1.0
        %v7258 = vadd.f32 %v7224, 1.0
        %v7259 = vadd.f32 %v7226, 1.0
        %v7260 = vadd.f32 %v7228, 1.0
        %v7261 = vrcp.pop %v7229
        %v7262 = vmul.f32 1.0, %v7261
        %v7263 = vrcp.pop %v7230
        %v7264 = vmul.f32 1.0, %v7263
        %v7265 = vrcp.pop %v7231
        %v7266 = vmul.f32 1.0, %v7265
        %v7267 = vrcp.pop %v7232
        %v7268 = vmul.f32 1.0, %v7267
        %v7269 = vrcp.pop %v7233
        %v7270 = vmul.f32 1.0, %v7269
        %v7271 = vrcp.pop %v7234
        %v7272 = vmul.f32 1.0, %v7271
        %v7273 = vrcp.pop %v7235
        %v7274 = vmul.f32 1.0, %v7273
        %v7275 = vrcp.pop %v7236
        %v7276 = vmul.f32 1.0, %v7275
        %v7277 = vrcp.pop %v7237
        %v7278 = vmul.f32 1.0, %v7277
        %v7279 = vrcp.pop %v7238
        %v7280 = vmul.f32 1.0, %v7279
        %v7281 = vrcp.pop %v7239
        %v7282 = vmul.f32 1.0, %v7281
        %v7283 = vrcp.pop %v7240
        %v7284 = vmul.f32 1.0, %v7283
        %v7285 = vrcp.pop %v7241
        %v7286 = vmul.f32 1.0, %v7285
        %v7287 = vrcp.pop %v7242
        %v7288 = vmul.f32 1.0, %v7287
        %v7289 = vrcp.pop %v7243
        %v7290 = vmul.f32 1.0, %v7289
        %v7291 = vrcp.pop %v7244
        %v7292 = vmul.f32 1.0, %v7291
        %v7293 = vrcp.pop %v7245
        %v7294 = vmul.f32 1.0, %v7293
        %v7295 = vrcp.pop %v7246
        %v7296 = vmul.f32 1.0, %v7295
        %v7297 = vrcp.pop %v7247
        %v7298 = vmul.f32 1.0, %v7297
        %v7299 = vrcp.pop %v7248
        %v7300 = vmul.f32 1.0, %v7299
        %v7301 = vrcp.pop %v7249
        %v7302 = vmul.f32 1.0, %v7301
        %v7303 = vrcp.pop %v7250
        %v7304 = vmul.f32 1.0, %v7303
        %v7305 = vrcp.pop %v7251
        %v7306 = vmul.f32 1.0, %v7305
        %v7307 = vrcp.pop %v7252
        %v7308 = vmul.f32 1.0, %v7307
        %v7309 = vrcp.pop %v7253
        %v7310 = vmul.f32 1.0, %v7309
        %v7311 = vrcp.pop %v7254
        %v7312 = vmul.f32 1.0, %v7311
        %v7313 = vrcp.pop %v7255
        %v7314 = vmul.f32 1.0, %v7313
        %v7315 = vrcp.pop %v7256
        %v7316 = vmul.f32 1.0, %v7315
        %v7317 = vrcp.pop %v7257
        %v7318 = vmul.f32 1.0, %v7317
        %v7319 = vrcp.pop %v7258
        %v7320 = vmul.f32 1.0, %v7319
        %v7321 = vrcp.pop %v7259
        %v7322 = vmul.f32 1.0, %v7321
        %v7323 = vrcp.pop %v7260
        %v7324 = vmul.f32 1.0, %v7323
        %v7325 = vmul.f32 %v7038, %v7101
        %v7326 = vmul.f32 %v7040, %v7102
        %v7327 = vmul.f32 %v7042, %v7103
        %v7328 = vmul.f32 %v7044, %v7104
        %v7329 = vmul.f32 %v7046, %v7105
        %v7330 = vmul.f32 %v7048, %v7106
        %v7331 = vmul.f32 %v7050, %v7107
        %v7332 = vmul.f32 %v7052, %v7108
        %v7333 = vmul.f32 %v7054, %v7109
        %v7334 = vmul.f32 %v7056, %v7110
        %v7335 = vmul.f32 %v7058, %v7111
        %v7336 = vmul.f32 %v7060, %v7112
        %v7337 = vmul.f32 %v7062, %v7113
        %v7338 = vmul.f32 %v7064, %v7114
        %v7339 = vmul.f32 %v7066, %v7115
        %v7340 = vmul.f32 %v7068, %v7116
        %v7341 = vmul.f32 %v7070, %v7117
        %v7342 = vmul.f32 %v7072, %v7118
        %v7343 = vmul.f32 %v7074, %v7119
        %v7344 = vmul.f32 %v7076, %v7120
        %v7345 = vmul.f32 %v7078, %v7121
        %v7346 = vmul.f32 %v7080, %v7122
        %v7347 = vmul.f32 %v7082, %v7123
        %v7348 = vmul.f32 %v7084, %v7124
        %v7349 = vmul.f32 %v7086, %v7125
        %v7350 = vmul.f32 %v7088, %v7126
        %v7351 = vmul.f32 %v7090, %v7127
        %v7352 = vmul.f32 %v7092, %v7128
        %v7353 = vmul.f32 %v7094, %v7129
        %v7354 = vmul.f32 %v7096, %v7130
        %v7355 = vmul.f32 %v7098, %v7131
        %v7356 = vmul.f32 %v7100, %v7132
        %v7357 = vtanh.pop %v7325
        %v7358 = vtanh.pop %v7326
        %v7359 = vtanh.pop %v7327
        %v7360 = vtanh.pop %v7328
        %v7361 = vtanh.pop %v7329
        %v7362 = vtanh.pop %v7330
        %v7363 = vtanh.pop %v7331
        %v7364 = vtanh.pop %v7332
        %v7365 = vtanh.pop %v7333
        %v7366 = vtanh.pop %v7334
        %v7367 = vtanh.pop %v7335
        %v7368 = vtanh.pop %v7336
        %v7369 = vtanh.pop %v7337
        %v7370 = vtanh.pop %v7338
        %v7371 = vtanh.pop %v7339
        %v7372 = vtanh.pop %v7340
        %v7373 = vtanh.pop %v7341
        %v7374 = vtanh.pop %v7342
        %v7375 = vtanh.pop %v7343
        %v7376 = vtanh.pop %v7344
        %v7377 = vtanh.pop %v7345
        %v7378 = vtanh.pop %v7346
        %v7379 = vtanh.pop %v7347
        %v7380 = vtanh.pop %v7348
        %v7381 = vtanh.pop %v7349
        %v7382 = vtanh.pop %v7350
        %v7383 = vtanh.pop %v7351
        %v7384 = vtanh.pop %v7352
        %v7385 = vtanh.pop %v7353
        %v7386 = vtanh.pop %v7354
        %v7387 = vtanh.pop %v7355
        %v7388 = vtanh.pop %v7356
        %v7389 = vmul.f32 %v7262, %v7357
        %v7390 = vmul.f32 %v7264, %v7358
        %v7391 = vmul.f32 %v7266, %v7359
        %v7392 = vmul.f32 %v7268, %v7360
        %v7393 = vmul.f32 %v7270, %v7361
        %v7394 = vmul.f32 %v7272, %v7362
        %v7395 = vmul.f32 %v7274, %v7363
        %v7396 = vmul.f32 %v7276, %v7364
        %v7397 = vmul.f32 %v7278, %v7365
        %v7398 = vmul.f32 %v7280, %v7366
        %v7399 = vmul.f32 %v7282, %v7367
        %v7400 = vmul.f32 %v7284, %v7368
        %v7401 = vmul.f32 %v7286, %v7369
        %v7402 = vmul.f32 %v7288, %v7370
        %v7403 = vmul.f32 %v7290, %v7371
        %v7404 = vmul.f32 %v7292, %v7372
        %v7405 = vmul.f32 %v7294, %v7373
        %v7406 = vmul.f32 %v7296, %v7374
        %v7407 = vmul.f32 %v7298, %v7375
        %v7408 = vmul.f32 %v7300, %v7376
        %v7409 = vmul.f32 %v7302, %v7377
        %v7410 = vmul.f32 %v7304, %v7378
        %v7411 = vmul.f32 %v7306, %v7379
        %v7412 = vmul.f32 %v7308, %v7380
        %v7413 = vmul.f32 %v7310, %v7381
        %v7414 = vmul.f32 %v7312, %v7382
        %v7415 = vmul.f32 %v7314, %v7383
        %v7416 = vmul.f32 %v7316, %v7384
        %v7417 = vmul.f32 %v7318, %v7385
        %v7418 = vmul.f32 %v7320, %v7386
        %v7419 = vmul.f32 %v7322, %v7387
        %v7420 = vmul.f32 %v7324, %v7388
        %v7421 = vld [vmem:[#allocation8 + $0x300] sm:$0xff]
        %v7422 = vld [vmem:[#allocation8 + $0x308] sm:$0xff]
        %v7423 = vld [vmem:[#allocation8 + $0x310] sm:$0xff]
        %v7424 = vld [vmem:[#allocation8 + $0x318] sm:$0xff]
        %v7425 = vld [vmem:[#allocation8 + $0x320] sm:$0xff]
        %v7426 = vld [vmem:[#allocation8 + $0x328] sm:$0xff]
        %v7427 = vld [vmem:[#allocation8 + $0x330] sm:$0xff]
        %v7428 = vld [vmem:[#allocation8 + $0x338] sm:$0xff]
        %v7429 = vld [vmem:[#allocation8 + $0x340] sm:$0xff]
        %v7430 = vld [vmem:[#allocation8 + $0x348] sm:$0xff]
        %v7431 = vld [vmem:[#allocation8 + $0x350] sm:$0xff]
        %v7432 = vld [vmem:[#allocation8 + $0x358] sm:$0xff]
        %v7433 = vld [vmem:[#allocation8 + $0x360] sm:$0xff]
        %v7434 = vld [vmem:[#allocation8 + $0x368] sm:$0xff]
        %v7435 = vld [vmem:[#allocation8 + $0x370] sm:$0xff]
        %v7436 = vld [vmem:[#allocation8 + $0x378] sm:$0xff]
        %v7437 = vld [vmem:[#allocation8 + $0x380] sm:$0xff]
        %v7438 = vld [vmem:[#allocation8 + $0x388] sm:$0xff]
        %v7439 = vld [vmem:[#allocation8 + $0x390] sm:$0xff]
        %v7440 = vld [vmem:[#allocation8 + $0x398] sm:$0xff]
        %v7441 = vld [vmem:[#allocation8 + $0x3a0] sm:$0xff]
        %v7442 = vld [vmem:[#allocation8 + $0x3a8] sm:$0xff]
        %v7443 = vld [vmem:[#allocation8 + $0x3b0] sm:$0xff]
        %v7444 = vld [vmem:[#allocation8 + $0x3b8] sm:$0xff]
        %v7445 = vld [vmem:[#allocation8 + $0x3c0] sm:$0xff]
        %v7446 = vld [vmem:[#allocation8 + $0x3c8] sm:$0xff]
        %v7447 = vld [vmem:[#allocation8 + $0x3d0] sm:$0xff]
        %v7448 = vld [vmem:[#allocation8 + $0x3d8] sm:$0xff]
        %v7449 = vld [vmem:[#allocation8 + $0x3e0] sm:$0xff]
        %v7450 = vld [vmem:[#allocation8 + $0x3e8] sm:$0xff]
        %v7451 = vld [vmem:[#allocation8 + $0x3f0] sm:$0xff]
        %v7452 = vld [vmem:[#allocation8 + $0x3f8] sm:$0xff]
        %v7453 = vld [vmem:[#allocation8 + $0x400] sm:$0xff]
        %v7454 = vld [vmem:[#allocation8 + $0x408] sm:$0xff]
        %v7455 = vld [vmem:[#allocation8 + $0x410] sm:$0xff]
        %v7456 = vld [vmem:[#allocation8 + $0x418] sm:$0xff]
        %v7457 = vld [vmem:[#allocation8 + $0x420] sm:$0xff]
        %v7458 = vld [vmem:[#allocation8 + $0x428] sm:$0xff]
        %v7459 = vld [vmem:[#allocation8 + $0x430] sm:$0xff]
        %v7460 = vld [vmem:[#allocation8 + $0x438] sm:$0xff]
        %v7461 = vld [vmem:[#allocation8 + $0x440] sm:$0xff]
        %v7462 = vld [vmem:[#allocation8 + $0x448] sm:$0xff]
        %v7463 = vld [vmem:[#allocation8 + $0x450] sm:$0xff]
        %v7464 = vld [vmem:[#allocation8 + $0x458] sm:$0xff]
        %v7465 = vld [vmem:[#allocation8 + $0x460] sm:$0xff]
        %v7466 = vld [vmem:[#allocation8 + $0x468] sm:$0xff]
        %v7467 = vld [vmem:[#allocation8 + $0x470] sm:$0xff]
        %v7468 = vld [vmem:[#allocation8 + $0x478] sm:$0xff]
        %v7469 = vld [vmem:[#allocation8 + $0x480] sm:$0xff]
        %v7470 = vld [vmem:[#allocation8 + $0x488] sm:$0xff]
        %v7471 = vld [vmem:[#allocation8 + $0x490] sm:$0xff]
        %v7472 = vld [vmem:[#allocation8 + $0x498] sm:$0xff]
        %v7473 = vld [vmem:[#allocation8 + $0x4a0] sm:$0xff]
        %v7474 = vld [vmem:[#allocation8 + $0x4a8] sm:$0xff]
        %v7475 = vld [vmem:[#allocation8 + $0x4b0] sm:$0xff]
        %v7476 = vld [vmem:[#allocation8 + $0x4b8] sm:$0xff]
        %v7477 = vld [vmem:[#allocation8 + $0x4c0] sm:$0xff]
        %v7478 = vld [vmem:[#allocation8 + $0x4c8] sm:$0xff]
        %v7479 = vld [vmem:[#allocation8 + $0x4d0] sm:$0xff]
        %v7480 = vld [vmem:[#allocation8 + $0x4d8] sm:$0xff]
        %v7481 = vld [vmem:[#allocation8 + $0x4e0] sm:$0xff]
        %v7482 = vld [vmem:[#allocation8 + $0x4e8] sm:$0xff]
        %v7483 = vld [vmem:[#allocation8 + $0x4f0] sm:$0xff]
        %v7484 = vld [vmem:[#allocation8 + $0x4f8] sm:$0xff]
        %v7485 = vld [vmem:[#allocation8 + $0x500] sm:$0xff]
        %v7486 = vld [vmem:[#allocation8 + $0x508] sm:$0xff]
        %v7487 = vld [vmem:[#allocation8 + $0x510] sm:$0xff]
        %v7488 = vld [vmem:[#allocation8 + $0x518] sm:$0xff]
        %v7489 = vld [vmem:[#allocation8 + $0x520] sm:$0xff]
        %v7490 = vld [vmem:[#allocation8 + $0x528] sm:$0xff]
        %v7491 = vld [vmem:[#allocation8 + $0x530] sm:$0xff]
        %v7492 = vld [vmem:[#allocation8 + $0x538] sm:$0xff]
        %v7493 = vld [vmem:[#allocation8 + $0x540] sm:$0xff]
        %v7494 = vld [vmem:[#allocation8 + $0x548] sm:$0xff]
        %v7495 = vld [vmem:[#allocation8 + $0x550] sm:$0xff]
        %v7496 = vld [vmem:[#allocation8 + $0x558] sm:$0xff]
        %v7497 = vld [vmem:[#allocation8 + $0x560] sm:$0xff]
        %v7498 = vld [vmem:[#allocation8 + $0x568] sm:$0xff]
        %v7499 = vld [vmem:[#allocation8 + $0x570] sm:$0xff]
        %v7500 = vld [vmem:[#allocation8 + $0x578] sm:$0xff]
        %v7501 = vld [vmem:[#allocation8 + $0x580] sm:$0xff]
        %v7502 = vld [vmem:[#allocation8 + $0x588] sm:$0xff]
        %v7503 = vld [vmem:[#allocation8 + $0x590] sm:$0xff]
        %v7504 = vld [vmem:[#allocation8 + $0x598] sm:$0xff]
        %v7505 = vld [vmem:[#allocation8 + $0x5a0] sm:$0xff]
        %v7506 = vld [vmem:[#allocation8 + $0x5a8] sm:$0xff]
        %v7507 = vld [vmem:[#allocation8 + $0x5b0] sm:$0xff]
        %v7508 = vld [vmem:[#allocation8 + $0x5b8] sm:$0xff]
        %v7509 = vld [vmem:[#allocation8 + $0x5c0] sm:$0xff]
        %v7510 = vld [vmem:[#allocation8 + $0x5c8] sm:$0xff]
        %v7511 = vld [vmem:[#allocation8 + $0x5d0] sm:$0xff]
        %v7512 = vld [vmem:[#allocation8 + $0x5d8] sm:$0xff]
        %v7513 = vld [vmem:[#allocation8 + $0x5e0] sm:$0xff]
        %v7514 = vld [vmem:[#allocation8 + $0x5e8] sm:$0xff]
        %v7515 = vld [vmem:[#allocation8 + $0x5f0] sm:$0xff]
        %v7516 = vld [vmem:[#allocation8 + $0x5f8] sm:$0xff]
        %s7517 = scalar_lea.vmem [#allocation10], 197
        %v7518 = vld [vmem:[%s7517] ss:$8 sm:$0xf]
        %v7519 = vld [vmem:[%s7517] ss:$8 sm:$0x30]
        %v7520 = vor.u32 %v7518, %v7519
        %v7521 = vpack.c.bf16 %v7391, %v7389
        %v7522 = vpack.c.bf16 %v7392, %v7390
        %v7523 = vpack.c.bf16 %v7395, %v7393
        %v7524 = vpack.c.bf16 %v7396, %v7394
        %v7525 = vpack.c.bf16 %v7399, %v7397
        %v7526 = vpack.c.bf16 %v7400, %v7398
        %v7527 = vpack.c.bf16 %v7403, %v7401
        %v7528 = vpack.c.bf16 %v7404, %v7402
        %v7529 = vpack.c.bf16 %v7407, %v7405
        %v7530 = vpack.c.bf16 %v7408, %v7406
        %v7531 = vpack.c.bf16 %v7411, %v7409
        %v7532 = vpack.c.bf16 %v7412, %v7410
        %v7533 = vpack.c.bf16 %v7415, %v7413
        %v7534 = vpack.c.bf16 %v7416, %v7414
        %v7535 = vpack.c.bf16 %v7419, %v7417
        %v7536 = vpack.c.bf16 %v7420, %v7418
        %v7538 = vlaneseq
        %v7539 = vshrl.u32 %v7538, 7
        %v7540 = vsub.s32 0, %v7539
        %v7541 = vrot.slane %v7520, %v7540
        %v7542 = vlaneseq
        %v7543 = vshrl.u32 %v7542, 7
        %v7544 = vsub.s32 1, %v7543
        %v7545 = vrot.slane %v7520, %v7544
        %v7546 = vlaneseq
        %v7547 = vshrl.u32 %v7546, 7
        %v7548 = vsub.s32 2, %v7547
        %v7549 = vrot.slane %v7520, %v7548
        %v7550 = vlaneseq
        %v7551 = vshrl.u32 %v7550, 7
        %v7552 = vsub.s32 3, %v7551
        %v7553 = vrot.slane %v7520, %v7552
        %v7554 = vlaneseq
        %v7555 = vshrl.u32 %v7554, 7
        %v7556 = vsub.s32 4, %v7555
        %v7557 = vrot.slane %v7520, %v7556
        %v7558 = vlaneseq
        %v7559 = vshrl.u32 %v7558, 7
        %v7560 = vsub.s32 5, %v7559
        %v7561 = vrot.slane %v7520, %v7560
        %v7664 = vunpack.c.l.b16 %v7421
        %v7665 = vunpack.c.h.b16 %v7421
        %v7666 = vunpack.c.l.b16 %v7422
        %v7667 = vunpack.c.h.b16 %v7422
        %v7668 = vunpack.c.l.b16 %v7423
        %v7669 = vunpack.c.h.b16 %v7423
        %v7670 = vunpack.c.l.b16 %v7424
        %v7671 = vunpack.c.h.b16 %v7424
        %v7672 = vunpack.c.l.b16 %v7425
        %v7673 = vunpack.c.h.b16 %v7425
        %v7674 = vunpack.c.l.b16 %v7426
        %v7675 = vunpack.c.h.b16 %v7426
        %v7676 = vunpack.c.l.b16 %v7427
        %v7677 = vunpack.c.h.b16 %v7427
        %v7678 = vunpack.c.l.b16 %v7428
        %v7679 = vunpack.c.h.b16 %v7428
        %v7680 = vunpack.c.l.b16 %v7429
        %v7681 = vunpack.c.h.b16 %v7429
        %v7682 = vunpack.c.l.b16 %v7430
        %v7683 = vunpack.c.h.b16 %v7430
        %v7684 = vunpack.c.l.b16 %v7431
        %v7685 = vunpack.c.h.b16 %v7431
        %v7686 = vunpack.c.l.b16 %v7432
        %v7687 = vunpack.c.h.b16 %v7432
        %v7688 = vunpack.c.l.b16 %v7433
        %v7689 = vunpack.c.h.b16 %v7433
        %v7690 = vunpack.c.l.b16 %v7434
        %v7691 = vunpack.c.h.b16 %v7434
        %v7692 = vunpack.c.l.b16 %v7435
        %v7693 = vunpack.c.h.b16 %v7435
        %v7694 = vunpack.c.l.b16 %v7436
        %v7695 = vunpack.c.h.b16 %v7436
        %v7696 = vunpack.c.l.b16 %v7437
        %v7697 = vunpack.c.h.b16 %v7437
        %v7698 = vunpack.c.l.b16 %v7438
        %v7699 = vunpack.c.h.b16 %v7438
        %v7700 = vunpack.c.l.b16 %v7439
        %v7701 = vunpack.c.h.b16 %v7439
        %v7702 = vunpack.c.l.b16 %v7440
        %v7703 = vunpack.c.h.b16 %v7440
        %v7704 = vunpack.c.l.b16 %v7441
        %v7705 = vunpack.c.h.b16 %v7441
        %v7706 = vunpack.c.l.b16 %v7442
        %v7707 = vunpack.c.h.b16 %v7442
        %v7708 = vunpack.c.l.b16 %v7443
        %v7709 = vunpack.c.h.b16 %v7443
        %v7710 = vunpack.c.l.b16 %v7444
        %v7711 = vunpack.c.h.b16 %v7444
        %v7712 = vunpack.c.l.b16 %v7445
        %v7713 = vunpack.c.h.b16 %v7445
        %v7714 = vunpack.c.l.b16 %v7446
        %v7715 = vunpack.c.h.b16 %v7446
        %v7716 = vunpack.c.l.b16 %v7447
        %v7717 = vunpack.c.h.b16 %v7447
        %v7718 = vunpack.c.l.b16 %v7448
        %v7719 = vunpack.c.h.b16 %v7448
        %v7720 = vunpack.c.l.b16 %v7449
        %v7721 = vunpack.c.h.b16 %v7449
        %v7722 = vunpack.c.l.b16 %v7450
        %v7723 = vunpack.c.h.b16 %v7450
        %v7724 = vunpack.c.l.b16 %v7451
        %v7725 = vunpack.c.h.b16 %v7451
        %v7726 = vunpack.c.l.b16 %v7452
        %v7727 = vunpack.c.h.b16 %v7452
        %v7728 = vunpack.c.l.b16 %v7453
        %v7729 = vunpack.c.h.b16 %v7453
        %v7730 = vunpack.c.l.b16 %v7454
        %v7731 = vunpack.c.h.b16 %v7454
        %v7732 = vunpack.c.l.b16 %v7455
        %v7733 = vunpack.c.h.b16 %v7455
        %v7734 = vunpack.c.l.b16 %v7456
        %v7735 = vunpack.c.h.b16 %v7456
        %v7736 = vunpack.c.l.b16 %v7457
        %v7737 = vunpack.c.h.b16 %v7457
        %v7738 = vunpack.c.l.b16 %v7458
        %v7739 = vunpack.c.h.b16 %v7458
        %v7740 = vunpack.c.l.b16 %v7459
        %v7741 = vunpack.c.h.b16 %v7459
        %v7742 = vunpack.c.l.b16 %v7460
        %v7743 = vunpack.c.h.b16 %v7460
        %v7744 = vunpack.c.l.b16 %v7461
        %v7745 = vunpack.c.h.b16 %v7461
        %v7746 = vunpack.c.l.b16 %v7462
        %v7747 = vunpack.c.h.b16 %v7462
        %v7748 = vunpack.c.l.b16 %v7463
        %v7749 = vunpack.c.h.b16 %v7463
        %v7750 = vunpack.c.l.b16 %v7464
        %v7751 = vunpack.c.h.b16 %v7464
        %v7752 = vunpack.c.l.b16 %v7465
        %v7753 = vunpack.c.h.b16 %v7465
        %v7754 = vunpack.c.l.b16 %v7466
        %v7755 = vunpack.c.h.b16 %v7466
        %v7756 = vunpack.c.l.b16 %v7467
        %v7757 = vunpack.c.h.b16 %v7467
        %v7758 = vunpack.c.l.b16 %v7468
        %v7759 = vunpack.c.h.b16 %v7468
        %v7760 = vunpack.c.l.b16 %v7469
        %v7761 = vunpack.c.h.b16 %v7469
        %v7762 = vunpack.c.l.b16 %v7470
        %v7763 = vunpack.c.h.b16 %v7470
        %v7764 = vunpack.c.l.b16 %v7471
        %v7765 = vunpack.c.h.b16 %v7471
        %v7766 = vunpack.c.l.b16 %v7472
        %v7767 = vunpack.c.h.b16 %v7472
        %v7768 = vunpack.c.l.b16 %v7473
        %v7769 = vunpack.c.h.b16 %v7473
        %v7770 = vunpack.c.l.b16 %v7474
        %v7771 = vunpack.c.h.b16 %v7474
        %v7772 = vunpack.c.l.b16 %v7475
        %v7773 = vunpack.c.h.b16 %v7475
        %v7774 = vunpack.c.l.b16 %v7476
        %v7775 = vunpack.c.h.b16 %v7476
        %v7776 = vunpack.c.l.b16 %v7477
        %v7777 = vunpack.c.h.b16 %v7477
        %v7778 = vunpack.c.l.b16 %v7478
        %v7779 = vunpack.c.h.b16 %v7478
        %v7780 = vunpack.c.l.b16 %v7479
        %v7781 = vunpack.c.h.b16 %v7479
        %v7782 = vunpack.c.l.b16 %v7480
        %v7783 = vunpack.c.h.b16 %v7480
        %v7784 = vunpack.c.l.b16 %v7481
        %v7785 = vunpack.c.h.b16 %v7481
        %v7786 = vunpack.c.l.b16 %v7482
        %v7787 = vunpack.c.h.b16 %v7482
        %v7788 = vunpack.c.l.b16 %v7483
        %v7789 = vunpack.c.h.b16 %v7483
        %v7790 = vunpack.c.l.b16 %v7484
        %v7791 = vunpack.c.h.b16 %v7484
        %v7792 = vunpack.c.l.b16 %v7485
        %v7793 = vunpack.c.h.b16 %v7485
        %v7794 = vunpack.c.l.b16 %v7486
        %v7795 = vunpack.c.h.b16 %v7486
        %v7796 = vunpack.c.l.b16 %v7487
        %v7797 = vunpack.c.h.b16 %v7487
        %v7798 = vunpack.c.l.b16 %v7488
        %v7799 = vunpack.c.h.b16 %v7488
        %v7800 = vunpack.c.l.b16 %v7489
        %v7801 = vunpack.c.h.b16 %v7489
        %v7802 = vunpack.c.l.b16 %v7490
        %v7803 = vunpack.c.h.b16 %v7490
        %v7804 = vunpack.c.l.b16 %v7491
        %v7805 = vunpack.c.h.b16 %v7491
        %v7806 = vunpack.c.l.b16 %v7492
        %v7807 = vunpack.c.h.b16 %v7492
        %v7808 = vunpack.c.l.b16 %v7493
        %v7809 = vunpack.c.h.b16 %v7493
        %v7810 = vunpack.c.l.b16 %v7494
        %v7811 = vunpack.c.h.b16 %v7494
        %v7812 = vunpack.c.l.b16 %v7495
        %v7813 = vunpack.c.h.b16 %v7495
        %v7814 = vunpack.c.l.b16 %v7496
        %v7815 = vunpack.c.h.b16 %v7496
        %v7816 = vunpack.c.l.b16 %v7497
        %v7817 = vunpack.c.h.b16 %v7497
        %v7818 = vunpack.c.l.b16 %v7498
        %v7819 = vunpack.c.h.b16 %v7498
        %v7820 = vunpack.c.l.b16 %v7499
        %v7821 = vunpack.c.h.b16 %v7499
        %v7822 = vunpack.c.l.b16 %v7500
        %v7823 = vunpack.c.h.b16 %v7500
        %v7824 = vunpack.c.l.b16 %v7501
        %v7825 = vunpack.c.h.b16 %v7501
        %v7826 = vunpack.c.l.b16 %v7502
        %v7827 = vunpack.c.h.b16 %v7502
        %v7828 = vunpack.c.l.b16 %v7503
        %v7829 = vunpack.c.h.b16 %v7503
        %v7830 = vunpack.c.l.b16 %v7504
        %v7831 = vunpack.c.h.b16 %v7504
        %v7832 = vunpack.c.l.b16 %v7505
        %v7833 = vunpack.c.h.b16 %v7505
        %v7834 = vunpack.c.l.b16 %v7506
        %v7835 = vunpack.c.h.b16 %v7506
        %v7836 = vunpack.c.l.b16 %v7507
        %v7837 = vunpack.c.h.b16 %v7507
        %v7838 = vunpack.c.l.b16 %v7508
        %v7839 = vunpack.c.h.b16 %v7508
        %v7840 = vunpack.c.l.b16 %v7509
        %v7841 = vunpack.c.h.b16 %v7509
        %v7842 = vunpack.c.l.b16 %v7510
        %v7843 = vunpack.c.h.b16 %v7510
        %v7844 = vunpack.c.l.b16 %v7511
        %v7845 = vunpack.c.h.b16 %v7511
        %v7846 = vunpack.c.l.b16 %v7512
        %v7847 = vunpack.c.h.b16 %v7512
        %v7848 = vunpack.c.l.b16 %v7513
        %v7849 = vunpack.c.h.b16 %v7513
        %v7850 = vunpack.c.l.b16 %v7514
        %v7851 = vunpack.c.h.b16 %v7514
        %v7852 = vunpack.c.l.b16 %v7515
        %v7853 = vunpack.c.h.b16 %v7515
        %v7854 = vunpack.c.l.b16 %v7516
        %v7855 = vunpack.c.h.b16 %v7516
        %v7856 = vpack.c.b16 %v7670, %v7664
        %v7857 = vpack.c.b16 %v7671, %v7665
        %v7858 = vpack.c.b16 %v7672, %v7666
        %v7859 = vpack.c.b16 %v7673, %v7667
        %v7860 = vpack.c.b16 %v7674, %v7668
        %v7861 = vpack.c.b16 %v7675, %v7669
        %v7862 = vpack.c.b16 %v7682, %v7676
        %v7863 = vpack.c.b16 %v7683, %v7677
        %v7864 = vpack.c.b16 %v7684, %v7678
        %v7865 = vpack.c.b16 %v7685, %v7679
        %v7866 = vpack.c.b16 %v7686, %v7680
        %v7867 = vpack.c.b16 %v7687, %v7681
        %v7868 = vpack.c.b16 %v7694, %v7688
        %v7869 = vpack.c.b16 %v7695, %v7689
        %v7870 = vpack.c.b16 %v7696, %v7690
        %v7871 = vpack.c.b16 %v7697, %v7691
        %v7872 = vpack.c.b16 %v7698, %v7692
        %v7873 = vpack.c.b16 %v7699, %v7693
        %v7874 = vpack.c.b16 %v7706, %v7700
        %v7875 = vpack.c.b16 %v7707, %v7701
        %v7876 = vpack.c.b16 %v7708, %v7702
        %v7877 = vpack.c.b16 %v7709, %v7703
        %v7878 = vpack.c.b16 %v7710, %v7704
        %v7879 = vpack.c.b16 %v7711, %v7705
        %v7880 = vpack.c.b16 %v7718, %v7712
        %v7881 = vpack.c.b16 %v7719, %v7713
        %v7882 = vpack.c.b16 %v7720, %v7714
        %v7883 = vpack.c.b16 %v7721, %v7715
        %v7884 = vpack.c.b16 %v7722, %v7716
        %v7885 = vpack.c.b16 %v7723, %v7717
        %v7886 = vpack.c.b16 %v7730, %v7724
        %v7887 = vpack.c.b16 %v7731, %v7725
        %v7888 = vpack.c.b16 %v7732, %v7726
        %v7889 = vpack.c.b16 %v7733, %v7727
        %v7890 = vpack.c.b16 %v7734, %v7728
        %v7891 = vpack.c.b16 %v7735, %v7729
        %v7892 = vpack.c.b16 %v7742, %v7736
        %v7893 = vpack.c.b16 %v7743, %v7737
        %v7894 = vpack.c.b16 %v7744, %v7738
        %v7895 = vpack.c.b16 %v7745, %v7739
        %v7896 = vpack.c.b16 %v7746, %v7740
        %v7897 = vpack.c.b16 %v7747, %v7741
        %v7898 = vpack.c.b16 %v7754, %v7748
        %v7899 = vpack.c.b16 %v7755, %v7749
        %v7900 = vpack.c.b16 %v7756, %v7750
        %v7901 = vpack.c.b16 %v7757, %v7751
        %v7902 = vpack.c.b16 %v7758, %v7752
        %v7903 = vpack.c.b16 %v7759, %v7753
        %v7904 = vpack.c.b16 %v7766, %v7760
        %v7905 = vpack.c.b16 %v7767, %v7761
        %v7906 = vpack.c.b16 %v7768, %v7762
        %v7907 = vpack.c.b16 %v7769, %v7763
        %v7908 = vpack.c.b16 %v7770, %v7764
        %v7909 = vpack.c.b16 %v7771, %v7765
        %v7910 = vpack.c.b16 %v7778, %v7772
        %v7911 = vpack.c.b16 %v7779, %v7773
        %v7912 = vpack.c.b16 %v7780, %v7774
        %v7913 = vpack.c.b16 %v7781, %v7775
        %v7914 = vpack.c.b16 %v7782, %v7776
        %v7915 = vpack.c.b16 %v7783, %v7777
        %v7916 = vpack.c.b16 %v7790, %v7784
        %v7917 = vpack.c.b16 %v7791, %v7785
        %v7918 = vpack.c.b16 %v7792, %v7786
        %v7919 = vpack.c.b16 %v7793, %v7787
        %v7920 = vpack.c.b16 %v7794, %v7788
        %v7921 = vpack.c.b16 %v7795, %v7789
        %v7922 = vpack.c.b16 %v7802, %v7796
        %v7923 = vpack.c.b16 %v7803, %v7797
        %v7924 = vpack.c.b16 %v7804, %v7798
        %v7925 = vpack.c.b16 %v7805, %v7799
        %v7926 = vpack.c.b16 %v7806, %v7800
        %v7927 = vpack.c.b16 %v7807, %v7801
        %v7928 = vpack.c.b16 %v7814, %v7808
        %v7929 = vpack.c.b16 %v7815, %v7809
        %v7930 = vpack.c.b16 %v7816, %v7810
        %v7931 = vpack.c.b16 %v7817, %v7811
        %v7932 = vpack.c.b16 %v7818, %v7812
        %v7933 = vpack.c.b16 %v7819, %v7813
        %v7934 = vpack.c.b16 %v7826, %v7820
        %v7935 = vpack.c.b16 %v7827, %v7821
        %v7936 = vpack.c.b16 %v7828, %v7822
        %v7937 = vpack.c.b16 %v7829, %v7823
        %v7938 = vpack.c.b16 %v7830, %v7824
        %v7939 = vpack.c.b16 %v7831, %v7825
        %v7940 = vpack.c.b16 %v7838, %v7832
        %v7941 = vpack.c.b16 %v7839, %v7833
        %v7942 = vpack.c.b16 %v7840, %v7834
        %v7943 = vpack.c.b16 %v7841, %v7835
        %v7944 = vpack.c.b16 %v7842, %v7836
        %v7945 = vpack.c.b16 %v7843, %v7837
        %v7946 = vpack.c.b16 %v7850, %v7844
        %v7947 = vpack.c.b16 %v7851, %v7845
        %v7948 = vpack.c.b16 %v7852, %v7846
        %v7949 = vpack.c.b16 %v7853, %v7847
        %v7950 = vpack.c.b16 %v7854, %v7848
        %v7951 = vpack.c.b16 %v7855, %v7849
        %8048 = vmatprep.subr.bf16.mxu0 %v7899
        %8049 = vmatpush1.bf16.msra.mxu0 %v7898
        %8050 = vmatprep.subr.bf16.mxu0 %v7893
        %8051 = vmatpush1.bf16.msra.mxu0 %v7892
        %8052 = vmatprep.subr.bf16.mxu0 %v7887
        %8053 = vmatpush1.bf16.msra.mxu0 %v7886
        %8054 = vmatprep.subr.bf16.mxu0 %v7881
        %8055 = vmatpush1.bf16.msra.mxu0 %v7880
        %8056 = vmatprep.subr.bf16.mxu0 %v7875
        %8057 = vmatpush1.bf16.msra.mxu0 %v7874
        %8058 = vmatprep.subr.bf16.mxu0 %v7869
        %8059 = vmatpush1.bf16.msra.mxu0 %v7868
        %8060 = vmatprep.subr.bf16.mxu0 %v7863
        %8061 = vmatpush1.bf16.msra.mxu0 %v7862
        %8062 = vmatprep.subr.bf16.mxu0 %v7857
        %8063 = vmatpush1.bf16.msra.mxu0 %v7856
        %8064 = vmatprep.subr.bf16.mxu0 %v7947
        %8065 = vmatpush2.bf16.msra.mxu0 %v7946
        %8066 = vmatprep.subr.bf16.mxu0 %v7941
        %8067 = vmatpush2.bf16.msra.mxu0 %v7940
        %8068 = vmatprep.subr.bf16.mxu0 %v7935
        %8069 = vmatpush2.bf16.msra.mxu0 %v7934
        %8070 = vmatprep.subr.bf16.mxu0 %v7929
        %8071 = vmatpush2.bf16.msra.mxu0 %v7928
        %8072 = vmatprep.subr.bf16.mxu0 %v7923
        %8073 = vmatpush2.bf16.msra.mxu0 %v7922
        %8074 = vmatprep.subr.bf16.mxu0 %v7917
        %8075 = vmatpush2.bf16.msra.mxu0 %v7916
        %8076 = vmatprep.subr.bf16.mxu0 %v7911
        %8077 = vmatpush2.bf16.msra.mxu0 %v7910
        %8078 = vmatprep.subr.bf16.mxu0 %v7905
        %8079 = vmatpush2.bf16.msra.mxu0 %v7904
        %8080 = vmatprep.mubr.bf16.mxu0 %v7522
        %8081 = vmatmul.mubr.bf16.gmra.mxu0 %v7521
        %v8082 = vpop.f32.mrf.mxu0
        %v8083 = vadd.f32 %v7541, %v8082
        %v8084 = vpop.f32.mrf.mxu0
        %v8085 = vadd.f32 %v7545, %v8084
        %v8086 = vpop.f32.mrf.mxu0
        %v8087 = vadd.f32 %v7541, %v8086
        %v8088 = vpop.f32.mrf.mxu0
        %v8089 = vadd.f32 %v7545, %v8088
        %8090 = vmatprep.mubr.bf16.mxu0 %v7524
        %8091 = vmatmul.mubr.bf16.gmra.mxu0 %v7523
        %v8092 = vpop.f32.mrf.mxu0
        %v8093 = vadd.f32 %v7541, %v8092
        %v8094 = vpop.f32.mrf.mxu0
        %v8095 = vadd.f32 %v7545, %v8094
        %v8096 = vpop.f32.mrf.mxu0
        %v8097 = vadd.f32 %v7541, %v8096
        %v8098 = vpop.f32.mrf.mxu0
        %v8099 = vadd.f32 %v7545, %v8098
        %8100 = vmatprep.mubr.bf16.mxu0 %v7526
        %8101 = vmatmul.mubr.bf16.gmra.mxu0 %v7525
        %v8102 = vpop.f32.mrf.mxu0
        %v8103 = vadd.f32 %v7541, %v8102
        %v8104 = vpop.f32.mrf.mxu0
        %v8105 = vadd.f32 %v7545, %v8104
        %v8106 = vpop.f32.mrf.mxu0
        %v8107 = vadd.f32 %v7541, %v8106
        %v8108 = vpop.f32.mrf.mxu0
        %v8109 = vadd.f32 %v7545, %v8108
        %8110 = vmatprep.mubr.bf16.mxu0 %v7528
        %8111 = vmatmul.mubr.bf16.gmra.mxu0 %v7527
        %v8112 = vpop.f32.mrf.mxu0
        %v8113 = vadd.f32 %v7541, %v8112
        %v8114 = vpop.f32.mrf.mxu0
        %v8115 = vadd.f32 %v7545, %v8114
        %v8116 = vpop.f32.mrf.mxu0
        %v8117 = vadd.f32 %v7541, %v8116
        %v8118 = vpop.f32.mrf.mxu0
        %v8119 = vadd.f32 %v7545, %v8118
        %8120 = vmatprep.mubr.bf16.mxu0 %v7530
        %8121 = vmatmul.mubr.bf16.gmra.mxu0 %v7529
        %v8122 = vpop.f32.mrf.mxu0
        %v8123 = vadd.f32 %v7541, %v8122
        %v8124 = vpop.f32.mrf.mxu0
        %v8125 = vadd.f32 %v7545, %v8124
        %v8126 = vpop.f32.mrf.mxu0
        %v8127 = vadd.f32 %v7541, %v8126
        %v8128 = vpop.f32.mrf.mxu0
        %v8129 = vadd.f32 %v7545, %v8128
        %8130 = vmatprep.mubr.bf16.mxu0 %v7532
        %8131 = vmatmul.mubr.bf16.gmra.mxu0 %v7531
        %v8132 = vpop.f32.mrf.mxu0
        %v8133 = vadd.f32 %v7541, %v8132
        %v8134 = vpop.f32.mrf.mxu0
        %v8135 = vadd.f32 %v7545, %v8134
        %v8136 = vpop.f32.mrf.mxu0
        %v8137 = vadd.f32 %v7541, %v8136
        %v8138 = vpop.f32.mrf.mxu0
        %v8139 = vadd.f32 %v7545, %v8138
        %8140 = vmatprep.mubr.bf16.mxu0 %v7534
        %8141 = vmatmul.mubr.bf16.gmra.mxu0 %v7533
        %v8142 = vpop.f32.mrf.mxu0
        %v8143 = vadd.f32 %v7541, %v8142
        %v8144 = vpop.f32.mrf.mxu0
        %v8145 = vadd.f32 %v7545, %v8144
        %v8146 = vpop.f32.mrf.mxu0
        %v8147 = vadd.f32 %v7541, %v8146
        %v8148 = vpop.f32.mrf.mxu0
        %v8149 = vadd.f32 %v7545, %v8148
        %8150 = vmatprep.mubr.bf16.mxu0 %v7536
        %8151 = vmatmul.mubr.bf16.gmra.mxu0 %v7535
        %v8152 = vpop.f32.mrf.mxu0
        %v8153 = vadd.f32 %v7541, %v8152
        %v8154 = vpop.f32.mrf.mxu0
        %v8155 = vadd.f32 %v7545, %v8154
        %v8156 = vpop.f32.mrf.mxu0
        %v8157 = vadd.f32 %v7541, %v8156
        %v8158 = vpop.f32.mrf.mxu0
        %v8159 = vadd.f32 %v7545, %v8158
        %8160 = vdwg.mxu0
        %8161 = vmatprep.subr.bf16.mxu0 %v7901
        %8162 = vmatpush1.bf16.msra.mxu0 %v7900
        %8163 = vmatprep.subr.bf16.mxu0 %v7895
        %8164 = vmatpush1.bf16.msra.mxu0 %v7894
        %8165 = vmatprep.subr.bf16.mxu0 %v7889
        %8166 = vmatpush1.bf16.msra.mxu0 %v7888
        %8167 = vmatprep.subr.bf16.mxu0 %v7883
        %8168 = vmatpush1.bf16.msra.mxu0 %v7882
        %8169 = vmatprep.subr.bf16.mxu0 %v7877
        %8170 = vmatpush1.bf16.msra.mxu0 %v7876
        %8171 = vmatprep.subr.bf16.mxu0 %v7871
        %8172 = vmatpush1.bf16.msra.mxu0 %v7870
        %8173 = vmatprep.subr.bf16.mxu0 %v7865
        %8174 = vmatpush1.bf16.msra.mxu0 %v7864
        %8175 = vmatprep.subr.bf16.mxu0 %v7859
        %8176 = vmatpush1.bf16.msra.mxu0 %v7858
        %8177 = vmatprep.subr.bf16.mxu0 %v7949
        %8178 = vmatpush2.bf16.msra.mxu0 %v7948
        %8179 = vmatprep.subr.bf16.mxu0 %v7943
        %8180 = vmatpush2.bf16.msra.mxu0 %v7942
        %8181 = vmatprep.subr.bf16.mxu0 %v7937
        %8182 = vmatpush2.bf16.msra.mxu0 %v7936
        %8183 = vmatprep.subr.bf16.mxu0 %v7931
        %8184 = vmatpush2.bf16.msra.mxu0 %v7930
        %8185 = vmatprep.subr.bf16.mxu0 %v7925
        %8186 = vmatpush2.bf16.msra.mxu0 %v7924
        %8187 = vmatprep.subr.bf16.mxu0 %v7919
        %8188 = vmatpush2.bf16.msra.mxu0 %v7918
        %8189 = vmatprep.subr.bf16.mxu0 %v7913
        %8190 = vmatpush2.bf16.msra.mxu0 %v7912
        %8191 = vmatprep.subr.bf16.mxu0 %v7907
        %8192 = vmatpush2.bf16.msra.mxu0 %v7906
        %8193 = vmatprep.mubr.bf16.mxu0 %v7522
        %8194 = vmatmul.mubr.bf16.gmra.mxu0 %v7521
        %v8195 = vpop.f32.mrf.mxu0
        %v8196 = vadd.f32 %v7549, %v8195
        %v8197 = vpop.f32.mrf.mxu0
        %v8198 = vadd.f32 %v7553, %v8197
        %v8199 = vpop.f32.mrf.mxu0
        %v8200 = vadd.f32 %v7549, %v8199
        %v8201 = vpop.f32.mrf.mxu0
        %v8202 = vadd.f32 %v7553, %v8201
        %8203 = vmatprep.mubr.bf16.mxu0 %v7524
        %8204 = vmatmul.mubr.bf16.gmra.mxu0 %v7523
        %v8205 = vpop.f32.mrf.mxu0
        %v8206 = vadd.f32 %v7549, %v8205
        %v8207 = vpop.f32.mrf.mxu0
        %v8208 = vadd.f32 %v7553, %v8207
        %v8209 = vpop.f32.mrf.mxu0
        %v8210 = vadd.f32 %v7549, %v8209
        %v8211 = vpop.f32.mrf.mxu0
        %v8212 = vadd.f32 %v7553, %v8211
        %8213 = vmatprep.mubr.bf16.mxu0 %v7526
        %8214 = vmatmul.mubr.bf16.gmra.mxu0 %v7525
        %v8215 = vpop.f32.mrf.mxu0
        %v8216 = vadd.f32 %v7549, %v8215
        %v8217 = vpop.f32.mrf.mxu0
        %v8218 = vadd.f32 %v7553, %v8217
        %v8219 = vpop.f32.mrf.mxu0
        %v8220 = vadd.f32 %v7549, %v8219
        %v8221 = vpop.f32.mrf.mxu0
        %v8222 = vadd.f32 %v7553, %v8221
        %8223 = vmatprep.mubr.bf16.mxu0 %v7528
        %8224 = vmatmul.mubr.bf16.gmra.mxu0 %v7527
        %v8225 = vpop.f32.mrf.mxu0
        %v8226 = vadd.f32 %v7549, %v8225
        %v8227 = vpop.f32.mrf.mxu0
        %v8228 = vadd.f32 %v7553, %v8227
        %v8229 = vpop.f32.mrf.mxu0
        %v8230 = vadd.f32 %v7549, %v8229
        %v8231 = vpop.f32.mrf.mxu0
        %v8232 = vadd.f32 %v7553, %v8231
        %8233 = vmatprep.mubr.bf16.mxu0 %v7530
        %8234 = vmatmul.mubr.bf16.gmra.mxu0 %v7529
        %v8235 = vpop.f32.mrf.mxu0
        %v8236 = vadd.f32 %v7549, %v8235
        %v8237 = vpop.f32.mrf.mxu0
        %v8238 = vadd.f32 %v7553, %v8237
        %v8239 = vpop.f32.mrf.mxu0
        %v8240 = vadd.f32 %v7549, %v8239
        %v8241 = vpop.f32.mrf.mxu0
        %v8242 = vadd.f32 %v7553, %v8241
        %8243 = vmatprep.mubr.bf16.mxu0 %v7532
        %8244 = vmatmul.mubr.bf16.gmra.mxu0 %v7531
        %v8245 = vpop.f32.mrf.mxu0
        %v8246 = vadd.f32 %v7549, %v8245
        %v8247 = vpop.f32.mrf.mxu0
        %v8248 = vadd.f32 %v7553, %v8247
        %v8249 = vpop.f32.mrf.mxu0
        %v8250 = vadd.f32 %v7549, %v8249
        %v8251 = vpop.f32.mrf.mxu0
        %v8252 = vadd.f32 %v7553, %v8251
        %8253 = vmatprep.mubr.bf16.mxu0 %v7534
        %8254 = vmatmul.mubr.bf16.gmra.mxu0 %v7533
        %v8255 = vpop.f32.mrf.mxu0
        %v8256 = vadd.f32 %v7549, %v8255
        %v8257 = vpop.f32.mrf.mxu0
        %v8258 = vadd.f32 %v7553, %v8257
        %v8259 = vpop.f32.mrf.mxu0
        %v8260 = vadd.f32 %v7549, %v8259
        %v8261 = vpop.f32.mrf.mxu0
        %v8262 = vadd.f32 %v7553, %v8261
        %8263 = vmatprep.mubr.bf16.mxu0 %v7536
        %8264 = vmatmul.mubr.bf16.gmra.mxu0 %v7535
        %v8265 = vpop.f32.mrf.mxu0
        %v8266 = vadd.f32 %v7549, %v8265
        %v8267 = vpop.f32.mrf.mxu0
        %v8268 = vadd.f32 %v7553, %v8267
        %v8269 = vpop.f32.mrf.mxu0
        %v8270 = vadd.f32 %v7549, %v8269
        %v8271 = vpop.f32.mrf.mxu0
        %v8272 = vadd.f32 %v7553, %v8271
        %8273 = vdwg.mxu0
        %8274 = vmatprep.subr.bf16.mxu0 %v7903
        %8275 = vmatpush1.bf16.msra.mxu0 %v7902
        %8276 = vmatprep.subr.bf16.mxu0 %v7897
        %8277 = vmatpush1.bf16.msra.mxu0 %v7896
        %8278 = vmatprep.subr.bf16.mxu0 %v7891
        %8279 = vmatpush1.bf16.msra.mxu0 %v7890
        %8280 = vmatprep.subr.bf16.mxu0 %v7885
        %8281 = vmatpush1.bf16.msra.mxu0 %v7884
        %8282 = vmatprep.subr.bf16.mxu0 %v7879
        %8283 = vmatpush1.bf16.msra.mxu0 %v7878
        %8284 = vmatprep.subr.bf16.mxu0 %v7873
        %8285 = vmatpush1.bf16.msra.mxu0 %v7872
        %8286 = vmatprep.subr.bf16.mxu0 %v7867
        %8287 = vmatpush1.bf16.msra.mxu0 %v7866
        %8288 = vmatprep.subr.bf16.mxu0 %v7861
        %8289 = vmatpush1.bf16.msra.mxu0 %v7860
        %8290 = vmatprep.subr.bf16.mxu0 %v7951
        %8291 = vmatpush2.bf16.msra.mxu0 %v7950
        %8292 = vmatprep.subr.bf16.mxu0 %v7945
        %8293 = vmatpush2.bf16.msra.mxu0 %v7944
        %8294 = vmatprep.subr.bf16.mxu0 %v7939
        %8295 = vmatpush2.bf16.msra.mxu0 %v7938
        %8296 = vmatprep.subr.bf16.mxu0 %v7933
        %8297 = vmatpush2.bf16.msra.mxu0 %v7932
        %8298 = vmatprep.subr.bf16.mxu0 %v7927
        %8299 = vmatpush2.bf16.msra.mxu0 %v7926
        %8300 = vmatprep.subr.bf16.mxu0 %v7921
        %8301 = vmatpush2.bf16.msra.mxu0 %v7920
        %8302 = vmatprep.subr.bf16.mxu0 %v7915
        %8303 = vmatpush2.bf16.msra.mxu0 %v7914
        %8304 = vmatprep.subr.bf16.mxu0 %v7909
        %8305 = vmatpush2.bf16.msra.mxu0 %v7908
        %8306 = vmatprep.mubr.bf16.mxu0 %v7522
        %8307 = vmatmul.mubr.bf16.gmra.mxu0 %v7521
        %v8308 = vpop.f32.mrf.mxu0
        %v8309 = vadd.f32 %v7557, %v8308
        %v8310 = vpop.f32.mrf.mxu0
        %v8311 = vadd.f32 %v7561, %v8310
        %v8312 = vpop.f32.mrf.mxu0
        %v8313 = vadd.f32 %v7557, %v8312
        %v8314 = vpop.f32.mrf.mxu0
        %v8315 = vadd.f32 %v7561, %v8314
        %8316 = vmatprep.mubr.bf16.mxu0 %v7524
        %8317 = vmatmul.mubr.bf16.gmra.mxu0 %v7523
        %v8318 = vpop.f32.mrf.mxu0
        %v8319 = vadd.f32 %v7557, %v8318
        %v8320 = vpop.f32.mrf.mxu0
        %v8321 = vadd.f32 %v7561, %v8320
        %v8322 = vpop.f32.mrf.mxu0
        %v8323 = vadd.f32 %v7557, %v8322
        %v8324 = vpop.f32.mrf.mxu0
        %v8325 = vadd.f32 %v7561, %v8324
        %8326 = vmatprep.mubr.bf16.mxu0 %v7526
        %8327 = vmatmul.mubr.bf16.gmra.mxu0 %v7525
        %v8328 = vpop.f32.mrf.mxu0
        %v8329 = vadd.f32 %v7557, %v8328
        %v8330 = vpop.f32.mrf.mxu0
        %v8331 = vadd.f32 %v7561, %v8330
        %v8332 = vpop.f32.mrf.mxu0
        %v8333 = vadd.f32 %v7557, %v8332
        %v8334 = vpop.f32.mrf.mxu0
        %v8335 = vadd.f32 %v7561, %v8334
        %8336 = vmatprep.mubr.bf16.mxu0 %v7528
        %8337 = vmatmul.mubr.bf16.gmra.mxu0 %v7527
        %v8338 = vpop.f32.mrf.mxu0
        %v8339 = vadd.f32 %v7557, %v8338
        %v8340 = vpop.f32.mrf.mxu0
        %v8341 = vadd.f32 %v7561, %v8340
        %v8342 = vpop.f32.mrf.mxu0
        %v8343 = vadd.f32 %v7557, %v8342
        %v8344 = vpop.f32.mrf.mxu0
        %v8345 = vadd.f32 %v7561, %v8344
        %8346 = vmatprep.mubr.bf16.mxu0 %v7530
        %8347 = vmatmul.mubr.bf16.gmra.mxu0 %v7529
        %v8348 = vpop.f32.mrf.mxu0
        %v8349 = vadd.f32 %v7557, %v8348
        %v8350 = vpop.f32.mrf.mxu0
        %v8351 = vadd.f32 %v7561, %v8350
        %v8352 = vpop.f32.mrf.mxu0
        %v8353 = vadd.f32 %v7557, %v8352
        %v8354 = vpop.f32.mrf.mxu0
        %v8355 = vadd.f32 %v7561, %v8354
        %8356 = vmatprep.mubr.bf16.mxu0 %v7532
        %8357 = vmatmul.mubr.bf16.gmra.mxu0 %v7531
        %v8358 = vpop.f32.mrf.mxu0
        %v8359 = vadd.f32 %v7557, %v8358
        %v8360 = vpop.f32.mrf.mxu0
        %v8361 = vadd.f32 %v7561, %v8360
        %v8362 = vpop.f32.mrf.mxu0
        %v8363 = vadd.f32 %v7557, %v8362
        %v8364 = vpop.f32.mrf.mxu0
        %v8365 = vadd.f32 %v7561, %v8364
        %8366 = vmatprep.mubr.bf16.mxu0 %v7534
        %8367 = vmatmul.mubr.bf16.gmra.mxu0 %v7533
        %v8368 = vpop.f32.mrf.mxu0
        %v8369 = vadd.f32 %v7557, %v8368
        %v8370 = vpop.f32.mrf.mxu0
        %v8371 = vadd.f32 %v7561, %v8370
        %v8372 = vpop.f32.mrf.mxu0
        %v8373 = vadd.f32 %v7557, %v8372
        %v8374 = vpop.f32.mrf.mxu0
        %v8375 = vadd.f32 %v7561, %v8374
        %8376 = vmatprep.mubr.bf16.mxu0 %v7536
        %8377 = vmatmul.mubr.bf16.gmra.mxu0 %v7535
        %v8378 = vpop.f32.mrf.mxu0
        %v8379 = vadd.f32 %v7557, %v8378
        %v8380 = vpop.f32.mrf.mxu0
        %v8381 = vadd.f32 %v7561, %v8380
        %v8382 = vpop.f32.mrf.mxu0
        %v8383 = vadd.f32 %v7557, %v8382
        %v8384 = vpop.f32.mrf.mxu0
        %v8385 = vadd.f32 %v7561, %v8384
        %8386 = vdwg.mxu0
        %v8387 = vxor.u32 %v8083, 2147483648
        %v8388 = vxor.u32 %v8085, 2147483648
        %v8389 = vxor.u32 %v8087, 2147483648
        %v8390 = vxor.u32 %v8089, 2147483648
        %v8391 = vxor.u32 %v8093, 2147483648
        %v8392 = vxor.u32 %v8095, 2147483648
        %v8393 = vxor.u32 %v8097, 2147483648
        %v8394 = vxor.u32 %v8099, 2147483648
        %v8395 = vxor.u32 %v8103, 2147483648
        %v8396 = vxor.u32 %v8105, 2147483648
        %v8397 = vxor.u32 %v8107, 2147483648
        %v8398 = vxor.u32 %v8109, 2147483648
        %v8399 = vxor.u32 %v8113, 2147483648
        %v8400 = vxor.u32 %v8115, 2147483648
        %v8401 = vxor.u32 %v8117, 2147483648
        %v8402 = vxor.u32 %v8119, 2147483648
        %v8403 = vxor.u32 %v8123, 2147483648
        %v8404 = vxor.u32 %v8125, 2147483648
        %v8405 = vxor.u32 %v8127, 2147483648
        %v8406 = vxor.u32 %v8129, 2147483648
        %v8407 = vxor.u32 %v8133, 2147483648
        %v8408 = vxor.u32 %v8135, 2147483648
        %v8409 = vxor.u32 %v8137, 2147483648
        %v8410 = vxor.u32 %v8139, 2147483648
        %v8411 = vxor.u32 %v8143, 2147483648
        %v8412 = vxor.u32 %v8145, 2147483648
        %v8413 = vxor.u32 %v8147, 2147483648
        %v8414 = vxor.u32 %v8149, 2147483648
        %v8415 = vxor.u32 %v8153, 2147483648
        %v8416 = vxor.u32 %v8155, 2147483648
        %v8417 = vxor.u32 %v8157, 2147483648
        %v8418 = vxor.u32 %v8159, 2147483648
        %v8419 = vmul.f32 %v8387, 1.442695
        %v8420 = vpow.pop %v8419
        %v8421 = vmul.f32 %v8388, 1.442695
        %v8422 = vpow.pop %v8421
        %v8423 = vmul.f32 %v8389, 1.442695
        %v8424 = vpow.pop %v8423
        %v8425 = vmul.f32 %v8390, 1.442695
        %v8426 = vpow.pop %v8425
        %v8427 = vmul.f32 %v8391, 1.442695
        %v8428 = vpow.pop %v8427
        %v8429 = vmul.f32 %v8392, 1.442695
        %v8430 = vpow.pop %v8429
        %v8431 = vmul.f32 %v8393, 1.442695
        %v8432 = vpow.pop %v8431
        %v8433 = vmul.f32 %v8394, 1.442695
        %v8434 = vpow.pop %v8433
        %v8435 = vmul.f32 %v8395, 1.442695
        %v8436 = vpow.pop %v8435
        %v8437 = vmul.f32 %v8396, 1.442695
        %v8438 = vpow.pop %v8437
        %v8439 = vmul.f32 %v8397, 1.442695
        %v8440 = vpow.pop %v8439
        %v8441 = vmul.f32 %v8398, 1.442695
        %v8442 = vpow.pop %v8441
        %v8443 = vmul.f32 %v8399, 1.442695
        %v8444 = vpow.pop %v8443
        %v8445 = vmul.f32 %v8400, 1.442695
        %v8446 = vpow.pop %v8445
        %v8447 = vmul.f32 %v8401, 1.442695
        %v8448 = vpow.pop %v8447
        %v8449 = vmul.f32 %v8402, 1.442695
        %v8450 = vpow.pop %v8449
        %v8451 = vmul.f32 %v8403, 1.442695
        %v8452 = vpow.pop %v8451
        %v8453 = vmul.f32 %v8404, 1.442695
        %v8454 = vpow.pop %v8453
        %v8455 = vmul.f32 %v8405, 1.442695
        %v8456 = vpow.pop %v8455
        %v8457 = vmul.f32 %v8406, 1.442695
        %v8458 = vpow.pop %v8457
        %v8459 = vmul.f32 %v8407, 1.442695
        %v8460 = vpow.pop %v8459
        %v8461 = vmul.f32 %v8408, 1.442695
        %v8462 = vpow.pop %v8461
        %v8463 = vmul.f32 %v8409, 1.442695
        %v8464 = vpow.pop %v8463
        %v8465 = vmul.f32 %v8410, 1.442695
        %v8466 = vpow.pop %v8465
        %v8467 = vmul.f32 %v8411, 1.442695
        %v8468 = vpow.pop %v8467
        %v8469 = vmul.f32 %v8412, 1.442695
        %v8470 = vpow.pop %v8469
        %v8471 = vmul.f32 %v8413, 1.442695
        %v8472 = vpow.pop %v8471
        %v8473 = vmul.f32 %v8414, 1.442695
        %v8474 = vpow.pop %v8473
        %v8475 = vmul.f32 %v8415, 1.442695
        %v8476 = vpow.pop %v8475
        %v8477 = vmul.f32 %v8416, 1.442695
        %v8478 = vpow.pop %v8477
        %v8479 = vmul.f32 %v8417, 1.442695
        %v8480 = vpow.pop %v8479
        %v8481 = vmul.f32 %v8418, 1.442695
        %v8482 = vpow.pop %v8481
        %v8483 = vadd.f32 %v8420, 1.0
        %v8484 = vadd.f32 %v8422, 1.0
        %v8485 = vadd.f32 %v8424, 1.0
        %v8486 = vadd.f32 %v8426, 1.0
        %v8487 = vadd.f32 %v8428, 1.0
        %v8488 = vadd.f32 %v8430, 1.0
        %v8489 = vadd.f32 %v8432, 1.0
        %v8490 = vadd.f32 %v8434, 1.0
        %v8491 = vadd.f32 %v8436, 1.0
        %v8492 = vadd.f32 %v8438, 1.0
        %v8493 = vadd.f32 %v8440, 1.0
        %v8494 = vadd.f32 %v8442, 1.0
        %v8495 = vadd.f32 %v8444, 1.0
        %v8496 = vadd.f32 %v8446, 1.0
        %v8497 = vadd.f32 %v8448, 1.0
        %v8498 = vadd.f32 %v8450, 1.0
        %v8499 = vadd.f32 %v8452, 1.0
        %v8500 = vadd.f32 %v8454, 1.0
        %v8501 = vadd.f32 %v8456, 1.0
        %v8502 = vadd.f32 %v8458, 1.0
        %v8503 = vadd.f32 %v8460, 1.0
        %v8504 = vadd.f32 %v8462, 1.0
        %v8505 = vadd.f32 %v8464, 1.0
        %v8506 = vadd.f32 %v8466, 1.0
        %v8507 = vadd.f32 %v8468, 1.0
        %v8508 = vadd.f32 %v8470, 1.0
        %v8509 = vadd.f32 %v8472, 1.0
        %v8510 = vadd.f32 %v8474, 1.0
        %v8511 = vadd.f32 %v8476, 1.0
        %v8512 = vadd.f32 %v8478, 1.0
        %v8513 = vadd.f32 %v8480, 1.0
        %v8514 = vadd.f32 %v8482, 1.0
        %v8515 = vrcp.pop %v8483
        %v8516 = vmul.f32 1.0, %v8515
        %v8517 = vrcp.pop %v8484
        %v8518 = vmul.f32 1.0, %v8517
        %v8519 = vrcp.pop %v8485
        %v8520 = vmul.f32 1.0, %v8519
        %v8521 = vrcp.pop %v8486
        %v8522 = vmul.f32 1.0, %v8521
        %v8523 = vrcp.pop %v8487
        %v8524 = vmul.f32 1.0, %v8523
        %v8525 = vrcp.pop %v8488
        %v8526 = vmul.f32 1.0, %v8525
        %v8527 = vrcp.pop %v8489
        %v8528 = vmul.f32 1.0, %v8527
        %v8529 = vrcp.pop %v8490
        %v8530 = vmul.f32 1.0, %v8529
        %v8531 = vrcp.pop %v8491
        %v8532 = vmul.f32 1.0, %v8531
        %v8533 = vrcp.pop %v8492
        %v8534 = vmul.f32 1.0, %v8533
        %v8535 = vrcp.pop %v8493
        %v8536 = vmul.f32 1.0, %v8535
        %v8537 = vrcp.pop %v8494
        %v8538 = vmul.f32 1.0, %v8537
        %v8539 = vrcp.pop %v8495
        %v8540 = vmul.f32 1.0, %v8539
        %v8541 = vrcp.pop %v8496
        %v8542 = vmul.f32 1.0, %v8541
        %v8543 = vrcp.pop %v8497
        %v8544 = vmul.f32 1.0, %v8543
        %v8545 = vrcp.pop %v8498
        %v8546 = vmul.f32 1.0, %v8545
        %v8547 = vrcp.pop %v8499
        %v8548 = vmul.f32 1.0, %v8547
        %v8549 = vrcp.pop %v8500
        %v8550 = vmul.f32 1.0, %v8549
        %v8551 = vrcp.pop %v8501
        %v8552 = vmul.f32 1.0, %v8551
        %v8553 = vrcp.pop %v8502
        %v8554 = vmul.f32 1.0, %v8553
        %v8555 = vrcp.pop %v8503
        %v8556 = vmul.f32 1.0, %v8555
        %v8557 = vrcp.pop %v8504
        %v8558 = vmul.f32 1.0, %v8557
        %v8559 = vrcp.pop %v8505
        %v8560 = vmul.f32 1.0, %v8559
        %v8561 = vrcp.pop %v8506
        %v8562 = vmul.f32 1.0, %v8561
        %v8563 = vrcp.pop %v8507
        %v8564 = vmul.f32 1.0, %v8563
        %v8565 = vrcp.pop %v8508
        %v8566 = vmul.f32 1.0, %v8565
        %v8567 = vrcp.pop %v8509
        %v8568 = vmul.f32 1.0, %v8567
        %v8569 = vrcp.pop %v8510
        %v8570 = vmul.f32 1.0, %v8569
        %v8571 = vrcp.pop %v8511
        %v8572 = vmul.f32 1.0, %v8571
        %v8573 = vrcp.pop %v8512
        %v8574 = vmul.f32 1.0, %v8573
        %v8575 = vrcp.pop %v8513
        %v8576 = vmul.f32 1.0, %v8575
        %v8577 = vrcp.pop %v8514
        %v8578 = vmul.f32 1.0, %v8577
        %v8579 = vtanh.pop %v8196
        %v8580 = vtanh.pop %v8198
        %v8581 = vtanh.pop %v8200
        %v8582 = vtanh.pop %v8202
        %v8583 = vtanh.pop %v8206
        %v8584 = vtanh.pop %v8208
        %v8585 = vtanh.pop %v8210
        %v8586 = vtanh.pop %v8212
        %v8587 = vtanh.pop %v8216
        %v8588 = vtanh.pop %v8218
        %v8589 = vtanh.pop %v8220
        %v8590 = vtanh.pop %v8222
        %v8591 = vtanh.pop %v8226
        %v8592 = vtanh.pop %v8228
        %v8593 = vtanh.pop %v8230
        %v8594 = vtanh.pop %v8232
        %v8595 = vtanh.pop %v8236
        %v8596 = vtanh.pop %v8238
        %v8597 = vtanh.pop %v8240
        %v8598 = vtanh.pop %v8242
        %v8599 = vtanh.pop %v8246
        %v8600 = vtanh.pop %v8248
        %v8601 = vtanh.pop %v8250
        %v8602 = vtanh.pop %v8252
        %v8603 = vtanh.pop %v8256
        %v8604 = vtanh.pop %v8258
        %v8605 = vtanh.pop %v8260
        %v8606 = vtanh.pop %v8262
        %v8607 = vtanh.pop %v8266
        %v8608 = vtanh.pop %v8268
        %v8609 = vtanh.pop %v8270
        %v8610 = vtanh.pop %v8272
        %v8611 = vxor.u32 %v8309, 2147483648
        %v8612 = vxor.u32 %v8311, 2147483648
        %v8613 = vxor.u32 %v8313, 2147483648
        %v8614 = vxor.u32 %v8315, 2147483648
        %v8615 = vxor.u32 %v8319, 2147483648
        %v8616 = vxor.u32 %v8321, 2147483648
        %v8617 = vxor.u32 %v8323, 2147483648
        %v8618 = vxor.u32 %v8325, 2147483648
        %v8619 = vxor.u32 %v8329, 2147483648
        %v8620 = vxor.u32 %v8331, 2147483648
        %v8621 = vxor.u32 %v8333, 2147483648
        %v8622 = vxor.u32 %v8335, 2147483648
        %v8623 = vxor.u32 %v8339, 2147483648
        %v8624 = vxor.u32 %v8341, 2147483648
        %v8625 = vxor.u32 %v8343, 2147483648
        %v8626 = vxor.u32 %v8345, 2147483648
        %v8627 = vxor.u32 %v8349, 2147483648
        %v8628 = vxor.u32 %v8351, 2147483648
        %v8629 = vxor.u32 %v8353, 2147483648
        %v8630 = vxor.u32 %v8355, 2147483648
        %v8631 = vxor.u32 %v8359, 2147483648
        %v8632 = vxor.u32 %v8361, 2147483648
        %v8633 = vxor.u32 %v8363, 2147483648
        %v8634 = vxor.u32 %v8365, 2147483648
        %v8635 = vxor.u32 %v8369, 2147483648
        %v8636 = vxor.u32 %v8371, 2147483648
        %v8637 = vxor.u32 %v8373, 2147483648
        %v8638 = vxor.u32 %v8375, 2147483648
        %v8639 = vxor.u32 %v8379, 2147483648
        %v8640 = vxor.u32 %v8381, 2147483648
        %v8641 = vxor.u32 %v8383, 2147483648
        %v8642 = vxor.u32 %v8385, 2147483648
        %v8643 = vmul.f32 %v8611, 1.442695
        %v8644 = vpow.pop %v8643
        %v8645 = vmul.f32 %v8612, 1.442695
        %v8646 = vpow.pop %v8645
        %v8647 = vmul.f32 %v8613, 1.442695
        %v8648 = vpow.pop %v8647
        %v8649 = vmul.f32 %v8614, 1.442695
        %v8650 = vpow.pop %v8649
        %v8651 = vmul.f32 %v8615, 1.442695
        %v8652 = vpow.pop %v8651
        %v8653 = vmul.f32 %v8616, 1.442695
        %v8654 = vpow.pop %v8653
        %v8655 = vmul.f32 %v8617, 1.442695
        %v8656 = vpow.pop %v8655
        %v8657 = vmul.f32 %v8618, 1.442695
        %v8658 = vpow.pop %v8657
        %v8659 = vmul.f32 %v8619, 1.442695
        %v8660 = vpow.pop %v8659
        %v8661 = vmul.f32 %v8620, 1.442695
        %v8662 = vpow.pop %v8661
        %v8663 = vmul.f32 %v8621, 1.442695
        %v8664 = vpow.pop %v8663
        %v8665 = vmul.f32 %v8622, 1.442695
        %v8666 = vpow.pop %v8665
        %v8667 = vmul.f32 %v8623, 1.442695
        %v8668 = vpow.pop %v8667
        %v8669 = vmul.f32 %v8624, 1.442695
        %v8670 = vpow.pop %v8669
        %v8671 = vmul.f32 %v8625, 1.442695
        %v8672 = vpow.pop %v8671
        %v8673 = vmul.f32 %v8626, 1.442695
        %v8674 = vpow.pop %v8673
        %v8675 = vmul.f32 %v8627, 1.442695
        %v8676 = vpow.pop %v8675
        %v8677 = vmul.f32 %v8628, 1.442695
        %v8678 = vpow.pop %v8677
        %v8679 = vmul.f32 %v8629, 1.442695
        %v8680 = vpow.pop %v8679
        %v8681 = vmul.f32 %v8630, 1.442695
        %v8682 = vpow.pop %v8681
        %v8683 = vmul.f32 %v8631, 1.442695
        %v8684 = vpow.pop %v8683
        %v8685 = vmul.f32 %v8632, 1.442695
        %v8686 = vpow.pop %v8685
        %v8687 = vmul.f32 %v8633, 1.442695
        %v8688 = vpow.pop %v8687
        %v8689 = vmul.f32 %v8634, 1.442695
        %v8690 = vpow.pop %v8689
        %v8691 = vmul.f32 %v8635, 1.442695
        %v8692 = vpow.pop %v8691
        %v8693 = vmul.f32 %v8636, 1.442695
        %v8694 = vpow.pop %v8693
        %v8695 = vmul.f32 %v8637, 1.442695
        %v8696 = vpow.pop %v8695
        %v8697 = vmul.f32 %v8638, 1.442695
        %v8698 = vpow.pop %v8697
        %v8699 = vmul.f32 %v8639, 1.442695
        %v8700 = vpow.pop %v8699
        %v8701 = vmul.f32 %v8640, 1.442695
        %v8702 = vpow.pop %v8701
        %v8703 = vmul.f32 %v8641, 1.442695
        %v8704 = vpow.pop %v8703
        %v8705 = vmul.f32 %v8642, 1.442695
        %v8706 = vpow.pop %v8705
        %v8707 = vadd.f32 %v8644, 1.0
        %v8708 = vadd.f32 %v8646, 1.0
        %v8709 = vadd.f32 %v8648, 1.0
        %v8710 = vadd.f32 %v8650, 1.0
        %v8711 = vadd.f32 %v8652, 1.0
        %v8712 = vadd.f32 %v8654, 1.0
        %v8713 = vadd.f32 %v8656, 1.0
        %v8714 = vadd.f32 %v8658, 1.0
        %v8715 = vadd.f32 %v8660, 1.0
        %v8716 = vadd.f32 %v8662, 1.0
        %v8717 = vadd.f32 %v8664, 1.0
        %v8718 = vadd.f32 %v8666, 1.0
        %v8719 = vadd.f32 %v8668, 1.0
        %v8720 = vadd.f32 %v8670, 1.0
        %v8721 = vadd.f32 %v8672, 1.0
        %v8722 = vadd.f32 %v8674, 1.0
        %v8723 = vadd.f32 %v8676, 1.0
        %v8724 = vadd.f32 %v8678, 1.0
        %v8725 = vadd.f32 %v8680, 1.0
        %v8726 = vadd.f32 %v8682, 1.0
        %v8727 = vadd.f32 %v8684, 1.0
        %v8728 = vadd.f32 %v8686, 1.0
        %v8729 = vadd.f32 %v8688, 1.0
        %v8730 = vadd.f32 %v8690, 1.0
        %v8731 = vadd.f32 %v8692, 1.0
        %v8732 = vadd.f32 %v8694, 1.0
        %v8733 = vadd.f32 %v8696, 1.0
        %v8734 = vadd.f32 %v8698, 1.0
        %v8735 = vadd.f32 %v8700, 1.0
        %v8736 = vadd.f32 %v8702, 1.0
        %v8737 = vadd.f32 %v8704, 1.0
        %v8738 = vadd.f32 %v8706, 1.0
        %v8739 = vrcp.pop %v8707
        %v8740 = vmul.f32 1.0, %v8739
        %v8741 = vrcp.pop %v8708
        %v8742 = vmul.f32 1.0, %v8741
        %v8743 = vrcp.pop %v8709
        %v8744 = vmul.f32 1.0, %v8743
        %v8745 = vrcp.pop %v8710
        %v8746 = vmul.f32 1.0, %v8745
        %v8747 = vrcp.pop %v8711
        %v8748 = vmul.f32 1.0, %v8747
        %v8749 = vrcp.pop %v8712
        %v8750 = vmul.f32 1.0, %v8749
        %v8751 = vrcp.pop %v8713
        %v8752 = vmul.f32 1.0, %v8751
        %v8753 = vrcp.pop %v8714
        %v8754 = vmul.f32 1.0, %v8753
        %v8755 = vrcp.pop %v8715
        %v8756 = vmul.f32 1.0, %v8755
        %v8757 = vrcp.pop %v8716
        %v8758 = vmul.f32 1.0, %v8757
        %v8759 = vrcp.pop %v8717
        %v8760 = vmul.f32 1.0, %v8759
        %v8761 = vrcp.pop %v8718
        %v8762 = vmul.f32 1.0, %v8761
        %v8763 = vrcp.pop %v8719
        %v8764 = vmul.f32 1.0, %v8763
        %v8765 = vrcp.pop %v8720
        %v8766 = vmul.f32 1.0, %v8765
        %v8767 = vrcp.pop %v8721
        %v8768 = vmul.f32 1.0, %v8767
        %v8769 = vrcp.pop %v8722
        %v8770 = vmul.f32 1.0, %v8769
        %v8771 = vrcp.pop %v8723
        %v8772 = vmul.f32 1.0, %v8771
        %v8773 = vrcp.pop %v8724
        %v8774 = vmul.f32 1.0, %v8773
        %v8775 = vrcp.pop %v8725
        %v8776 = vmul.f32 1.0, %v8775
        %v8777 = vrcp.pop %v8726
        %v8778 = vmul.f32 1.0, %v8777
        %v8779 = vrcp.pop %v8727
        %v8780 = vmul.f32 1.0, %v8779
        %v8781 = vrcp.pop %v8728
        %v8782 = vmul.f32 1.0, %v8781
        %v8783 = vrcp.pop %v8729
        %v8784 = vmul.f32 1.0, %v8783
        %v8785 = vrcp.pop %v8730
        %v8786 = vmul.f32 1.0, %v8785
        %v8787 = vrcp.pop %v8731
        %v8788 = vmul.f32 1.0, %v8787
        %v8789 = vrcp.pop %v8732
        %v8790 = vmul.f32 1.0, %v8789
        %v8791 = vrcp.pop %v8733
        %v8792 = vmul.f32 1.0, %v8791
        %v8793 = vrcp.pop %v8734
        %v8794 = vmul.f32 1.0, %v8793
        %v8795 = vrcp.pop %v8735
        %v8796 = vmul.f32 1.0, %v8795
        %v8797 = vrcp.pop %v8736
        %v8798 = vmul.f32 1.0, %v8797
        %v8799 = vrcp.pop %v8737
        %v8800 = vmul.f32 1.0, %v8799
        %v8801 = vrcp.pop %v8738
        %v8802 = vmul.f32 1.0, %v8801
        %v8803 = vmul.f32 %v8516, %v8579
        %v8804 = vmul.f32 %v8518, %v8580
        %v8805 = vmul.f32 %v8520, %v8581
        %v8806 = vmul.f32 %v8522, %v8582
        %v8807 = vmul.f32 %v8524, %v8583
        %v8808 = vmul.f32 %v8526, %v8584
        %v8809 = vmul.f32 %v8528, %v8585
        %v8810 = vmul.f32 %v8530, %v8586
        %v8811 = vmul.f32 %v8532, %v8587
        %v8812 = vmul.f32 %v8534, %v8588
        %v8813 = vmul.f32 %v8536, %v8589
        %v8814 = vmul.f32 %v8538, %v8590
        %v8815 = vmul.f32 %v8540, %v8591
        %v8816 = vmul.f32 %v8542, %v8592
        %v8817 = vmul.f32 %v8544, %v8593
        %v8818 = vmul.f32 %v8546, %v8594
        %v8819 = vmul.f32 %v8548, %v8595
        %v8820 = vmul.f32 %v8550, %v8596
        %v8821 = vmul.f32 %v8552, %v8597
        %v8822 = vmul.f32 %v8554, %v8598
        %v8823 = vmul.f32 %v8556, %v8599
        %v8824 = vmul.f32 %v8558, %v8600
        %v8825 = vmul.f32 %v8560, %v8601
        %v8826 = vmul.f32 %v8562, %v8602
        %v8827 = vmul.f32 %v8564, %v8603
        %v8828 = vmul.f32 %v8566, %v8604
        %v8829 = vmul.f32 %v8568, %v8605
        %v8830 = vmul.f32 %v8570, %v8606
        %v8831 = vmul.f32 %v8572, %v8607
        %v8832 = vmul.f32 %v8574, %v8608
        %v8833 = vmul.f32 %v8576, %v8609
        %v8834 = vmul.f32 %v8578, %v8610
        %v8835 = vtanh.pop %v8803
        %v8836 = vtanh.pop %v8804
        %v8837 = vtanh.pop %v8805
        %v8838 = vtanh.pop %v8806
        %v8839 = vtanh.pop %v8807
        %v8840 = vtanh.pop %v8808
        %v8841 = vtanh.pop %v8809
        %v8842 = vtanh.pop %v8810
        %v8843 = vtanh.pop %v8811
        %v8844 = vtanh.pop %v8812
        %v8845 = vtanh.pop %v8813
        %v8846 = vtanh.pop %v8814
        %v8847 = vtanh.pop %v8815
        %v8848 = vtanh.pop %v8816
        %v8849 = vtanh.pop %v8817
        %v8850 = vtanh.pop %v8818
        %v8851 = vtanh.pop %v8819
        %v8852 = vtanh.pop %v8820
        %v8853 = vtanh.pop %v8821
        %v8854 = vtanh.pop %v8822
        %v8855 = vtanh.pop %v8823
        %v8856 = vtanh.pop %v8824
        %v8857 = vtanh.pop %v8825
        %v8858 = vtanh.pop %v8826
        %v8859 = vtanh.pop %v8827
        %v8860 = vtanh.pop %v8828
        %v8861 = vtanh.pop %v8829
        %v8862 = vtanh.pop %v8830
        %v8863 = vtanh.pop %v8831
        %v8864 = vtanh.pop %v8832
        %v8865 = vtanh.pop %v8833
        %v8866 = vtanh.pop %v8834
        %v8867 = vmul.f32 %v8740, %v8835
        %v8868 = vmul.f32 %v8742, %v8836
        %v8869 = vmul.f32 %v8744, %v8837
        %v8870 = vmul.f32 %v8746, %v8838
        %v8871 = vmul.f32 %v8748, %v8839
        %v8872 = vmul.f32 %v8750, %v8840
        %v8873 = vmul.f32 %v8752, %v8841
        %v8874 = vmul.f32 %v8754, %v8842
        %v8875 = vmul.f32 %v8756, %v8843
        %v8876 = vmul.f32 %v8758, %v8844
        %v8877 = vmul.f32 %v8760, %v8845
        %v8878 = vmul.f32 %v8762, %v8846
        %v8879 = vmul.f32 %v8764, %v8847
        %v8880 = vmul.f32 %v8766, %v8848
        %v8881 = vmul.f32 %v8768, %v8849
        %v8882 = vmul.f32 %v8770, %v8850
        %v8883 = vmul.f32 %v8772, %v8851
        %v8884 = vmul.f32 %v8774, %v8852
        %v8885 = vmul.f32 %v8776, %v8853
        %v8886 = vmul.f32 %v8778, %v8854
        %v8887 = vmul.f32 %v8780, %v8855
        %v8888 = vmul.f32 %v8782, %v8856
        %v8889 = vmul.f32 %v8784, %v8857
        %v8890 = vmul.f32 %v8786, %v8858
        %v8891 = vmul.f32 %v8788, %v8859
        %v8892 = vmul.f32 %v8790, %v8860
        %v8893 = vmul.f32 %v8792, %v8861
        %v8894 = vmul.f32 %v8794, %v8862
        %v8895 = vmul.f32 %v8796, %v8863
        %v8896 = vmul.f32 %v8798, %v8864
        %v8897 = vmul.f32 %v8800, %v8865
        %v8898 = vmul.f32 %v8802, %v8866
        %v8899 = vld [vmem:[#allocation8 + $0x600] sm:$0xff]
        %v8900 = vld [vmem:[#allocation8 + $0x608] sm:$0xff]
        %v8901 = vld [vmem:[#allocation8 + $0x610] sm:$0xff]
        %v8902 = vld [vmem:[#allocation8 + $0x618] sm:$0xff]
        %v8903 = vld [vmem:[#allocation8 + $0x620] sm:$0xff]
        %v8904 = vld [vmem:[#allocation8 + $0x628] sm:$0xff]
        %v8905 = vld [vmem:[#allocation8 + $0x630] sm:$0xff]
        %v8906 = vld [vmem:[#allocation8 + $0x638] sm:$0xff]
        %v8907 = vld [vmem:[#allocation8 + $0x640] sm:$0xff]
        %v8908 = vld [vmem:[#allocation8 + $0x648] sm:$0xff]
        %v8909 = vld [vmem:[#allocation8 + $0x650] sm:$0xff]
        %v8910 = vld [vmem:[#allocation8 + $0x658] sm:$0xff]
        %v8911 = vld [vmem:[#allocation8 + $0x660] sm:$0xff]
        %v8912 = vld [vmem:[#allocation8 + $0x668] sm:$0xff]
        %v8913 = vld [vmem:[#allocation8 + $0x670] sm:$0xff]
        %v8914 = vld [vmem:[#allocation8 + $0x678] sm:$0xff]
        %v8915 = vld [vmem:[#allocation8 + $0x680] sm:$0xff]
        %v8916 = vld [vmem:[#allocation8 + $0x688] sm:$0xff]
        %v8917 = vld [vmem:[#allocation8 + $0x690] sm:$0xff]
        %v8918 = vld [vmem:[#allocation8 + $0x698] sm:$0xff]
        %v8919 = vld [vmem:[#allocation8 + $0x6a0] sm:$0xff]
        %v8920 = vld [vmem:[#allocation8 + $0x6a8] sm:$0xff]
        %v8921 = vld [vmem:[#allocation8 + $0x6b0] sm:$0xff]
        %v8922 = vld [vmem:[#allocation8 + $0x6b8] sm:$0xff]
        %v8923 = vld [vmem:[#allocation8 + $0x6c0] sm:$0xff]
        %v8924 = vld [vmem:[#allocation8 + $0x6c8] sm:$0xff]
        %v8925 = vld [vmem:[#allocation8 + $0x6d0] sm:$0xff]
        %v8926 = vld [vmem:[#allocation8 + $0x6d8] sm:$0xff]
        %v8927 = vld [vmem:[#allocation8 + $0x6e0] sm:$0xff]
        %v8928 = vld [vmem:[#allocation8 + $0x6e8] sm:$0xff]
        %v8929 = vld [vmem:[#allocation8 + $0x6f0] sm:$0xff]
        %v8930 = vld [vmem:[#allocation8 + $0x6f8] sm:$0xff]
        %v8931 = vld [vmem:[#allocation8 + $0x700] sm:$0xff]
        %v8932 = vld [vmem:[#allocation8 + $0x708] sm:$0xff]
        %v8933 = vld [vmem:[#allocation8 + $0x710] sm:$0xff]
        %v8934 = vld [vmem:[#allocation8 + $0x718] sm:$0xff]
        %v8935 = vld [vmem:[#allocation8 + $0x720] sm:$0xff]
        %v8936 = vld [vmem:[#allocation8 + $0x728] sm:$0xff]
        %v8937 = vld [vmem:[#allocation8 + $0x730] sm:$0xff]
        %v8938 = vld [vmem:[#allocation8 + $0x738] sm:$0xff]
        %v8939 = vld [vmem:[#allocation8 + $0x740] sm:$0xff]
        %v8940 = vld [vmem:[#allocation8 + $0x748] sm:$0xff]
        %v8941 = vld [vmem:[#allocation8 + $0x750] sm:$0xff]
        %v8942 = vld [vmem:[#allocation8 + $0x758] sm:$0xff]
        %v8943 = vld [vmem:[#allocation8 + $0x760] sm:$0xff]
        %v8944 = vld [vmem:[#allocation8 + $0x768] sm:$0xff]
        %v8945 = vld [vmem:[#allocation8 + $0x770] sm:$0xff]
        %v8946 = vld [vmem:[#allocation8 + $0x778] sm:$0xff]
        %v8947 = vld [vmem:[#allocation8 + $0x780] sm:$0xff]
        %v8948 = vld [vmem:[#allocation8 + $0x788] sm:$0xff]
        %v8949 = vld [vmem:[#allocation8 + $0x790] sm:$0xff]
        %v8950 = vld [vmem:[#allocation8 + $0x798] sm:$0xff]
        %v8951 = vld [vmem:[#allocation8 + $0x7a0] sm:$0xff]
        %v8952 = vld [vmem:[#allocation8 + $0x7a8] sm:$0xff]
        %v8953 = vld [vmem:[#allocation8 + $0x7b0] sm:$0xff]
        %v8954 = vld [vmem:[#allocation8 + $0x7b8] sm:$0xff]
        %v8955 = vld [vmem:[#allocation8 + $0x7c0] sm:$0xff]
        %v8956 = vld [vmem:[#allocation8 + $0x7c8] sm:$0xff]
        %v8957 = vld [vmem:[#allocation8 + $0x7d0] sm:$0xff]
        %v8958 = vld [vmem:[#allocation8 + $0x7d8] sm:$0xff]
        %v8959 = vld [vmem:[#allocation8 + $0x7e0] sm:$0xff]
        %v8960 = vld [vmem:[#allocation8 + $0x7e8] sm:$0xff]
        %v8961 = vld [vmem:[#allocation8 + $0x7f0] sm:$0xff]
        %v8962 = vld [vmem:[#allocation8 + $0x7f8] sm:$0xff]
        %v8963 = vld [vmem:[#allocation8 + $0x800] sm:$0xff]
        %v8964 = vld [vmem:[#allocation8 + $0x808] sm:$0xff]
        %v8965 = vld [vmem:[#allocation8 + $0x810] sm:$0xff]
        %v8966 = vld [vmem:[#allocation8 + $0x818] sm:$0xff]
        %v8967 = vld [vmem:[#allocation8 + $0x820] sm:$0xff]
        %v8968 = vld [vmem:[#allocation8 + $0x828] sm:$0xff]
        %v8969 = vld [vmem:[#allocation8 + $0x830] sm:$0xff]
        %v8970 = vld [vmem:[#allocation8 + $0x838] sm:$0xff]
        %v8971 = vld [vmem:[#allocation8 + $0x840] sm:$0xff]
        %v8972 = vld [vmem:[#allocation8 + $0x848] sm:$0xff]
        %v8973 = vld [vmem:[#allocation8 + $0x850] sm:$0xff]
        %v8974 = vld [vmem:[#allocation8 + $0x858] sm:$0xff]
        %v8975 = vld [vmem:[#allocation8 + $0x860] sm:$0xff]
        %v8976 = vld [vmem:[#allocation8 + $0x868] sm:$0xff]
        %v8977 = vld [vmem:[#allocation8 + $0x870] sm:$0xff]
        %v8978 = vld [vmem:[#allocation8 + $0x878] sm:$0xff]
        %v8979 = vld [vmem:[#allocation8 + $0x880] sm:$0xff]
        %v8980 = vld [vmem:[#allocation8 + $0x888] sm:$0xff]
        %v8981 = vld [vmem:[#allocation8 + $0x890] sm:$0xff]
        %v8982 = vld [vmem:[#allocation8 + $0x898] sm:$0xff]
        %v8983 = vld [vmem:[#allocation8 + $0x8a0] sm:$0xff]
        %v8984 = vld [vmem:[#allocation8 + $0x8a8] sm:$0xff]
        %v8985 = vld [vmem:[#allocation8 + $0x8b0] sm:$0xff]
        %v8986 = vld [vmem:[#allocation8 + $0x8b8] sm:$0xff]
        %v8987 = vld [vmem:[#allocation8 + $0x8c0] sm:$0xff]
        %v8988 = vld [vmem:[#allocation8 + $0x8c8] sm:$0xff]
        %v8989 = vld [vmem:[#allocation8 + $0x8d0] sm:$0xff]
        %v8990 = vld [vmem:[#allocation8 + $0x8d8] sm:$0xff]
        %v8991 = vld [vmem:[#allocation8 + $0x8e0] sm:$0xff]
        %v8992 = vld [vmem:[#allocation8 + $0x8e8] sm:$0xff]
        %v8993 = vld [vmem:[#allocation8 + $0x8f0] sm:$0xff]
        %v8994 = vld [vmem:[#allocation8 + $0x8f8] sm:$0xff]
        %s8995 = scalar_lea.vmem [#allocation10], 198
        %v8996 = vld [vmem:[%s8995] ss:$8 sm:$0xf]
        %v8997 = vld [vmem:[%s8995] ss:$8 sm:$0x30]
        %v8998 = vor.u32 %v8996, %v8997
        %v8999 = vpack.c.bf16 %v8869, %v8867
        %v9000 = vpack.c.bf16 %v8870, %v8868
        %v9001 = vpack.c.bf16 %v8873, %v8871
        %v9002 = vpack.c.bf16 %v8874, %v8872
        %v9003 = vpack.c.bf16 %v8877, %v8875
        %v9004 = vpack.c.bf16 %v8878, %v8876
        %v9005 = vpack.c.bf16 %v8881, %v8879
        %v9006 = vpack.c.bf16 %v8882, %v8880
        %v9007 = vpack.c.bf16 %v8885, %v8883
        %v9008 = vpack.c.bf16 %v8886, %v8884
        %v9009 = vpack.c.bf16 %v8889, %v8887
        %v9010 = vpack.c.bf16 %v8890, %v8888
        %v9011 = vpack.c.bf16 %v8893, %v8891
        %v9012 = vpack.c.bf16 %v8894, %v8892
        %v9013 = vpack.c.bf16 %v8897, %v8895
        %v9014 = vpack.c.bf16 %v8898, %v8896
        %v9016 = vlaneseq
        %v9017 = vshrl.u32 %v9016, 7
        %v9018 = vsub.s32 0, %v9017
        %v9019 = vrot.slane %v8998, %v9018
        %v9020 = vlaneseq
        %v9021 = vshrl.u32 %v9020, 7
        %v9022 = vsub.s32 1, %v9021
        %v9023 = vrot.slane %v8998, %v9022
        %v9024 = vlaneseq
        %v9025 = vshrl.u32 %v9024, 7
        %v9026 = vsub.s32 2, %v9025
        %v9027 = vrot.slane %v8998, %v9026
        %v9028 = vlaneseq
        %v9029 = vshrl.u32 %v9028, 7
        %v9030 = vsub.s32 3, %v9029
        %v9031 = vrot.slane %v8998, %v9030
        %v9032 = vlaneseq
        %v9033 = vshrl.u32 %v9032, 7
        %v9034 = vsub.s32 4, %v9033
        %v9035 = vrot.slane %v8998, %v9034
        %v9036 = vlaneseq
        %v9037 = vshrl.u32 %v9036, 7
        %v9038 = vsub.s32 5, %v9037
        %v9039 = vrot.slane %v8998, %v9038
        %v9142 = vunpack.c.l.b16 %v8899
        %v9143 = vunpack.c.h.b16 %v8899
        %v9144 = vunpack.c.l.b16 %v8900
        %v9145 = vunpack.c.h.b16 %v8900
        %v9146 = vunpack.c.l.b16 %v8901
        %v9147 = vunpack.c.h.b16 %v8901
        %v9148 = vunpack.c.l.b16 %v8902
        %v9149 = vunpack.c.h.b16 %v8902
        %v9150 = vunpack.c.l.b16 %v8903
        %v9151 = vunpack.c.h.b16 %v8903
        %v9152 = vunpack.c.l.b16 %v8904
        %v9153 = vunpack.c.h.b16 %v8904
        %v9154 = vunpack.c.l.b16 %v8905
        %v9155 = vunpack.c.h.b16 %v8905
        %v9156 = vunpack.c.l.b16 %v8906
        %v9157 = vunpack.c.h.b16 %v8906
        %v9158 = vunpack.c.l.b16 %v8907
        %v9159 = vunpack.c.h.b16 %v8907
        %v9160 = vunpack.c.l.b16 %v8908
        %v9161 = vunpack.c.h.b16 %v8908
        %v9162 = vunpack.c.l.b16 %v8909
        %v9163 = vunpack.c.h.b16 %v8909
        %v9164 = vunpack.c.l.b16 %v8910
        %v9165 = vunpack.c.h.b16 %v8910
        %v9166 = vunpack.c.l.b16 %v8911
        %v9167 = vunpack.c.h.b16 %v8911
        %v9168 = vunpack.c.l.b16 %v8912
        %v9169 = vunpack.c.h.b16 %v8912
        %v9170 = vunpack.c.l.b16 %v8913
        %v9171 = vunpack.c.h.b16 %v8913
        %v9172 = vunpack.c.l.b16 %v8914
        %v9173 = vunpack.c.h.b16 %v8914
        %v9174 = vunpack.c.l.b16 %v8915
        %v9175 = vunpack.c.h.b16 %v8915
        %v9176 = vunpack.c.l.b16 %v8916
        %v9177 = vunpack.c.h.b16 %v8916
        %v9178 = vunpack.c.l.b16 %v8917
        %v9179 = vunpack.c.h.b16 %v8917
        %v9180 = vunpack.c.l.b16 %v8918
        %v9181 = vunpack.c.h.b16 %v8918
        %v9182 = vunpack.c.l.b16 %v8919
        %v9183 = vunpack.c.h.b16 %v8919
        %v9184 = vunpack.c.l.b16 %v8920
        %v9185 = vunpack.c.h.b16 %v8920
        %v9186 = vunpack.c.l.b16 %v8921
        %v9187 = vunpack.c.h.b16 %v8921
        %v9188 = vunpack.c.l.b16 %v8922
        %v9189 = vunpack.c.h.b16 %v8922
        %v9190 = vunpack.c.l.b16 %v8923
        %v9191 = vunpack.c.h.b16 %v8923
        %v9192 = vunpack.c.l.b16 %v8924
        %v9193 = vunpack.c.h.b16 %v8924
        %v9194 = vunpack.c.l.b16 %v8925
        %v9195 = vunpack.c.h.b16 %v8925
        %v9196 = vunpack.c.l.b16 %v8926
        %v9197 = vunpack.c.h.b16 %v8926
        %v9198 = vunpack.c.l.b16 %v8927
        %v9199 = vunpack.c.h.b16 %v8927
        %v9200 = vunpack.c.l.b16 %v8928
        %v9201 = vunpack.c.h.b16 %v8928
        %v9202 = vunpack.c.l.b16 %v8929
        %v9203 = vunpack.c.h.b16 %v8929
        %v9204 = vunpack.c.l.b16 %v8930
        %v9205 = vunpack.c.h.b16 %v8930
        %v9206 = vunpack.c.l.b16 %v8931
        %v9207 = vunpack.c.h.b16 %v8931
        %v9208 = vunpack.c.l.b16 %v8932
        %v9209 = vunpack.c.h.b16 %v8932
        %v9210 = vunpack.c.l.b16 %v8933
        %v9211 = vunpack.c.h.b16 %v8933
        %v9212 = vunpack.c.l.b16 %v8934
        %v9213 = vunpack.c.h.b16 %v8934
        %v9214 = vunpack.c.l.b16 %v8935
        %v9215 = vunpack.c.h.b16 %v8935
        %v9216 = vunpack.c.l.b16 %v8936
        %v9217 = vunpack.c.h.b16 %v8936
        %v9218 = vunpack.c.l.b16 %v8937
        %v9219 = vunpack.c.h.b16 %v8937
        %v9220 = vunpack.c.l.b16 %v8938
        %v9221 = vunpack.c.h.b16 %v8938
        %v9222 = vunpack.c.l.b16 %v8939
        %v9223 = vunpack.c.h.b16 %v8939
        %v9224 = vunpack.c.l.b16 %v8940
        %v9225 = vunpack.c.h.b16 %v8940
        %v9226 = vunpack.c.l.b16 %v8941
        %v9227 = vunpack.c.h.b16 %v8941
        %v9228 = vunpack.c.l.b16 %v8942
        %v9229 = vunpack.c.h.b16 %v8942
        %v9230 = vunpack.c.l.b16 %v8943
        %v9231 = vunpack.c.h.b16 %v8943
        %v9232 = vunpack.c.l.b16 %v8944
        %v9233 = vunpack.c.h.b16 %v8944
        %v9234 = vunpack.c.l.b16 %v8945
        %v9235 = vunpack.c.h.b16 %v8945
        %v9236 = vunpack.c.l.b16 %v8946
        %v9237 = vunpack.c.h.b16 %v8946
        %v9238 = vunpack.c.l.b16 %v8947
        %v9239 = vunpack.c.h.b16 %v8947
        %v9240 = vunpack.c.l.b16 %v8948
        %v9241 = vunpack.c.h.b16 %v8948
        %v9242 = vunpack.c.l.b16 %v8949
        %v9243 = vunpack.c.h.b16 %v8949
        %v9244 = vunpack.c.l.b16 %v8950
        %v9245 = vunpack.c.h.b16 %v8950
        %v9246 = vunpack.c.l.b16 %v8951
        %v9247 = vunpack.c.h.b16 %v8951
        %v9248 = vunpack.c.l.b16 %v8952
        %v9249 = vunpack.c.h.b16 %v8952
        %v9250 = vunpack.c.l.b16 %v8953
        %v9251 = vunpack.c.h.b16 %v8953
        %v9252 = vunpack.c.l.b16 %v8954
        %v9253 = vunpack.c.h.b16 %v8954
        %v9254 = vunpack.c.l.b16 %v8955
        %v9255 = vunpack.c.h.b16 %v8955
        %v9256 = vunpack.c.l.b16 %v8956
        %v9257 = vunpack.c.h.b16 %v8956
        %v9258 = vunpack.c.l.b16 %v8957
        %v9259 = vunpack.c.h.b16 %v8957
        %v9260 = vunpack.c.l.b16 %v8958
        %v9261 = vunpack.c.h.b16 %v8958
        %v9262 = vunpack.c.l.b16 %v8959
        %v9263 = vunpack.c.h.b16 %v8959
        %v9264 = vunpack.c.l.b16 %v8960
        %v9265 = vunpack.c.h.b16 %v8960
        %v9266 = vunpack.c.l.b16 %v8961
        %v9267 = vunpack.c.h.b16 %v8961
        %v9268 = vunpack.c.l.b16 %v8962
        %v9269 = vunpack.c.h.b16 %v8962
        %v9270 = vunpack.c.l.b16 %v8963
        %v9271 = vunpack.c.h.b16 %v8963
        %v9272 = vunpack.c.l.b16 %v8964
        %v9273 = vunpack.c.h.b16 %v8964
        %v9274 = vunpack.c.l.b16 %v8965
        %v9275 = vunpack.c.h.b16 %v8965
        %v9276 = vunpack.c.l.b16 %v8966
        %v9277 = vunpack.c.h.b16 %v8966
        %v9278 = vunpack.c.l.b16 %v8967
        %v9279 = vunpack.c.h.b16 %v8967
        %v9280 = vunpack.c.l.b16 %v8968
        %v9281 = vunpack.c.h.b16 %v8968
        %v9282 = vunpack.c.l.b16 %v8969
        %v9283 = vunpack.c.h.b16 %v8969
        %v9284 = vunpack.c.l.b16 %v8970
        %v9285 = vunpack.c.h.b16 %v8970
        %v9286 = vunpack.c.l.b16 %v8971
        %v9287 = vunpack.c.h.b16 %v8971
        %v9288 = vunpack.c.l.b16 %v8972
        %v9289 = vunpack.c.h.b16 %v8972
        %v9290 = vunpack.c.l.b16 %v8973
        %v9291 = vunpack.c.h.b16 %v8973
        %v9292 = vunpack.c.l.b16 %v8974
        %v9293 = vunpack.c.h.b16 %v8974
        %v9294 = vunpack.c.l.b16 %v8975
        %v9295 = vunpack.c.h.b16 %v8975
        %v9296 = vunpack.c.l.b16 %v8976
        %v9297 = vunpack.c.h.b16 %v8976
        %v9298 = vunpack.c.l.b16 %v8977
        %v9299 = vunpack.c.h.b16 %v8977
        %v9300 = vunpack.c.l.b16 %v8978
        %v9301 = vunpack.c.h.b16 %v8978
        %v9302 = vunpack.c.l.b16 %v8979
        %v9303 = vunpack.c.h.b16 %v8979
        %v9304 = vunpack.c.l.b16 %v8980
        %v9305 = vunpack.c.h.b16 %v8980
        %v9306 = vunpack.c.l.b16 %v8981
        %v9307 = vunpack.c.h.b16 %v8981
        %v9308 = vunpack.c.l.b16 %v8982
        %v9309 = vunpack.c.h.b16 %v8982
        %v9310 = vunpack.c.l.b16 %v8983
        %v9311 = vunpack.c.h.b16 %v8983
        %v9312 = vunpack.c.l.b16 %v8984
        %v9313 = vunpack.c.h.b16 %v8984
        %v9314 = vunpack.c.l.b16 %v8985
        %v9315 = vunpack.c.h.b16 %v8985
        %v9316 = vunpack.c.l.b16 %v8986
        %v9317 = vunpack.c.h.b16 %v8986
        %v9318 = vunpack.c.l.b16 %v8987
        %v9319 = vunpack.c.h.b16 %v8987
        %v9320 = vunpack.c.l.b16 %v8988
        %v9321 = vunpack.c.h.b16 %v8988
        %v9322 = vunpack.c.l.b16 %v8989
        %v9323 = vunpack.c.h.b16 %v8989
        %v9324 = vunpack.c.l.b16 %v8990
        %v9325 = vunpack.c.h.b16 %v8990
        %v9326 = vunpack.c.l.b16 %v8991
        %v9327 = vunpack.c.h.b16 %v8991
        %v9328 = vunpack.c.l.b16 %v8992
        %v9329 = vunpack.c.h.b16 %v8992
        %v9330 = vunpack.c.l.b16 %v8993
        %v9331 = vunpack.c.h.b16 %v8993
        %v9332 = vunpack.c.l.b16 %v8994
        %v9333 = vunpack.c.h.b16 %v8994
        %v9334 = vpack.c.b16 %v9148, %v9142
        %v9335 = vpack.c.b16 %v9149, %v9143
        %v9336 = vpack.c.b16 %v9150, %v9144
        %v9337 = vpack.c.b16 %v9151, %v9145
        %v9338 = vpack.c.b16 %v9152, %v9146
        %v9339 = vpack.c.b16 %v9153, %v9147
        %v9340 = vpack.c.b16 %v9160, %v9154
        %v9341 = vpack.c.b16 %v9161, %v9155
        %v9342 = vpack.c.b16 %v9162, %v9156
        %v9343 = vpack.c.b16 %v9163, %v9157
        %v9344 = vpack.c.b16 %v9164, %v9158
        %v9345 = vpack.c.b16 %v9165, %v9159
        %v9346 = vpack.c.b16 %v9172, %v9166
        %v9347 = vpack.c.b16 %v9173, %v9167
        %v9348 = vpack.c.b16 %v9174, %v9168
        %v9349 = vpack.c.b16 %v9175, %v9169
        %v9350 = vpack.c.b16 %v9176, %v9170
        %v9351 = vpack.c.b16 %v9177, %v9171
        %v9352 = vpack.c.b16 %v9184, %v9178
        %v9353 = vpack.c.b16 %v9185, %v9179
        %v9354 = vpack.c.b16 %v9186, %v9180
        %v9355 = vpack.c.b16 %v9187, %v9181
        %v9356 = vpack.c.b16 %v9188, %v9182
        %v9357 = vpack.c.b16 %v9189, %v9183
        %v9358 = vpack.c.b16 %v9196, %v9190
        %v9359 = vpack.c.b16 %v9197, %v9191
        %v9360 = vpack.c.b16 %v9198, %v9192
        %v9361 = vpack.c.b16 %v9199, %v9193
        %v9362 = vpack.c.b16 %v9200, %v9194
        %v9363 = vpack.c.b16 %v9201, %v9195
        %v9364 = vpack.c.b16 %v9208, %v9202
        %v9365 = vpack.c.b16 %v9209, %v9203
        %v9366 = vpack.c.b16 %v9210, %v9204
        %v9367 = vpack.c.b16 %v9211, %v9205
        %v9368 = vpack.c.b16 %v9212, %v9206
        %v9369 = vpack.c.b16 %v9213, %v9207
        %v9370 = vpack.c.b16 %v9220, %v9214
        %v9371 = vpack.c.b16 %v9221, %v9215
        %v9372 = vpack.c.b16 %v9222, %v9216
        %v9373 = vpack.c.b16 %v9223, %v9217
        %v9374 = vpack.c.b16 %v9224, %v9218
        %v9375 = vpack.c.b16 %v9225, %v9219
        %v9376 = vpack.c.b16 %v9232, %v9226
        %v9377 = vpack.c.b16 %v9233, %v9227
        %v9378 = vpack.c.b16 %v9234, %v9228
        %v9379 = vpack.c.b16 %v9235, %v9229
        %v9380 = vpack.c.b16 %v9236, %v9230
        %v9381 = vpack.c.b16 %v9237, %v9231
        %v9382 = vpack.c.b16 %v9244, %v9238
        %v9383 = vpack.c.b16 %v9245, %v9239
        %v9384 = vpack.c.b16 %v9246, %v9240
        %v9385 = vpack.c.b16 %v9247, %v9241
        %v9386 = vpack.c.b16 %v9248, %v9242
        %v9387 = vpack.c.b16 %v9249, %v9243
        %v9388 = vpack.c.b16 %v9256, %v9250
        %v9389 = vpack.c.b16 %v9257, %v9251
        %v9390 = vpack.c.b16 %v9258, %v9252
        %v9391 = vpack.c.b16 %v9259, %v9253
        %v9392 = vpack.c.b16 %v9260, %v9254
        %v9393 = vpack.c.b16 %v9261, %v9255
        %v9394 = vpack.c.b16 %v9268, %v9262
        %v9395 = vpack.c.b16 %v9269, %v9263
        %v9396 = vpack.c.b16 %v9270, %v9264
        %v9397 = vpack.c.b16 %v9271, %v9265
        %v9398 = vpack.c.b16 %v9272, %v9266
        %v9399 = vpack.c.b16 %v9273, %v9267
        %v9400 = vpack.c.b16 %v9280, %v9274
        %v9401 = vpack.c.b16 %v9281, %v9275
        %v9402 = vpack.c.b16 %v9282, %v9276
        %v9403 = vpack.c.b16 %v9283, %v9277
        %v9404 = vpack.c.b16 %v9284, %v9278
        %v9405 = vpack.c.b16 %v9285, %v9279
        %v9406 = vpack.c.b16 %v9292, %v9286
        %v9407 = vpack.c.b16 %v9293, %v9287
        %v9408 = vpack.c.b16 %v9294, %v9288
        %v9409 = vpack.c.b16 %v9295, %v9289
        %v9410 = vpack.c.b16 %v9296, %v9290
        %v9411 = vpack.c.b16 %v9297, %v9291
        %v9412 = vpack.c.b16 %v9304, %v9298
        %v9413 = vpack.c.b16 %v9305, %v9299
        %v9414 = vpack.c.b16 %v9306, %v9300
        %v9415 = vpack.c.b16 %v9307, %v9301
        %v9416 = vpack.c.b16 %v9308, %v9302
        %v9417 = vpack.c.b16 %v9309, %v9303
        %v9418 = vpack.c.b16 %v9316, %v9310
        %v9419 = vpack.c.b16 %v9317, %v9311
        %v9420 = vpack.c.b16 %v9318, %v9312
        %v9421 = vpack.c.b16 %v9319, %v9313
        %v9422 = vpack.c.b16 %v9320, %v9314
        %v9423 = vpack.c.b16 %v9321, %v9315
        %v9424 = vpack.c.b16 %v9328, %v9322
        %v9425 = vpack.c.b16 %v9329, %v9323
        %v9426 = vpack.c.b16 %v9330, %v9324
        %v9427 = vpack.c.b16 %v9331, %v9325
        %v9428 = vpack.c.b16 %v9332, %v9326
        %v9429 = vpack.c.b16 %v9333, %v9327
        %9526 = vmatprep.subr.bf16.mxu0 %v9377
        %9527 = vmatpush1.bf16.msra.mxu0 %v9376
        %9528 = vmatprep.subr.bf16.mxu0 %v9371
        %9529 = vmatpush1.bf16.msra.mxu0 %v9370
        %9530 = vmatprep.subr.bf16.mxu0 %v9365
        %9531 = vmatpush1.bf16.msra.mxu0 %v9364
        %9532 = vmatprep.subr.bf16.mxu0 %v9359
        %9533 = vmatpush1.bf16.msra.mxu0 %v9358
        %9534 = vmatprep.subr.bf16.mxu0 %v9353
        %9535 = vmatpush1.bf16.msra.mxu0 %v9352
        %9536 = vmatprep.subr.bf16.mxu0 %v9347
        %9537 = vmatpush1.bf16.msra.mxu0 %v9346
        %9538 = vmatprep.subr.bf16.mxu0 %v9341
        %9539 = vmatpush1.bf16.msra.mxu0 %v9340
        %9540 = vmatprep.subr.bf16.mxu0 %v9335
        %9541 = vmatpush1.bf16.msra.mxu0 %v9334
        %9542 = vmatprep.subr.bf16.mxu0 %v9425
        %9543 = vmatpush2.bf16.msra.mxu0 %v9424
        %9544 = vmatprep.subr.bf16.mxu0 %v9419
        %9545 = vmatpush2.bf16.msra.mxu0 %v9418
        %9546 = vmatprep.subr.bf16.mxu0 %v9413
        %9547 = vmatpush2.bf16.msra.mxu0 %v9412
        %9548 = vmatprep.subr.bf16.mxu0 %v9407
        %9549 = vmatpush2.bf16.msra.mxu0 %v9406
        %9550 = vmatprep.subr.bf16.mxu0 %v9401
        %9551 = vmatpush2.bf16.msra.mxu0 %v9400
        %9552 = vmatprep.subr.bf16.mxu0 %v9395
        %9553 = vmatpush2.bf16.msra.mxu0 %v9394
        %9554 = vmatprep.subr.bf16.mxu0 %v9389
        %9555 = vmatpush2.bf16.msra.mxu0 %v9388
        %9556 = vmatprep.subr.bf16.mxu0 %v9383
        %9557 = vmatpush2.bf16.msra.mxu0 %v9382
        %9558 = vmatprep.mubr.bf16.mxu0 %v9000
        %9559 = vmatmul.mubr.bf16.gmra.mxu0 %v8999
        %v9560 = vpop.f32.mrf.mxu0
        %v9561 = vadd.f32 %v9019, %v9560
        %v9562 = vpop.f32.mrf.mxu0
        %v9563 = vadd.f32 %v9023, %v9562
        %v9564 = vpop.f32.mrf.mxu0
        %v9565 = vadd.f32 %v9019, %v9564
        %v9566 = vpop.f32.mrf.mxu0
        %v9567 = vadd.f32 %v9023, %v9566
        %9568 = vmatprep.mubr.bf16.mxu0 %v9002
        %9569 = vmatmul.mubr.bf16.gmra.mxu0 %v9001
        %v9570 = vpop.f32.mrf.mxu0
        %v9571 = vadd.f32 %v9019, %v9570
        %v9572 = vpop.f32.mrf.mxu0
        %v9573 = vadd.f32 %v9023, %v9572
        %v9574 = vpop.f32.mrf.mxu0
        %v9575 = vadd.f32 %v9019, %v9574
        %v9576 = vpop.f32.mrf.mxu0
        %v9577 = vadd.f32 %v9023, %v9576
        %9578 = vmatprep.mubr.bf16.mxu0 %v9004
        %9579 = vmatmul.mubr.bf16.gmra.mxu0 %v9003
        %v9580 = vpop.f32.mrf.mxu0
        %v9581 = vadd.f32 %v9019, %v9580
        %v9582 = vpop.f32.mrf.mxu0
        %v9583 = vadd.f32 %v9023, %v9582
        %v9584 = vpop.f32.mrf.mxu0
        %v9585 = vadd.f32 %v9019, %v9584
        %v9586 = vpop.f32.mrf.mxu0
        %v9587 = vadd.f32 %v9023, %v9586
        %9588 = vmatprep.mubr.bf16.mxu0 %v9006
        %9589 = vmatmul.mubr.bf16.gmra.mxu0 %v9005
        %v9590 = vpop.f32.mrf.mxu0
        %v9591 = vadd.f32 %v9019, %v9590
        %v9592 = vpop.f32.mrf.mxu0
        %v9593 = vadd.f32 %v9023, %v9592
        %v9594 = vpop.f32.mrf.mxu0
        %v9595 = vadd.f32 %v9019, %v9594
        %v9596 = vpop.f32.mrf.mxu0
        %v9597 = vadd.f32 %v9023, %v9596
        %9598 = vmatprep.mubr.bf16.mxu0 %v9008
        %9599 = vmatmul.mubr.bf16.gmra.mxu0 %v9007
        %v9600 = vpop.f32.mrf.mxu0
        %v9601 = vadd.f32 %v9019, %v9600
        %v9602 = vpop.f32.mrf.mxu0
        %v9603 = vadd.f32 %v9023, %v9602
        %v9604 = vpop.f32.mrf.mxu0
        %v9605 = vadd.f32 %v9019, %v9604
        %v9606 = vpop.f32.mrf.mxu0
        %v9607 = vadd.f32 %v9023, %v9606
        %9608 = vmatprep.mubr.bf16.mxu0 %v9010
        %9609 = vmatmul.mubr.bf16.gmra.mxu0 %v9009
        %v9610 = vpop.f32.mrf.mxu0
        %v9611 = vadd.f32 %v9019, %v9610
        %v9612 = vpop.f32.mrf.mxu0
        %v9613 = vadd.f32 %v9023, %v9612
        %v9614 = vpop.f32.mrf.mxu0
        %v9615 = vadd.f32 %v9019, %v9614
        %v9616 = vpop.f32.mrf.mxu0
        %v9617 = vadd.f32 %v9023, %v9616
        %9618 = vmatprep.mubr.bf16.mxu0 %v9012
        %9619 = vmatmul.mubr.bf16.gmra.mxu0 %v9011
        %v9620 = vpop.f32.mrf.mxu0
        %v9621 = vadd.f32 %v9019, %v9620
        %v9622 = vpop.f32.mrf.mxu0
        %v9623 = vadd.f32 %v9023, %v9622
        %v9624 = vpop.f32.mrf.mxu0
        %v9625 = vadd.f32 %v9019, %v9624
        %v9626 = vpop.f32.mrf.mxu0
        %v9627 = vadd.f32 %v9023, %v9626
        %9628 = vmatprep.mubr.bf16.mxu0 %v9014
        %9629 = vmatmul.mubr.bf16.gmra.mxu0 %v9013
        %v9630 = vpop.f32.mrf.mxu0
        %v9631 = vadd.f32 %v9019, %v9630
        %v9632 = vpop.f32.mrf.mxu0
        %v9633 = vadd.f32 %v9023, %v9632
        %v9634 = vpop.f32.mrf.mxu0
        %v9635 = vadd.f32 %v9019, %v9634
        %v9636 = vpop.f32.mrf.mxu0
        %v9637 = vadd.f32 %v9023, %v9636
        %9638 = vdwg.mxu0
        %9639 = vmatprep.subr.bf16.mxu0 %v9379
        %9640 = vmatpush1.bf16.msra.mxu0 %v9378
        %9641 = vmatprep.subr.bf16.mxu0 %v9373
        %9642 = vmatpush1.bf16.msra.mxu0 %v9372
        %9643 = vmatprep.subr.bf16.mxu0 %v9367
        %9644 = vmatpush1.bf16.msra.mxu0 %v9366
        %9645 = vmatprep.subr.bf16.mxu0 %v9361
        %9646 = vmatpush1.bf16.msra.mxu0 %v9360
        %9647 = vmatprep.subr.bf16.mxu0 %v9355
        %9648 = vmatpush1.bf16.msra.mxu0 %v9354
        %9649 = vmatprep.subr.bf16.mxu0 %v9349
        %9650 = vmatpush1.bf16.msra.mxu0 %v9348
        %9651 = vmatprep.subr.bf16.mxu0 %v9343
        %9652 = vmatpush1.bf16.msra.mxu0 %v9342
        %9653 = vmatprep.subr.bf16.mxu0 %v9337
        %9654 = vmatpush1.bf16.msra.mxu0 %v9336
        %9655 = vmatprep.subr.bf16.mxu0 %v9427
        %9656 = vmatpush2.bf16.msra.mxu0 %v9426
        %9657 = vmatprep.subr.bf16.mxu0 %v9421
        %9658 = vmatpush2.bf16.msra.mxu0 %v9420
        %9659 = vmatprep.subr.bf16.mxu0 %v9415
        %9660 = vmatpush2.bf16.msra.mxu0 %v9414
        %9661 = vmatprep.subr.bf16.mxu0 %v9409
        %9662 = vmatpush2.bf16.msra.mxu0 %v9408
        %9663 = vmatprep.subr.bf16.mxu0 %v9403
        %9664 = vmatpush2.bf16.msra.mxu0 %v9402
        %9665 = vmatprep.subr.bf16.mxu0 %v9397
        %9666 = vmatpush2.bf16.msra.mxu0 %v9396
        %9667 = vmatprep.subr.bf16.mxu0 %v9391
        %9668 = vmatpush2.bf16.msra.mxu0 %v9390
        %9669 = vmatprep.subr.bf16.mxu0 %v9385
        %9670 = vmatpush2.bf16.msra.mxu0 %v9384
        %9671 = vmatprep.mubr.bf16.mxu0 %v9000
        %9672 = vmatmul.mubr.bf16.gmra.mxu0 %v8999
        %v9673 = vpop.f32.mrf.mxu0
        %v9674 = vadd.f32 %v9027, %v9673
        %v9675 = vpop.f32.mrf.mxu0
        %v9676 = vadd.f32 %v9031, %v9675
        %v9677 = vpop.f32.mrf.mxu0
        %v9678 = vadd.f32 %v9027, %v9677
        %v9679 = vpop.f32.mrf.mxu0
        %v9680 = vadd.f32 %v9031, %v9679
        %9681 = vmatprep.mubr.bf16.mxu0 %v9002
        %9682 = vmatmul.mubr.bf16.gmra.mxu0 %v9001
        %v9683 = vpop.f32.mrf.mxu0
        %v9684 = vadd.f32 %v9027, %v9683
        %v9685 = vpop.f32.mrf.mxu0
        %v9686 = vadd.f32 %v9031, %v9685
        %v9687 = vpop.f32.mrf.mxu0
        %v9688 = vadd.f32 %v9027, %v9687
        %v9689 = vpop.f32.mrf.mxu0
        %v9690 = vadd.f32 %v9031, %v9689
        %9691 = vmatprep.mubr.bf16.mxu0 %v9004
        %9692 = vmatmul.mubr.bf16.gmra.mxu0 %v9003
        %v9693 = vpop.f32.mrf.mxu0
        %v9694 = vadd.f32 %v9027, %v9693
        %v9695 = vpop.f32.mrf.mxu0
        %v9696 = vadd.f32 %v9031, %v9695
        %v9697 = vpop.f32.mrf.mxu0
        %v9698 = vadd.f32 %v9027, %v9697
        %v9699 = vpop.f32.mrf.mxu0
        %v9700 = vadd.f32 %v9031, %v9699
        %9701 = vmatprep.mubr.bf16.mxu0 %v9006
        %9702 = vmatmul.mubr.bf16.gmra.mxu0 %v9005
        %v9703 = vpop.f32.mrf.mxu0
        %v9704 = vadd.f32 %v9027, %v9703
        %v9705 = vpop.f32.mrf.mxu0
        %v9706 = vadd.f32 %v9031, %v9705
        %v9707 = vpop.f32.mrf.mxu0
        %v9708 = vadd.f32 %v9027, %v9707
        %v9709 = vpop.f32.mrf.mxu0
        %v9710 = vadd.f32 %v9031, %v9709
        %9711 = vmatprep.mubr.bf16.mxu0 %v9008
        %9712 = vmatmul.mubr.bf16.gmra.mxu0 %v9007
        %v9713 = vpop.f32.mrf.mxu0
        %v9714 = vadd.f32 %v9027, %v9713
        %v9715 = vpop.f32.mrf.mxu0
        %v9716 = vadd.f32 %v9031, %v9715
        %v9717 = vpop.f32.mrf.mxu0
        %v9718 = vadd.f32 %v9027, %v9717
        %v9719 = vpop.f32.mrf.mxu0
        %v9720 = vadd.f32 %v9031, %v9719
        %9721 = vmatprep.mubr.bf16.mxu0 %v9010
        %9722 = vmatmul.mubr.bf16.gmra.mxu0 %v9009
        %v9723 = vpop.f32.mrf.mxu0
        %v9724 = vadd.f32 %v9027, %v9723
        %v9725 = vpop.f32.mrf.mxu0
        %v9726 = vadd.f32 %v9031, %v9725
        %v9727 = vpop.f32.mrf.mxu0
        %v9728 = vadd.f32 %v9027, %v9727
        %v9729 = vpop.f32.mrf.mxu0
        %v9730 = vadd.f32 %v9031, %v9729
        %9731 = vmatprep.mubr.bf16.mxu0 %v9012
        %9732 = vmatmul.mubr.bf16.gmra.mxu0 %v9011
        %v9733 = vpop.f32.mrf.mxu0
        %v9734 = vadd.f32 %v9027, %v9733
        %v9735 = vpop.f32.mrf.mxu0
        %v9736 = vadd.f32 %v9031, %v9735
        %v9737 = vpop.f32.mrf.mxu0
        %v9738 = vadd.f32 %v9027, %v9737
        %v9739 = vpop.f32.mrf.mxu0
        %v9740 = vadd.f32 %v9031, %v9739
        %9741 = vmatprep.mubr.bf16.mxu0 %v9014
        %9742 = vmatmul.mubr.bf16.gmra.mxu0 %v9013
        %v9743 = vpop.f32.mrf.mxu0
        %v9744 = vadd.f32 %v9027, %v9743
        %v9745 = vpop.f32.mrf.mxu0
        %v9746 = vadd.f32 %v9031, %v9745
        %v9747 = vpop.f32.mrf.mxu0
        %v9748 = vadd.f32 %v9027, %v9747
        %v9749 = vpop.f32.mrf.mxu0
        %v9750 = vadd.f32 %v9031, %v9749
        %9751 = vdwg.mxu0
        %9752 = vmatprep.subr.bf16.mxu0 %v9381
        %9753 = vmatpush1.bf16.msra.mxu0 %v9380
        %9754 = vmatprep.subr.bf16.mxu0 %v9375
        %9755 = vmatpush1.bf16.msra.mxu0 %v9374
        %9756 = vmatprep.subr.bf16.mxu0 %v9369
        %9757 = vmatpush1.bf16.msra.mxu0 %v9368
        %9758 = vmatprep.subr.bf16.mxu0 %v9363
        %9759 = vmatpush1.bf16.msra.mxu0 %v9362
        %9760 = vmatprep.subr.bf16.mxu0 %v9357
        %9761 = vmatpush1.bf16.msra.mxu0 %v9356
        %9762 = vmatprep.subr.bf16.mxu0 %v9351
        %9763 = vmatpush1.bf16.msra.mxu0 %v9350
        %9764 = vmatprep.subr.bf16.mxu0 %v9345
        %9765 = vmatpush1.bf16.msra.mxu0 %v9344
        %9766 = vmatprep.subr.bf16.mxu0 %v9339
        %9767 = vmatpush1.bf16.msra.mxu0 %v9338
        %9768 = vmatprep.subr.bf16.mxu0 %v9429
        %9769 = vmatpush2.bf16.msra.mxu0 %v9428
        %9770 = vmatprep.subr.bf16.mxu0 %v9423
        %9771 = vmatpush2.bf16.msra.mxu0 %v9422
        %9772 = vmatprep.subr.bf16.mxu0 %v9417
        %9773 = vmatpush2.bf16.msra.mxu0 %v9416
        %9774 = vmatprep.subr.bf16.mxu0 %v9411
        %9775 = vmatpush2.bf16.msra.mxu0 %v9410
        %9776 = vmatprep.subr.bf16.mxu0 %v9405
        %9777 = vmatpush2.bf16.msra.mxu0 %v9404
        %9778 = vmatprep.subr.bf16.mxu0 %v9399
        %9779 = vmatpush2.bf16.msra.mxu0 %v9398
        %9780 = vmatprep.subr.bf16.mxu0 %v9393
        %9781 = vmatpush2.bf16.msra.mxu0 %v9392
        %9782 = vmatprep.subr.bf16.mxu0 %v9387
        %9783 = vmatpush2.bf16.msra.mxu0 %v9386
        %9784 = vmatprep.mubr.bf16.mxu0 %v9000
        %9785 = vmatmul.mubr.bf16.gmra.mxu0 %v8999
        %v9786 = vpop.f32.mrf.mxu0
        %v9787 = vadd.f32 %v9035, %v9786
        %v9788 = vpop.f32.mrf.mxu0
        %v9789 = vadd.f32 %v9039, %v9788
        %v9790 = vpop.f32.mrf.mxu0
        %v9791 = vadd.f32 %v9035, %v9790
        %v9792 = vpop.f32.mrf.mxu0
        %v9793 = vadd.f32 %v9039, %v9792
        %9794 = vmatprep.mubr.bf16.mxu0 %v9002
        %9795 = vmatmul.mubr.bf16.gmra.mxu0 %v9001
        %v9796 = vpop.f32.mrf.mxu0
        %v9797 = vadd.f32 %v9035, %v9796
        %v9798 = vpop.f32.mrf.mxu0
        %v9799 = vadd.f32 %v9039, %v9798
        %v9800 = vpop.f32.mrf.mxu0
        %v9801 = vadd.f32 %v9035, %v9800
        %v9802 = vpop.f32.mrf.mxu0
        %v9803 = vadd.f32 %v9039, %v9802
        %9804 = vmatprep.mubr.bf16.mxu0 %v9004
        %9805 = vmatmul.mubr.bf16.gmra.mxu0 %v9003
        %v9806 = vpop.f32.mrf.mxu0
        %v9807 = vadd.f32 %v9035, %v9806
        %v9808 = vpop.f32.mrf.mxu0
        %v9809 = vadd.f32 %v9039, %v9808
        %v9810 = vpop.f32.mrf.mxu0
        %v9811 = vadd.f32 %v9035, %v9810
        %v9812 = vpop.f32.mrf.mxu0
        %v9813 = vadd.f32 %v9039, %v9812
        %9814 = vmatprep.mubr.bf16.mxu0 %v9006
        %9815 = vmatmul.mubr.bf16.gmra.mxu0 %v9005
        %v9816 = vpop.f32.mrf.mxu0
        %v9817 = vadd.f32 %v9035, %v9816
        %v9818 = vpop.f32.mrf.mxu0
        %v9819 = vadd.f32 %v9039, %v9818
        %v9820 = vpop.f32.mrf.mxu0
        %v9821 = vadd.f32 %v9035, %v9820
        %v9822 = vpop.f32.mrf.mxu0
        %v9823 = vadd.f32 %v9039, %v9822
        %9824 = vmatprep.mubr.bf16.mxu0 %v9008
        %9825 = vmatmul.mubr.bf16.gmra.mxu0 %v9007
        %v9826 = vpop.f32.mrf.mxu0
        %v9827 = vadd.f32 %v9035, %v9826
        %v9828 = vpop.f32.mrf.mxu0
        %v9829 = vadd.f32 %v9039, %v9828
        %v9830 = vpop.f32.mrf.mxu0
        %v9831 = vadd.f32 %v9035, %v9830
        %v9832 = vpop.f32.mrf.mxu0
        %v9833 = vadd.f32 %v9039, %v9832
        %9834 = vmatprep.mubr.bf16.mxu0 %v9010
        %9835 = vmatmul.mubr.bf16.gmra.mxu0 %v9009
        %v9836 = vpop.f32.mrf.mxu0
        %v9837 = vadd.f32 %v9035, %v9836
        %v9838 = vpop.f32.mrf.mxu0
        %v9839 = vadd.f32 %v9039, %v9838
        %v9840 = vpop.f32.mrf.mxu0
        %v9841 = vadd.f32 %v9035, %v9840
        %v9842 = vpop.f32.mrf.mxu0
        %v9843 = vadd.f32 %v9039, %v9842
        %9844 = vmatprep.mubr.bf16.mxu0 %v9012
        %9845 = vmatmul.mubr.bf16.gmra.mxu0 %v9011
        %v9846 = vpop.f32.mrf.mxu0
        %v9847 = vadd.f32 %v9035, %v9846
        %v9848 = vpop.f32.mrf.mxu0
        %v9849 = vadd.f32 %v9039, %v9848
        %v9850 = vpop.f32.mrf.mxu0
        %v9851 = vadd.f32 %v9035, %v9850
        %v9852 = vpop.f32.mrf.mxu0
        %v9853 = vadd.f32 %v9039, %v9852
        %9854 = vmatprep.mubr.bf16.mxu0 %v9014
        %9855 = vmatmul.mubr.bf16.gmra.mxu0 %v9013
        %v9856 = vpop.f32.mrf.mxu0
        %v9857 = vadd.f32 %v9035, %v9856
        %v9858 = vpop.f32.mrf.mxu0
        %v9859 = vadd.f32 %v9039, %v9858
        %v9860 = vpop.f32.mrf.mxu0
        %v9861 = vadd.f32 %v9035, %v9860
        %v9862 = vpop.f32.mrf.mxu0
        %v9863 = vadd.f32 %v9039, %v9862
        %9864 = vdwg.mxu0
        %v9865 = vxor.u32 %v9561, 2147483648
        %v9866 = vxor.u32 %v9563, 2147483648
        %v9867 = vxor.u32 %v9565, 2147483648
        %v9868 = vxor.u32 %v9567, 2147483648
        %v9869 = vxor.u32 %v9571, 2147483648
        %v9870 = vxor.u32 %v9573, 2147483648
        %v9871 = vxor.u32 %v9575, 2147483648
        %v9872 = vxor.u32 %v9577, 2147483648
        %v9873 = vxor.u32 %v9581, 2147483648
        %v9874 = vxor.u32 %v9583, 2147483648
        %v9875 = vxor.u32 %v9585, 2147483648
        %v9876 = vxor.u32 %v9587, 2147483648
        %v9877 = vxor.u32 %v9591, 2147483648
        %v9878 = vxor.u32 %v9593, 2147483648
        %v9879 = vxor.u32 %v9595, 2147483648
        %v9880 = vxor.u32 %v9597, 2147483648
        %v9881 = vxor.u32 %v9601, 2147483648
        %v9882 = vxor.u32 %v9603, 2147483648
        %v9883 = vxor.u32 %v9605, 2147483648
        %v9884 = vxor.u32 %v9607, 2147483648
        %v9885 = vxor.u32 %v9611, 2147483648
        %v9886 = vxor.u32 %v9613, 2147483648
        %v9887 = vxor.u32 %v9615, 2147483648
        %v9888 = vxor.u32 %v9617, 2147483648
        %v9889 = vxor.u32 %v9621, 2147483648
        %v9890 = vxor.u32 %v9623, 2147483648
        %v9891 = vxor.u32 %v9625, 2147483648
        %v9892 = vxor.u32 %v9627, 2147483648
        %v9893 = vxor.u32 %v9631, 2147483648
        %v9894 = vxor.u32 %v9633, 2147483648
        %v9895 = vxor.u32 %v9635, 2147483648
        %v9896 = vxor.u32 %v9637, 2147483648
        %v9897 = vmul.f32 %v9865, 1.442695
        %v9898 = vpow.pop %v9897
        %v9899 = vmul.f32 %v9866, 1.442695
        %v9900 = vpow.pop %v9899
        %v9901 = vmul.f32 %v9867, 1.442695
        %v9902 = vpow.pop %v9901
        %v9903 = vmul.f32 %v9868, 1.442695
        %v9904 = vpow.pop %v9903
        %v9905 = vmul.f32 %v9869, 1.442695
        %v9906 = vpow.pop %v9905
        %v9907 = vmul.f32 %v9870, 1.442695
        %v9908 = vpow.pop %v9907
        %v9909 = vmul.f32 %v9871, 1.442695
        %v9910 = vpow.pop %v9909
        %v9911 = vmul.f32 %v9872, 1.442695
        %v9912 = vpow.pop %v9911
        %v9913 = vmul.f32 %v9873, 1.442695
        %v9914 = vpow.pop %v9913
        %v9915 = vmul.f32 %v9874, 1.442695
        %v9916 = vpow.pop %v9915
        %v9917 = vmul.f32 %v9875, 1.442695
        %v9918 = vpow.pop %v9917
        %v9919 = vmul.f32 %v9876, 1.442695
        %v9920 = vpow.pop %v9919
        %v9921 = vmul.f32 %v9877, 1.442695
        %v9922 = vpow.pop %v9921
        %v9923 = vmul.f32 %v9878, 1.442695
        %v9924 = vpow.pop %v9923
        %v9925 = vmul.f32 %v9879, 1.442695
        %v9926 = vpow.pop %v9925
        %v9927 = vmul.f32 %v9880, 1.442695
        %v9928 = vpow.pop %v9927
        %v9929 = vmul.f32 %v9881, 1.442695
        %v9930 = vpow.pop %v9929
        %v9931 = vmul.f32 %v9882, 1.442695
        %v9932 = vpow.pop %v9931
        %v9933 = vmul.f32 %v9883, 1.442695
        %v9934 = vpow.pop %v9933
        %v9935 = vmul.f32 %v9884, 1.442695
        %v9936 = vpow.pop %v9935
        %v9937 = vmul.f32 %v9885, 1.442695
        %v9938 = vpow.pop %v9937
        %v9939 = vmul.f32 %v9886, 1.442695
        %v9940 = vpow.pop %v9939
        %v9941 = vmul.f32 %v9887, 1.442695
        %v9942 = vpow.pop %v9941
        %v9943 = vmul.f32 %v9888, 1.442695
        %v9944 = vpow.pop %v9943
        %v9945 = vmul.f32 %v9889, 1.442695
        %v9946 = vpow.pop %v9945
        %v9947 = vmul.f32 %v9890, 1.442695
        %v9948 = vpow.pop %v9947
        %v9949 = vmul.f32 %v9891, 1.442695
        %v9950 = vpow.pop %v9949
        %v9951 = vmul.f32 %v9892, 1.442695
        %v9952 = vpow.pop %v9951
        %v9953 = vmul.f32 %v9893, 1.442695
        %v9954 = vpow.pop %v9953
        %v9955 = vmul.f32 %v9894, 1.442695
        %v9956 = vpow.pop %v9955
        %v9957 = vmul.f32 %v9895, 1.442695
        %v9958 = vpow.pop %v9957
        %v9959 = vmul.f32 %v9896, 1.442695
        %v9960 = vpow.pop %v9959
        %v9961 = vadd.f32 %v9898, 1.0
        %v9962 = vadd.f32 %v9900, 1.0
        %v9963 = vadd.f32 %v9902, 1.0
        %v9964 = vadd.f32 %v9904, 1.0
        %v9965 = vadd.f32 %v9906, 1.0
        %v9966 = vadd.f32 %v9908, 1.0
        %v9967 = vadd.f32 %v9910, 1.0
        %v9968 = vadd.f32 %v9912, 1.0
        %v9969 = vadd.f32 %v9914, 1.0
        %v9970 = vadd.f32 %v9916, 1.0
        %v9971 = vadd.f32 %v9918, 1.0
        %v9972 = vadd.f32 %v9920, 1.0
        %v9973 = vadd.f32 %v9922, 1.0
        %v9974 = vadd.f32 %v9924, 1.0
        %v9975 = vadd.f32 %v9926, 1.0
        %v9976 = vadd.f32 %v9928, 1.0
        %v9977 = vadd.f32 %v9930, 1.0
        %v9978 = vadd.f32 %v9932, 1.0
        %v9979 = vadd.f32 %v9934, 1.0
        %v9980 = vadd.f32 %v9936, 1.0
        %v9981 = vadd.f32 %v9938, 1.0
        %v9982 = vadd.f32 %v9940, 1.0
        %v9983 = vadd.f32 %v9942, 1.0
        %v9984 = vadd.f32 %v9944, 1.0
        %v9985 = vadd.f32 %v9946, 1.0
        %v9986 = vadd.f32 %v9948, 1.0
        %v9987 = vadd.f32 %v9950, 1.0
        %v9988 = vadd.f32 %v9952, 1.0
        %v9989 = vadd.f32 %v9954, 1.0
        %v9990 = vadd.f32 %v9956, 1.0
        %v9991 = vadd.f32 %v9958, 1.0
        %v9992 = vadd.f32 %v9960, 1.0
        %v9993 = vrcp.pop %v9961
        %v9994 = vmul.f32 1.0, %v9993
        %v9995 = vrcp.pop %v9962
        %v9996 = vmul.f32 1.0, %v9995
        %v9997 = vrcp.pop %v9963
        %v9998 = vmul.f32 1.0, %v9997
        %v9999 = vrcp.pop %v9964
        %v10000 = vmul.f32 1.0, %v9999
        %v10001 = vrcp.pop %v9965
        %v10002 = vmul.f32 1.0, %v10001
        %v10003 = vrcp.pop %v9966
        %v10004 = vmul.f32 1.0, %v10003
        %v10005 = vrcp.pop %v9967
        %v10006 = vmul.f32 1.0, %v10005
        %v10007 = vrcp.pop %v9968
        %v10008 = vmul.f32 1.0, %v10007
        %v10009 = vrcp.pop %v9969
        %v10010 = vmul.f32 1.0, %v10009
        %v10011 = vrcp.pop %v9970
        %v10012 = vmul.f32 1.0, %v10011
        %v10013 = vrcp.pop %v9971
        %v10014 = vmul.f32 1.0, %v10013
        %v10015 = vrcp.pop %v9972
        %v10016 = vmul.f32 1.0, %v10015
        %v10017 = vrcp.pop %v9973
        %v10018 = vmul.f32 1.0, %v10017
        %v10019 = vrcp.pop %v9974
        %v10020 = vmul.f32 1.0, %v10019
        %v10021 = vrcp.pop %v9975
        %v10022 = vmul.f32 1.0, %v10021
        %v10023 = vrcp.pop %v9976
        %v10024 = vmul.f32 1.0, %v10023
        %v10025 = vrcp.pop %v9977
        %v10026 = vmul.f32 1.0, %v10025
        %v10027 = vrcp.pop %v9978
        %v10028 = vmul.f32 1.0, %v10027
        %v10029 = vrcp.pop %v9979
        %v10030 = vmul.f32 1.0, %v10029
        %v10031 = vrcp.pop %v9980
        %v10032 = vmul.f32 1.0, %v10031
        %v10033 = vrcp.pop %v9981
        %v10034 = vmul.f32 1.0, %v10033
        %v10035 = vrcp.pop %v9982
        %v10036 = vmul.f32 1.0, %v10035
        %v10037 = vrcp.pop %v9983
        %v10038 = vmul.f32 1.0, %v10037
        %v10039 = vrcp.pop %v9984
        %v10040 = vmul.f32 1.0, %v10039
        %v10041 = vrcp.pop %v9985
        %v10042 = vmul.f32 1.0, %v10041
        %v10043 = vrcp.pop %v9986
        %v10044 = vmul.f32 1.0, %v10043
        %v10045 = vrcp.pop %v9987
        %v10046 = vmul.f32 1.0, %v10045
        %v10047 = vrcp.pop %v9988
        %v10048 = vmul.f32 1.0, %v10047
        %v10049 = vrcp.pop %v9989
        %v10050 = vmul.f32 1.0, %v10049
        %v10051 = vrcp.pop %v9990
        %v10052 = vmul.f32 1.0, %v10051
        %v10053 = vrcp.pop %v9991
        %v10054 = vmul.f32 1.0, %v10053
        %v10055 = vrcp.pop %v9992
        %v10056 = vmul.f32 1.0, %v10055
        %v10057 = vtanh.pop %v9674
        %v10058 = vtanh.pop %v9676
        %v10059 = vtanh.pop %v9678
        %v10060 = vtanh.pop %v9680
        %v10061 = vtanh.pop %v9684
        %v10062 = vtanh.pop %v9686
        %v10063 = vtanh.pop %v9688
        %v10064 = vtanh.pop %v9690
        %v10065 = vtanh.pop %v9694
        %v10066 = vtanh.pop %v9696
        %v10067 = vtanh.pop %v9698
        %v10068 = vtanh.pop %v9700
        %v10069 = vtanh.pop %v9704
        %v10070 = vtanh.pop %v9706
        %v10071 = vtanh.pop %v9708
        %v10072 = vtanh.pop %v9710
        %v10073 = vtanh.pop %v9714
        %v10074 = vtanh.pop %v9716
        %v10075 = vtanh.pop %v9718
        %v10076 = vtanh.pop %v9720
        %v10077 = vtanh.pop %v9724
        %v10078 = vtanh.pop %v9726
        %v10079 = vtanh.pop %v9728
        %v10080 = vtanh.pop %v9730
        %v10081 = vtanh.pop %v9734
        %v10082 = vtanh.pop %v9736
        %v10083 = vtanh.pop %v9738
        %v10084 = vtanh.pop %v9740
        %v10085 = vtanh.pop %v9744
        %v10086 = vtanh.pop %v9746
        %v10087 = vtanh.pop %v9748
        %v10088 = vtanh.pop %v9750
        %v10089 = vxor.u32 %v9787, 2147483648
        %v10090 = vxor.u32 %v9789, 2147483648
        %v10091 = vxor.u32 %v9791, 2147483648
        %v10092 = vxor.u32 %v9793, 2147483648
        %v10093 = vxor.u32 %v9797, 2147483648
        %v10094 = vxor.u32 %v9799, 2147483648
        %v10095 = vxor.u32 %v9801, 2147483648
        %v10096 = vxor.u32 %v9803, 2147483648
        %v10097 = vxor.u32 %v9807, 2147483648
        %v10098 = vxor.u32 %v9809, 2147483648
        %v10099 = vxor.u32 %v9811, 2147483648
        %v10100 = vxor.u32 %v9813, 2147483648
        %v10101 = vxor.u32 %v9817, 2147483648
        %v10102 = vxor.u32 %v9819, 2147483648
        %v10103 = vxor.u32 %v9821, 2147483648
        %v10104 = vxor.u32 %v9823, 2147483648
        %v10105 = vxor.u32 %v9827, 2147483648
        %v10106 = vxor.u32 %v9829, 2147483648
        %v10107 = vxor.u32 %v9831, 2147483648
        %v10108 = vxor.u32 %v9833, 2147483648
        %v10109 = vxor.u32 %v9837, 2147483648
        %v10110 = vxor.u32 %v9839, 2147483648
        %v10111 = vxor.u32 %v9841, 2147483648
        %v10112 = vxor.u32 %v9843, 2147483648
        %v10113 = vxor.u32 %v9847, 2147483648
        %v10114 = vxor.u32 %v9849, 2147483648
        %v10115 = vxor.u32 %v9851, 2147483648
        %v10116 = vxor.u32 %v9853, 2147483648
        %v10117 = vxor.u32 %v9857, 2147483648
        %v10118 = vxor.u32 %v9859, 2147483648
        %v10119 = vxor.u32 %v9861, 2147483648
        %v10120 = vxor.u32 %v9863, 2147483648
        %v10121 = vmul.f32 %v10089, 1.442695
        %v10122 = vpow.pop %v10121
        %v10123 = vmul.f32 %v10090, 1.442695
        %v10124 = vpow.pop %v10123
        %v10125 = vmul.f32 %v10091, 1.442695
        %v10126 = vpow.pop %v10125
        %v10127 = vmul.f32 %v10092, 1.442695
        %v10128 = vpow.pop %v10127
        %v10129 = vmul.f32 %v10093, 1.442695
        %v10130 = vpow.pop %v10129
        %v10131 = vmul.f32 %v10094, 1.442695
        %v10132 = vpow.pop %v10131
        %v10133 = vmul.f32 %v10095, 1.442695
        %v10134 = vpow.pop %v10133
        %v10135 = vmul.f32 %v10096, 1.442695
        %v10136 = vpow.pop %v10135
        %v10137 = vmul.f32 %v10097, 1.442695
        %v10138 = vpow.pop %v10137
        %v10139 = vmul.f32 %v10098, 1.442695
        %v10140 = vpow.pop %v10139
        %v10141 = vmul.f32 %v10099, 1.442695
        %v10142 = vpow.pop %v10141
        %v10143 = vmul.f32 %v10100, 1.442695
        %v10144 = vpow.pop %v10143
        %v10145 = vmul.f32 %v10101, 1.442695
        %v10146 = vpow.pop %v10145
        %v10147 = vmul.f32 %v10102, 1.442695
        %v10148 = vpow.pop %v10147
        %v10149 = vmul.f32 %v10103, 1.442695
        %v10150 = vpow.pop %v10149
        %v10151 = vmul.f32 %v10104, 1.442695
        %v10152 = vpow.pop %v10151
        %v10153 = vmul.f32 %v10105, 1.442695
        %v10154 = vpow.pop %v10153
        %v10155 = vmul.f32 %v10106, 1.442695
        %v10156 = vpow.pop %v10155
        %v10157 = vmul.f32 %v10107, 1.442695
        %v10158 = vpow.pop %v10157
        %v10159 = vmul.f32 %v10108, 1.442695
        %v10160 = vpow.pop %v10159
        %v10161 = vmul.f32 %v10109, 1.442695
        %v10162 = vpow.pop %v10161
        %v10163 = vmul.f32 %v10110, 1.442695
        %v10164 = vpow.pop %v10163
        %v10165 = vmul.f32 %v10111, 1.442695
        %v10166 = vpow.pop %v10165
        %v10167 = vmul.f32 %v10112, 1.442695
        %v10168 = vpow.pop %v10167
        %v10169 = vmul.f32 %v10113, 1.442695
        %v10170 = vpow.pop %v10169
        %v10171 = vmul.f32 %v10114, 1.442695
        %v10172 = vpow.pop %v10171
        %v10173 = vmul.f32 %v10115, 1.442695
        %v10174 = vpow.pop %v10173
        %v10175 = vmul.f32 %v10116, 1.442695
        %v10176 = vpow.pop %v10175
        %v10177 = vmul.f32 %v10117, 1.442695
        %v10178 = vpow.pop %v10177
        %v10179 = vmul.f32 %v10118, 1.442695
        %v10180 = vpow.pop %v10179
        %v10181 = vmul.f32 %v10119, 1.442695
        %v10182 = vpow.pop %v10181
        %v10183 = vmul.f32 %v10120, 1.442695
        %v10184 = vpow.pop %v10183
        %v10185 = vadd.f32 %v10122, 1.0
        %v10186 = vadd.f32 %v10124, 1.0
        %v10187 = vadd.f32 %v10126, 1.0
        %v10188 = vadd.f32 %v10128, 1.0
        %v10189 = vadd.f32 %v10130, 1.0
        %v10190 = vadd.f32 %v10132, 1.0
        %v10191 = vadd.f32 %v10134, 1.0
        %v10192 = vadd.f32 %v10136, 1.0
        %v10193 = vadd.f32 %v10138, 1.0
        %v10194 = vadd.f32 %v10140, 1.0
        %v10195 = vadd.f32 %v10142, 1.0
        %v10196 = vadd.f32 %v10144, 1.0
        %v10197 = vadd.f32 %v10146, 1.0
        %v10198 = vadd.f32 %v10148, 1.0
        %v10199 = vadd.f32 %v10150, 1.0
        %v10200 = vadd.f32 %v10152, 1.0
        %v10201 = vadd.f32 %v10154, 1.0
        %v10202 = vadd.f32 %v10156, 1.0
        %v10203 = vadd.f32 %v10158, 1.0
        %v10204 = vadd.f32 %v10160, 1.0
        %v10205 = vadd.f32 %v10162, 1.0
        %v10206 = vadd.f32 %v10164, 1.0
        %v10207 = vadd.f32 %v10166, 1.0
        %v10208 = vadd.f32 %v10168, 1.0
        %v10209 = vadd.f32 %v10170, 1.0
        %v10210 = vadd.f32 %v10172, 1.0
        %v10211 = vadd.f32 %v10174, 1.0
        %v10212 = vadd.f32 %v10176, 1.0
        %v10213 = vadd.f32 %v10178, 1.0
        %v10214 = vadd.f32 %v10180, 1.0
        %v10215 = vadd.f32 %v10182, 1.0
        %v10216 = vadd.f32 %v10184, 1.0
        %v10217 = vrcp.pop %v10185
        %v10218 = vmul.f32 1.0, %v10217
        %v10219 = vrcp.pop %v10186
        %v10220 = vmul.f32 1.0, %v10219
        %v10221 = vrcp.pop %v10187
        %v10222 = vmul.f32 1.0, %v10221
        %v10223 = vrcp.pop %v10188
        %v10224 = vmul.f32 1.0, %v10223
        %v10225 = vrcp.pop %v10189
        %v10226 = vmul.f32 1.0, %v10225
        %v10227 = vrcp.pop %v10190
        %v10228 = vmul.f32 1.0, %v10227
        %v10229 = vrcp.pop %v10191
        %v10230 = vmul.f32 1.0, %v10229
        %v10231 = vrcp.pop %v10192
        %v10232 = vmul.f32 1.0, %v10231
        %v10233 = vrcp.pop %v10193
        %v10234 = vmul.f32 1.0, %v10233
        %v10235 = vrcp.pop %v10194
        %v10236 = vmul.f32 1.0, %v10235
        %v10237 = vrcp.pop %v10195
        %v10238 = vmul.f32 1.0, %v10237
        %v10239 = vrcp.pop %v10196
        %v10240 = vmul.f32 1.0, %v10239
        %v10241 = vrcp.pop %v10197
        %v10242 = vmul.f32 1.0, %v10241
        %v10243 = vrcp.pop %v10198
        %v10244 = vmul.f32 1.0, %v10243
        %v10245 = vrcp.pop %v10199
        %v10246 = vmul.f32 1.0, %v10245
        %v10247 = vrcp.pop %v10200
        %v10248 = vmul.f32 1.0, %v10247
        %v10249 = vrcp.pop %v10201
        %v10250 = vmul.f32 1.0, %v10249
        %v10251 = vrcp.pop %v10202
        %v10252 = vmul.f32 1.0, %v10251
        %v10253 = vrcp.pop %v10203
        %v10254 = vmul.f32 1.0, %v10253
        %v10255 = vrcp.pop %v10204
        %v10256 = vmul.f32 1.0, %v10255
        %v10257 = vrcp.pop %v10205
        %v10258 = vmul.f32 1.0, %v10257
        %v10259 = vrcp.pop %v10206
        %v10260 = vmul.f32 1.0, %v10259
        %v10261 = vrcp.pop %v10207
        %v10262 = vmul.f32 1.0, %v10261
        %v10263 = vrcp.pop %v10208
        %v10264 = vmul.f32 1.0, %v10263
        %v10265 = vrcp.pop %v10209
        %v10266 = vmul.f32 1.0, %v10265
        %v10267 = vrcp.pop %v10210
        %v10268 = vmul.f32 1.0, %v10267
        %v10269 = vrcp.pop %v10211
        %v10270 = vmul.f32 1.0, %v10269
        %v10271 = vrcp.pop %v10212
        %v10272 = vmul.f32 1.0, %v10271
        %v10273 = vrcp.pop %v10213
        %v10274 = vmul.f32 1.0, %v10273
        %v10275 = vrcp.pop %v10214
        %v10276 = vmul.f32 1.0, %v10275
        %v10277 = vrcp.pop %v10215
        %v10278 = vmul.f32 1.0, %v10277
        %v10279 = vrcp.pop %v10216
        %v10280 = vmul.f32 1.0, %v10279
        %v10281 = vmul.f32 %v9994, %v10057
        %v10282 = vmul.f32 %v9996, %v10058
        %v10283 = vmul.f32 %v9998, %v10059
        %v10284 = vmul.f32 %v10000, %v10060
        %v10285 = vmul.f32 %v10002, %v10061
        %v10286 = vmul.f32 %v10004, %v10062
        %v10287 = vmul.f32 %v10006, %v10063
        %v10288 = vmul.f32 %v10008, %v10064
        %v10289 = vmul.f32 %v10010, %v10065
        %v10290 = vmul.f32 %v10012, %v10066
        %v10291 = vmul.f32 %v10014, %v10067
        %v10292 = vmul.f32 %v10016, %v10068
        %v10293 = vmul.f32 %v10018, %v10069
        %v10294 = vmul.f32 %v10020, %v10070
        %v10295 = vmul.f32 %v10022, %v10071
        %v10296 = vmul.f32 %v10024, %v10072
        %v10297 = vmul.f32 %v10026, %v10073
        %v10298 = vmul.f32 %v10028, %v10074
        %v10299 = vmul.f32 %v10030, %v10075
        %v10300 = vmul.f32 %v10032, %v10076
        %v10301 = vmul.f32 %v10034, %v10077
        %v10302 = vmul.f32 %v10036, %v10078
        %v10303 = vmul.f32 %v10038, %v10079
        %v10304 = vmul.f32 %v10040, %v10080
        %v10305 = vmul.f32 %v10042, %v10081
        %v10306 = vmul.f32 %v10044, %v10082
        %v10307 = vmul.f32 %v10046, %v10083
        %v10308 = vmul.f32 %v10048, %v10084
        %v10309 = vmul.f32 %v10050, %v10085
        %v10310 = vmul.f32 %v10052, %v10086
        %v10311 = vmul.f32 %v10054, %v10087
        %v10312 = vmul.f32 %v10056, %v10088
        %v10313 = vtanh.pop %v10281
        %v10314 = vtanh.pop %v10282
        %v10315 = vtanh.pop %v10283
        %v10316 = vtanh.pop %v10284
        %v10317 = vtanh.pop %v10285
        %v10318 = vtanh.pop %v10286
        %v10319 = vtanh.pop %v10287
        %v10320 = vtanh.pop %v10288
        %v10321 = vtanh.pop %v10289
        %v10322 = vtanh.pop %v10290
        %v10323 = vtanh.pop %v10291
        %v10324 = vtanh.pop %v10292
        %v10325 = vtanh.pop %v10293
        %v10326 = vtanh.pop %v10294
        %v10327 = vtanh.pop %v10295
        %v10328 = vtanh.pop %v10296
        %v10329 = vtanh.pop %v10297
        %v10330 = vtanh.pop %v10298
        %v10331 = vtanh.pop %v10299
        %v10332 = vtanh.pop %v10300
        %v10333 = vtanh.pop %v10301
        %v10334 = vtanh.pop %v10302
        %v10335 = vtanh.pop %v10303
        %v10336 = vtanh.pop %v10304
        %v10337 = vtanh.pop %v10305
        %v10338 = vtanh.pop %v10306
        %v10339 = vtanh.pop %v10307
        %v10340 = vtanh.pop %v10308
        %v10341 = vtanh.pop %v10309
        %v10342 = vtanh.pop %v10310
        %v10343 = vtanh.pop %v10311
        %v10344 = vtanh.pop %v10312
        %v10345 = vmul.f32 %v10218, %v10313
        %v10346 = vmul.f32 %v10220, %v10314
        %v10347 = vmul.f32 %v10222, %v10315
        %v10348 = vmul.f32 %v10224, %v10316
        %v10349 = vmul.f32 %v10226, %v10317
        %v10350 = vmul.f32 %v10228, %v10318
        %v10351 = vmul.f32 %v10230, %v10319
        %v10352 = vmul.f32 %v10232, %v10320
        %v10353 = vmul.f32 %v10234, %v10321
        %v10354 = vmul.f32 %v10236, %v10322
        %v10355 = vmul.f32 %v10238, %v10323
        %v10356 = vmul.f32 %v10240, %v10324
        %v10357 = vmul.f32 %v10242, %v10325
        %v10358 = vmul.f32 %v10244, %v10326
        %v10359 = vmul.f32 %v10246, %v10327
        %v10360 = vmul.f32 %v10248, %v10328
        %v10361 = vmul.f32 %v10250, %v10329
        %v10362 = vmul.f32 %v10252, %v10330
        %v10363 = vmul.f32 %v10254, %v10331
        %v10364 = vmul.f32 %v10256, %v10332
        %v10365 = vmul.f32 %v10258, %v10333
        %v10366 = vmul.f32 %v10260, %v10334
        %v10367 = vmul.f32 %v10262, %v10335
        %v10368 = vmul.f32 %v10264, %v10336
        %v10369 = vmul.f32 %v10266, %v10337
        %v10370 = vmul.f32 %v10268, %v10338
        %v10371 = vmul.f32 %v10270, %v10339
        %v10372 = vmul.f32 %v10272, %v10340
        %v10373 = vmul.f32 %v10274, %v10341
        %v10374 = vmul.f32 %v10276, %v10342
        %v10375 = vmul.f32 %v10278, %v10343
        %v10376 = vmul.f32 %v10280, %v10344
        %v10377 = vld [vmem:[#allocation7 + $0x180] sm:$0xff]
        %v10378 = vld [vmem:[#allocation7 + $0x188] sm:$0xff]
        %v10379 = vld [vmem:[#allocation7 + $0x190] sm:$0xff]
        %v10380 = vld [vmem:[#allocation7 + $0x198] sm:$0xff]
        %v10381 = vld [vmem:[#allocation7 + $0x1a0] sm:$0xff]
        %v10382 = vld [vmem:[#allocation7 + $0x1a8] sm:$0xff]
        %v10383 = vld [vmem:[#allocation7 + $0x1b0] sm:$0xff]
        %v10384 = vld [vmem:[#allocation7 + $0x1b8] sm:$0xff]
        %v10385 = vld [vmem:[#allocation7 + $0x1c0] sm:$0xff]
        %v10386 = vld [vmem:[#allocation7 + $0x1c8] sm:$0xff]
        %v10387 = vld [vmem:[#allocation7 + $0x1d0] sm:$0xff]
        %v10388 = vld [vmem:[#allocation7 + $0x1d8] sm:$0xff]
        %v10389 = vld [vmem:[#allocation7 + $0x1e0] sm:$0xff]
        %v10390 = vld [vmem:[#allocation7 + $0x1e8] sm:$0xff]
        %v10391 = vld [vmem:[#allocation7 + $0x1f0] sm:$0xff]
        %v10392 = vld [vmem:[#allocation7 + $0x1f8] sm:$0xff]
        %v10393 = vld [vmem:[#allocation7 + $0x200] sm:$0xff]
        %v10394 = vld [vmem:[#allocation7 + $0x208] sm:$0xff]
        %v10395 = vld [vmem:[#allocation7 + $0x210] sm:$0xff]
        %v10396 = vld [vmem:[#allocation7 + $0x218] sm:$0xff]
        %v10397 = vld [vmem:[#allocation7 + $0x220] sm:$0xff]
        %v10398 = vld [vmem:[#allocation7 + $0x228] sm:$0xff]
        %v10399 = vld [vmem:[#allocation7 + $0x230] sm:$0xff]
        %v10400 = vld [vmem:[#allocation7 + $0x238] sm:$0xff]
        %v10401 = vld [vmem:[#allocation7 + $0x240] sm:$0xff]
        %v10402 = vld [vmem:[#allocation7 + $0x248] sm:$0xff]
        %v10403 = vld [vmem:[#allocation7 + $0x250] sm:$0xff]
        %v10404 = vld [vmem:[#allocation7 + $0x258] sm:$0xff]
        %v10405 = vld [vmem:[#allocation7 + $0x260] sm:$0xff]
        %v10406 = vld [vmem:[#allocation7 + $0x268] sm:$0xff]
        %v10407 = vld [vmem:[#allocation7 + $0x270] sm:$0xff]
        %v10408 = vld [vmem:[#allocation7 + $0x278] sm:$0xff]
        %s10409 = scalar_lea.vmem [#allocation10], 199
        %v10410 = vld [vmem:[%s10409] ss:$8 sm:$0x3]
        %v10411 = vpack.c.bf16 %v10347, %v10345
        %v10412 = vpack.c.bf16 %v10348, %v10346
        %v10413 = vpack.c.bf16 %v10351, %v10349
        %v10414 = vpack.c.bf16 %v10352, %v10350
        %v10415 = vpack.c.bf16 %v10355, %v10353
        %v10416 = vpack.c.bf16 %v10356, %v10354
        %v10417 = vpack.c.bf16 %v10359, %v10357
        %v10418 = vpack.c.bf16 %v10360, %v10358
        %v10419 = vpack.c.bf16 %v10363, %v10361
        %v10420 = vpack.c.bf16 %v10364, %v10362
        %v10421 = vpack.c.bf16 %v10367, %v10365
        %v10422 = vpack.c.bf16 %v10368, %v10366
        %v10423 = vpack.c.bf16 %v10371, %v10369
        %v10424 = vpack.c.bf16 %v10372, %v10370
        %v10425 = vpack.c.bf16 %v10375, %v10373
        %v10426 = vpack.c.bf16 %v10376, %v10374
        %v10428 = vlaneseq
        %v10429 = vshrl.u32 %v10428, 7
        %v10430 = vsub.s32 0, %v10429
        %v10431 = vrot.slane %v10410, %v10430
        %v10432 = vlaneseq
        %v10433 = vshrl.u32 %v10432, 7
        %v10434 = vsub.s32 1, %v10433
        %v10435 = vrot.slane %v10410, %v10434
        %v10470 = vunpack.c.l.b16 %v10377
        %v10471 = vunpack.c.h.b16 %v10377
        %v10472 = vunpack.c.l.b16 %v10378
        %v10473 = vunpack.c.h.b16 %v10378
        %v10474 = vunpack.c.l.b16 %v10379
        %v10475 = vunpack.c.h.b16 %v10379
        %v10476 = vunpack.c.l.b16 %v10380
        %v10477 = vunpack.c.h.b16 %v10380
        %v10478 = vunpack.c.l.b16 %v10381
        %v10479 = vunpack.c.h.b16 %v10381
        %v10480 = vunpack.c.l.b16 %v10382
        %v10481 = vunpack.c.h.b16 %v10382
        %v10482 = vunpack.c.l.b16 %v10383
        %v10483 = vunpack.c.h.b16 %v10383
        %v10484 = vunpack.c.l.b16 %v10384
        %v10485 = vunpack.c.h.b16 %v10384
        %v10486 = vunpack.c.l.b16 %v10385
        %v10487 = vunpack.c.h.b16 %v10385
        %v10488 = vunpack.c.l.b16 %v10386
        %v10489 = vunpack.c.h.b16 %v10386
        %v10490 = vunpack.c.l.b16 %v10387
        %v10491 = vunpack.c.h.b16 %v10387
        %v10492 = vunpack.c.l.b16 %v10388
        %v10493 = vunpack.c.h.b16 %v10388
        %v10494 = vunpack.c.l.b16 %v10389
        %v10495 = vunpack.c.h.b16 %v10389
        %v10496 = vunpack.c.l.b16 %v10390
        %v10497 = vunpack.c.h.b16 %v10390
        %v10498 = vunpack.c.l.b16 %v10391
        %v10499 = vunpack.c.h.b16 %v10391
        %v10500 = vunpack.c.l.b16 %v10392
        %v10501 = vunpack.c.h.b16 %v10392
        %v10502 = vunpack.c.l.b16 %v10393
        %v10503 = vunpack.c.h.b16 %v10393
        %v10504 = vunpack.c.l.b16 %v10394
        %v10505 = vunpack.c.h.b16 %v10394
        %v10506 = vunpack.c.l.b16 %v10395
        %v10507 = vunpack.c.h.b16 %v10395
        %v10508 = vunpack.c.l.b16 %v10396
        %v10509 = vunpack.c.h.b16 %v10396
        %v10510 = vunpack.c.l.b16 %v10397
        %v10511 = vunpack.c.h.b16 %v10397
        %v10512 = vunpack.c.l.b16 %v10398
        %v10513 = vunpack.c.h.b16 %v10398
        %v10514 = vunpack.c.l.b16 %v10399
        %v10515 = vunpack.c.h.b16 %v10399
        %v10516 = vunpack.c.l.b16 %v10400
        %v10517 = vunpack.c.h.b16 %v10400
        %v10518 = vunpack.c.l.b16 %v10401
        %v10519 = vunpack.c.h.b16 %v10401
        %v10520 = vunpack.c.l.b16 %v10402
        %v10521 = vunpack.c.h.b16 %v10402
        %v10522 = vunpack.c.l.b16 %v10403
        %v10523 = vunpack.c.h.b16 %v10403
        %v10524 = vunpack.c.l.b16 %v10404
        %v10525 = vunpack.c.h.b16 %v10404
        %v10526 = vunpack.c.l.b16 %v10405
        %v10527 = vunpack.c.h.b16 %v10405
        %v10528 = vunpack.c.l.b16 %v10406
        %v10529 = vunpack.c.h.b16 %v10406
        %v10530 = vunpack.c.l.b16 %v10407
        %v10531 = vunpack.c.h.b16 %v10407
        %v10532 = vunpack.c.l.b16 %v10408
        %v10533 = vunpack.c.h.b16 %v10408
        %v10534 = vpack.c.b16 %v10472, %v10470
        %v10535 = vpack.c.b16 %v10473, %v10471
        %v10536 = vpack.c.b16 %v10476, %v10474
        %v10537 = vpack.c.b16 %v10477, %v10475
        %v10538 = vpack.c.b16 %v10480, %v10478
        %v10539 = vpack.c.b16 %v10481, %v10479
        %v10540 = vpack.c.b16 %v10484, %v10482
        %v10541 = vpack.c.b16 %v10485, %v10483
        %v10542 = vpack.c.b16 %v10488, %v10486
        %v10543 = vpack.c.b16 %v10489, %v10487
        %v10544 = vpack.c.b16 %v10492, %v10490
        %v10545 = vpack.c.b16 %v10493, %v10491
        %v10546 = vpack.c.b16 %v10496, %v10494
        %v10547 = vpack.c.b16 %v10497, %v10495
        %v10548 = vpack.c.b16 %v10500, %v10498
        %v10549 = vpack.c.b16 %v10501, %v10499
        %v10550 = vpack.c.b16 %v10504, %v10502
        %v10551 = vpack.c.b16 %v10505, %v10503
        %v10552 = vpack.c.b16 %v10508, %v10506
        %v10553 = vpack.c.b16 %v10509, %v10507
        %v10554 = vpack.c.b16 %v10512, %v10510
        %v10555 = vpack.c.b16 %v10513, %v10511
        %v10556 = vpack.c.b16 %v10516, %v10514
        %v10557 = vpack.c.b16 %v10517, %v10515
        %v10558 = vpack.c.b16 %v10520, %v10518
        %v10559 = vpack.c.b16 %v10521, %v10519
        %v10560 = vpack.c.b16 %v10524, %v10522
        %v10561 = vpack.c.b16 %v10525, %v10523
        %v10562 = vpack.c.b16 %v10528, %v10526
        %v10563 = vpack.c.b16 %v10529, %v10527
        %v10564 = vpack.c.b16 %v10532, %v10530
        %v10565 = vpack.c.b16 %v10533, %v10531
        %10598 = vmatprep.subr.bf16.mxu0 %v10549
        %10599 = vmatpush1.bf16.msra.mxu0 %v10548
        %10600 = vmatprep.subr.bf16.mxu0 %v10547
        %10601 = vmatpush1.bf16.msra.mxu0 %v10546
        %10602 = vmatprep.subr.bf16.mxu0 %v10545
        %10603 = vmatpush1.bf16.msra.mxu0 %v10544
        %10604 = vmatprep.subr.bf16.mxu0 %v10543
        %10605 = vmatpush1.bf16.msra.mxu0 %v10542
        %10606 = vmatprep.subr.bf16.mxu0 %v10541
        %10607 = vmatpush1.bf16.msra.mxu0 %v10540
        %10608 = vmatprep.subr.bf16.mxu0 %v10539
        %10609 = vmatpush1.bf16.msra.mxu0 %v10538
        %10610 = vmatprep.subr.bf16.mxu0 %v10537
        %10611 = vmatpush1.bf16.msra.mxu0 %v10536
        %10612 = vmatprep.subr.bf16.mxu0 %v10535
        %10613 = vmatpush1.bf16.msra.mxu0 %v10534
        %10614 = vmatprep.subr.bf16.mxu0 %v10565
        %10615 = vmatpush2.bf16.msra.mxu0 %v10564
        %10616 = vmatprep.subr.bf16.mxu0 %v10563
        %10617 = vmatpush2.bf16.msra.mxu0 %v10562
        %10618 = vmatprep.subr.bf16.mxu0 %v10561
        %10619 = vmatpush2.bf16.msra.mxu0 %v10560
        %10620 = vmatprep.subr.bf16.mxu0 %v10559
        %10621 = vmatpush2.bf16.msra.mxu0 %v10558
        %10622 = vmatprep.subr.bf16.mxu0 %v10557
        %10623 = vmatpush2.bf16.msra.mxu0 %v10556
        %10624 = vmatprep.subr.bf16.mxu0 %v10555
        %10625 = vmatpush2.bf16.msra.mxu0 %v10554
        %10626 = vmatprep.subr.bf16.mxu0 %v10553
        %10627 = vmatpush2.bf16.msra.mxu0 %v10552
        %10628 = vmatprep.subr.bf16.mxu0 %v10551
        %10629 = vmatpush2.bf16.msra.mxu0 %v10550
        %10630 = vmatprep.mubr.bf16.mxu0 %v10412
        %10631 = vmatmul.mubr.bf16.gmra.mxu0 %v10411
        %v10632 = vpop.f32.mrf.mxu0
        %v10633 = vadd.f32 %v10431, %v10632
        %v10634 = vpop.f32.mrf.mxu0
        %v10635 = vadd.f32 %v10435, %v10634
        %v10636 = vpop.f32.mrf.mxu0
        %v10637 = vadd.f32 %v10431, %v10636
        %v10638 = vpop.f32.mrf.mxu0
        %v10639 = vadd.f32 %v10435, %v10638
        %10640 = vmatprep.mubr.bf16.mxu0 %v10414
        %10641 = vmatmul.mubr.bf16.gmra.mxu0 %v10413
        %v10642 = vpop.f32.mrf.mxu0
        %v10643 = vadd.f32 %v10431, %v10642
        %v10644 = vpop.f32.mrf.mxu0
        %v10645 = vadd.f32 %v10435, %v10644
        %v10646 = vpop.f32.mrf.mxu0
        %v10647 = vadd.f32 %v10431, %v10646
        %v10648 = vpop.f32.mrf.mxu0
        %v10649 = vadd.f32 %v10435, %v10648
        %10650 = vmatprep.mubr.bf16.mxu0 %v10416
        %10651 = vmatmul.mubr.bf16.gmra.mxu0 %v10415
        %v10652 = vpop.f32.mrf.mxu0
        %v10653 = vadd.f32 %v10431, %v10652
        %v10654 = vpop.f32.mrf.mxu0
        %v10655 = vadd.f32 %v10435, %v10654
        %v10656 = vpop.f32.mrf.mxu0
        %v10657 = vadd.f32 %v10431, %v10656
        %v10658 = vpop.f32.mrf.mxu0
        %v10659 = vadd.f32 %v10435, %v10658
        %10660 = vmatprep.mubr.bf16.mxu0 %v10418
        %10661 = vmatmul.mubr.bf16.gmra.mxu0 %v10417
        %v10662 = vpop.f32.mrf.mxu0
        %v10663 = vadd.f32 %v10431, %v10662
        %v10664 = vpop.f32.mrf.mxu0
        %v10665 = vadd.f32 %v10435, %v10664
        %v10666 = vpop.f32.mrf.mxu0
        %v10667 = vadd.f32 %v10431, %v10666
        %v10668 = vpop.f32.mrf.mxu0
        %v10669 = vadd.f32 %v10435, %v10668
        %10670 = vmatprep.mubr.bf16.mxu0 %v10420
        %10671 = vmatmul.mubr.bf16.gmra.mxu0 %v10419
        %v10672 = vpop.f32.mrf.mxu0
        %v10673 = vadd.f32 %v10431, %v10672
        %v10674 = vpop.f32.mrf.mxu0
        %v10675 = vadd.f32 %v10435, %v10674
        %v10676 = vpop.f32.mrf.mxu0
        %v10677 = vadd.f32 %v10431, %v10676
        %v10678 = vpop.f32.mrf.mxu0
        %v10679 = vadd.f32 %v10435, %v10678
        %10680 = vmatprep.mubr.bf16.mxu0 %v10422
        %10681 = vmatmul.mubr.bf16.gmra.mxu0 %v10421
        %v10682 = vpop.f32.mrf.mxu0
        %v10683 = vadd.f32 %v10431, %v10682
        %v10684 = vpop.f32.mrf.mxu0
        %v10685 = vadd.f32 %v10435, %v10684
        %v10686 = vpop.f32.mrf.mxu0
        %v10687 = vadd.f32 %v10431, %v10686
        %v10688 = vpop.f32.mrf.mxu0
        %v10689 = vadd.f32 %v10435, %v10688
        %10690 = vmatprep.mubr.bf16.mxu0 %v10424
        %10691 = vmatmul.mubr.bf16.gmra.mxu0 %v10423
        %v10692 = vpop.f32.mrf.mxu0
        %v10693 = vadd.f32 %v10431, %v10692
        %v10694 = vpop.f32.mrf.mxu0
        %v10695 = vadd.f32 %v10435, %v10694
        %v10696 = vpop.f32.mrf.mxu0
        %v10697 = vadd.f32 %v10431, %v10696
        %v10698 = vpop.f32.mrf.mxu0
        %v10699 = vadd.f32 %v10435, %v10698
        %10700 = vmatprep.mubr.bf16.mxu0 %v10426
        %10701 = vmatmul.mubr.bf16.gmra.mxu0 %v10425
        %v10702 = vpop.f32.mrf.mxu0
        %v10703 = vadd.f32 %v10431, %v10702
        %v10704 = vpop.f32.mrf.mxu0
        %v10705 = vadd.f32 %v10435, %v10704
        %v10706 = vpop.f32.mrf.mxu0
        %v10707 = vadd.f32 %v10431, %v10706
        %v10708 = vpop.f32.mrf.mxu0
        %v10709 = vadd.f32 %v10435, %v10708
        %10710 = vdwg.mxu0
        %10711 = vst [vmem:[%s301] sm:$0xff] %v10633
        %10712 = vst [vmem:[%s301 + $0x8] sm:$0xff] %v10635
        %10713 = vst [vmem:[%s301 + $0x10] sm:$0xff] %v10637
        %10714 = vst [vmem:[%s301 + $0x18] sm:$0xff] %v10639
        %10715 = vst [vmem:[%s301 + $0x20] sm:$0xff] %v10643
        %10716 = vst [vmem:[%s301 + $0x28] sm:$0xff] %v10645
        %10717 = vst [vmem:[%s301 + $0x30] sm:$0xff] %v10647
        %10718 = vst [vmem:[%s301 + $0x38] sm:$0xff] %v10649
        %10719 = vst [vmem:[%s301 + $0x40] sm:$0xff] %v10653
        %10720 = vst [vmem:[%s301 + $0x48] sm:$0xff] %v10655
        %10721 = vst [vmem:[%s301 + $0x50] sm:$0xff] %v10657
        %10722 = vst [vmem:[%s301 + $0x58] sm:$0xff] %v10659
        %10723 = vst [vmem:[%s301 + $0x60] sm:$0xff] %v10663
        %10724 = vst [vmem:[%s301 + $0x68] sm:$0xff] %v10665
        %10725 = vst [vmem:[%s301 + $0x70] sm:$0xff] %v10667
        %10726 = vst [vmem:[%s301 + $0x78] sm:$0xff] %v10669
        %10727 = vst [vmem:[%s301 + $0x80] sm:$0xff] %v10673
        %10728 = vst [vmem:[%s301 + $0x88] sm:$0xff] %v10675
        %10729 = vst [vmem:[%s301 + $0x90] sm:$0xff] %v10677
        %10730 = vst [vmem:[%s301 + $0x98] sm:$0xff] %v10679
        %10731 = vst [vmem:[%s301 + $0xa0] sm:$0xff] %v10683
        %10732 = vst [vmem:[%s301 + $0xa8] sm:$0xff] %v10685
        %10733 = vst [vmem:[%s301 + $0xb0] sm:$0xff] %v10687
        %10734 = vst [vmem:[%s301 + $0xb8] sm:$0xff] %v10689
        %10735 = vst [vmem:[%s301 + $0xc0] sm:$0xff] %v10693
        %10736 = vst [vmem:[%s301 + $0xc8] sm:$0xff] %v10695
        %10737 = vst [vmem:[%s301 + $0xd0] sm:$0xff] %v10697
        %10738 = vst [vmem:[%s301 + $0xd8] sm:$0xff] %v10699
        %10739 = vst [vmem:[%s301 + $0xe0] sm:$0xff] %v10703
        %10740 = vst [vmem:[%s301 + $0xe8] sm:$0xff] %v10705
        %10741 = vst [vmem:[%s301 + $0xf0] sm:$0xff] %v10707
        %10742 = vst [vmem:[%s301 + $0xf8] sm:$0xff] %v10709
        %s10743 = sand.u32 %s142, 1
        %s10744 = scalar_lea.sflag [#allocation4], %s10743
        %s10745 = sand.u32 %s142, 1
        %s10746 = smul.addr %s10745, 256
        %s10747 = scalar_lea.vmem [#allocation11], %s10746
        // Predicated region
        $region61: #{tpu_custom_call.1} parent=39 // pred_check
          %p10748 = pneg %p152
        $region62: #{tpu_custom_call.1} parent=39 // pred_check_branch
          %10750 = sbr.rel (%p10748) target = $region64
        $region63: #{tpu_custom_call.1} parent=39 // pred_region
          %s10751 = smul.u32 16, %s24
          %s10753 = ssub.s32 4096, 4096
          %10754 = vsyncadd %s10744, %s10753
          %s10755 = smul.addr %s10751, 2
          %s10756 = smul.addr %s10755, 128
          %s10757 = scalar_lea.hbm %s5, %s10756
          %s10758 = sshll.u32 %s10747, 4
          %s10759 = int_to_ptr.vmem [resolvable:$true] %s10758
          %10764 = dma.vmem_to_hbm [thread:$0]  %s10759, 4096, %s10757, %s10744, 256, 256, 16
        $region64: #{tpu_custom_call.1} parent=39 // pred_fallthru
          _
      $region40: #{tpu_custom_call.1} parent=5 // pred_fallthru
        _
      %p10765 = scmp.le.s32.totalorder 2, %s19
      // Predicated region
      $region65: #{tpu_custom_call.1} parent=5 // pred_check
        %p10766 = pneg %p10765
      $region66: #{tpu_custom_call.1} parent=5 // pred_check_branch
        %10768 = sbr.rel (%p10766) target = $region68
      $region67: #{tpu_custom_call.1} parent=5 // pred_region
        %s10769 = ssub.s32 %s19, 2
        // Predicated region
        $region69: #{tpu_custom_call.1} parent=67 // pred_check
          %p10770 = pneg %p158
        $region70: #{tpu_custom_call.1} parent=67 // pred_check_branch
          %10772 = sbr.rel (%p10770) target = $region72
        $region71: #{tpu_custom_call.1} parent=67 // pred_region
          %s10773 = sand.u32 %s143, 1
          %s10774 = scalar_lea.sflag [#allocation4], %s10773
          %s10775 = sand.u32 %s143, 1
          %s10776 = smul.addr %s10775, 256
          %s10777 = scalar_lea.vmem [#allocation11], %s10776
          %10778 = dma.done %s10774, 4096
        $region72: #{tpu_custom_call.1} parent=67 // pred_fallthru
          _
      $region68: #{tpu_custom_call.1} parent=5 // pred_fallthru
        _
    $region6: #{tpu_custom_call.1} parent=1 // loop_footer
      %s23 = sadd.s32 1, %s19
    $region7: #{tpu_custom_call.1} parent=1 // loop_footer_branch
      %18 = sbr.rel target = $region3
    $region8: #{tpu_custom_call.1} parent=1 // loop_exit
      _
    %10779 = vsyncpa [#allocation3], 1
    %s10780 = scalar_lea.sflag [#allocation3], 1
    %10781 = vsyncpa %s10780, 1
    %10782 = vsyncpa [#allocation6], 1
    %10783 = vsyncpa [#allocation9], 1
    %10784 = vsyncpa [#allocation4], 1
    %s10785 = scalar_lea.sflag [#allocation4], 1
    %10786 = vsyncpa %s10785, 1

</llo_original>
